<compile_context>
chip_gen: v7x
topology: tpu7x:2x2x1
jax: 0.10.0
libtpu: 0.0.40
codegen_flags: <defaults>
</compile_context>

<pallas_src>
import math
from functools import partial

import numpy as np
import jax
import jax.numpy as jnp
from jax import lax
from jax.experimental import pallas as pl
from jax.experimental.pallas import tpu as pltpu


_TM = 512                      # row-tile for the row-parallel kernels (multiple of 8)
_EPS = 1e-5
_VMEM_LIMIT = 64 * 1024 * 1024
_SQRT_2_OVER_PI = 0.7978845608028654


# ------------------------------------------------------------------ small helpers

def _gelu_tanh(x):
    # TODO(synk): switch to exact erf GELU in-kernel once erf lowering in Mosaic is guaranteed.
    return 0.5 * x * (1.0 + jnp.tanh(_SQRT_2_OVER_PI * (x + 0.044715 * x * x * x)))


def gelu(x):
    return jax.nn.gelu(x, approximate=False)   # exact erf GELU (XLA side)


def _ln(x, g, b, eps):
    mu = jnp.mean(x, axis=-1, keepdims=True)
    var = jnp.mean((x - mu) ** 2, axis=-1, keepdims=True)
    return (x - mu) * lax.rsqrt(var + eps) * g + b


def _bf16_dot(x, w):
    return jnp.dot(x.astype(jnp.bfloat16), w.astype(jnp.bfloat16),
                   preferred_element_type=jnp.float32)


# ------------------------------------------------------------------ generic row-tiled launcher

def _row_call(kernel_fn, row_inputs, bcast_inputs, out_cols):
    """Launch `kernel_fn` tiled over rows of the 2D `row_inputs`.

    Kernel signature: kernel(*row_refs, *bcast_refs, out_ref).  Row inputs/output
    share the row tiling; bcast inputs (weights, biases, per-channel scales) are
    full-dim blocks with a constant index_map (fetched once, reused every step).
    """
    M = row_inputs[0].shape[0]
    tm = M if M <= _TM else _TM
    grid = (pl.cdiv(M, tm),)
    in_specs = [pl.BlockSpec((tm, r.shape[1]), lambda i: (i, 0)) for r in row_inputs]
    # TODO(synk): mark these invariant weight blocks pipeline_mode=pl.Buffered(1) on v7x.
    in_specs += [pl.BlockSpec(b.shape, lambda i: (0,) * b.ndim) for b in bcast_inputs]
    return pl.pallas_call(
        kernel_fn,
        out_shape=jax.ShapeDtypeStruct((M, out_cols), jnp.float32),
        grid=grid,
        in_specs=in_specs,
        out_specs=pl.BlockSpec((tm, out_cols), lambda i: (i, 0)),
        compiler_params=pltpu.CompilerParams(
            dimension_semantics=("parallel",),
            vmem_limit_bytes=_VMEM_LIMIT),
    )(*row_inputs, *bcast_inputs)


# ------------------------------------------------------------------ Pallas kernels

def _layernorm_kernel(x_ref, g_ref, b_ref, o_ref, *, eps):
    o_ref[...] = _ln(x_ref[...], g_ref[...], b_ref[...], eps)


def layer_norm(x, g, b, eps=_EPS):
    return _row_call(partial(_layernorm_kernel, eps=eps), [x],
                     [g.reshape(1, -1), b.reshape(1, -1)], x.shape[1])


def _proj_qkv_kernel(x_ref, w1_ref, b1_ref, g_ref, be_ref, w2_ref, b2_ref, o_ref, *, eps):
    # proj_attn -> LayerNorm -> qkv, all fused (bf16 matmuls, f32 accumulate).
    h = _bf16_dot(x_ref[...], w1_ref[...]) + b1_ref[...]
    hn = _ln(h, g_ref[...], be_ref[...], eps)
    o_ref[...] = _bf16_dot(hn, w2_ref[...]) + b2_ref[...]


def proj_qkv(x, w1, b1, g, be, w2, b2, eps=_EPS):
    return _row_call(partial(_proj_qkv_kernel, eps=eps), [x],
                     [w1, b1.reshape(1, -1), g.reshape(1, -1), be.reshape(1, -1),
                      w2, b2.reshape(1, -1)],
                     w2.shape[1])


def _bn_gelu_linear_kernel(x_ref, a_ref, c_ref, w_ref, b_ref, o_ref):
    # conv-branch BN (folded scale/shift) + GELU as prologue of the 1x1 projection.
    xact = _gelu_tanh(x_ref[...] * a_ref[...] + c_ref[...])
    o_ref[...] = _bf16_dot(xact, w_ref[...]) + b_ref[...]


def bn_gelu_linear(x, a, c, w, b):
    return _row_call(_bn_gelu_linear_kernel, [x],
                     [a.reshape(1, -1), c.reshape(1, -1), w, b.reshape(1, -1)],
                     w.shape[1])


def _merge_proj_kernel(xa_ref, xc_ref, g_ref, be_ref, a_ref, c_ref, w_ref, b_ref,
                       o_ref, *, eps, Ca):
    # attn_norm LN + conv_norm BN(scale/shift) + concat + final projection.
    xan = _ln(xa_ref[...], g_ref[...], be_ref[...], eps)
    xcn = xc_ref[...] * a_ref[...] + c_ref[...]
    w = w_ref[...]                       # full (C, C) weight, sliced in-kernel
    o_ref[...] = (_bf16_dot(xan, w[:Ca, :]) + _bf16_dot(xcn, w[Ca:, :]) + b_ref[...])


def merge_proj(xa, xc, g, be, a, c, w, b, *, Ca, eps=_EPS):
    return _row_call(partial(_merge_proj_kernel, eps=eps, Ca=Ca), [xa, xc],
                     [g.reshape(1, -1), be.reshape(1, -1),
                      a.reshape(1, -1), c.reshape(1, -1),
                      w, b.reshape(1, -1)],
                     w.shape[1])


def _mlp_kernel(x_ref, g1_ref, b1_ref, w1_ref, wb1_ref, g2_ref, b2_ref,
                w2_ref, wb2_ref, o_ref, *, eps):
    # norm2 -> fc1 -> GELU -> mlp_norm -> fc2 -> +residual, fully fused:
    # the hidden activation never leaves VMEM.
    x = x_ref[...]
    h = _bf16_dot(_ln(x, g1_ref[...], b1_ref[...], eps), w1_ref[...]) + wb1_ref[...]
    h = _gelu_tanh(h)
    y = _bf16_dot(_ln(h, g2_ref[...], b2_ref[...], eps), w2_ref[...]) + wb2_ref[...]
    o_ref[...] = x + y                   # DropPath(p=0) == identity


def mlp_block(x, n2g, n2b, w1, b1, mng, mnb, w2, b2, eps=_EPS):
    return _row_call(partial(_mlp_kernel, eps=eps), [x],
                     [n2g.reshape(1, -1), n2b.reshape(1, -1), w1, b1.reshape(1, -1),
                      mng.reshape(1, -1), mnb.reshape(1, -1), w2, b2.reshape(1, -1)],
                     w2.shape[1])


def _attn_kernel(qkv_ref, gate_ref, bias_ref, o_ref, *, scale, nh, hd, Ca):
    qkv = qkv_ref[0]                     # (wt, N, 3*Ca)
    gate = gate_ref[0]                   # (1, Ca)   per-image channel gate
    outs = []
    # TODO(synk): move the head loop onto a grid axis / fori_loop for large nh.
    for h in range(nh):
        q = (qkv[:, :, h * hd:(h + 1) * hd] * scale).astype(jnp.bfloat16)
        k = qkv[:, :, Ca + h * hd:Ca + (h + 1) * hd].astype(jnp.bfloat16)
        v = (qkv[:, :, 2 * Ca + h * hd:2 * Ca + (h + 1) * hd]
             * gate[:, h * hd:(h + 1) * hd][None, :, :]).astype(jnp.bfloat16)
        s = lax.dot_general(q, k, (((2,), (2,)), ((0,), (0,))),
                            preferred_element_type=jnp.float32)       # (wt, N, N)
        s = s + bias_ref[h][None, :, :]
        s = s - jnp.max(s, axis=-1, keepdims=True)
        p = jnp.exp(s)
        p = p * pl.reciprocal(jnp.sum(p, axis=-1, keepdims=True), approx=True)
        outs.append(lax.dot_general(p.astype(jnp.bfloat16), v,
                                    (((2,), (1,)), ((0,), (0,))),
                                    preferred_element_type=jnp.float32))  # (wt, N, hd)
    o_ref[0] = jnp.concatenate(outs, axis=-1)        # single lane-dense (wt, N, Ca) store


def _pick_window_tile(win_per_img, max_tile=16):
    t = min(win_per_img, max_tile)
    while win_per_img % t:
        t -= 1
    return t


def attention(qkv4, gate3, bias, *, scale, nh, hd):
    """qkv4: (B, windows_per_image, N, 3*Ca); gate3: (B, 1, Ca); bias: (nh, N, N).
    Returns head-minor (B, windows_per_image, N, Ca); the reference's quirky merge
    order is produced by the caller with a cheap reshape/transpose."""
    B, win_per_img, N, threeCa = qkv4.shape
    Ca = threeCa // 3
    wt = _pick_window_tile(win_per_img)
    grid = (B, win_per_img // wt)
    return pl.pallas_call(
        partial(_attn_kernel, scale=scale, nh=nh, hd=hd, Ca=Ca),
        out_shape=jax.ShapeDtypeStruct((B, win_per_img, N, Ca), jnp.float32),
        grid=grid,
        in_specs=[pl.BlockSpec((1, wt, N, threeCa), lambda b, w: (b, w, 0, 0)),
                  pl.BlockSpec((1, 1, Ca), lambda b, w: (b, 0, 0)),
                  pl.BlockSpec((nh, N, N), lambda b, w: (0, 0, 0))],
        out_specs=pl.BlockSpec((1, wt, N, Ca), lambda b, w: (b, w, 0, 0)),
        compiler_params=pltpu.CompilerParams(
            dimension_semantics=("parallel", "parallel"),
            vmem_limit_bytes=_VMEM_LIMIT),
    )(qkv4, gate3, bias)


def _dwconv_kernel(x_ref, w_ref, b_ref, o_ref, *, K, H, W):
    x = x_ref[...]            # (1, H+2p, W+2p, C)
    w = w_ref[...]            # (K, K, C)
    acc = jnp.zeros(o_ref.shape, jnp.float32)
    for ky in range(K):
        for kx in range(K):
            acc = acc + x[:, ky:ky + H, kx:kx + W, :] * w[ky, kx, :]
    o_ref[...] = acc + b_ref[...]


def depthwise_conv(x_nhwc, w, b, k):
    """Depthwise conv, NHWC, padding = k//2, groups = C (one image per grid step)."""
    B, H, W, C = x_nhwc.shape
    pad = k // 2
    # TODO(synk): tile over image rows with a k//2 halo and mask borders in-kernel to
    # avoid this jnp.pad copy and to fit large maps in v7x's 64 MiB VMEM.
    xp = jnp.pad(x_nhwc, ((0, 0), (pad, pad), (pad, pad), (0, 0)))
    Hp_, Wp_ = H + 2 * pad, W + 2 * pad
    return pl.pallas_call(
        partial(_dwconv_kernel, K=k, H=H, W=W),
        out_shape=jax.ShapeDtypeStruct((B, H, W, C), jnp.float32),
        grid=(B,),
        in_specs=[pl.BlockSpec((1, Hp_, Wp_, C), lambda bi: (bi, 0, 0, 0)),
                  pl.BlockSpec((k, k, C), lambda bi: (0, 0, 0)),
                  pl.BlockSpec((1, C), lambda bi: (0, 0))],
        out_specs=pl.BlockSpec((1, H, W, C), lambda bi: (bi, 0, 0, 0)),
        compiler_params=pltpu.CompilerParams(
            dimension_semantics=("parallel",),
            vmem_limit_bytes=_VMEM_LIMIT),
    )(xp, w, b.reshape(1, C))


# ------------------------------------------------------------------ JAX glue helpers

def bn_fold(x, gamma, beta, axes, eps=_EPS):
    """Training-mode BatchNorm -> per-channel (scale, shift)."""
    mu = jnp.mean(x, axis=axes)
    var = jnp.mean((x - mu) ** 2, axis=axes)
    a = gamma * lax.rsqrt(var + eps)
    c = beta - mu * a
    return a, c


def window_partition(x, wh, ww):
    """WP: (B, C, H, W) -> (B * H//wh * W//ww, wh*ww, C)."""
    B, C, H, W = x.shape
    x = x.reshape(B, C, H // wh, wh, W // ww, ww)
    x = jnp.transpose(x, (0, 2, 4, 3, 5, 1))
    return x.reshape(-1, wh * ww, C)


def reverse_window_partition(windows, H, W, wh, ww):
    """RWP: (B*nWh*nWw, wh*ww, C) -> (B, C, H, W)."""
    Bn, N, C = windows.shape
    B = Bn // ((H // wh) * (W // ww))
    x = windows.reshape(B, H // wh, W // ww, wh, ww, C)
    x = jnp.transpose(x, (0, 5, 1, 3, 2, 4))
    return x.reshape(B, C, H, W)


def windows_to_nhwc(windows, H, W, wh, ww):
    """(B*nWh*nWw, wh*ww, C) -> (B, H, W, C); == transpose(RWP(.), NHWC)."""
    Bn, N, C = windows.shape
    B = Bn // ((H // wh) * (W // ww))
    x = windows.reshape(B, H // wh, W // ww, wh, ww, C)
    x = jnp.transpose(x, (0, 1, 3, 2, 4, 5))
    return x.reshape(B, H, W, C)


def nhwc_to_windows(x, wh, ww):
    """(B, H, W, C) -> (B*nWh*nWw, wh*ww, C); == WP(transpose(., NCHW))."""
    B, H, W, C = x.shape
    x = x.reshape(B, H // wh, wh, W // ww, ww, C)
    x = jnp.transpose(x, (0, 1, 3, 2, 4, 5))
    return x.reshape(-1, wh * ww, C)


def rel_pos_idx(wh, ww):
    coords = np.stack(np.meshgrid(np.arange(wh), np.arange(ww), indexing="ij"))
    coords = coords.reshape(2, -1)
    rel = coords[:, :, None] - coords[:, None, :]
    rel = rel.transpose(1, 2, 0).astype(np.int64)
    rel[:, :, 0] += wh - 1
    rel[:, :, 1] += ww - 1
    rel[:, :, 0] *= 2 * ww - 1
    return jnp.asarray(rel.sum(-1), jnp.int32)          # (wh*ww, wh*ww)


# ------------------------------------------------------------------ MixingAttention

def mixing_attention_forward(p, x_windows, x_pad_nchw, h, w, *,
                             num_heads, window_size, kernel_size, rel_idx):
    B_, N, C = x_windows.shape
    wh, ww = window_size
    Ca = C // 2
    nh = num_heads
    hd = Ca // nh
    scale = hd ** (-0.5)
    B = x_pad_nchw.shape[0]
    win_per_img = B_ // B

    # --- attention branch: proj_attn -> LayerNorm -> qkv, fused in one kernel ---
    qkv = proj_qkv(x_windows.reshape(B_ * N, C),
                   p['proj_attn_w'], p['proj_attn_b'],
                   p['proj_attn_norm_g'], p['proj_attn_norm_b'],
                   p['qkv_w'], p['qkv_b'])                          # (B_*N, 3*Ca)

    # NOTE: the reference computes proj_cnn_norm(proj_cnn(x)) and immediately
    # overwrites it -> skipped (no effect on output); its params still exist.

    # --- CNN branch: RWP(WP(x_pad)) == x_pad, so use the padded map directly ---
    x_cnn = jnp.transpose(x_pad_nchw, (0, 2, 3, 1))                 # NHWC (B, h, w, C)
    conv_raw = depthwise_conv(x_cnn, p['conv_w'], p['conv_b'], kernel_size)
    a_bn, c_bn = bn_fold(conv_raw, p['conv_bn_g'], p['conv_bn_b'], axes=(0, 1, 2))

    # channel interaction (tiny -> XLA): GAP -> 1x1 -> BN -> GELU -> 1x1 -> sigmoid
    gap = jnp.mean(_gelu_tanh(conv_raw * a_bn + c_bn), axis=(1, 2))  # (B, C), fused reduce
    ci = gap @ p['ci_w1'] + p['ci_b1']
    a_ci, c_ci = bn_fold(ci, p['ci_bn_g'], p['ci_bn_b'], axes=(0,))
    ci = gelu(ci * a_ci + c_ci)
    gate = jax.nn.sigmoid(ci @ p['ci_w2'] + p['ci_b2'])             # (B, Ca)

    # 1x1 projection with conv BN + GELU fused as prologue (x_act never hits HBM)
    x_cnn_p = bn_gelu_linear(conv_raw.reshape(B * h * w, C), a_bn, c_bn,
                             p['projection_w'], p['projection_b']).reshape(B, h, w, Ca)

    # --- window/head attention, tiled over (image, window-tile) ---
    bias = jnp.transpose(p['rel_pos_bias'][rel_idx].reshape(N, N, nh), (2, 0, 1))
    attn_std = attention(qkv.reshape(B, win_per_img, N, 3 * Ca),
                         gate.reshape(B, 1, Ca), bias,
                         scale=scale, nh=nh, hd=hd)                 # (B, win, N, Ca)
    # Reference merge quirk: (1,B_,nh,N,hd).transpose(1,2).reshape(B_,N,Ca)
    x_attn = jnp.transpose(attn_std.reshape(B_, N, nh, hd),
                           (2, 0, 1, 3)).reshape(B_, N, Ca)

    # --- spatial interaction (tiny -> XLA) ---
    xs = windows_to_nhwc(x_attn, h, w, wh, ww).reshape(B * h * w, Ca)
    si = xs @ p['si_w1'] + p['si_b1']                               # (B*h*w, C//16)
    a_si, c_si = bn_fold(si, p['si_bn_g'], p['si_bn_b'], axes=(0,))
    si = gelu(si * a_si + c_si)
    si = (si @ p['si_w2'] + p['si_b2']).reshape(B, h, w, 1)

    t = jax.nn.sigmoid(si * x_cnn_p)                                # (B, h, w, Ca)
    a_cn, c_cn = bn_fold(t, p['conv_norm_g'], p['conv_norm_b'], axes=(0, 1, 2))
    x_cnn_rows = nhwc_to_windows(t, wh, ww).reshape(B_ * N, Ca)

    # --- fused attn_norm LN + conv_norm BN + concat + final projection ---
    out = merge_proj(x_attn.reshape(B_ * N, Ca), x_cnn_rows,
                     p['attn_norm_g'], p['attn_norm_b'], a_cn, c_cn,
                     p['proj_w'], p['proj_b'], Ca=Ca)
    return out.reshape(B_, N, C)


# ------------------------------------------------------------------ MixFormerBlock

def mixformer_block_forward(p, x, H, W, *, num_heads, window_size, kernel_size, rel_idx):
    B, N, C = x.shape
    assert N == H * W
    wh, ww = window_size

    residual = x
    xn = layer_norm(x.reshape(B * N, C), p['norm1_g'], p['norm1_b']).reshape(B, N, C)
    xm = xn.reshape(B, C, H, W)            # reference uses reshape (not permute) -> mirrored

    pad_w = (ww - W % ww) % ww
    pad_h = (wh - H % wh) % wh
    pad_l, pad_r = pad_w // 2, math.ceil(pad_w / 2)
    pad_t, pad_b = pad_h // 2, math.ceil(pad_h / 2)
    xp_ = jnp.pad(xm, ((0, 0), (0, 0), (pad_t, pad_b), (pad_l, pad_r)))
    Hp, Wp = xp_.shape[2], xp_.shape[3]

    x_windows = window_partition(xp_, wh, ww)
    attn_windows = mixing_attention_forward(
        p, x_windows, xp_, Hp, Wp, num_heads=num_heads, window_size=window_size,
        kernel_size=kernel_size, rel_idx=rel_idx)

    x_rev = reverse_window_partition(attn_windows, Hp, Wp, wh, ww)
    y = x_rev[:, :, pad_t:Hp - pad_b, pad_l:Wp - pad_r]
    x1 = residual + y.reshape(B, H * W, C)   # reference reshape quirk; DropPath(0) == identity

    # Fully fused MLP: norm2 -> fc1 -> GELU -> mlp_norm -> fc2 (+ residual), one kernel
    out = mlp_block(x1.reshape(B * N, C), p['norm2_g'], p['norm2_b'],
                    p['fc1_w'], p['fc1_b'], p['mlp_norm_g'], p['mlp_norm_b'],
                    p['fc2_w'], p['fc2_b'])
    return out.reshape(B, N, C)


# ------------------------------------------------------------------ parameter init

def init_params(key, C, num_heads, window_size, kernel_size, mlp_ratio):
    wh, ww = window_size
    Ca = C // 2
    hidden = int(mlp_ratio * C)
    keys = iter(jax.random.split(key, 64))

    def w(shape):
        return 0.02 * jax.random.normal(next(keys), shape, jnp.float32)

    zeros = lambda s: jnp.zeros(s, jnp.float32)
    ones = lambda s: jnp.ones(s, jnp.float32)

    p = {}
    p['norm1_g'], p['norm1_b'] = ones((C,)), zeros((C,))
    p['norm2_g'], p['norm2_b'] = ones((C,)), zeros((C,))
    # ---- MixingAttention ----
    p['rel_pos_bias'] = jax.random.uniform(
        next(keys), ((2 * wh - 1) * (2 * ww - 1), num_heads), jnp.float32)
    p['proj_attn_w'], p['proj_attn_b'] = w((C, Ca)), zeros((Ca,))
    p['proj_attn_norm_g'], p['proj_attn_norm_b'] = ones((Ca,)), zeros((Ca,))
    # proj_cnn / proj_cnn_norm params exist in the module but their output is discarded
    p['proj_cnn_w'], p['proj_cnn_b'] = w((C, C)), zeros((C,))
    p['proj_cnn_norm_g'], p['proj_cnn_norm_b'] = ones((C,)), zeros((C,))
    p['conv_w'], p['conv_b'] = w((kernel_size, kernel_size, C)), zeros((C,))
    p['conv_bn_g'], p['conv_bn_b'] = ones((C,)), zeros((C,))
    p['ci_w1'], p['ci_b1'] = w((C, C // 8)), zeros((C // 8,))
    p['ci_bn_g'], p['ci_bn_b'] = ones((C // 8,)), zeros((C // 8,))
    p['ci_w2'], p['ci_b2'] = w((C // 8, Ca)), zeros((Ca,))
    p['projection_w'], p['projection_b'] = w((C, Ca)), zeros((Ca,))
    p['conv_norm_g'], p['conv_norm_b'] = ones((Ca,)), zeros((Ca,))
    p['qkv_w'], p['qkv_b'] = w((Ca, 3 * Ca)), zeros((3 * Ca,))
    p['si_w1'], p['si_b1'] = w((Ca, C // 16)), zeros((C // 16,))
    p['si_bn_g'], p['si_bn_b'] = ones((C // 16,)), zeros((C // 16,))
    p['si_w2'], p['si_b2'] = w((C // 16, 1)), zeros((1,))
    p['attn_norm_g'], p['attn_norm_b'] = ones((Ca,)), zeros((Ca,))
    p['proj_w'], p['proj_b'] = w((C, C)), zeros((C,))
    # ---- MLP ----
    p['fc1_w'], p['fc1_b'] = w((C, hidden)), zeros((hidden,))
    p['mlp_norm_g'], p['mlp_norm_b'] = ones((hidden,)), zeros((hidden,))
    p['fc2_w'], p['fc2_b'] = w((hidden, C)), zeros((C,))
    return p


# ------------------------------------------------------------------ main

if __name__ == "__main__":
    B, H, W = 2, 8, 8
    C = 32
    num_heads = 2
    window_size = (4, 4)
    kernel_size = 3
    mlp_ratio = 2.0

    key = jax.random.PRNGKey(0)
    params = init_params(key, C, num_heads, window_size, kernel_size, mlp_ratio)
    x = jax.random.normal(jax.random.fold_in(key, 12345), (B, H * W, C), jnp.float32)
    rel_idx_arr = rel_pos_idx(window_size[0], window_size[1])

    @jax.jit
    def run(p, xx, ridx):
        return mixformer_block_forward(
            p, xx, H, W, num_heads=num_heads, window_size=window_size,
            kernel_size=kernel_size, rel_idx=ridx)

    out = jax.block_until_ready(run(params, x, rel_idx_arr))

    assert out.shape == (B, H * W, C), out.shape
    assert bool(jnp.all(jnp.isfinite(out)))
    print("KERNEL_OK")
</pallas_src>

<mosaic_0001>
module attributes {stable_mosaic.version = 11 : i64} {
  func.func @_layernorm_kernel(%arg0: i32, %arg1: memref<128x32xf32, #tpu.memory_space<vmem>>, %arg2: memref<1x32xf32, #tpu.memory_space<vmem>>, %arg3: memref<1x32xf32, #tpu.memory_space<vmem>>, %arg4: memref<128x32xf32, #tpu.memory_space<vmem>>) attributes {dimension_semantics = [#tpu.dimension_semantics<parallel>], iteration_bounds = array<i64: 1>, scalar_prefetch = 0 : i64, scratch_operands = 0 : i64, tpu.core_type = #tpu.core_type<tc>, window_params = [{transform_indices = @transform_0, window_bounds = array<i64: 128, 32>}, {pipeline_mode = #tpu.pipeline_mode<synchronous>, transform_indices = @transform_1, window_bounds = array<i64: 1, 32>}, {pipeline_mode = #tpu.pipeline_mode<synchronous>, transform_indices = @transform_2, window_bounds = array<i64: 1, 32>}, {transform_indices = @transform_3, window_bounds = array<i64: 128, 32>}]} {
    %c0 = arith.constant 0 : index
    %c0_0 = arith.constant 0 : index
    %0 = vector.load %arg1[%c0, %c0_0] : memref<128x32xf32, #tpu.memory_space<vmem>>, vector<128x32xf32>
    %c0_1 = arith.constant 0 : index
    %c0_2 = arith.constant 0 : index
    %1 = vector.load %arg2[%c0_1, %c0_2] : memref<1x32xf32, #tpu.memory_space<vmem>>, vector<1x32xf32>
    %c0_3 = arith.constant 0 : index
    %c0_4 = arith.constant 0 : index
    %2 = vector.load %arg3[%c0_3, %c0_4] : memref<1x32xf32, #tpu.memory_space<vmem>>, vector<1x32xf32>
    %cst = arith.constant dense<0.000000e+00> : vector<128xf32>
    %3 = vector.multi_reduction <add>, %0, %cst [1] : vector<128x32xf32> to vector<128xf32>
    %4 = vector.shape_cast %3 : vector<128xf32> to vector<128x1xf32>
    %cst_5 = arith.constant 3.200000e+01 : f32
    %5 = vector.broadcast %cst_5 : f32 to vector<128x1xf32>
    %6 = arith.divf %4, %5 : vector<128x1xf32>
    %7 = vector.broadcast %6 : vector<128x1xf32> to vector<128x32xf32>
    %8 = arith.subf %0, %7 : vector<128x32xf32>
    %9 = arith.mulf %8, %8 : vector<128x32xf32>
    %cst_6 = arith.constant dense<0.000000e+00> : vector<128xf32>
    %10 = vector.multi_reduction <add>, %9, %cst_6 [1] : vector<128x32xf32> to vector<128xf32>
    %11 = vector.shape_cast %10 : vector<128xf32> to vector<128x1xf32>
    %cst_7 = arith.constant 3.200000e+01 : f32
    %12 = vector.broadcast %cst_7 : f32 to vector<128x1xf32>
    %13 = arith.divf %11, %12 : vector<128x1xf32>
    %14 = vector.broadcast %6 : vector<128x1xf32> to vector<128x32xf32>
    %15 = arith.subf %0, %14 : vector<128x32xf32>
    %cst_8 = arith.constant 9.99999974E-6 : f32
    %16 = vector.broadcast %cst_8 : f32 to vector<128x1xf32>
    %17 = arith.addf %13, %16 : vector<128x1xf32>
    %18 = math.rsqrt %17 : vector<128x1xf32>
    %19 = vector.broadcast %18 : vector<128x1xf32> to vector<128x32xf32>
    %20 = arith.mulf %15, %19 : vector<128x32xf32>
    %21 = vector.broadcast %1 : vector<1x32xf32> to vector<128x32xf32>
    %22 = arith.mulf %20, %21 : vector<128x32xf32>
    %23 = vector.broadcast %2 : vector<1x32xf32> to vector<128x32xf32>
    %24 = arith.addf %22, %23 : vector<128x32xf32>
    %c0_9 = arith.constant 0 : index
    %c0_10 = arith.constant 0 : index
    %25 = vector.load %arg4[%c0_9, %c0_10] : memref<128x32xf32, #tpu.memory_space<vmem>>, vector<128x32xf32>
    tpu.vector_store %arg4[%c0_9, %c0_10], %24 {strides = array<i32>} : memref<128x32xf32, #tpu.memory_space<vmem>>, vector<128x32xf32>,
    return
  }
  func.func @transform_0(%arg0: i32) -> (i32, i32) {
    %c0_i32 = arith.constant 0 : i32
    %c0_i32_0 = arith.constant 0 : i32
    return %arg0, %c0_i32 : i32, i32
  }
  func.func @transform_1(%arg0: i32) -> (i32, i32) {
    %c0_i32 = arith.constant 0 : i32
    %c0_i32_0 = arith.constant 0 : i32
    %c0_i32_1 = arith.constant 0 : i32
    return %c0_i32, %c0_i32_0 : i32, i32
  }
  func.func @transform_2(%arg0: i32) -> (i32, i32) {
    %c0_i32 = arith.constant 0 : i32
    %c0_i32_0 = arith.constant 0 : i32
    %c0_i32_1 = arith.constant 0 : i32
    return %c0_i32, %c0_i32_0 : i32, i32
  }
  func.func @transform_3(%arg0: i32) -> (i32, i32) {
    %c0_i32 = arith.constant 0 : i32
    %c0_i32_0 = arith.constant 0 : i32
    return %arg0, %c0_i32 : i32, i32
  }
}

module attributes {stable_mosaic.version = 11 : i64} {
  func.func @_proj_qkv_kernel(%arg0: i32, %arg1: memref<128x32xf32, #tpu.memory_space<vmem>>, %arg2: memref<32x16xf32, #tpu.memory_space<vmem>>, %arg3: memref<1x16xf32, #tpu.memory_space<vmem>>, %arg4: memref<1x16xf32, #tpu.memory_space<vmem>>, %arg5: memref<1x16xf32, #tpu.memory_space<vmem>>, %arg6: memref<16x48xf32, #tpu.memory_space<vmem>>, %arg7: memref<1x48xf32, #tpu.memory_space<vmem>>, %arg8: memref<128x48xf32, #tpu.memory_space<vmem>>) attributes {dimension_semantics = [#tpu.dimension_semantics<parallel>], iteration_bounds = array<i64: 1>, scalar_prefetch = 0 : i64, scratch_operands = 0 : i64, tpu.core_type = #tpu.core_type<tc>, window_params = [{transform_indices = @transform_0, window_bounds = array<i64: 128, 32>}, {pipeline_mode = #tpu.pipeline_mode<synchronous>, transform_indices = @transform_1, window_bounds = array<i64: 32, 16>}, {pipeline_mode = #tpu.pipeline_mode<synchronous>, transform_indices = @transform_2, window_bounds = array<i64: 1, 16>}, {pipeline_mode = #tpu.pipeline_mode<synchronous>, transform_indices = @transform_3, window_bounds = array<i64: 1, 16>}, {pipeline_mode = #tpu.pipeline_mode<synchronous>, transform_indices = @transform_4, window_bounds = array<i64: 1, 16>}, {pipeline_mode = #tpu.pipeline_mode<synchronous>, transform_indices = @transform_5, window_bounds = array<i64: 16, 48>}, {pipeline_mode = #tpu.pipeline_mode<synchronous>, transform_indices = @transform_6, window_bounds = array<i64: 1, 48>}, {transform_indices = @transform_7, window_bounds = array<i64: 128, 48>}]} {
    %c0 = arith.constant 0 : index
    %c0_0 = arith.constant 0 : index
    %0 = vector.load %arg1[%c0, %c0_0] : memref<128x32xf32, #tpu.memory_space<vmem>>, vector<128x32xf32>
    %c0_1 = arith.constant 0 : index
    %c0_2 = arith.constant 0 : index
    %1 = vector.load %arg2[%c0_1, %c0_2] : memref<32x16xf32, #tpu.memory_space<vmem>>, vector<32x16xf32>
    %2 = arith.truncf %0 : vector<128x32xf32> to vector<128x32xbf16>
    %3 = arith.truncf %1 : vector<32x16xf32> to vector<32x16xbf16>
    %cst = arith.constant dense<0.000000e+00> : vector<128x16xf32>
    %4 = tpu.matmul %2, %3, %cst {dimension_numbers = #tpu.dot_dimension_numbers<[1], [0], [0], [1], [0, 0, 1, 1], [], []>} : vector<128x32xbf16>, vector<32x16xbf16>, vector<128x16xf32> -> vector<128x16xf32>
    %c0_3 = arith.constant 0 : index
    %c0_4 = arith.constant 0 : index
    %5 = vector.load %arg3[%c0_3, %c0_4] : memref<1x16xf32, #tpu.memory_space<vmem>>, vector<1x16xf32>
    %6 = vector.broadcast %5 : vector<1x16xf32> to vector<128x16xf32>
    %7 = arith.addf %4, %6 : vector<128x16xf32>
    %c0_5 = arith.constant 0 : index
    %c0_6 = arith.constant 0 : index
    %8 = vector.load %arg4[%c0_5, %c0_6] : memref<1x16xf32, #tpu.memory_space<vmem>>, vector<1x16xf32>
    %c0_7 = arith.constant 0 : index
    %c0_8 = arith.constant 0 : index
    %9 = vector.load %arg5[%c0_7, %c0_8] : memref<1x16xf32, #tpu.memory_space<vmem>>, vector<1x16xf32>
    %cst_9 = arith.constant dense<0.000000e+00> : vector<128xf32>
    %10 = vector.multi_reduction <add>, %7, %cst_9 [1] : vector<128x16xf32> to vector<128xf32>
    %11 = vector.shape_cast %10 : vector<128xf32> to vector<128x1xf32>
    %cst_10 = arith.constant 1.600000e+01 : f32
    %12 = vector.broadcast %cst_10 : f32 to vector<128x1xf32>
    %13 = arith.divf %11, %12 : vector<128x1xf32>
    %14 = vector.broadcast %13 : vector<128x1xf32> to vector<128x16xf32>
    %15 = arith.subf %7, %14 : vector<128x16xf32>
    %16 = arith.mulf %15, %15 : vector<128x16xf32>
    %cst_11 = arith.constant dense<0.000000e+00> : vector<128xf32>
    %17 = vector.multi_reduction <add>, %16, %cst_11 [1] : vector<128x16xf32> to vector<128xf32>
    %18 = vector.shape_cast %17 : vector<128xf32> to vector<128x1xf32>
    %cst_12 = arith.constant 1.600000e+01 : f32
    %19 = vector.broadcast %cst_12 : f32 to vector<128x1xf32>
    %20 = arith.divf %18, %19 : vector<128x1xf32>
    %21 = vector.broadcast %13 : vector<128x1xf32> to vector<128x16xf32>
    %22 = arith.subf %7, %21 : vector<128x16xf32>
    %cst_13 = arith.constant 9.99999974E-6 : f32
    %23 = vector.broadcast %cst_13 : f32 to vector<128x1xf32>
    %24 = arith.addf %20, %23 : vector<128x1xf32>
    %25 = math.rsqrt %24 : vector<128x1xf32>
    %26 = vector.broadcast %25 : vector<128x1xf32> to vector<128x16xf32>
    %27 = arith.mulf %22, %26 : vector<128x16xf32>
    %28 = vector.broadcast %8 : vector<1x16xf32> to vector<128x16xf32>
    %29 = arith.mulf %27, %28 : vector<128x16xf32>
    %30 = vector.broadcast %9 : vector<1x16xf32> to vector<128x16xf32>
    %31 = arith.addf %29, %30 : vector<128x16xf32>
    %c0_14 = arith.constant 0 : index
    %c0_15 = arith.constant 0 : index
    %32 = vector.load %arg6[%c0_14, %c0_15] : memref<16x48xf32, #tpu.memory_space<vmem>>, vector<16x48xf32>
    %33 = arith.truncf %31 : vector<128x16xf32> to vector<128x16xbf16>
    %34 = arith.truncf %32 : vector<16x48xf32> to vector<16x48xbf16>
    %cst_16 = arith.constant dense<0.000000e+00> : vector<128x48xf32>
    %35 = tpu.matmul %33, %34, %cst_16 {dimension_numbers = #tpu.dot_dimension_numbers<[1], [0], [0], [1], [0, 0, 1, 1], [], []>} : vector<128x16xbf16>, vector<16x48xbf16>, vector<128x48xf32> -> vector<128x48xf32>
    %c0_17 = arith.constant 0 : index
    %c0_18 = arith.constant 0 : index
    %36 = vector.load %arg7[%c0_17, %c0_18] : memref<1x48xf32, #tpu.memory_space<vmem>>, vector<1x48xf32>
    %37 = vector.broadcast %36 : vector<1x48xf32> to vector<128x48xf32>
    %38 = arith.addf %35, %37 : vector<128x48xf32>
    %c0_19 = arith.constant 0 : index
    %c0_20 = arith.constant 0 : index
    %39 = vector.load %arg8[%c0_19, %c0_20] : memref<128x48xf32, #tpu.memory_space<vmem>>, vector<128x48xf32>
    tpu.vector_store %arg8[%c0_19, %c0_20], %38 {strides = array<i32>} : memref<128x48xf32, #tpu.memory_space<vmem>>, vector<128x48xf32>,
    return
  }
  func.func @transform_0(%arg0: i32) -> (i32, i32) {
    %c0_i32 = arith.constant 0 : i32
    %c0_i32_0 = arith.constant 0 : i32
    return %arg0, %c0_i32 : i32, i32
  }
  func.func @transform_1(%arg0: i32) -> (i32, i32) {
    %c0_i32 = arith.constant 0 : i32
    %c0_i32_0 = arith.constant 0 : i32
    %c0_i32_1 = arith.constant 0 : i32
    return %c0_i32, %c0_i32_0 : i32, i32
  }
  func.func @transform_2(%arg0: i32) -> (i32, i32) {
    %c0_i32 = arith.constant 0 : i32
    %c0_i32_0 = arith.constant 0 : i32
    %c0_i32_1 = arith.constant 0 : i32
    return %c0_i32, %c0_i32_0 : i32, i32
  }
  func.func @transform_3(%arg0: i32) -> (i32, i32) {
    %c0_i32 = arith.constant 0 : i32
    %c0_i32_0 = arith.constant 0 : i32
    %c0_i32_1 = arith.constant 0 : i32
    return %c0_i32, %c0_i32_0 : i32, i32
  }
  func.func @transform_4(%arg0: i32) -> (i32, i32) {
    %c0_i32 = arith.constant 0 : i32
    %c0_i32_0 = arith.constant 0 : i32
    %c0_i32_1 = arith.constant 0 : i32
    return %c0_i32, %c0_i32_0 : i32, i32
  }
  func.func @transform_5(%arg0: i32) -> (i32, i32) {
    %c0_i32 = arith.constant 0 : i32
    %c0_i32_0 = arith.constant 0 : i32
    %c0_i32_1 = arith.constant 0 : i32
    return %c0_i32, %c0_i32_0 : i32, i32
  }
  func.func @transform_6(%arg0: i32) -> (i32, i32) {
    %c0_i32 = arith.constant 0 : i32
    %c0_i32_0 = arith.constant 0 : i32
    %c0_i32_1 = arith.constant 0 : i32
    return %c0_i32, %c0_i32_0 : i32, i32
  }
  func.func @transform_7(%arg0: i32) -> (i32, i32) {
    %c0_i32 = arith.constant 0 : i32
    %c0_i32_0 = arith.constant 0 : i32
    return %arg0, %c0_i32 : i32, i32
  }
}

module attributes {stable_mosaic.version = 11 : i64} {
  func.func @_dwconv_kernel(%arg0: i32, %arg1: memref<1x10x10x32xf32, #tpu.memory_space<vmem>>, %arg2: memref<3x3x32xf32, #tpu.memory_space<vmem>>, %arg3: memref<1x32xf32, #tpu.memory_space<vmem>>, %arg4: memref<1x8x8x32xf32, #tpu.memory_space<vmem>>) attributes {dimension_semantics = [#tpu.dimension_semantics<parallel>], iteration_bounds = array<i64: 2>, scalar_prefetch = 0 : i64, scratch_operands = 0 : i64, tpu.core_type = #tpu.core_type<tc>, window_params = [{transform_indices = @transform_0, window_bounds = array<i64: 1, 10, 10, 32>}, {pipeline_mode = #tpu.pipeline_mode<synchronous>, transform_indices = @transform_1, window_bounds = array<i64: 3, 3, 32>}, {pipeline_mode = #tpu.pipeline_mode<synchronous>, transform_indices = @transform_2, window_bounds = array<i64: 1, 32>}, {transform_indices = @transform_3, window_bounds = array<i64: 1, 8, 8, 32>}]} {
    %c0 = arith.constant 0 : index
    %c0_0 = arith.constant 0 : index
    %c0_1 = arith.constant 0 : index
    %c0_2 = arith.constant 0 : index
    %0 = vector.load %arg1[%c0, %c0_0, %c0_1, %c0_2] : memref<1x10x10x32xf32, #tpu.memory_space<vmem>>, vector<1x10x10x32xf32>
    %c0_3 = arith.constant 0 : index
    %c0_4 = arith.constant 0 : index
    %c0_5 = arith.constant 0 : index
    %1 = vector.load %arg2[%c0_3, %c0_4, %c0_5] : memref<3x3x32xf32, #tpu.memory_space<vmem>>, vector<3x3x32xf32>
    %cst = arith.constant 0.000000e+00 : f32
    %2 = vector.broadcast %cst : f32 to vector<1x8x8x32xf32>
    %3 = vector.extract_strided_slice %0 {offsets = [0, 0, 0, 0], sizes = [1, 8, 8, 32], strides = [1, 1, 1, 1]} : vector<1x10x10x32xf32> to vector<1x8x8x32xf32>
    %4 = vector.extract_strided_slice %1 {offsets = [0, 0, 0], sizes = [1, 1, 32], strides = [1, 1, 1]} : vector<3x3x32xf32> to vector<1x1x32xf32>
    %5 = vector.shape_cast %4 : vector<1x1x32xf32> to vector<32xf32>
    %6 = vector.shape_cast %5 : vector<32xf32> to vector<1x1x1x32xf32>
    %7 = vector.broadcast %6 : vector<1x1x1x32xf32> to vector<1x8x8x32xf32>
    %8 = arith.mulf %3, %7 : vector<1x8x8x32xf32>
    %9 = arith.addf %2, %8 : vector<1x8x8x32xf32>
    %10 = vector.extract_strided_slice %0 {offsets = [0, 0, 1, 0], sizes = [1, 8, 8, 32], strides = [1, 1, 1, 1]} : vector<1x10x10x32xf32> to vector<1x8x8x32xf32>
    %11 = vector.extract_strided_slice %1 {offsets = [0, 1, 0], sizes = [1, 1, 32], strides = [1, 1, 1]} : vector<3x3x32xf32> to vector<1x1x32xf32>
    %12 = vector.shape_cast %11 : vector<1x1x32xf32> to vector<32xf32>
    %13 = vector.shape_cast %12 : vector<32xf32> to vector<1x1x1x32xf32>
    %14 = vector.broadcast %13 : vector<1x1x1x32xf32> to vector<1x8x8x32xf32>
    %15 = arith.mulf %10, %14 : vector<1x8x8x32xf32>
    %16 = arith.addf %9, %15 : vector<1x8x8x32xf32>
    %17 = vector.extract_strided_slice %0 {offsets = [0, 0, 2, 0], sizes = [1, 8, 8, 32], strides = [1, 1, 1, 1]} : vector<1x10x10x32xf32> to vector<1x8x8x32xf32>
    %18 = vector.extract_strided_slice %1 {offsets = [0, 2, 0], sizes = [1, 1, 32], strides = [1, 1, 1]} : vector<3x3x32xf32> to vector<1x1x32xf32>
    %19 = vector.shape_cast %18 : vector<1x1x32xf32> to vector<32xf32>
    %20 = vector.shape_cast %19 : vector<32xf32> to vector<1x1x1x32xf32>
    %21 = vector.broadcast %20 : vector<1x1x1x32xf32> to vector<1x8x8x32xf32>
    %22 = arith.mulf %17, %21 : vector<1x8x8x32xf32>
    %23 = arith.addf %16, %22 : vector<1x8x8x32xf32>
    %24 = vector.extract_strided_slice %0 {offsets = [0, 1, 0, 0], sizes = [1, 8, 8, 32], strides = [1, 1, 1, 1]} : vector<1x10x10x32xf32> to vector<1x8x8x32xf32>
    %25 = vector.extract_strided_slice %1 {offsets = [1, 0, 0], sizes = [1, 1, 32], strides = [1, 1, 1]} : vector<3x3x32xf32> to vector<1x1x32xf32>
    %26 = vector.shape_cast %25 : vector<1x1x32xf32> to vector<32xf32>
    %27 = vector.shape_cast %26 : vector<32xf32> to vector<1x1x1x32xf32>
    %28 = vector.broadcast %27 : vector<1x1x1x32xf32> to vector<1x8x8x32xf32>
    %29 = arith.mulf %24, %28 : vector<1x8x8x32xf32>
    %30 = arith.addf %23, %29 : vector<1x8x8x32xf32>
    %31 = vector.extract_strided_slice %0 {offsets = [0, 1, 1, 0], sizes = [1, 8, 8, 32], strides = [1, 1, 1, 1]} : vector<1x10x10x32xf32> to vector<1x8x8x32xf32>
    %32 = vector.extract_strided_slice %1 {offsets = [1, 1, 0], sizes = [1, 1, 32], strides = [1, 1, 1]} : vector<3x3x32xf32> to vector<1x1x32xf32>
    %33 = vector.shape_cast %32 : vector<1x1x32xf32> to vector<32xf32>
    %34 = vector.shape_cast %33 : vector<32xf32> to vector<1x1x1x32xf32>
    %35 = vector.broadcast %34 : vector<1x1x1x32xf32> to vector<1x8x8x32xf32>
    %36 = arith.mulf %31, %35 : vector<1x8x8x32xf32>
    %37 = arith.addf %30, %36 : vector<1x8x8x32xf32>
    %38 = vector.extract_strided_slice %0 {offsets = [0, 1, 2, 0], sizes = [1, 8, 8, 32], strides = [1, 1, 1, 1]} : vector<1x10x10x32xf32> to vector<1x8x8x32xf32>
    %39 = vector.extract_strided_slice %1 {offsets = [1, 2, 0], sizes = [1, 1, 32], strides = [1, 1, 1]} : vector<3x3x32xf32> to vector<1x1x32xf32>
    %40 = vector.shape_cast %39 : vector<1x1x32xf32> to vector<32xf32>
    %41 = vector.shape_cast %40 : vector<32xf32> to vector<1x1x1x32xf32>
    %42 = vector.broadcast %41 : vector<1x1x1x32xf32> to vector<1x8x8x32xf32>
    %43 = arith.mulf %38, %42 : vector<1x8x8x32xf32>
    %44 = arith.addf %37, %43 : vector<1x8x8x32xf32>
    %45 = vector.extract_strided_slice %0 {offsets = [0, 2, 0, 0], sizes = [1, 8, 8, 32], strides = [1, 1, 1, 1]} : vector<1x10x10x32xf32> to vector<1x8x8x32xf32>
    %46 = vector.extract_strided_slice %1 {offsets = [2, 0, 0], sizes = [1, 1, 32], strides = [1, 1, 1]} : vector<3x3x32xf32> to vector<1x1x32xf32>
    %47 = vector.shape_cast %46 : vector<1x1x32xf32> to vector<32xf32>
    %48 = vector.shape_cast %47 : vector<32xf32> to vector<1x1x1x32xf32>
    %49 = vector.broadcast %48 : vector<1x1x1x32xf32> to vector<1x8x8x32xf32>
    %50 = arith.mulf %45, %49 : vector<1x8x8x32xf32>
    %51 = arith.addf %44, %50 : vector<1x8x8x32xf32>
    %52 = vector.extract_strided_slice %0 {offsets = [0, 2, 1, 0], sizes = [1, 8, 8, 32], strides = [1, 1, 1, 1]} : vector<1x10x10x32xf32> to vector<1x8x8x32xf32>
    %53 = vector.extract_strided_slice %1 {offsets = [2, 1, 0], sizes = [1, 1, 32], strides = [1, 1, 1]} : vector<3x3x32xf32> to vector<1x1x32xf32>
    %54 = vector.shape_cast %53 : vector<1x1x32xf32> to vector<32xf32>
    %55 = vector.shape_cast %54 : vector<32xf32> to vector<1x1x1x32xf32>
    %56 = vector.broadcast %55 : vector<1x1x1x32xf32> to vector<1x8x8x32xf32>
    %57 = arith.mulf %52, %56 : vector<1x8x8x32xf32>
    %58 = arith.addf %51, %57 : vector<1x8x8x32xf32>
    %59 = vector.extract_strided_slice %0 {offsets = [0, 2, 2, 0], sizes = [1, 8, 8, 32], strides = [1, 1, 1, 1]} : vector<1x10x10x32xf32> to vector<1x8x8x32xf32>
    %60 = vector.extract_strided_slice %1 {offsets = [2, 2, 0], sizes = [1, 1, 32], strides = [1, 1, 1]} : vector<3x3x32xf32> to vector<1x1x32xf32>
    %61 = vector.shape_cast %60 : vector<1x1x32xf32> to vector<32xf32>
    %62 = vector.shape_cast %61 : vector<32xf32> to vector<1x1x1x32xf32>
    %63 = vector.broadcast %62 : vector<1x1x1x32xf32> to vector<1x8x8x32xf32>
    %64 = arith.mulf %59, %63 : vector<1x8x8x32xf32>
    %65 = arith.addf %58, %64 : vector<1x8x8x32xf32>
    %c0_6 = arith.constant 0 : index
    %c0_7 = arith.constant 0 : index
    %66 = vector.load %arg3[%c0_6, %c0_7] : memref<1x32xf32, #tpu.memory_space<vmem>>, vector<1x32xf32>
    %67 = vector.shape_cast %66 : vector<1x32xf32> to vector<1x1x1x32xf32>
    %68 = vector.broadcast %67 : vector<1x1x1x32xf32> to vector<1x8x8x32xf32>
    %69 = arith.addf %65, %68 : vector<1x8x8x32xf32>
    %c0_8 = arith.constant 0 : index
    %c0_9 = arith.constant 0 : index
    %c0_10 = arith.constant 0 : index
    %c0_11 = arith.constant 0 : index
    %70 = vector.load %arg4[%c0_8, %c0_9, %c0_10, %c0_11] : memref<1x8x8x32xf32, #tpu.memory_space<vmem>>, vector<1x8x8x32xf32>
    tpu.vector_store %arg4[%c0_8, %c0_9, %c0_10, %c0_11], %69 {strides = array<i32>} : memref<1x8x8x32xf32, #tpu.memory_space<vmem>>, vector<1x8x8x32xf32>,
    return
  }
  func.func @transform_0(%arg0: i32) -> (i32, i32, i32, i32) {
    %c0_i32 = arith.constant 0 : i32
    %c0_i32_0 = arith.constant 0 : i32
    %c0_i32_1 = arith.constant 0 : i32
    %c0_i32_2 = arith.constant 0 : i32
    return %arg0, %c0_i32, %c0_i32_0, %c0_i32_1 : i32, i32, i32, i32
  }
  func.func @transform_1(%arg0: i32) -> (i32, i32, i32) {
    %c0_i32 = arith.constant 0 : i32
    %c0_i32_0 = arith.constant 0 : i32
    %c0_i32_1 = arith.constant 0 : i32
    %c0_i32_2 = arith.constant 0 : i32
    return %c0_i32, %c0_i32_0, %c0_i32_1 : i32, i32, i32
  }
  func.func @transform_2(%arg0: i32) -> (i32, i32) {
    %c0_i32 = arith.constant 0 : i32
    %c0_i32_0 = arith.constant 0 : i32
    %c0_i32_1 = arith.constant 0 : i32
    return %c0_i32, %c0_i32_0 : i32, i32
  }
  func.func @transform_3(%arg0: i32) -> (i32, i32, i32, i32) {
    %c0_i32 = arith.constant 0 : i32
    %c0_i32_0 = arith.constant 0 : i32
    %c0_i32_1 = arith.constant 0 : i32
    %c0_i32_2 = arith.constant 0 : i32
    return %arg0, %c0_i32, %c0_i32_0, %c0_i32_1 : i32, i32, i32, i32
  }
}

module attributes {stable_mosaic.version = 11 : i64} {
  func.func @_attn_kernel(%arg0: i32, %arg1: i32, %arg2: memref<1x4x16x48xf32, #tpu.memory_space<vmem>>, %arg3: memref<1x1x16xf32, #tpu.memory_space<vmem>>, %arg4: memref<2x16x16xf32, #tpu.memory_space<vmem>>, %arg5: memref<1x4x16x16xf32, #tpu.memory_space<vmem>>) attributes {dimension_semantics = [#tpu.dimension_semantics<parallel>, #tpu.dimension_semantics<parallel>], iteration_bounds = array<i64: 2, 1>, scalar_prefetch = 0 : i64, scratch_operands = 0 : i64, tpu.core_type = #tpu.core_type<tc>, window_params = [{transform_indices = @transform_0, window_bounds = array<i64: 1, 4, 16, 48>}, {transform_indices = @transform_1, window_bounds = array<i64: 1, 1, 16>}, {pipeline_mode = #tpu.pipeline_mode<synchronous>, transform_indices = @transform_2, window_bounds = array<i64: 2, 16, 16>}, {transform_indices = @transform_3, window_bounds = array<i64: 1, 4, 16, 16>}]} {
    %c0 = arith.constant 0 : index
    %c0_0 = arith.constant 0 : index
    %c0_1 = arith.constant 0 : index
    %c0_2 = arith.constant 0 : index
    %0 = vector.load %arg2[%c0, %c0_0, %c0_1, %c0_2] : memref<1x4x16x48xf32, #tpu.memory_space<vmem>>, vector<1x4x16x48xf32>
    %1 = vector.shape_cast %0 : vector<1x4x16x48xf32> to vector<4x16x48xf32>
    %c0_3 = arith.constant 0 : index
    %c0_4 = arith.constant 0 : index
    %c0_5 = arith.constant 0 : index
    %2 = vector.load %arg3[%c0_3, %c0_4, %c0_5] : memref<1x1x16xf32, #tpu.memory_space<vmem>>, vector<1x1x16xf32>
    %3 = vector.shape_cast %2 : vector<1x1x16xf32> to vector<1x16xf32>
    %4 = vector.extract_strided_slice %1 {offsets = [0, 0, 0], sizes = [4, 16, 8], strides = [1, 1, 1]} : vector<4x16x48xf32> to vector<4x16x8xf32>
    %cst = arith.constant 0.353553385 : f32
    %5 = vector.broadcast %cst : f32 to vector<4x16x8xf32>
    %6 = arith.mulf %4, %5 : vector<4x16x8xf32>
    %7 = arith.truncf %6 : vector<4x16x8xf32> to vector<4x16x8xbf16>
    %8 = vector.extract_strided_slice %1 {offsets = [0, 0, 16], sizes = [4, 16, 8], strides = [1, 1, 1]} : vector<4x16x48xf32> to vector<4x16x8xf32>
    %9 = arith.truncf %8 : vector<4x16x8xf32> to vector<4x16x8xbf16>
    %10 = vector.extract_strided_slice %1 {offsets = [0, 0, 32], sizes = [4, 16, 8], strides = [1, 1, 1]} : vector<4x16x48xf32> to vector<4x16x8xf32>
    %11 = vector.extract_strided_slice %3 {offsets = [0, 0], sizes = [1, 8], strides = [1, 1]} : vector<1x16xf32> to vector<1x8xf32>
    %12 = vector.shape_cast %11 : vector<1x8xf32> to vector<1x1x8xf32>
    %13 = vector.broadcast %12 : vector<1x1x8xf32> to vector<4x16x8xf32>
    %14 = arith.mulf %10, %13 : vector<4x16x8xf32>
    %15 = arith.truncf %14 : vector<4x16x8xf32> to vector<4x16x8xbf16>
    %cst_6 = arith.constant dense<0.000000e+00> : vector<4x16x16xf32>
    %16 = tpu.matmul %7, %9, %cst_6 {dimension_numbers = #tpu.dot_dimension_numbers<[2], [2], [1], [1], [0, 0, 0, 1, 1, 1], [0], [0]>} : vector<4x16x8xbf16>, vector<4x16x8xbf16>, vector<4x16x16xf32> -> vector<4x16x16xf32>
    %c0_7 = arith.constant 0 : index
    %c0_8 = arith.constant 0 : index
    %c0_9 = arith.constant 0 : index
    %17 = vector.load %arg4[%c0_7, %c0_8, %c0_9] : memref<2x16x16xf32, #tpu.memory_space<vmem>>, vector<1x16x16xf32>
    %18 = vector.shape_cast %17 : vector<1x16x16xf32> to vector<16x16xf32>
    %19 = vector.shape_cast %18 : vector<16x16xf32> to vector<1x16x16xf32>
    %20 = vector.broadcast %19 : vector<1x16x16xf32> to vector<4x16x16xf32>
    %21 = arith.addf %16, %20 : vector<4x16x16xf32>
    %cst_10 = arith.constant dense<0xFF800000> : vector<4x16xf32>
    %22 = vector.multi_reduction <maximumf>, %21, %cst_10 [2] : vector<4x16x16xf32> to vector<4x16xf32>
    %23 = vector.shape_cast %22 : vector<4x16xf32> to vector<4x16x1xf32>
    %24 = vector.broadcast %23 : vector<4x16x1xf32> to vector<4x16x16xf32>
    %25 = arith.subf %21, %24 : vector<4x16x16xf32>
    %26 = math.exp %25 : vector<4x16x16xf32>
    %cst_11 = arith.constant dense<0.000000e+00> : vector<4x16xf32>
    %27 = vector.multi_reduction <add>, %26, %cst_11 [2] : vector<4x16x16xf32> to vector<4x16xf32>
    %28 = vector.shape_cast %27 : vector<4x16xf32> to vector<4x16x1xf32>
    %29 = tpu.reciprocal %28 {approx = true} : vector<4x16x1xf32> -> vector<4x16x1xf32>
    %30 = vector.broadcast %29 : vector<4x16x1xf32> to vector<4x16x16xf32>
    %31 = arith.mulf %26, %30 : vector<4x16x16xf32>
    %32 = arith.truncf %31 : vector<4x16x16xf32> to vector<4x16x16xbf16>
    %cst_12 = arith.constant dense<0.000000e+00> : vector<4x16x8xf32>
    %33 = tpu.matmul %32, %15, %cst_12 {dimension_numbers = #tpu.dot_dimension_numbers<[2], [1], [1], [2], [0, 0, 0, 1, 1, 2], [0], [0]>} : vector<4x16x16xbf16>, vector<4x16x8xbf16>, vector<4x16x8xf32> -> vector<4x16x8xf32>
    %34 = vector.extract_strided_slice %1 {offsets = [0, 0, 8], sizes = [4, 16, 8], strides = [1, 1, 1]} : vector<4x16x48xf32> to vector<4x16x8xf32>
    %cst_13 = arith.constant 0.353553385 : f32
    %35 = vector.broadcast %cst_13 : f32 to vector<4x16x8xf32>
    %36 = arith.mulf %34, %35 : vector<4x16x8xf32>
    %37 = arith.truncf %36 : vector<4x16x8xf32> to vector<4x16x8xbf16>
    %38 = vector.extract_strided_slice %1 {offsets = [0, 0, 24], sizes = [4, 16, 8], strides = [1, 1, 1]} : vector<4x16x48xf32> to vector<4x16x8xf32>
    %39 = arith.truncf %38 : vector<4x16x8xf32> to vector<4x16x8xbf16>
    %40 = vector.extract_strided_slice %1 {offsets = [0, 0, 40], sizes = [4, 16, 8], strides = [1, 1, 1]} : vector<4x16x48xf32> to vector<4x16x8xf32>
    %41 = vector.extract_strided_slice %3 {offsets = [0, 8], sizes = [1, 8], strides = [1, 1]} : vector<1x16xf32> to vector<1x8xf32>
    %42 = vector.shape_cast %41 : vector<1x8xf32> to vector<1x1x8xf32>
    %43 = vector.broadcast %42 : vector<1x1x8xf32> to vector<4x16x8xf32>
    %44 = arith.mulf %40, %43 : vector<4x16x8xf32>
    %45 = arith.truncf %44 : vector<4x16x8xf32> to vector<4x16x8xbf16>
    %cst_14 = arith.constant dense<0.000000e+00> : vector<4x16x16xf32>
    %46 = tpu.matmul %37, %39, %cst_14 {dimension_numbers = #tpu.dot_dimension_numbers<[2], [2], [1], [1], [0, 0, 0, 1, 1, 1], [0], [0]>} : vector<4x16x8xbf16>, vector<4x16x8xbf16>, vector<4x16x16xf32> -> vector<4x16x16xf32>
    %c1 = arith.constant 1 : index
    %c0_15 = arith.constant 0 : index
    %c0_16 = arith.constant 0 : index
    %47 = vector.load %arg4[%c1, %c0_15, %c0_16] : memref<2x16x16xf32, #tpu.memory_space<vmem>>, vector<1x16x16xf32>
    %48 = vector.shape_cast %47 : vector<1x16x16xf32> to vector<16x16xf32>
    %49 = vector.shape_cast %48 : vector<16x16xf32> to vector<1x16x16xf32>
    %50 = vector.broadcast %49 : vector<1x16x16xf32> to vector<4x16x16xf32>
    %51 = arith.addf %46, %50 : vector<4x16x16xf32>
    %cst_17 = arith.constant dense<0xFF800000> : vector<4x16xf32>
    %52 = vector.multi_reduction <maximumf>, %51, %cst_17 [2] : vector<4x16x16xf32> to vector<4x16xf32>
    %53 = vector.shape_cast %52 : vector<4x16xf32> to vector<4x16x1xf32>
    %54 = vector.broadcast %53 : vector<4x16x1xf32> to vector<4x16x16xf32>
    %55 = arith.subf %51, %54 : vector<4x16x16xf32>
    %56 = math.exp %55 : vector<4x16x16xf32>
    %cst_18 = arith.constant dense<0.000000e+00> : vector<4x16xf32>
    %57 = vector.multi_reduction <add>, %56, %cst_18 [2] : vector<4x16x16xf32> to vector<4x16xf32>
    %58 = vector.shape_cast %57 : vector<4x16xf32> to vector<4x16x1xf32>
    %59 = tpu.reciprocal %58 {approx = true} : vector<4x16x1xf32> -> vector<4x16x1xf32>
    %60 = vector.broadcast %59 : vector<4x16x1xf32> to vector<4x16x16xf32>
    %61 = arith.mulf %56, %60 : vector<4x16x16xf32>
    %62 = arith.truncf %61 : vector<4x16x16xf32> to vector<4x16x16xbf16>
    %cst_19 = arith.constant dense<0.000000e+00> : vector<4x16x8xf32>
    %63 = tpu.matmul %62, %45, %cst_19 {dimension_numbers = #tpu.dot_dimension_numbers<[2], [1], [1], [2], [0, 0, 0, 1, 1, 2], [0], [0]>} : vector<4x16x16xbf16>, vector<4x16x8xbf16>, vector<4x16x8xf32> -> vector<4x16x8xf32>
    %64 = tpu.concatenate %33, %63 in 2 : vector<4x16x8xf32>, vector<4x16x8xf32> -> vector<4x16x16xf32>
    %c0_20 = arith.constant 0 : index
    %c0_21 = arith.constant 0 : index
    %c0_22 = arith.constant 0 : index
    %c0_23 = arith.constant 0 : index
    %65 = vector.load %arg5[%c0_20, %c0_21, %c0_22, %c0_23] : memref<1x4x16x16xf32, #tpu.memory_space<vmem>>, vector<1x4x16x16xf32>
    %66 = vector.shape_cast %65 : vector<1x4x16x16xf32> to vector<4x16x16xf32>
    %67 = vector.shape_cast %64 : vector<4x16x16xf32> to vector<1x4x16x16xf32>
    tpu.vector_store %arg5[%c0_20, %c0_21, %c0_22, %c0_23], %67 {strides = array<i32>} : memref<1x4x16x16xf32, #tpu.memory_space<vmem>>, vector<1x4x16x16xf32>,
    return
  }
  func.func @transform_0(%arg0: i32, %arg1: i32) -> (i32, i32, i32, i32) {
    %c0_i32 = arith.constant 0 : i32
    %c0_i32_0 = arith.constant 0 : i32
    %c0_i32_1 = arith.constant 0 : i32
    return %arg0, %arg1, %c0_i32, %c0_i32_0 : i32, i32, i32, i32
  }
  func.func @transform_1(%arg0: i32, %arg1: i32) -> (i32, i32, i32) {
    %c0_i32 = arith.constant 0 : i32
    %c0_i32_0 = arith.constant 0 : i32
    %c0_i32_1 = arith.constant 0 : i32
    return %arg0, %c0_i32, %c0_i32_0 : i32, i32, i32
  }
  func.func @transform_2(%arg0: i32, %arg1: i32) -> (i32, i32, i32) {
    %c0_i32 = arith.constant 0 : i32
    %c0_i32_0 = arith.constant 0 : i32
    %c0_i32_1 = arith.constant 0 : i32
    %c0_i32_2 = arith.constant 0 : i32
    return %c0_i32, %c0_i32_0, %c0_i32_1 : i32, i32, i32
  }
  func.func @transform_3(%arg0: i32, %arg1: i32) -> (i32, i32, i32, i32) {
    %c0_i32 = arith.constant 0 : i32
    %c0_i32_0 = arith.constant 0 : i32
    %c0_i32_1 = arith.constant 0 : i32
    return %arg0, %arg1, %c0_i32, %c0_i32_0 : i32, i32, i32, i32
  }
}

module attributes {stable_mosaic.version = 11 : i64} {
  func.func @_bn_gelu_linear_kernel(%arg0: i32, %arg1: memref<128x32xf32, #tpu.memory_space<vmem>>, %arg2: memref<1x32xf32, #tpu.memory_space<vmem>>, %arg3: memref<1x32xf32, #tpu.memory_space<vmem>>, %arg4: memref<32x16xf32, #tpu.memory_space<vmem>>, %arg5: memref<1x16xf32, #tpu.memory_space<vmem>>, %arg6: memref<128x16xf32, #tpu.memory_space<vmem>>) attributes {dimension_semantics = [#tpu.dimension_semantics<parallel>], iteration_bounds = array<i64: 1>, scalar_prefetch = 0 : i64, scratch_operands = 0 : i64, tpu.core_type = #tpu.core_type<tc>, window_params = [{transform_indices = @transform_0, window_bounds = array<i64: 128, 32>}, {pipeline_mode = #tpu.pipeline_mode<synchronous>, transform_indices = @transform_1, window_bounds = array<i64: 1, 32>}, {pipeline_mode = #tpu.pipeline_mode<synchronous>, transform_indices = @transform_2, window_bounds = array<i64: 1, 32>}, {pipeline_mode = #tpu.pipeline_mode<synchronous>, transform_indices = @transform_3, window_bounds = array<i64: 32, 16>}, {pipeline_mode = #tpu.pipeline_mode<synchronous>, transform_indices = @transform_4, window_bounds = array<i64: 1, 16>}, {transform_indices = @transform_5, window_bounds = array<i64: 128, 16>}]} {
    %c0 = arith.constant 0 : index
    %c0_0 = arith.constant 0 : index
    %0 = vector.load %arg1[%c0, %c0_0] : memref<128x32xf32, #tpu.memory_space<vmem>>, vector<128x32xf32>
    %c0_1 = arith.constant 0 : index
    %c0_2 = arith.constant 0 : index
    %1 = vector.load %arg2[%c0_1, %c0_2] : memref<1x32xf32, #tpu.memory_space<vmem>>, vector<1x32xf32>
    %2 = vector.broadcast %1 : vector<1x32xf32> to vector<128x32xf32>
    %3 = arith.mulf %0, %2 : vector<128x32xf32>
    %c0_3 = arith.constant 0 : index
    %c0_4 = arith.constant 0 : index
    %4 = vector.load %arg3[%c0_3, %c0_4] : memref<1x32xf32, #tpu.memory_space<vmem>>, vector<1x32xf32>
    %5 = vector.broadcast %4 : vector<1x32xf32> to vector<128x32xf32>
    %6 = arith.addf %3, %5 : vector<128x32xf32>
    %cst = arith.constant 5.000000e-01 : f32
    %7 = vector.broadcast %cst : f32 to vector<128x32xf32>
    %8 = arith.mulf %7, %6 : vector<128x32xf32>
    %cst_5 = arith.constant 4.471500e-02 : f32
    %9 = vector.broadcast %cst_5 : f32 to vector<128x32xf32>
    %10 = arith.mulf %9, %6 : vector<128x32xf32>
    %11 = arith.mulf %10, %6 : vector<128x32xf32>
    %12 = arith.mulf %11, %6 : vector<128x32xf32>
    %13 = arith.addf %6, %12 : vector<128x32xf32>
    %cst_6 = arith.constant 0.797884583 : f32
    %14 = vector.broadcast %cst_6 : f32 to vector<128x32xf32>
    %15 = arith.mulf %14, %13 : vector<128x32xf32>
    %16 = math.tanh %15 : vector<128x32xf32>
    %cst_7 = arith.constant 1.000000e+00 : f32
    %17 = vector.broadcast %cst_7 : f32 to vector<128x32xf32>
    %18 = arith.addf %17, %16 : vector<128x32xf32>
    %19 = arith.mulf %8, %18 : vector<128x32xf32>
    %c0_8 = arith.constant 0 : index
    %c0_9 = arith.constant 0 : index
    %20 = vector.load %arg4[%c0_8, %c0_9] : memref<32x16xf32, #tpu.memory_space<vmem>>, vector<32x16xf32>
    %21 = arith.truncf %19 : vector<128x32xf32> to vector<128x32xbf16>
    %22 = arith.truncf %20 : vector<32x16xf32> to vector<32x16xbf16>
    %cst_10 = arith.constant dense<0.000000e+00> : vector<128x16xf32>
    %23 = tpu.matmul %21, %22, %cst_10 {dimension_numbers = #tpu.dot_dimension_numbers<[1], [0], [0], [1], [0, 0, 1, 1], [], []>} : vector<128x32xbf16>, vector<32x16xbf16>, vector<128x16xf32> -> vector<128x16xf32>
    %c0_11 = arith.constant 0 : index
    %c0_12 = arith.constant 0 : index
    %24 = vector.load %arg5[%c0_11, %c0_12] : memref<1x16xf32, #tpu.memory_space<vmem>>, vector<1x16xf32>
    %25 = vector.broadcast %24 : vector<1x16xf32> to vector<128x16xf32>
    %26 = arith.addf %23, %25 : vector<128x16xf32>
    %c0_13 = arith.constant 0 : index
    %c0_14 = arith.constant 0 : index
    %27 = vector.load %arg6[%c0_13, %c0_14] : memref<128x16xf32, #tpu.memory_space<vmem>>, vector<128x16xf32>
    tpu.vector_store %arg6[%c0_13, %c0_14], %26 {strides = array<i32>} : memref<128x16xf32, #tpu.memory_space<vmem>>, vector<128x16xf32>,
    return
  }
  func.func @transform_0(%arg0: i32) -> (i32, i32) {
    %c0_i32 = arith.constant 0 : i32
    %c0_i32_0 = arith.constant 0 : i32
    return %arg0, %c0_i32 : i32, i32
  }
  func.func @transform_1(%arg0: i32) -> (i32, i32) {
    %c0_i32 = arith.constant 0 : i32
    %c0_i32_0 = arith.constant 0 : i32
    %c0_i32_1 = arith.constant 0 : i32
    return %c0_i32, %c0_i32_0 : i32, i32
  }
  func.func @transform_2(%arg0: i32) -> (i32, i32) {
    %c0_i32 = arith.constant 0 : i32
    %c0_i32_0 = arith.constant 0 : i32
    %c0_i32_1 = arith.constant 0 : i32
    return %c0_i32, %c0_i32_0 : i32, i32
  }
  func.func @transform_3(%arg0: i32) -> (i32, i32) {
    %c0_i32 = arith.constant 0 : i32
    %c0_i32_0 = arith.constant 0 : i32
    %c0_i32_1 = arith.constant 0 : i32
    return %c0_i32, %c0_i32_0 : i32, i32
  }
  func.func @transform_4(%arg0: i32) -> (i32, i32) {
    %c0_i32 = arith.constant 0 : i32
    %c0_i32_0 = arith.constant 0 : i32
    %c0_i32_1 = arith.constant 0 : i32
    return %c0_i32, %c0_i32_0 : i32, i32
  }
  func.func @transform_5(%arg0: i32) -> (i32, i32) {
    %c0_i32 = arith.constant 0 : i32
    %c0_i32_0 = arith.constant 0 : i32
    return %arg0, %c0_i32 : i32, i32
  }
}

module attributes {stable_mosaic.version = 11 : i64} {
  func.func @_merge_proj_kernel(%arg0: i32, %arg1: memref<128x16xf32, #tpu.memory_space<vmem>>, %arg2: memref<128x16xf32, #tpu.memory_space<vmem>>, %arg3: memref<1x16xf32, #tpu.memory_space<vmem>>, %arg4: memref<1x16xf32, #tpu.memory_space<vmem>>, %arg5: memref<1x16xf32, #tpu.memory_space<vmem>>, %arg6: memref<1x16xf32, #tpu.memory_space<vmem>>, %arg7: memref<32x32xf32, #tpu.memory_space<vmem>>, %arg8: memref<1x32xf32, #tpu.memory_space<vmem>>, %arg9: memref<128x32xf32, #tpu.memory_space<vmem>>) attributes {dimension_semantics = [#tpu.dimension_semantics<parallel>], iteration_bounds = array<i64: 1>, scalar_prefetch = 0 : i64, scratch_operands = 0 : i64, tpu.core_type = #tpu.core_type<tc>, window_params = [{transform_indices = @transform_0, window_bounds = array<i64: 128, 16>}, {transform_indices = @transform_1, window_bounds = array<i64: 128, 16>}, {pipeline_mode = #tpu.pipeline_mode<synchronous>, transform_indices = @transform_2, window_bounds = array<i64: 1, 16>}, {pipeline_mode = #tpu.pipeline_mode<synchronous>, transform_indices = @transform_3, window_bounds = array<i64: 1, 16>}, {pipeline_mode = #tpu.pipeline_mode<synchronous>, transform_indices = @transform_4, window_bounds = array<i64: 1, 16>}, {pipeline_mode = #tpu.pipeline_mode<synchronous>, transform_indices = @transform_5, window_bounds = array<i64: 1, 16>}, {pipeline_mode = #tpu.pipeline_mode<synchronous>, transform_indices = @transform_6, window_bounds = array<i64: 32, 32>}, {pipeline_mode = #tpu.pipeline_mode<synchronous>, transform_indices = @transform_7, window_bounds = array<i64: 1, 32>}, {transform_indices = @transform_8, window_bounds = array<i64: 128, 32>}]} {
    %c0 = arith.constant 0 : index
    %c0_0 = arith.constant 0 : index
    %0 = vector.load %arg1[%c0, %c0_0] : memref<128x16xf32, #tpu.memory_space<vmem>>, vector<128x16xf32>
    %c0_1 = arith.constant 0 : index
    %c0_2 = arith.constant 0 : index
    %1 = vector.load %arg3[%c0_1, %c0_2] : memref<1x16xf32, #tpu.memory_space<vmem>>, vector<1x16xf32>
    %c0_3 = arith.constant 0 : index
    %c0_4 = arith.constant 0 : index
    %2 = vector.load %arg4[%c0_3, %c0_4] : memref<1x16xf32, #tpu.memory_space<vmem>>, vector<1x16xf32>
    %cst = arith.constant dense<0.000000e+00> : vector<128xf32>
    %3 = vector.multi_reduction <add>, %0, %cst [1] : vector<128x16xf32> to vector<128xf32>
    %4 = vector.shape_cast %3 : vector<128xf32> to vector<128x1xf32>
    %cst_5 = arith.constant 1.600000e+01 : f32
    %5 = vector.broadcast %cst_5 : f32 to vector<128x1xf32>
    %6 = arith.divf %4, %5 : vector<128x1xf32>
    %7 = vector.broadcast %6 : vector<128x1xf32> to vector<128x16xf32>
    %8 = arith.subf %0, %7 : vector<128x16xf32>
    %9 = arith.mulf %8, %8 : vector<128x16xf32>
    %cst_6 = arith.constant dense<0.000000e+00> : vector<128xf32>
    %10 = vector.multi_reduction <add>, %9, %cst_6 [1] : vector<128x16xf32> to vector<128xf32>
    %11 = vector.shape_cast %10 : vector<128xf32> to vector<128x1xf32>
    %cst_7 = arith.constant 1.600000e+01 : f32
    %12 = vector.broadcast %cst_7 : f32 to vector<128x1xf32>
    %13 = arith.divf %11, %12 : vector<128x1xf32>
    %14 = vector.broadcast %6 : vector<128x1xf32> to vector<128x16xf32>
    %15 = arith.subf %0, %14 : vector<128x16xf32>
    %cst_8 = arith.constant 9.99999974E-6 : f32
    %16 = vector.broadcast %cst_8 : f32 to vector<128x1xf32>
    %17 = arith.addf %13, %16 : vector<128x1xf32>
    %18 = math.rsqrt %17 : vector<128x1xf32>
    %19 = vector.broadcast %18 : vector<128x1xf32> to vector<128x16xf32>
    %20 = arith.mulf %15, %19 : vector<128x16xf32>
    %21 = vector.broadcast %1 : vector<1x16xf32> to vector<128x16xf32>
    %22 = arith.mulf %20, %21 : vector<128x16xf32>
    %23 = vector.broadcast %2 : vector<1x16xf32> to vector<128x16xf32>
    %24 = arith.addf %22, %23 : vector<128x16xf32>
    %c0_9 = arith.constant 0 : index
    %c0_10 = arith.constant 0 : index
    %25 = vector.load %arg2[%c0_9, %c0_10] : memref<128x16xf32, #tpu.memory_space<vmem>>, vector<128x16xf32>
    %c0_11 = arith.constant 0 : index
    %c0_12 = arith.constant 0 : index
    %26 = vector.load %arg5[%c0_11, %c0_12] : memref<1x16xf32, #tpu.memory_space<vmem>>, vector<1x16xf32>
    %27 = vector.broadcast %26 : vector<1x16xf32> to vector<128x16xf32>
    %28 = arith.mulf %25, %27 : vector<128x16xf32>
    %c0_13 = arith.constant 0 : index
    %c0_14 = arith.constant 0 : index
    %29 = vector.load %arg6[%c0_13, %c0_14] : memref<1x16xf32, #tpu.memory_space<vmem>>, vector<1x16xf32>
    %30 = vector.broadcast %29 : vector<1x16xf32> to vector<128x16xf32>
    %31 = arith.addf %28, %30 : vector<128x16xf32>
    %c0_15 = arith.constant 0 : index
    %c0_16 = arith.constant 0 : index
    %32 = vector.load %arg7[%c0_15, %c0_16] : memref<32x32xf32, #tpu.memory_space<vmem>>, vector<32x32xf32>
    %33 = vector.extract_strided_slice %32 {offsets = [0, 0], sizes = [16, 32], strides = [1, 1]} : vector<32x32xf32> to vector<16x32xf32>
    %34 = arith.truncf %24 : vector<128x16xf32> to vector<128x16xbf16>
    %35 = arith.truncf %33 : vector<16x32xf32> to vector<16x32xbf16>
    %cst_17 = arith.constant dense<0.000000e+00> : vector<128x32xf32>
    %36 = tpu.matmul %34, %35, %cst_17 {dimension_numbers = #tpu.dot_dimension_numbers<[1], [0], [0], [1], [0, 0, 1, 1], [], []>} : vector<128x16xbf16>, vector<16x32xbf16>, vector<128x32xf32> -> vector<128x32xf32>
    %37 = vector.extract_strided_slice %32 {offsets = [16, 0], sizes = [16, 32], strides = [1, 1]} : vector<32x32xf32> to vector<16x32xf32>
    %38 = arith.truncf %31 : vector<128x16xf32> to vector<128x16xbf16>
    %39 = arith.truncf %37 : vector<16x32xf32> to vector<16x32xbf16>
    %cst_18 = arith.constant dense<0.000000e+00> : vector<128x32xf32>
    %40 = tpu.matmul %38, %39, %cst_18 {dimension_numbers = #tpu.dot_dimension_numbers<[1], [0], [0], [1], [0, 0, 1, 1], [], []>} : vector<128x16xbf16>, vector<16x32xbf16>, vector<128x32xf32> -> vector<128x32xf32>
    %41 = arith.addf %36, %40 : vector<128x32xf32>
    %c0_19 = arith.constant 0 : index
    %c0_20 = arith.constant 0 : index
    %42 = vector.load %arg8[%c0_19, %c0_20] : memref<1x32xf32, #tpu.memory_space<vmem>>, vector<1x32xf32>
    %43 = vector.broadcast %42 : vector<1x32xf32> to vector<128x32xf32>
    %44 = arith.addf %41, %43 : vector<128x32xf32>
    %c0_21 = arith.constant 0 : index
    %c0_22 = arith.constant 0 : index
    %45 = vector.load %arg9[%c0_21, %c0_22] : memref<128x32xf32, #tpu.memory_space<vmem>>, vector<128x32xf32>
    tpu.vector_store %arg9[%c0_21, %c0_22], %44 {strides = array<i32>} : memref<128x32xf32, #tpu.memory_space<vmem>>, vector<128x32xf32>,
    return
  }
  func.func @transform_0(%arg0: i32) -> (i32, i32) {
    %c0_i32 = arith.constant 0 : i32
    %c0_i32_0 = arith.constant 0 : i32
    return %arg0, %c0_i32 : i32, i32
  }
  func.func @transform_1(%arg0: i32) -> (i32, i32) {
    %c0_i32 = arith.constant 0 : i32
    %c0_i32_0 = arith.constant 0 : i32
    return %arg0, %c0_i32 : i32, i32
  }
  func.func @transform_2(%arg0: i32) -> (i32, i32) {
    %c0_i32 = arith.constant 0 : i32
    %c0_i32_0 = arith.constant 0 : i32
    %c0_i32_1 = arith.constant 0 : i32
    return %c0_i32, %c0_i32_0 : i32, i32
  }
  func.func @transform_3(%arg0: i32) -> (i32, i32) {
    %c0_i32 = arith.constant 0 : i32
    %c0_i32_0 = arith.constant 0 : i32
    %c0_i32_1 = arith.constant 0 : i32
    return %c0_i32, %c0_i32_0 : i32, i32
  }
  func.func @transform_4(%arg0: i32) -> (i32, i32) {
    %c0_i32 = arith.constant 0 : i32
    %c0_i32_0 = arith.constant 0 : i32
    %c0_i32_1 = arith.constant 0 : i32
    return %c0_i32, %c0_i32_0 : i32, i32
  }
  func.func @transform_5(%arg0: i32) -> (i32, i32) {
    %c0_i32 = arith.constant 0 : i32
    %c0_i32_0 = arith.constant 0 : i32
    %c0_i32_1 = arith.constant 0 : i32
    return %c0_i32, %c0_i32_0 : i32, i32
  }
  func.func @transform_6(%arg0: i32) -> (i32, i32) {
    %c0_i32 = arith.constant 0 : i32
    %c0_i32_0 = arith.constant 0 : i32
    %c0_i32_1 = arith.constant 0 : i32
    return %c0_i32, %c0_i32_0 : i32, i32
  }
  func.func @transform_7(%arg0: i32) -> (i32, i32) {
    %c0_i32 = arith.constant 0 : i32
    %c0_i32_0 = arith.constant 0 : i32
    %c0_i32_1 = arith.constant 0 : i32
    return %c0_i32, %c0_i32_0 : i32, i32
  }
  func.func @transform_8(%arg0: i32) -> (i32, i32) {
    %c0_i32 = arith.constant 0 : i32
    %c0_i32_0 = arith.constant 0 : i32
    return %arg0, %c0_i32 : i32, i32
  }
}

module attributes {stable_mosaic.version = 11 : i64} {
  func.func @_mlp_kernel(%arg0: i32, %arg1: memref<128x32xf32, #tpu.memory_space<vmem>>, %arg2: memref<1x32xf32, #tpu.memory_space<vmem>>, %arg3: memref<1x32xf32, #tpu.memory_space<vmem>>, %arg4: memref<32x64xf32, #tpu.memory_space<vmem>>, %arg5: memref<1x64xf32, #tpu.memory_space<vmem>>, %arg6: memref<1x64xf32, #tpu.memory_space<vmem>>, %arg7: memref<1x64xf32, #tpu.memory_space<vmem>>, %arg8: memref<64x32xf32, #tpu.memory_space<vmem>>, %arg9: memref<1x32xf32, #tpu.memory_space<vmem>>, %arg10: memref<128x32xf32, #tpu.memory_space<vmem>>) attributes {dimension_semantics = [#tpu.dimension_semantics<parallel>], iteration_bounds = array<i64: 1>, scalar_prefetch = 0 : i64, scratch_operands = 0 : i64, tpu.core_type = #tpu.core_type<tc>, window_params = [{transform_indices = @transform_0, window_bounds = array<i64: 128, 32>}, {pipeline_mode = #tpu.pipeline_mode<synchronous>, transform_indices = @transform_1, window_bounds = array<i64: 1, 32>}, {pipeline_mode = #tpu.pipeline_mode<synchronous>, transform_indices = @transform_2, window_bounds = array<i64: 1, 32>}, {pipeline_mode = #tpu.pipeline_mode<synchronous>, transform_indices = @transform_3, window_bounds = array<i64: 32, 64>}, {pipeline_mode = #tpu.pipeline_mode<synchronous>, transform_indices = @transform_4, window_bounds = array<i64: 1, 64>}, {pipeline_mode = #tpu.pipeline_mode<synchronous>, transform_indices = @transform_5, window_bounds = array<i64: 1, 64>}, {pipeline_mode = #tpu.pipeline_mode<synchronous>, transform_indices = @transform_6, window_bounds = array<i64: 1, 64>}, {pipeline_mode = #tpu.pipeline_mode<synchronous>, transform_indices = @transform_7, window_bounds = array<i64: 64, 32>}, {pipeline_mode = #tpu.pipeline_mode<synchronous>, transform_indices = @transform_8, window_bounds = array<i64: 1, 32>}, {transform_indices = @transform_9, window_bounds = array<i64: 128, 32>}]} {
    %c0 = arith.constant 0 : index
    %c0_0 = arith.constant 0 : index
    %0 = vector.load %arg1[%c0, %c0_0] : memref<128x32xf32, #tpu.memory_space<vmem>>, vector<128x32xf32>
    %c0_1 = arith.constant 0 : index
    %c0_2 = arith.constant 0 : index
    %1 = vector.load %arg2[%c0_1, %c0_2] : memref<1x32xf32, #tpu.memory_space<vmem>>, vector<1x32xf32>
    %c0_3 = arith.constant 0 : index
    %c0_4 = arith.constant 0 : index
    %2 = vector.load %arg3[%c0_3, %c0_4] : memref<1x32xf32, #tpu.memory_space<vmem>>, vector<1x32xf32>
    %cst = arith.constant dense<0.000000e+00> : vector<128xf32>
    %3 = vector.multi_reduction <add>, %0, %cst [1] : vector<128x32xf32> to vector<128xf32>
    %4 = vector.shape_cast %3 : vector<128xf32> to vector<128x1xf32>
    %cst_5 = arith.constant 3.200000e+01 : f32
    %5 = vector.broadcast %cst_5 : f32 to vector<128x1xf32>
    %6 = arith.divf %4, %5 : vector<128x1xf32>
    %7 = vector.broadcast %6 : vector<128x1xf32> to vector<128x32xf32>
    %8 = arith.subf %0, %7 : vector<128x32xf32>
    %9 = arith.mulf %8, %8 : vector<128x32xf32>
    %cst_6 = arith.constant dense<0.000000e+00> : vector<128xf32>
    %10 = vector.multi_reduction <add>, %9, %cst_6 [1] : vector<128x32xf32> to vector<128xf32>
    %11 = vector.shape_cast %10 : vector<128xf32> to vector<128x1xf32>
    %cst_7 = arith.constant 3.200000e+01 : f32
    %12 = vector.broadcast %cst_7 : f32 to vector<128x1xf32>
    %13 = arith.divf %11, %12 : vector<128x1xf32>
    %14 = vector.broadcast %6 : vector<128x1xf32> to vector<128x32xf32>
    %15 = arith.subf %0, %14 : vector<128x32xf32>
    %cst_8 = arith.constant 9.99999974E-6 : f32
    %16 = vector.broadcast %cst_8 : f32 to vector<128x1xf32>
    %17 = arith.addf %13, %16 : vector<128x1xf32>
    %18 = math.rsqrt %17 : vector<128x1xf32>
    %19 = vector.broadcast %18 : vector<128x1xf32> to vector<128x32xf32>
    %20 = arith.mulf %15, %19 : vector<128x32xf32>
    %21 = vector.broadcast %1 : vector<1x32xf32> to vector<128x32xf32>
    %22 = arith.mulf %20, %21 : vector<128x32xf32>
    %23 = vector.broadcast %2 : vector<1x32xf32> to vector<128x32xf32>
    %24 = arith.addf %22, %23 : vector<128x32xf32>
    %c0_9 = arith.constant 0 : index
    %c0_10 = arith.constant 0 : index
    %25 = vector.load %arg4[%c0_9, %c0_10] : memref<32x64xf32, #tpu.memory_space<vmem>>, vector<32x64xf32>
    %26 = arith.truncf %24 : vector<128x32xf32> to vector<128x32xbf16>
    %27 = arith.truncf %25 : vector<32x64xf32> to vector<32x64xbf16>
    %cst_11 = arith.constant dense<0.000000e+00> : vector<128x64xf32>
    %28 = tpu.matmul %26, %27, %cst_11 {dimension_numbers = #tpu.dot_dimension_numbers<[1], [0], [0], [1], [0, 0, 1, 1], [], []>} : vector<128x32xbf16>, vector<32x64xbf16>, vector<128x64xf32> -> vector<128x64xf32>
    %c0_12 = arith.constant 0 : index
    %c0_13 = arith.constant 0 : index
    %29 = vector.load %arg5[%c0_12, %c0_13] : memref<1x64xf32, #tpu.memory_space<vmem>>, vector<1x64xf32>
    %30 = vector.broadcast %29 : vector<1x64xf32> to vector<128x64xf32>
    %31 = arith.addf %28, %30 : vector<128x64xf32>
    %cst_14 = arith.constant 5.000000e-01 : f32
    %32 = vector.broadcast %cst_14 : f32 to vector<128x64xf32>
    %33 = arith.mulf %32, %31 : vector<128x64xf32>
    %cst_15 = arith.constant 4.471500e-02 : f32
    %34 = vector.broadcast %cst_15 : f32 to vector<128x64xf32>
    %35 = arith.mulf %34, %31 : vector<128x64xf32>
    %36 = arith.mulf %35, %31 : vector<128x64xf32>
    %37 = arith.mulf %36, %31 : vector<128x64xf32>
    %38 = arith.addf %31, %37 : vector<128x64xf32>
    %cst_16 = arith.constant 0.797884583 : f32
    %39 = vector.broadcast %cst_16 : f32 to vector<128x64xf32>
    %40 = arith.mulf %39, %38 : vector<128x64xf32>
    %41 = math.tanh %40 : vector<128x64xf32>
    %cst_17 = arith.constant 1.000000e+00 : f32
    %42 = vector.broadcast %cst_17 : f32 to vector<128x64xf32>
    %43 = arith.addf %42, %41 : vector<128x64xf32>
    %44 = arith.mulf %33, %43 : vector<128x64xf32>
    %c0_18 = arith.constant 0 : index
    %c0_19 = arith.constant 0 : index
    %45 = vector.load %arg6[%c0_18, %c0_19] : memref<1x64xf32, #tpu.memory_space<vmem>>, vector<1x64xf32>
    %c0_20 = arith.constant 0 : index
    %c0_21 = arith.constant 0 : index
    %46 = vector.load %arg7[%c0_20, %c0_21] : memref<1x64xf32, #tpu.memory_space<vmem>>, vector<1x64xf32>
    %cst_22 = arith.constant dense<0.000000e+00> : vector<128xf32>
    %47 = vector.multi_reduction <add>, %44, %cst_22 [1] : vector<128x64xf32> to vector<128xf32>
    %48 = vector.shape_cast %47 : vector<128xf32> to vector<128x1xf32>
    %cst_23 = arith.constant 6.400000e+01 : f32
    %49 = vector.broadcast %cst_23 : f32 to vector<128x1xf32>
    %50 = arith.divf %48, %49 : vector<128x1xf32>
    %51 = vector.broadcast %50 : vector<128x1xf32> to vector<128x64xf32>
    %52 = arith.subf %44, %51 : vector<128x64xf32>
    %53 = arith.mulf %52, %52 : vector<128x64xf32>
    %cst_24 = arith.constant dense<0.000000e+00> : vector<128xf32>
    %54 = vector.multi_reduction <add>, %53, %cst_24 [1] : vector<128x64xf32> to vector<128xf32>
    %55 = vector.shape_cast %54 : vector<128xf32> to vector<128x1xf32>
    %cst_25 = arith.constant 6.400000e+01 : f32
    %56 = vector.broadcast %cst_25 : f32 to vector<128x1xf32>
    %57 = arith.divf %55, %56 : vector<128x1xf32>
    %58 = vector.broadcast %50 : vector<128x1xf32> to vector<128x64xf32>
    %59 = arith.subf %44, %58 : vector<128x64xf32>
    %cst_26 = arith.constant 9.99999974E-6 : f32
    %60 = vector.broadcast %cst_26 : f32 to vector<128x1xf32>
    %61 = arith.addf %57, %60 : vector<128x1xf32>
    %62 = math.rsqrt %61 : vector<128x1xf32>
    %63 = vector.broadcast %62 : vector<128x1xf32> to vector<128x64xf32>
    %64 = arith.mulf %59, %63 : vector<128x64xf32>
    %65 = vector.broadcast %45 : vector<1x64xf32> to vector<128x64xf32>
    %66 = arith.mulf %64, %65 : vector<128x64xf32>
    %67 = vector.broadcast %46 : vector<1x64xf32> to vector<128x64xf32>
    %68 = arith.addf %66, %67 : vector<128x64xf32>
    %c0_27 = arith.constant 0 : index
    %c0_28 = arith.constant 0 : index
    %69 = vector.load %arg8[%c0_27, %c0_28] : memref<64x32xf32, #tpu.memory_space<vmem>>, vector<64x32xf32>
    %70 = arith.truncf %68 : vector<128x64xf32> to vector<128x64xbf16>
    %71 = arith.truncf %69 : vector<64x32xf32> to vector<64x32xbf16>
    %cst_29 = arith.constant dense<0.000000e+00> : vector<128x32xf32>
    %72 = tpu.matmul %70, %71, %cst_29 {dimension_numbers = #tpu.dot_dimension_numbers<[1], [0], [0], [1], [0, 0, 1, 1], [], []>} : vector<128x64xbf16>, vector<64x32xbf16>, vector<128x32xf32> -> vector<128x32xf32>
    %c0_30 = arith.constant 0 : index
    %c0_31 = arith.constant 0 : index
    %73 = vector.load %arg9[%c0_30, %c0_31] : memref<1x32xf32, #tpu.memory_space<vmem>>, vector<1x32xf32>
    %74 = vector.broadcast %73 : vector<1x32xf32> to vector<128x32xf32>
    %75 = arith.addf %72, %74 : vector<128x32xf32>
    %76 = arith.addf %0, %75 : vector<128x32xf32>
    %c0_32 = arith.constant 0 : index
    %c0_33 = arith.constant 0 : index
    %77 = vector.load %arg10[%c0_32, %c0_33] : memref<128x32xf32, #tpu.memory_space<vmem>>, vector<128x32xf32>
    tpu.vector_store %arg10[%c0_32, %c0_33], %76 {strides = array<i32>} : memref<128x32xf32, #tpu.memory_space<vmem>>, vector<128x32xf32>,
    return
  }
  func.func @transform_0(%arg0: i32) -> (i32, i32) {
    %c0_i32 = arith.constant 0 : i32
    %c0_i32_0 = arith.constant 0 : i32
    return %arg0, %c0_i32 : i32, i32
  }
  func.func @transform_1(%arg0: i32) -> (i32, i32) {
    %c0_i32 = arith.constant 0 : i32
    %c0_i32_0 = arith.constant 0 : i32
    %c0_i32_1 = arith.constant 0 : i32
    return %c0_i32, %c0_i32_0 : i32, i32
  }
  func.func @transform_2(%arg0: i32) -> (i32, i32) {
    %c0_i32 = arith.constant 0 : i32
    %c0_i32_0 = arith.constant 0 : i32
    %c0_i32_1 = arith.constant 0 : i32
    return %c0_i32, %c0_i32_0 : i32, i32
  }
  func.func @transform_3(%arg0: i32) -> (i32, i32) {
    %c0_i32 = arith.constant 0 : i32
    %c0_i32_0 = arith.constant 0 : i32
    %c0_i32_1 = arith.constant 0 : i32
    return %c0_i32, %c0_i32_0 : i32, i32
  }
  func.func @transform_4(%arg0: i32) -> (i32, i32) {
    %c0_i32 = arith.constant 0 : i32
    %c0_i32_0 = arith.constant 0 : i32
    %c0_i32_1 = arith.constant 0 : i32
    return %c0_i32, %c0_i32_0 : i32, i32
  }
  func.func @transform_5(%arg0: i32) -> (i32, i32) {
    %c0_i32 = arith.constant 0 : i32
    %c0_i32_0 = arith.constant 0 : i32
    %c0_i32_1 = arith.constant 0 : i32
    return %c0_i32, %c0_i32_0 : i32, i32
  }
  func.func @transform_6(%arg0: i32) -> (i32, i32) {
    %c0_i32 = arith.constant 0 : i32
    %c0_i32_0 = arith.constant 0 : i32
    %c0_i32_1 = arith.constant 0 : i32
    return %c0_i32, %c0_i32_0 : i32, i32
  }
  func.func @transform_7(%arg0: i32) -> (i32, i32) {
    %c0_i32 = arith.constant 0 : i32
    %c0_i32_0 = arith.constant 0 : i32
    %c0_i32_1 = arith.constant 0 : i32
    return %c0_i32, %c0_i32_0 : i32, i32
  }
  func.func @transform_8(%arg0: i32) -> (i32, i32) {
    %c0_i32 = arith.constant 0 : i32
    %c0_i32_0 = arith.constant 0 : i32
    %c0_i32_1 = arith.constant 0 : i32
    return %c0_i32, %c0_i32_0 : i32, i32
  }
  func.func @transform_9(%arg0: i32) -> (i32, i32) {
    %c0_i32 = arith.constant 0 : i32
    %c0_i32_0 = arith.constant 0 : i32
    return %arg0, %c0_i32 : i32, i32
  }
}

</mosaic_0001>

<llo_original>
// kernel: run.7
$region0: #{run.7}
  #allocation0 [shape = 'u32[]', space=smem, size = 0x4, offset = 0x4, fixed_abs, tag = 'smem constant byte address 0x4 - core index']
  #allocation1 [shape = 'u32[144,128]{1,0:T(1,128)}', space=vmem, size = 0x12000, scoped, tag = 'internal scratch']
  %s0 = inlined_call_operand.hbm [shape: f32[128,32], index: 0, kind: input, shape index: {}]
  %s1 = inlined_call_operand.hbm [shape: f32[1,32], index: 1, kind: input, shape index: {}]
  %s2 = inlined_call_operand.hbm [shape: f32[1,32], index: 2, kind: input, shape index: {}]
  %s3 = inlined_call_operand.hbm [shape: f32[128,32], index: 3, kind: output, shape index: {}]
  %s4 = sld [smem:[#allocation0]]
  $region34: #{run.7} parent=0
    _
  %s6 = ssub.s32 1, %s4
  %s7 = scalar_select 0, %s6, %s4
  $region1: #{run.7} parent=0
    #allocation2 [shape = 'u8[65536]{0}', space=vmem, size = 0x10000, scoped, tag = 'input window, operand 0, single buffered']
    #allocation3 [shape = 's32[1]{0}', space=sflag, size = 0x4, scoped, tag = 'scoped memory for run.7']
    #allocation4 [shape = 's32[1]{0}', space=sflag, size = 0x4, scoped, tag = 'scoped memory for run.7']
    #allocation5 [shape = 'u8[512]{0}', space=vmem, size = 0x400, scoped, tag = 'input window, operand 1, single buffered']
    #allocation6 [shape = 's32[1]{0}', space=sflag, size = 0x4, scoped, tag = 'scoped memory for run.7']
    #allocation7 [shape = 'u8[512]{0}', space=vmem, size = 0x400, scoped, tag = 'input window, operand 2, single buffered']
    #allocation8 [shape = 'u8[65536]{0}', space=vmem, size = 0x10000, scoped, tag = 'output window, operand 0, single buffered']
    %8 = vsyncpa [#allocation3], 0
    %9 = vsyncpa [#allocation6], 0
    %10 = vsyncpa [#allocation4], 0
    // Predicated region
    $region2: #{run.7} parent=1 // pred_check
      _
    $region3: #{run.7} parent=1 // pred_check_branch
      %12 = sbr.rel (0) target = $region5
    $region4: #{run.7} parent=1 // pred_region
      %s14 = ssub.s32 2048, 2048
      %15 = vsyncadd [#allocation3], %s14
      %s16 = sshll.u32 [#allocation2], 4
      %s17 = int_to_ptr.vmem [resolvable:$true] %s16
      %22 = dma.hbm_to_vmem [thread:$0]  %s0, 2048, %s17, [#allocation3], 128, 128, 8
    $region5: #{run.7} parent=1 // pred_fallthru
      _
    // Predicated region
    $region6: #{run.7} parent=1 // pred_check
      _
    $region7: #{run.7} parent=1 // pred_check_branch
      %24 = sbr.rel (0) target = $region9
    $region8: #{run.7} parent=1 // pred_region
      %s26 = ssub.s32 16, 16
      %27 = vsyncadd [#allocation6], %s26
      %s29 = sshll.u32 [#allocation5], 4
      %s30 = int_to_ptr.vmem [resolvable:$true] %s29
      %32 = dma.hbm_to_vmem [thread:$0]  %s1, 16, %s30, [#allocation6]
    $region9: #{run.7} parent=1 // pred_fallthru
      _
    // Predicated region
    $region10: #{run.7} parent=1 // pred_check
      _
    $region11: #{run.7} parent=1 // pred_check_branch
      %34 = sbr.rel (0) target = $region13
    $region12: #{run.7} parent=1 // pred_region
      %s36 = ssub.s32 16, 16
      %37 = vsyncadd [#allocation6], %s36
      %s39 = sshll.u32 [#allocation7], 4
      %s40 = int_to_ptr.vmem [resolvable:$true] %s39
      %42 = dma.hbm_to_vmem [thread:$0]  %s2, 16, %s40, [#allocation6]
    $region13: #{run.7} parent=1 // pred_fallthru
      _
    // Predicated region
    $region14: #{run.7} parent=1 // pred_check
      _
    $region15: #{run.7} parent=1 // pred_check_branch
      %44 = sbr.rel (0) target = $region17
    $region16: #{run.7} parent=1 // pred_region
      %45 = dma.done [#allocation3], 2048
    $region17: #{run.7} parent=1 // pred_fallthru
      _
    // Predicated region
    $region18: #{run.7} parent=1 // pred_check
      _
    $region19: #{run.7} parent=1 // pred_check_branch
      %47 = sbr.rel (0) target = $region21
    $region20: #{run.7} parent=1 // pred_region
      %48 = dma.done [#allocation6], 16
    $region21: #{run.7} parent=1 // pred_fallthru
      _
    // Predicated region
    $region22: #{run.7} parent=1 // pred_check
      _
    $region23: #{run.7} parent=1 // pred_check_branch
      %50 = sbr.rel (0) target = $region25
    $region24: #{run.7} parent=1 // pred_region
      %51 = dma.done [#allocation6], 16
    $region25: #{run.7} parent=1 // pred_fallthru
      _
    %v52 = vld [vmem:[#allocation2] sm:$0xff]
    %v53 = vld [vmem:[#allocation2 + $0x8] sm:$0xff]
    %v54 = vld [vmem:[#allocation2 + $0x10] sm:$0xff]
    %v55 = vld [vmem:[#allocation2 + $0x18] sm:$0xff]
    %v56 = vld [vmem:[#allocation2 + $0x20] sm:$0xff]
    %v57 = vld [vmem:[#allocation2 + $0x28] sm:$0xff]
    %v58 = vld [vmem:[#allocation2 + $0x30] sm:$0xff]
    %v59 = vld [vmem:[#allocation2 + $0x38] sm:$0xff]
    %v60 = vld [vmem:[#allocation2 + $0x40] sm:$0xff]
    %v61 = vld [vmem:[#allocation2 + $0x48] sm:$0xff]
    %v62 = vld [vmem:[#allocation2 + $0x50] sm:$0xff]
    %v63 = vld [vmem:[#allocation2 + $0x58] sm:$0xff]
    %v64 = vld [vmem:[#allocation2 + $0x60] sm:$0xff]
    %v65 = vld [vmem:[#allocation2 + $0x68] sm:$0xff]
    %v66 = vld [vmem:[#allocation2 + $0x70] sm:$0xff]
    %v67 = vld [vmem:[#allocation2 + $0x78] sm:$0xff]
    %v68 = vld [vmem:[#allocation5] sm:$0x1]
    %v69 = vld [vmem:[#allocation7] sm:$0x1]
    %vm70 = vcmask 261120
    %v71 = vsel %vm70, %v52, 0.0
    %72 = vadd.xlane.f32.xlu0 %v71
    %v73 = vpop.xlane.xlu0 %72
    %v74 = vsel %vm70, %v53, 0.0
    %75 = vadd.xlane.f32.xlu0 %v74
    %v76 = vpop.xlane.xlu0 %75
    %v77 = vsel %vm70, %v54, 0.0
    %78 = vadd.xlane.f32.xlu0 %v77
    %v79 = vpop.xlane.xlu0 %78
    %v80 = vsel %vm70, %v55, 0.0
    %81 = vadd.xlane.f32.xlu0 %v80
    %v82 = vpop.xlane.xlu0 %81
    %v83 = vsel %vm70, %v56, 0.0
    %84 = vadd.xlane.f32.xlu0 %v83
    %v85 = vpop.xlane.xlu0 %84
    %v86 = vsel %vm70, %v57, 0.0
    %87 = vadd.xlane.f32.xlu0 %v86
    %v88 = vpop.xlane.xlu0 %87
    %v89 = vsel %vm70, %v58, 0.0
    %90 = vadd.xlane.f32.xlu0 %v89
    %v91 = vpop.xlane.xlu0 %90
    %v92 = vsel %vm70, %v59, 0.0
    %93 = vadd.xlane.f32.xlu0 %v92
    %v94 = vpop.xlane.xlu0 %93
    %v95 = vsel %vm70, %v60, 0.0
    %96 = vadd.xlane.f32.xlu0 %v95
    %v97 = vpop.xlane.xlu0 %96
    %v98 = vsel %vm70, %v61, 0.0
    %99 = vadd.xlane.f32.xlu0 %v98
    %v100 = vpop.xlane.xlu0 %99
    %v101 = vsel %vm70, %v62, 0.0
    %102 = vadd.xlane.f32.xlu0 %v101
    %v103 = vpop.xlane.xlu0 %102
    %v104 = vsel %vm70, %v63, 0.0
    %105 = vadd.xlane.f32.xlu0 %v104
    %v106 = vpop.xlane.xlu0 %105
    %v107 = vsel %vm70, %v64, 0.0
    %108 = vadd.xlane.f32.xlu0 %v107
    %v109 = vpop.xlane.xlu0 %108
    %v110 = vsel %vm70, %v65, 0.0
    %111 = vadd.xlane.f32.xlu0 %v110
    %v112 = vpop.xlane.xlu0 %111
    %v113 = vsel %vm70, %v66, 0.0
    %114 = vadd.xlane.f32.xlu0 %v113
    %v115 = vpop.xlane.xlu0 %114
    %v116 = vsel %vm70, %v67, 0.0
    %117 = vadd.xlane.f32.xlu0 %v116
    %v118 = vpop.xlane.xlu0 %117
    %v119 = vrcp.pop 32.0
    %v120 = vmul.f32 %v73, %v119
    %v121 = vmul.f32 %v76, %v119
    %v122 = vmul.f32 %v79, %v119
    %v123 = vmul.f32 %v82, %v119
    %v124 = vmul.f32 %v85, %v119
    %v125 = vmul.f32 %v88, %v119
    %v126 = vmul.f32 %v91, %v119
    %v127 = vmul.f32 %v94, %v119
    %v128 = vmul.f32 %v97, %v119
    %v129 = vmul.f32 %v100, %v119
    %v130 = vmul.f32 %v103, %v119
    %v131 = vmul.f32 %v106, %v119
    %v132 = vmul.f32 %v109, %v119
    %v133 = vmul.f32 %v112, %v119
    %v134 = vmul.f32 %v115, %v119
    %v135 = vmul.f32 %v118, %v119
    %v136 = vsub.f32 %v52, %v120
    %v137 = vsub.f32 %v53, %v121
    %v138 = vsub.f32 %v54, %v122
    %v139 = vsub.f32 %v55, %v123
    %v140 = vsub.f32 %v56, %v124
    %v141 = vsub.f32 %v57, %v125
    %v142 = vsub.f32 %v58, %v126
    %v143 = vsub.f32 %v59, %v127
    %v144 = vsub.f32 %v60, %v128
    %v145 = vsub.f32 %v61, %v129
    %v146 = vsub.f32 %v62, %v130
    %v147 = vsub.f32 %v63, %v131
    %v148 = vsub.f32 %v64, %v132
    %v149 = vsub.f32 %v65, %v133
    %v150 = vsub.f32 %v66, %v134
    %v151 = vsub.f32 %v67, %v135
    %v152 = vmul.f32 %v136, %v136
    %v153 = vmul.f32 %v137, %v137
    %v154 = vmul.f32 %v138, %v138
    %v155 = vmul.f32 %v139, %v139
    %v156 = vmul.f32 %v140, %v140
    %v157 = vmul.f32 %v141, %v141
    %v158 = vmul.f32 %v142, %v142
    %v159 = vmul.f32 %v143, %v143
    %v160 = vmul.f32 %v144, %v144
    %v161 = vmul.f32 %v145, %v145
    %v162 = vmul.f32 %v146, %v146
    %v163 = vmul.f32 %v147, %v147
    %v164 = vmul.f32 %v148, %v148
    %v165 = vmul.f32 %v149, %v149
    %v166 = vmul.f32 %v150, %v150
    %v167 = vmul.f32 %v151, %v151
    %v168 = vsel %vm70, %v152, 0.0
    %169 = vadd.xlane.f32.xlu0 %v168
    %v170 = vpop.xlane.xlu0 %169
    %v171 = vsel %vm70, %v153, 0.0
    %172 = vadd.xlane.f32.xlu0 %v171
    %v173 = vpop.xlane.xlu0 %172
    %v174 = vsel %vm70, %v154, 0.0
    %175 = vadd.xlane.f32.xlu0 %v174
    %v176 = vpop.xlane.xlu0 %175
    %v177 = vsel %vm70, %v155, 0.0
    %178 = vadd.xlane.f32.xlu0 %v177
    %v179 = vpop.xlane.xlu0 %178
    %v180 = vsel %vm70, %v156, 0.0
    %181 = vadd.xlane.f32.xlu0 %v180
    %v182 = vpop.xlane.xlu0 %181
    %v183 = vsel %vm70, %v157, 0.0
    %184 = vadd.xlane.f32.xlu0 %v183
    %v185 = vpop.xlane.xlu0 %184
    %v186 = vsel %vm70, %v158, 0.0
    %187 = vadd.xlane.f32.xlu0 %v186
    %v188 = vpop.xlane.xlu0 %187
    %v189 = vsel %vm70, %v159, 0.0
    %190 = vadd.xlane.f32.xlu0 %v189
    %v191 = vpop.xlane.xlu0 %190
    %v192 = vsel %vm70, %v160, 0.0
    %193 = vadd.xlane.f32.xlu0 %v192
    %v194 = vpop.xlane.xlu0 %193
    %v195 = vsel %vm70, %v161, 0.0
    %196 = vadd.xlane.f32.xlu0 %v195
    %v197 = vpop.xlane.xlu0 %196
    %v198 = vsel %vm70, %v162, 0.0
    %199 = vadd.xlane.f32.xlu0 %v198
    %v200 = vpop.xlane.xlu0 %199
    %v201 = vsel %vm70, %v163, 0.0
    %202 = vadd.xlane.f32.xlu0 %v201
    %v203 = vpop.xlane.xlu0 %202
    %v204 = vsel %vm70, %v164, 0.0
    %205 = vadd.xlane.f32.xlu0 %v204
    %v206 = vpop.xlane.xlu0 %205
    %v207 = vsel %vm70, %v165, 0.0
    %208 = vadd.xlane.f32.xlu0 %v207
    %v209 = vpop.xlane.xlu0 %208
    %v210 = vsel %vm70, %v166, 0.0
    %211 = vadd.xlane.f32.xlu0 %v210
    %v212 = vpop.xlane.xlu0 %211
    %v213 = vsel %vm70, %v167, 0.0
    %214 = vadd.xlane.f32.xlu0 %v213
    %v215 = vpop.xlane.xlu0 %214
    %v216 = vmul.f32 %v170, %v119
    %v217 = vmul.f32 %v173, %v119
    %v218 = vmul.f32 %v176, %v119
    %v219 = vmul.f32 %v179, %v119
    %v220 = vmul.f32 %v182, %v119
    %v221 = vmul.f32 %v185, %v119
    %v222 = vmul.f32 %v188, %v119
    %v223 = vmul.f32 %v191, %v119
    %v224 = vmul.f32 %v194, %v119
    %v225 = vmul.f32 %v197, %v119
    %v226 = vmul.f32 %v200, %v119
    %v227 = vmul.f32 %v203, %v119
    %v228 = vmul.f32 %v206, %v119
    %v229 = vmul.f32 %v209, %v119
    %v230 = vmul.f32 %v212, %v119
    %v231 = vmul.f32 %v215, %v119
    %v232 = vadd.f32 %v216, 1e-05
    %v233 = vadd.f32 %v217, 1e-05
    %v234 = vadd.f32 %v218, 1e-05
    %v235 = vadd.f32 %v219, 1e-05
    %v236 = vadd.f32 %v220, 1e-05
    %v237 = vadd.f32 %v221, 1e-05
    %v238 = vadd.f32 %v222, 1e-05
    %v239 = vadd.f32 %v223, 1e-05
    %v240 = vadd.f32 %v224, 1e-05
    %v241 = vadd.f32 %v225, 1e-05
    %v242 = vadd.f32 %v226, 1e-05
    %v243 = vadd.f32 %v227, 1e-05
    %v244 = vadd.f32 %v228, 1e-05
    %v245 = vadd.f32 %v229, 1e-05
    %v246 = vadd.f32 %v230, 1e-05
    %v247 = vadd.f32 %v231, 1e-05
    %v248 = vrsqrt.pop %v232
    %v249 = vrsqrt.pop %v233
    %v250 = vrsqrt.pop %v234
    %v251 = vrsqrt.pop %v235
    %v252 = vrsqrt.pop %v236
    %v253 = vrsqrt.pop %v237
    %v254 = vrsqrt.pop %v238
    %v255 = vrsqrt.pop %v239
    %v256 = vrsqrt.pop %v240
    %v257 = vrsqrt.pop %v241
    %v258 = vrsqrt.pop %v242
    %v259 = vrsqrt.pop %v243
    %v260 = vrsqrt.pop %v244
    %v261 = vrsqrt.pop %v245
    %v262 = vrsqrt.pop %v246
    %v263 = vrsqrt.pop %v247
    %v264 = vmul.f32 %v136, %v248
    %v265 = vmul.f32 %v137, %v249
    %v266 = vmul.f32 %v138, %v250
    %v267 = vmul.f32 %v139, %v251
    %v268 = vmul.f32 %v140, %v252
    %v269 = vmul.f32 %v141, %v253
    %v270 = vmul.f32 %v142, %v254
    %v271 = vmul.f32 %v143, %v255
    %v272 = vmul.f32 %v144, %v256
    %v273 = vmul.f32 %v145, %v257
    %v274 = vmul.f32 %v146, %v258
    %v275 = vmul.f32 %v147, %v259
    %v276 = vmul.f32 %v148, %v260
    %v277 = vmul.f32 %v149, %v261
    %v278 = vmul.f32 %v150, %v262
    %v279 = vmul.f32 %v151, %v263
    %v281 = vlaneseq
    %v282 = vshrl.u32 %v281, 7
    %v283 = vsub.s32 0, %v282
    %v284 = vrot.slane %v68, %v283
    %v286 = vmul.f32 %v264, %v284
    %v287 = vmul.f32 %v265, %v284
    %v288 = vmul.f32 %v266, %v284
    %v289 = vmul.f32 %v267, %v284
    %v290 = vmul.f32 %v268, %v284
    %v291 = vmul.f32 %v269, %v284
    %v292 = vmul.f32 %v270, %v284
    %v293 = vmul.f32 %v271, %v284
    %v294 = vmul.f32 %v272, %v284
    %v295 = vmul.f32 %v273, %v284
    %v296 = vmul.f32 %v274, %v284
    %v297 = vmul.f32 %v275, %v284
    %v298 = vmul.f32 %v276, %v284
    %v299 = vmul.f32 %v277, %v284
    %v300 = vmul.f32 %v278, %v284
    %v301 = vmul.f32 %v279, %v284
    %v303 = vlaneseq
    %v304 = vshrl.u32 %v303, 7
    %v305 = vsub.s32 0, %v304
    %v306 = vrot.slane %v69, %v305
    %v308 = vadd.f32 %v286, %v306
    %v309 = vadd.f32 %v287, %v306
    %v310 = vadd.f32 %v288, %v306
    %v311 = vadd.f32 %v289, %v306
    %v312 = vadd.f32 %v290, %v306
    %v313 = vadd.f32 %v291, %v306
    %v314 = vadd.f32 %v292, %v306
    %v315 = vadd.f32 %v293, %v306
    %v316 = vadd.f32 %v294, %v306
    %v317 = vadd.f32 %v295, %v306
    %v318 = vadd.f32 %v296, %v306
    %v319 = vadd.f32 %v297, %v306
    %v320 = vadd.f32 %v298, %v306
    %v321 = vadd.f32 %v299, %v306
    %v322 = vadd.f32 %v300, %v306
    %v323 = vadd.f32 %v301, %v306
    %324 = vst.msk [vmem:[#allocation8] sm:$0xff] %vm70, %v308
    %325 = vst.msk [vmem:[#allocation8 + $0x8] sm:$0xff] %vm70, %v309
    %326 = vst.msk [vmem:[#allocation8 + $0x10] sm:$0xff] %vm70, %v310
    %327 = vst.msk [vmem:[#allocation8 + $0x18] sm:$0xff] %vm70, %v311
    %328 = vst.msk [vmem:[#allocation8 + $0x20] sm:$0xff] %vm70, %v312
    %329 = vst.msk [vmem:[#allocation8 + $0x28] sm:$0xff] %vm70, %v313
    %330 = vst.msk [vmem:[#allocation8 + $0x30] sm:$0xff] %vm70, %v314
    %331 = vst.msk [vmem:[#allocation8 + $0x38] sm:$0xff] %vm70, %v315
    %332 = vst.msk [vmem:[#allocation8 + $0x40] sm:$0xff] %vm70, %v316
    %333 = vst.msk [vmem:[#allocation8 + $0x48] sm:$0xff] %vm70, %v317
    %334 = vst.msk [vmem:[#allocation8 + $0x50] sm:$0xff] %vm70, %v318
    %335 = vst.msk [vmem:[#allocation8 + $0x58] sm:$0xff] %vm70, %v319
    %336 = vst.msk [vmem:[#allocation8 + $0x60] sm:$0xff] %vm70, %v320
    %337 = vst.msk [vmem:[#allocation8 + $0x68] sm:$0xff] %vm70, %v321
    %338 = vst.msk [vmem:[#allocation8 + $0x70] sm:$0xff] %vm70, %v322
    %339 = vst.msk [vmem:[#allocation8 + $0x78] sm:$0xff] %vm70, %v323
    // Predicated region
    $region26: #{run.7} parent=1 // pred_check
      _
    $region27: #{run.7} parent=1 // pred_check_branch
      %341 = sbr.rel (0) target = $region29
    $region28: #{run.7} parent=1 // pred_region
      %s343 = ssub.s32 2048, 2048
      %344 = vsyncadd [#allocation4], %s343
      %s345 = sshll.u32 [#allocation8], 4
      %s346 = int_to_ptr.vmem [resolvable:$true] %s345
      %351 = dma.vmem_to_hbm [thread:$0]  %s346, 2048, %s3, [#allocation4], 128, 128, 8
    $region29: #{run.7} parent=1 // pred_fallthru
      _
    // Predicated region
    $region30: #{run.7} parent=1 // pred_check
      _
    $region31: #{run.7} parent=1 // pred_check_branch
      %353 = sbr.rel (0) target = $region33
    $region32: #{run.7} parent=1 // pred_region
      %354 = dma.done [#allocation4], 2048
    $region33: #{run.7} parent=1 // pred_fallthru
      _
    %355 = vsyncpa [#allocation3], 1
    %356 = vsyncpa [#allocation6], 1
    %357 = vsyncpa [#allocation4], 1

// kernel: run.8
$region0: #{run.8}
  #allocation0 [shape = 'u32[]', space=smem, size = 0x4, offset = 0x4, fixed_abs, tag = 'smem constant byte address 0x4 - core index']
  #allocation1 [shape = 'u32[144,128]{1,0:T(1,128)}', space=vmem, size = 0x12000, scoped, tag = 'internal scratch']
  %s0 = inlined_call_operand.hbm [shape: f32[128,32], index: 0, kind: input, shape index: {}]
  %s1 = inlined_call_operand.hbm [shape: f32[32,16], index: 1, kind: input, shape index: {}]
  %s2 = inlined_call_operand.hbm [shape: f32[1,16], index: 2, kind: input, shape index: {}]
  %s3 = inlined_call_operand.hbm [shape: f32[1,16], index: 3, kind: input, shape index: {}]
  %s4 = inlined_call_operand.hbm [shape: f32[1,16], index: 4, kind: input, shape index: {}]
  %s5 = inlined_call_operand.hbm [shape: f32[16,48], index: 5, kind: input, shape index: {}]
  %s6 = inlined_call_operand.hbm [shape: f32[1,48], index: 6, kind: input, shape index: {}]
  %s7 = inlined_call_operand.hbm [shape: f32[128,48], index: 7, kind: output, shape index: {}]
  %s8 = sld [smem:[#allocation0]]
  $region66: #{run.8} parent=0
    _
  %s10 = ssub.s32 1, %s8
  %s11 = scalar_select 0, %s10, %s8
  $region1: #{run.8} parent=0
    #allocation2 [shape = 'u8[65536]{0}', space=vmem, size = 0x10000, scoped, tag = 'input window, operand 0, single buffered']
    #allocation3 [shape = 's32[1]{0}', space=sflag, size = 0x4, scoped, tag = 'scoped memory for run.8']
    #allocation4 [shape = 's32[1]{0}', space=sflag, size = 0x4, scoped, tag = 'scoped memory for run.8']
    #allocation5 [shape = 'u8[16384]{0}', space=vmem, size = 0x4000, scoped, tag = 'input window, operand 1, single buffered']
    #allocation6 [shape = 's32[1]{0}', space=sflag, size = 0x4, scoped, tag = 'scoped memory for run.8']
    #allocation7 [shape = 'u8[512]{0}', space=vmem, size = 0x400, scoped, tag = 'input window, operand 2, single buffered']
    #allocation8 [shape = 'u8[512]{0}', space=vmem, size = 0x400, scoped, tag = 'input window, operand 3, single buffered']
    #allocation9 [shape = 's32[1]{0}', space=sflag, size = 0x4, scoped, tag = 'scoped memory for run.8']
    #allocation10 [shape = 'u8[512]{0}', space=vmem, size = 0x400, scoped, tag = 'input window, operand 4, single buffered']
    #allocation11 [shape = 'u8[8192]{0}', space=vmem, size = 0x2000, scoped, tag = 'input window, operand 5, single buffered']
    #allocation12 [shape = 's32[1]{0}', space=sflag, size = 0x4, scoped, tag = 'scoped memory for run.8']
    #allocation13 [shape = 'u8[512]{0}', space=vmem, size = 0x400, scoped, tag = 'input window, operand 6, single buffered']
    #allocation14 [shape = 'u8[65536]{0}', space=vmem, size = 0x10000, scoped, tag = 'output window, operand 0, single buffered']
    %12 = vsyncpa [#allocation3], 0
    %13 = vsyncpa [#allocation6], 0
    %14 = vsyncpa [#allocation9], 0
    %15 = vsyncpa [#allocation12], 0
    %16 = vsyncpa [#allocation4], 0
    // Predicated region
    $region2: #{run.8} parent=1 // pred_check
      _
    $region3: #{run.8} parent=1 // pred_check_branch
      %18 = sbr.rel (0) target = $region5
    $region4: #{run.8} parent=1 // pred_region
      %s20 = ssub.s32 2048, 2048
      %21 = vsyncadd [#allocation3], %s20
      %s22 = sshll.u32 [#allocation2], 4
      %s23 = int_to_ptr.vmem [resolvable:$true] %s22
      %28 = dma.hbm_to_vmem [thread:$0]  %s0, 2048, %s23, [#allocation3], 128, 128, 8
    $region5: #{run.8} parent=1 // pred_fallthru
      _
    // Predicated region
    $region6: #{run.8} parent=1 // pred_check
      _
    $region7: #{run.8} parent=1 // pred_check_branch
      %30 = sbr.rel (0) target = $region9
    $region8: #{run.8} parent=1 // pred_region
      %s32 = ssub.s32 512, 512
      %33 = vsyncadd [#allocation6], %s32
      %s34 = sshll.u32 [#allocation5], 4
      %s35 = int_to_ptr.vmem [resolvable:$true] %s34
      %40 = dma.hbm_to_vmem [thread:$0]  %s1, 512, %s35, [#allocation6], 128, 128, 8
    $region9: #{run.8} parent=1 // pred_fallthru
      _
    // Predicated region
    $region10: #{run.8} parent=1 // pred_check
      _
    $region11: #{run.8} parent=1 // pred_check_branch
      %42 = sbr.rel (0) target = $region13
    $region12: #{run.8} parent=1 // pred_region
      %s44 = ssub.s32 16, 16
      %45 = vsyncadd [#allocation6], %s44
      %s47 = sshll.u32 [#allocation7], 4
      %s48 = int_to_ptr.vmem [resolvable:$true] %s47
      %50 = dma.hbm_to_vmem [thread:$0]  %s2, 16, %s48, [#allocation6]
    $region13: #{run.8} parent=1 // pred_fallthru
      _
    // Predicated region
    $region14: #{run.8} parent=1 // pred_check
      _
    $region15: #{run.8} parent=1 // pred_check_branch
      %52 = sbr.rel (0) target = $region17
    $region16: #{run.8} parent=1 // pred_region
      %s54 = ssub.s32 16, 16
      %55 = vsyncadd [#allocation9], %s54
      %s57 = sshll.u32 [#allocation8], 4
      %s58 = int_to_ptr.vmem [resolvable:$true] %s57
      %60 = dma.hbm_to_vmem [thread:$0]  %s3, 16, %s58, [#allocation9]
    $region17: #{run.8} parent=1 // pred_fallthru
      _
    // Predicated region
    $region18: #{run.8} parent=1 // pred_check
      _
    $region19: #{run.8} parent=1 // pred_check_branch
      %62 = sbr.rel (0) target = $region21
    $region20: #{run.8} parent=1 // pred_region
      %s64 = ssub.s32 16, 16
      %65 = vsyncadd [#allocation9], %s64
      %s67 = sshll.u32 [#allocation10], 4
      %s68 = int_to_ptr.vmem [resolvable:$true] %s67
      %70 = dma.hbm_to_vmem [thread:$0]  %s4, 16, %s68, [#allocation9]
    $region21: #{run.8} parent=1 // pred_fallthru
      _
    // Predicated region
    $region22: #{run.8} parent=1 // pred_check
      _
    $region23: #{run.8} parent=1 // pred_check_branch
      %72 = sbr.rel (0) target = $region25
    $region24: #{run.8} parent=1 // pred_region
      %s74 = ssub.s32 256, 256
      %75 = vsyncadd [#allocation12], %s74
      %s76 = sshll.u32 [#allocation11], 4
      %s77 = int_to_ptr.vmem [resolvable:$true] %s76
      %82 = dma.hbm_to_vmem [thread:$0]  %s5, 256, %s77, [#allocation12], 128, 128, 8
    $region25: #{run.8} parent=1 // pred_fallthru
      _
    // Predicated region
    $region26: #{run.8} parent=1 // pred_check
      _
    $region27: #{run.8} parent=1 // pred_check_branch
      %84 = sbr.rel (0) target = $region29
    $region28: #{run.8} parent=1 // pred_region
      %s86 = ssub.s32 16, 16
      %87 = vsyncadd [#allocation12], %s86
      %s89 = sshll.u32 [#allocation13], 4
      %s90 = int_to_ptr.vmem [resolvable:$true] %s89
      %92 = dma.hbm_to_vmem [thread:$0]  %s6, 16, %s90, [#allocation12]
    $region29: #{run.8} parent=1 // pred_fallthru
      _
    // Predicated region
    $region30: #{run.8} parent=1 // pred_check
      _
    $region31: #{run.8} parent=1 // pred_check_branch
      %94 = sbr.rel (0) target = $region33
    $region32: #{run.8} parent=1 // pred_region
      %95 = dma.done [#allocation3], 2048
    $region33: #{run.8} parent=1 // pred_fallthru
      _
    // Predicated region
    $region34: #{run.8} parent=1 // pred_check
      _
    $region35: #{run.8} parent=1 // pred_check_branch
      %97 = sbr.rel (0) target = $region37
    $region36: #{run.8} parent=1 // pred_region
      %98 = dma.done [#allocation6], 512
    $region37: #{run.8} parent=1 // pred_fallthru
      _
    // Predicated region
    $region38: #{run.8} parent=1 // pred_check
      _
    $region39: #{run.8} parent=1 // pred_check_branch
      %100 = sbr.rel (0) target = $region41
    $region40: #{run.8} parent=1 // pred_region
      %101 = dma.done [#allocation6], 16
    $region41: #{run.8} parent=1 // pred_fallthru
      _
    // Predicated region
    $region42: #{run.8} parent=1 // pred_check
      _
    $region43: #{run.8} parent=1 // pred_check_branch
      %103 = sbr.rel (0) target = $region45
    $region44: #{run.8} parent=1 // pred_region
      %104 = dma.done [#allocation9], 16
    $region45: #{run.8} parent=1 // pred_fallthru
      _
    // Predicated region
    $region46: #{run.8} parent=1 // pred_check
      _
    $region47: #{run.8} parent=1 // pred_check_branch
      %106 = sbr.rel (0) target = $region49
    $region48: #{run.8} parent=1 // pred_region
      %107 = dma.done [#allocation9], 16
    $region49: #{run.8} parent=1 // pred_fallthru
      _
    // Predicated region
    $region50: #{run.8} parent=1 // pred_check
      _
    $region51: #{run.8} parent=1 // pred_check_branch
      %109 = sbr.rel (0) target = $region53
    $region52: #{run.8} parent=1 // pred_region
      %110 = dma.done [#allocation12], 256
    $region53: #{run.8} parent=1 // pred_fallthru
      _
    // Predicated region
    $region54: #{run.8} parent=1 // pred_check
      _
    $region55: #{run.8} parent=1 // pred_check_branch
      %112 = sbr.rel (0) target = $region57
    $region56: #{run.8} parent=1 // pred_region
      %113 = dma.done [#allocation12], 16
    $region57: #{run.8} parent=1 // pred_fallthru
      _
    %v115 = vld [vmem:[#allocation2] sm:$0xff]
    %v116 = vld [vmem:[#allocation2 + $0x8] sm:$0xff]
    %v117 = vld [vmem:[#allocation2 + $0x10] sm:$0xff]
    %v118 = vld [vmem:[#allocation2 + $0x18] sm:$0xff]
    %v119 = vld [vmem:[#allocation2 + $0x20] sm:$0xff]
    %v120 = vld [vmem:[#allocation2 + $0x28] sm:$0xff]
    %v121 = vld [vmem:[#allocation2 + $0x30] sm:$0xff]
    %v122 = vld [vmem:[#allocation2 + $0x38] sm:$0xff]
    %v123 = vld [vmem:[#allocation2 + $0x40] sm:$0xff]
    %v124 = vld [vmem:[#allocation2 + $0x48] sm:$0xff]
    %v125 = vld [vmem:[#allocation2 + $0x50] sm:$0xff]
    %v126 = vld [vmem:[#allocation2 + $0x58] sm:$0xff]
    %v127 = vld [vmem:[#allocation2 + $0x60] sm:$0xff]
    %v128 = vld [vmem:[#allocation2 + $0x68] sm:$0xff]
    %v129 = vld [vmem:[#allocation2 + $0x70] sm:$0xff]
    %v130 = vld [vmem:[#allocation2 + $0x78] sm:$0xff]
    %v131 = vld [vmem:[#allocation5] sm:$0xff]
    %v132 = vld [vmem:[#allocation5 + $0x8] sm:$0xff]
    %v133 = vld [vmem:[#allocation5 + $0x10] sm:$0xff]
    %v134 = vld [vmem:[#allocation5 + $0x18] sm:$0xff]
    %v135 = vpack.c.bf16 %v116, %v115
    %v136 = vpack.c.bf16 %v118, %v117
    %v137 = vpack.c.bf16 %v120, %v119
    %v138 = vpack.c.bf16 %v122, %v121
    %v139 = vpack.c.bf16 %v124, %v123
    %v140 = vpack.c.bf16 %v126, %v125
    %v141 = vpack.c.bf16 %v128, %v127
    %v142 = vpack.c.bf16 %v130, %v129
    %v143 = vpack.c.bf16 %v132, %v131
    %v144 = vpack.c.bf16 %v134, %v133
    %v145 = vld [vmem:[#allocation7] sm:$0x1]
    %v147 = vlaneseq
    %v148 = vshrl.u32 %v147, 7
    %v149 = vsub.s32 0, %v148
    %v150 = vrot.slane %v145, %v149
    %vm152 = vcmask 261120
    %v154 = vsel %vm152, %v135, 0
    %v157 = vsel %vm152, %v136, 0
    %v160 = vsel %vm152, %v137, 0
    %v163 = vsel %vm152, %v138, 0
    %v166 = vsel %vm152, %v139, 0
    %v169 = vsel %vm152, %v140, 0
    %v172 = vsel %vm152, %v141, 0
    %v175 = vsel %vm152, %v142, 0
    %177 = vmatprep.subr.bf16.mxu0 0
    %178 = vmatpush1.bf16.msra.mxu0 %v143
    %179 = vmatprep.subr.bf16.mxu0 0
    %180 = vmatpush1.bf16.msra.mxu0 %v144
    %181 = vmatprep.subr.bf16.mxu0 0
    %182 = vmatpush1.bf16.msra.mxu0 0
    %183 = vmatprep.subr.bf16.mxu0 0
    %184 = vmatpush1.bf16.msra.mxu0 0
    %185 = vmatprep.subr.bf16.mxu0 0
    %186 = vmatpush1.bf16.msra.mxu0 0
    %187 = vmatprep.subr.bf16.mxu0 0
    %188 = vmatpush1.bf16.msra.mxu0 0
    %189 = vmatprep.subr.bf16.mxu0 0
    %190 = vmatpush1.bf16.msra.mxu0 0
    %191 = vmatprep.subr.bf16.mxu0 0
    %192 = vmatpush1.bf16.msra.mxu0 0
    %193 = vmatprep.subr.bf16.mxu0 0
    %194 = vmatpush1.bf16.msra.mxu0 0
    %195 = vmatprep.subr.bf16.mxu0 0
    %196 = vmatpush1.bf16.msra.mxu0 0
    %197 = vmatprep.subr.bf16.mxu0 0
    %198 = vmatpush1.bf16.msra.mxu0 0
    %199 = vmatprep.subr.bf16.mxu0 0
    %200 = vmatpush1.bf16.msra.mxu0 0
    %201 = vmatprep.subr.bf16.mxu0 0
    %202 = vmatpush1.bf16.msra.mxu0 0
    %203 = vmatprep.subr.bf16.mxu0 0
    %204 = vmatpush1.bf16.msra.mxu0 0
    %205 = vmatprep.subr.bf16.mxu0 0
    %206 = vmatpush1.bf16.msra.mxu0 0
    %207 = vmatprep.subr.bf16.mxu0 0
    %208 = vmatpush1.bf16.msra.mxu0 0
    %209 = vmatprep.mubr.bf16.mxu0 0
    %210 = vmatmul.mubr.bf16.gmra.mrb[0].mxu0 %v154
    %v211 = vpop.f32.mrb[0].mxu0
    %v212 = vadd.f32 %v150, %v211
    %v213 = vpop.f32.mrb[0].mxu0
    %v214 = vpop.f32.mrb[0].mxu0
    %v215 = vadd.f32 %v150, %v214
    %v216 = vpop.f32.mrb[0].mxu0
    %217 = vmatprep.mubr.bf16.mxu0 0
    %218 = vmatmul.mubr.bf16.gmra.mrb[0].mxu0 %v157
    %v219 = vpop.f32.mrb[0].mxu0
    %v220 = vadd.f32 %v150, %v219
    %v221 = vpop.f32.mrb[0].mxu0
    %v222 = vpop.f32.mrb[0].mxu0
    %v223 = vadd.f32 %v150, %v222
    %v224 = vpop.f32.mrb[0].mxu0
    %225 = vmatprep.mubr.bf16.mxu0 0
    %226 = vmatmul.mubr.bf16.gmra.mrb[0].mxu0 %v160
    %v227 = vpop.f32.mrb[0].mxu0
    %v228 = vadd.f32 %v150, %v227
    %v229 = vpop.f32.mrb[0].mxu0
    %v230 = vpop.f32.mrb[0].mxu0
    %v231 = vadd.f32 %v150, %v230
    %v232 = vpop.f32.mrb[0].mxu0
    %233 = vmatprep.mubr.bf16.mxu0 0
    %234 = vmatmul.mubr.bf16.gmra.mrb[0].mxu0 %v163
    %v235 = vpop.f32.mrb[0].mxu0
    %v236 = vadd.f32 %v150, %v235
    %v237 = vpop.f32.mrb[0].mxu0
    %v238 = vpop.f32.mrb[0].mxu0
    %v239 = vadd.f32 %v150, %v238
    %v240 = vpop.f32.mrb[0].mxu0
    %241 = vmatprep.mubr.bf16.mxu0 0
    %242 = vmatmul.mubr.bf16.gmra.mrb[0].mxu0 %v166
    %v243 = vpop.f32.mrb[0].mxu0
    %v244 = vadd.f32 %v150, %v243
    %v245 = vpop.f32.mrb[0].mxu0
    %v246 = vpop.f32.mrb[0].mxu0
    %v247 = vadd.f32 %v150, %v246
    %v248 = vpop.f32.mrb[0].mxu0
    %249 = vmatprep.mubr.bf16.mxu0 0
    %250 = vmatmul.mubr.bf16.gmra.mrb[0].mxu0 %v169
    %v251 = vpop.f32.mrb[0].mxu0
    %v252 = vadd.f32 %v150, %v251
    %v253 = vpop.f32.mrb[0].mxu0
    %v254 = vpop.f32.mrb[0].mxu0
    %v255 = vadd.f32 %v150, %v254
    %v256 = vpop.f32.mrb[0].mxu0
    %257 = vmatprep.mubr.bf16.mxu0 0
    %258 = vmatmul.mubr.bf16.gmra.mrb[0].mxu0 %v172
    %v259 = vpop.f32.mrb[0].mxu0
    %v260 = vadd.f32 %v150, %v259
    %v261 = vpop.f32.mrb[0].mxu0
    %v262 = vpop.f32.mrb[0].mxu0
    %v263 = vadd.f32 %v150, %v262
    %v264 = vpop.f32.mrb[0].mxu0
    %265 = vmatprep.mubr.bf16.mxu0 0
    %266 = vmatmul.mubr.bf16.gmra.mrb[0].mxu0 %v175
    %v267 = vpop.f32.mrb[0].mxu0
    %v268 = vadd.f32 %v150, %v267
    %v269 = vpop.f32.mrb[0].mxu0
    %v270 = vpop.f32.mrb[0].mxu0
    %v271 = vadd.f32 %v150, %v270
    %v272 = vpop.f32.mrb[0].mxu0
    %273 = vdwg.mxu0
    %v274 = vld [vmem:[#allocation8] sm:$0x1]
    %v275 = vld [vmem:[#allocation10] sm:$0x1]
    %vm276 = vcmask 130048
    %v277 = vsel %vm276, %v212, 0.0
    %278 = vadd.xlane.f32.xlu0 %v277
    %v279 = vpop.xlane.xlu0 %278
    %v280 = vsel %vm276, %v215, 0.0
    %281 = vadd.xlane.f32.xlu0 %v280
    %v282 = vpop.xlane.xlu0 %281
    %v283 = vsel %vm276, %v220, 0.0
    %284 = vadd.xlane.f32.xlu0 %v283
    %v285 = vpop.xlane.xlu0 %284
    %v286 = vsel %vm276, %v223, 0.0
    %287 = vadd.xlane.f32.xlu0 %v286
    %v288 = vpop.xlane.xlu0 %287
    %v289 = vsel %vm276, %v228, 0.0
    %290 = vadd.xlane.f32.xlu0 %v289
    %v291 = vpop.xlane.xlu0 %290
    %v292 = vsel %vm276, %v231, 0.0
    %293 = vadd.xlane.f32.xlu0 %v292
    %v294 = vpop.xlane.xlu0 %293
    %v295 = vsel %vm276, %v236, 0.0
    %296 = vadd.xlane.f32.xlu0 %v295
    %v297 = vpop.xlane.xlu0 %296
    %v298 = vsel %vm276, %v239, 0.0
    %299 = vadd.xlane.f32.xlu0 %v298
    %v300 = vpop.xlane.xlu0 %299
    %v301 = vsel %vm276, %v244, 0.0
    %302 = vadd.xlane.f32.xlu0 %v301
    %v303 = vpop.xlane.xlu0 %302
    %v304 = vsel %vm276, %v247, 0.0
    %305 = vadd.xlane.f32.xlu0 %v304
    %v306 = vpop.xlane.xlu0 %305
    %v307 = vsel %vm276, %v252, 0.0
    %308 = vadd.xlane.f32.xlu0 %v307
    %v309 = vpop.xlane.xlu0 %308
    %v310 = vsel %vm276, %v255, 0.0
    %311 = vadd.xlane.f32.xlu0 %v310
    %v312 = vpop.xlane.xlu0 %311
    %v313 = vsel %vm276, %v260, 0.0
    %314 = vadd.xlane.f32.xlu0 %v313
    %v315 = vpop.xlane.xlu0 %314
    %v316 = vsel %vm276, %v263, 0.0
    %317 = vadd.xlane.f32.xlu0 %v316
    %v318 = vpop.xlane.xlu0 %317
    %v319 = vsel %vm276, %v268, 0.0
    %320 = vadd.xlane.f32.xlu0 %v319
    %v321 = vpop.xlane.xlu0 %320
    %v322 = vsel %vm276, %v271, 0.0
    %323 = vadd.xlane.f32.xlu0 %v322
    %v324 = vpop.xlane.xlu0 %323
    %v325 = vrcp.pop 16.0
    %v326 = vmul.f32 %v279, %v325
    %v327 = vmul.f32 %v282, %v325
    %v328 = vmul.f32 %v285, %v325
    %v329 = vmul.f32 %v288, %v325
    %v330 = vmul.f32 %v291, %v325
    %v331 = vmul.f32 %v294, %v325
    %v332 = vmul.f32 %v297, %v325
    %v333 = vmul.f32 %v300, %v325
    %v334 = vmul.f32 %v303, %v325
    %v335 = vmul.f32 %v306, %v325
    %v336 = vmul.f32 %v309, %v325
    %v337 = vmul.f32 %v312, %v325
    %v338 = vmul.f32 %v315, %v325
    %v339 = vmul.f32 %v318, %v325
    %v340 = vmul.f32 %v321, %v325
    %v341 = vmul.f32 %v324, %v325
    %v342 = vsub.f32 %v212, %v326
    %v343 = vsub.f32 %v215, %v327
    %v344 = vsub.f32 %v220, %v328
    %v345 = vsub.f32 %v223, %v329
    %v346 = vsub.f32 %v228, %v330
    %v347 = vsub.f32 %v231, %v331
    %v348 = vsub.f32 %v236, %v332
    %v349 = vsub.f32 %v239, %v333
    %v350 = vsub.f32 %v244, %v334
    %v351 = vsub.f32 %v247, %v335
    %v352 = vsub.f32 %v252, %v336
    %v353 = vsub.f32 %v255, %v337
    %v354 = vsub.f32 %v260, %v338
    %v355 = vsub.f32 %v263, %v339
    %v356 = vsub.f32 %v268, %v340
    %v357 = vsub.f32 %v271, %v341
    %v358 = vmul.f32 %v342, %v342
    %v359 = vmul.f32 %v343, %v343
    %v360 = vmul.f32 %v344, %v344
    %v361 = vmul.f32 %v345, %v345
    %v362 = vmul.f32 %v346, %v346
    %v363 = vmul.f32 %v347, %v347
    %v364 = vmul.f32 %v348, %v348
    %v365 = vmul.f32 %v349, %v349
    %v366 = vmul.f32 %v350, %v350
    %v367 = vmul.f32 %v351, %v351
    %v368 = vmul.f32 %v352, %v352
    %v369 = vmul.f32 %v353, %v353
    %v370 = vmul.f32 %v354, %v354
    %v371 = vmul.f32 %v355, %v355
    %v372 = vmul.f32 %v356, %v356
    %v373 = vmul.f32 %v357, %v357
    %v374 = vsel %vm276, %v358, 0.0
    %375 = vadd.xlane.f32.xlu0 %v374
    %v376 = vpop.xlane.xlu0 %375
    %v377 = vsel %vm276, %v359, 0.0
    %378 = vadd.xlane.f32.xlu0 %v377
    %v379 = vpop.xlane.xlu0 %378
    %v380 = vsel %vm276, %v360, 0.0
    %381 = vadd.xlane.f32.xlu0 %v380
    %v382 = vpop.xlane.xlu0 %381
    %v383 = vsel %vm276, %v361, 0.0
    %384 = vadd.xlane.f32.xlu0 %v383
    %v385 = vpop.xlane.xlu0 %384
    %v386 = vsel %vm276, %v362, 0.0
    %387 = vadd.xlane.f32.xlu0 %v386
    %v388 = vpop.xlane.xlu0 %387
    %v389 = vsel %vm276, %v363, 0.0
    %390 = vadd.xlane.f32.xlu0 %v389
    %v391 = vpop.xlane.xlu0 %390
    %v392 = vsel %vm276, %v364, 0.0
    %393 = vadd.xlane.f32.xlu0 %v392
    %v394 = vpop.xlane.xlu0 %393
    %v395 = vsel %vm276, %v365, 0.0
    %396 = vadd.xlane.f32.xlu0 %v395
    %v397 = vpop.xlane.xlu0 %396
    %v398 = vsel %vm276, %v366, 0.0
    %399 = vadd.xlane.f32.xlu0 %v398
    %v400 = vpop.xlane.xlu0 %399
    %v401 = vsel %vm276, %v367, 0.0
    %402 = vadd.xlane.f32.xlu0 %v401
    %v403 = vpop.xlane.xlu0 %402
    %v404 = vsel %vm276, %v368, 0.0
    %405 = vadd.xlane.f32.xlu0 %v404
    %v406 = vpop.xlane.xlu0 %405
    %v407 = vsel %vm276, %v369, 0.0
    %408 = vadd.xlane.f32.xlu0 %v407
    %v409 = vpop.xlane.xlu0 %408
    %v410 = vsel %vm276, %v370, 0.0
    %411 = vadd.xlane.f32.xlu0 %v410
    %v412 = vpop.xlane.xlu0 %411
    %v413 = vsel %vm276, %v371, 0.0
    %414 = vadd.xlane.f32.xlu0 %v413
    %v415 = vpop.xlane.xlu0 %414
    %v416 = vsel %vm276, %v372, 0.0
    %417 = vadd.xlane.f32.xlu0 %v416
    %v418 = vpop.xlane.xlu0 %417
    %v419 = vsel %vm276, %v373, 0.0
    %420 = vadd.xlane.f32.xlu0 %v419
    %v421 = vpop.xlane.xlu0 %420
    %v422 = vmul.f32 %v376, %v325
    %v423 = vmul.f32 %v379, %v325
    %v424 = vmul.f32 %v382, %v325
    %v425 = vmul.f32 %v385, %v325
    %v426 = vmul.f32 %v388, %v325
    %v427 = vmul.f32 %v391, %v325
    %v428 = vmul.f32 %v394, %v325
    %v429 = vmul.f32 %v397, %v325
    %v430 = vmul.f32 %v400, %v325
    %v431 = vmul.f32 %v403, %v325
    %v432 = vmul.f32 %v406, %v325
    %v433 = vmul.f32 %v409, %v325
    %v434 = vmul.f32 %v412, %v325
    %v435 = vmul.f32 %v415, %v325
    %v436 = vmul.f32 %v418, %v325
    %v437 = vmul.f32 %v421, %v325
    %v438 = vadd.f32 %v422, 1e-05
    %v439 = vadd.f32 %v423, 1e-05
    %v440 = vadd.f32 %v424, 1e-05
    %v441 = vadd.f32 %v425, 1e-05
    %v442 = vadd.f32 %v426, 1e-05
    %v443 = vadd.f32 %v427, 1e-05
    %v444 = vadd.f32 %v428, 1e-05
    %v445 = vadd.f32 %v429, 1e-05
    %v446 = vadd.f32 %v430, 1e-05
    %v447 = vadd.f32 %v431, 1e-05
    %v448 = vadd.f32 %v432, 1e-05
    %v449 = vadd.f32 %v433, 1e-05
    %v450 = vadd.f32 %v434, 1e-05
    %v451 = vadd.f32 %v435, 1e-05
    %v452 = vadd.f32 %v436, 1e-05
    %v453 = vadd.f32 %v437, 1e-05
    %v454 = vrsqrt.pop %v438
    %v455 = vrsqrt.pop %v439
    %v456 = vrsqrt.pop %v440
    %v457 = vrsqrt.pop %v441
    %v458 = vrsqrt.pop %v442
    %v459 = vrsqrt.pop %v443
    %v460 = vrsqrt.pop %v444
    %v461 = vrsqrt.pop %v445
    %v462 = vrsqrt.pop %v446
    %v463 = vrsqrt.pop %v447
    %v464 = vrsqrt.pop %v448
    %v465 = vrsqrt.pop %v449
    %v466 = vrsqrt.pop %v450
    %v467 = vrsqrt.pop %v451
    %v468 = vrsqrt.pop %v452
    %v469 = vrsqrt.pop %v453
    %v470 = vmul.f32 %v342, %v454
    %v471 = vmul.f32 %v343, %v455
    %v472 = vmul.f32 %v344, %v456
    %v473 = vmul.f32 %v345, %v457
    %v474 = vmul.f32 %v346, %v458
    %v475 = vmul.f32 %v347, %v459
    %v476 = vmul.f32 %v348, %v460
    %v477 = vmul.f32 %v349, %v461
    %v478 = vmul.f32 %v350, %v462
    %v479 = vmul.f32 %v351, %v463
    %v480 = vmul.f32 %v352, %v464
    %v481 = vmul.f32 %v353, %v465
    %v482 = vmul.f32 %v354, %v466
    %v483 = vmul.f32 %v355, %v467
    %v484 = vmul.f32 %v356, %v468
    %v485 = vmul.f32 %v357, %v469
    %v487 = vlaneseq
    %v488 = vshrl.u32 %v487, 7
    %v489 = vsub.s32 0, %v488
    %v490 = vrot.slane %v274, %v489
    %v492 = vmul.f32 %v470, %v490
    %v493 = vmul.f32 %v471, %v490
    %v494 = vmul.f32 %v472, %v490
    %v495 = vmul.f32 %v473, %v490
    %v496 = vmul.f32 %v474, %v490
    %v497 = vmul.f32 %v475, %v490
    %v498 = vmul.f32 %v476, %v490
    %v499 = vmul.f32 %v477, %v490
    %v500 = vmul.f32 %v478, %v490
    %v501 = vmul.f32 %v479, %v490
    %v502 = vmul.f32 %v480, %v490
    %v503 = vmul.f32 %v481, %v490
    %v504 = vmul.f32 %v482, %v490
    %v505 = vmul.f32 %v483, %v490
    %v506 = vmul.f32 %v484, %v490
    %v507 = vmul.f32 %v485, %v490
    %v509 = vlaneseq
    %v510 = vshrl.u32 %v509, 7
    %v511 = vsub.s32 0, %v510
    %v512 = vrot.slane %v275, %v511
    %v514 = vadd.f32 %v492, %v512
    %v515 = vadd.f32 %v493, %v512
    %v516 = vadd.f32 %v494, %v512
    %v517 = vadd.f32 %v495, %v512
    %v518 = vadd.f32 %v496, %v512
    %v519 = vadd.f32 %v497, %v512
    %v520 = vadd.f32 %v498, %v512
    %v521 = vadd.f32 %v499, %v512
    %v522 = vadd.f32 %v500, %v512
    %v523 = vadd.f32 %v501, %v512
    %v524 = vadd.f32 %v502, %v512
    %v525 = vadd.f32 %v503, %v512
    %v526 = vadd.f32 %v504, %v512
    %v527 = vadd.f32 %v505, %v512
    %v528 = vadd.f32 %v506, %v512
    %v529 = vadd.f32 %v507, %v512
    %v530 = vld [vmem:[#allocation11] sm:$0xff]
    %v531 = vld [vmem:[#allocation11 + $0x8] sm:$0xff]
    %v532 = vpack.c.bf16 %v515, %v514
    %v533 = vpack.c.bf16 %v517, %v516
    %v534 = vpack.c.bf16 %v519, %v518
    %v535 = vpack.c.bf16 %v521, %v520
    %v536 = vpack.c.bf16 %v523, %v522
    %v537 = vpack.c.bf16 %v525, %v524
    %v538 = vpack.c.bf16 %v527, %v526
    %v539 = vpack.c.bf16 %v529, %v528
    %v540 = vpack.c.bf16 %v531, %v530
    %v541 = vld [vmem:[#allocation13] sm:$0x1]
    %v543 = vlaneseq
    %v544 = vshrl.u32 %v543, 7
    %v545 = vsub.s32 0, %v544
    %v546 = vrot.slane %v541, %v545
    %v549 = vsel %vm276, %v532, 0
    %v552 = vsel %vm276, %v533, 0
    %v555 = vsel %vm276, %v534, 0
    %v558 = vsel %vm276, %v535, 0
    %v561 = vsel %vm276, %v536, 0
    %v564 = vsel %vm276, %v537, 0
    %v567 = vsel %vm276, %v538, 0
    %v570 = vsel %vm276, %v539, 0
    %572 = vmatprep.subr.bf16.mxu0 0
    %573 = vmatpush1.bf16.msra.mxu0 %v540
    %574 = vmatprep.subr.bf16.mxu0 0
    %575 = vmatpush1.bf16.msra.mxu0 0
    %576 = vmatprep.subr.bf16.mxu0 0
    %577 = vmatpush1.bf16.msra.mxu0 0
    %578 = vmatprep.subr.bf16.mxu0 0
    %579 = vmatpush1.bf16.msra.mxu0 0
    %580 = vmatprep.subr.bf16.mxu0 0
    %581 = vmatpush1.bf16.msra.mxu0 0
    %582 = vmatprep.subr.bf16.mxu0 0
    %583 = vmatpush1.bf16.msra.mxu0 0
    %584 = vmatprep.subr.bf16.mxu0 0
    %585 = vmatpush1.bf16.msra.mxu0 0
    %586 = vmatprep.subr.bf16.mxu0 0
    %587 = vmatpush1.bf16.msra.mxu0 0
    %588 = vmatprep.subr.bf16.mxu0 0
    %589 = vmatpush1.bf16.msra.mxu0 0
    %590 = vmatprep.subr.bf16.mxu0 0
    %591 = vmatpush1.bf16.msra.mxu0 0
    %592 = vmatprep.subr.bf16.mxu0 0
    %593 = vmatpush1.bf16.msra.mxu0 0
    %594 = vmatprep.subr.bf16.mxu0 0
    %595 = vmatpush1.bf16.msra.mxu0 0
    %596 = vmatprep.subr.bf16.mxu0 0
    %597 = vmatpush1.bf16.msra.mxu0 0
    %598 = vmatprep.subr.bf16.mxu0 0
    %599 = vmatpush1.bf16.msra.mxu0 0
    %600 = vmatprep.subr.bf16.mxu0 0
    %601 = vmatpush1.bf16.msra.mxu0 0
    %602 = vmatprep.subr.bf16.mxu0 0
    %603 = vmatpush1.bf16.msra.mxu0 0
    %604 = vmatprep.mubr.bf16.mxu0 0
    %605 = vmatmul.mubr.bf16.gmra.mrb[0].mxu0 %v549
    %v606 = vpop.f32.mrb[0].mxu0
    %v607 = vadd.f32 %v546, %v606
    %v608 = vpop.f32.mrb[0].mxu0
    %v609 = vpop.f32.mrb[0].mxu0
    %v610 = vadd.f32 %v546, %v609
    %v611 = vpop.f32.mrb[0].mxu0
    %612 = vmatprep.mubr.bf16.mxu0 0
    %613 = vmatmul.mubr.bf16.gmra.mrb[0].mxu0 %v552
    %v614 = vpop.f32.mrb[0].mxu0
    %v615 = vadd.f32 %v546, %v614
    %v616 = vpop.f32.mrb[0].mxu0
    %v617 = vpop.f32.mrb[0].mxu0
    %v618 = vadd.f32 %v546, %v617
    %v619 = vpop.f32.mrb[0].mxu0
    %620 = vmatprep.mubr.bf16.mxu0 0
    %621 = vmatmul.mubr.bf16.gmra.mrb[0].mxu0 %v555
    %v622 = vpop.f32.mrb[0].mxu0
    %v623 = vadd.f32 %v546, %v622
    %v624 = vpop.f32.mrb[0].mxu0
    %v625 = vpop.f32.mrb[0].mxu0
    %v626 = vadd.f32 %v546, %v625
    %v627 = vpop.f32.mrb[0].mxu0
    %628 = vmatprep.mubr.bf16.mxu0 0
    %629 = vmatmul.mubr.bf16.gmra.mrb[0].mxu0 %v558
    %v630 = vpop.f32.mrb[0].mxu0
    %v631 = vadd.f32 %v546, %v630
    %v632 = vpop.f32.mrb[0].mxu0
    %v633 = vpop.f32.mrb[0].mxu0
    %v634 = vadd.f32 %v546, %v633
    %v635 = vpop.f32.mrb[0].mxu0
    %636 = vmatprep.mubr.bf16.mxu0 0
    %637 = vmatmul.mubr.bf16.gmra.mrb[0].mxu0 %v561
    %v638 = vpop.f32.mrb[0].mxu0
    %v639 = vadd.f32 %v546, %v638
    %v640 = vpop.f32.mrb[0].mxu0
    %v641 = vpop.f32.mrb[0].mxu0
    %v642 = vadd.f32 %v546, %v641
    %v643 = vpop.f32.mrb[0].mxu0
    %644 = vmatprep.mubr.bf16.mxu0 0
    %645 = vmatmul.mubr.bf16.gmra.mrb[0].mxu0 %v564
    %v646 = vpop.f32.mrb[0].mxu0
    %v647 = vadd.f32 %v546, %v646
    %v648 = vpop.f32.mrb[0].mxu0
    %v649 = vpop.f32.mrb[0].mxu0
    %v650 = vadd.f32 %v546, %v649
    %v651 = vpop.f32.mrb[0].mxu0
    %652 = vmatprep.mubr.bf16.mxu0 0
    %653 = vmatmul.mubr.bf16.gmra.mrb[0].mxu0 %v567
    %v654 = vpop.f32.mrb[0].mxu0
    %v655 = vadd.f32 %v546, %v654
    %v656 = vpop.f32.mrb[0].mxu0
    %v657 = vpop.f32.mrb[0].mxu0
    %v658 = vadd.f32 %v546, %v657
    %v659 = vpop.f32.mrb[0].mxu0
    %660 = vmatprep.mubr.bf16.mxu0 0
    %661 = vmatmul.mubr.bf16.gmra.mrb[0].mxu0 %v570
    %v662 = vpop.f32.mrb[0].mxu0
    %v663 = vadd.f32 %v546, %v662
    %v664 = vpop.f32.mrb[0].mxu0
    %v665 = vpop.f32.mrb[0].mxu0
    %v666 = vadd.f32 %v546, %v665
    %v667 = vpop.f32.mrb[0].mxu0
    %668 = vdwg.mxu0
    %vm669 = vcmask 392192
    %670 = vst.msk [vmem:[#allocation14] sm:$0xff] %vm669, %v607
    %671 = vst.msk [vmem:[#allocation14 + $0x8] sm:$0xff] %vm669, %v610
    %672 = vst.msk [vmem:[#allocation14 + $0x10] sm:$0xff] %vm669, %v615
    %673 = vst.msk [vmem:[#allocation14 + $0x18] sm:$0xff] %vm669, %v618
    %674 = vst.msk [vmem:[#allocation14 + $0x20] sm:$0xff] %vm669, %v623
    %675 = vst.msk [vmem:[#allocation14 + $0x28] sm:$0xff] %vm669, %v626
    %676 = vst.msk [vmem:[#allocation14 + $0x30] sm:$0xff] %vm669, %v631
    %677 = vst.msk [vmem:[#allocation14 + $0x38] sm:$0xff] %vm669, %v634
    %678 = vst.msk [vmem:[#allocation14 + $0x40] sm:$0xff] %vm669, %v639
    %679 = vst.msk [vmem:[#allocation14 + $0x48] sm:$0xff] %vm669, %v642
    %680 = vst.msk [vmem:[#allocation14 + $0x50] sm:$0xff] %vm669, %v647
    %681 = vst.msk [vmem:[#allocation14 + $0x58] sm:$0xff] %vm669, %v650
    %682 = vst.msk [vmem:[#allocation14 + $0x60] sm:$0xff] %vm669, %v655
    %683 = vst.msk [vmem:[#allocation14 + $0x68] sm:$0xff] %vm669, %v658
    %684 = vst.msk [vmem:[#allocation14 + $0x70] sm:$0xff] %vm669, %v663
    %685 = vst.msk [vmem:[#allocation14 + $0x78] sm:$0xff] %vm669, %v666
    // Predicated region
    $region58: #{run.8} parent=1 // pred_check
      _
    $region59: #{run.8} parent=1 // pred_check_branch
      %687 = sbr.rel (0) target = $region61
    $region60: #{run.8} parent=1 // pred_region
      %s689 = ssub.s32 2048, 2048
      %690 = vsyncadd [#allocation4], %s689
      %s691 = sshll.u32 [#allocation14], 4
      %s692 = int_to_ptr.vmem [resolvable:$true] %s691
      %697 = dma.vmem_to_hbm [thread:$0]  %s692, 2048, %s7, [#allocation4], 128, 128, 8
    $region61: #{run.8} parent=1 // pred_fallthru
      _
    // Predicated region
    $region62: #{run.8} parent=1 // pred_check
      _
    $region63: #{run.8} parent=1 // pred_check_branch
      %699 = sbr.rel (0) target = $region65
    $region64: #{run.8} parent=1 // pred_region
      %700 = dma.done [#allocation4], 2048
    $region65: #{run.8} parent=1 // pred_fallthru
      _
    %701 = vsyncpa [#allocation3], 1
    %702 = vsyncpa [#allocation6], 1
    %703 = vsyncpa [#allocation9], 1
    %704 = vsyncpa [#allocation12], 1
    %705 = vsyncpa [#allocation4], 1

// kernel: run.9
$region0: #{run.9}
  #allocation0 [shape = 'u32[]', space=smem, size = 0x4, offset = 0x4, fixed_abs, tag = 'smem constant byte address 0x4 - core index']
  #allocation1 [shape = 'u32[144,128]{1,0:T(1,128)}', space=vmem, size = 0x12000, scoped, tag = 'internal scratch']
  %s0 = inlined_call_operand.hbm [shape: f32[2,10,10,32], index: 0, kind: input, shape index: {}]
  %s1 = inlined_call_operand.hbm [shape: f32[3,3,32], index: 1, kind: input, shape index: {}]
  %s2 = inlined_call_operand.hbm [shape: f32[1,32], index: 2, kind: input, shape index: {}]
  %s3 = inlined_call_operand.hbm [shape: f32[2,8,8,32], index: 3, kind: output, shape index: {}]
  %s4 = sld [smem:[#allocation0]]
  $region57: #{run.9} parent=0
    _
  %s6 = ssub.s32 1, %s4
  %s7 = scalar_select 0, %s6, %s4
  $region1: #{run.9} parent=0
    #allocation2 [shape = 'u8[163840]{0}', space=vmem, size = 0x28000, scoped, tag = 'input window, operand 0']
    #allocation3 [shape = 's32[2]{0}', space=sflag, size = 0x8, scoped, tag = 'scoped memory for run.9']
    #allocation4 [shape = 's32[2]{0}', space=sflag, size = 0x8, scoped, tag = 'scoped memory for run.9']
    #allocation5 [shape = 'u8[6144]{0}', space=vmem, size = 0x1800, scoped, tag = 'input window, operand 1, single buffered']
    #allocation6 [shape = 's32[1]{0}', space=sflag, size = 0x4, scoped, tag = 'scoped memory for run.9']
    #allocation7 [shape = 'u8[512]{0}', space=vmem, size = 0x400, scoped, tag = 'input window, operand 2, single buffered']
    #allocation8 [shape = 'u8[65536]{0}', space=vmem, size = 0x10000, scoped, tag = 'output window, operand 0']
    %8 = vsyncpa [#allocation3], 0
    %s9 = scalar_lea.sflag [#allocation3], 1
    %10 = vsyncpa %s9, 0
    %11 = vsyncpa [#allocation6], 0
    %12 = vsyncpa [#allocation4], 0
    %s13 = scalar_lea.sflag [#allocation4], 1
    %14 = vsyncpa %s13, 0
    loop: start=0, step=1, limit=4
    $region2: #{run.9} parent=1 // loop_pre_header
      _
    $region3: #{run.9} parent=1 // loop_header
      %s16 = sphi 0, %s20
      %p17 = scmp.ge.s32.totalorder %s16, 4
      %s26 = sphi 0, %s28
      %s29 = sphi 0, %s26
      %s30 = sphi 0, %s29
      %s46 = sphi 0, %s30
      %s50 = sphi 0, %s50
      %s52 = sphi 0, %s50
      %s53 = sphi 0, %s52
      %s67 = sphi 0, %s53
      %s71 = sphi 0, %s71
      %s73 = sphi 0, %s71
      %s74 = sphi 0, %s73
      %s88 = sphi 0, %s74
      %s94 = sphi 0, %s96
      %s97 = sphi 0, %s94
      %s98 = sphi 0, %s97
      %s114 = sphi 0, %s98
    $region4: #{run.9} parent=1 // loop_header_branch
      %19 = sbr.rel (%p17) target = $region8
    $region5: #{run.9} parent=1 // loop_body
      %s21 = ssub.s32 %s16, 1
      %s22 = ssub.s32 %s16, 2
      %s23 = sadd.s32 %s16, 1
      %s24 = ssub.s32 %s16, %s23
      %p25 = scmp.eq.s32.totalorder %s24, 0
      %s27 = sadd.s32 %s26, 1
      %s28 = scalar_select %p25, %s26, %s27
      %p31 = pneg %p25
      %p32 = scmp.eq.s32.totalorder %s16, 1
      %p33 = por %p31, %p32
      %p34 = scmp.ne.s32.totalorder %s26, %s29
      %p35 = scmp.eq.s32.totalorder %s16, 0
      %p36 = por %p34, %p35
      %p37 = scmp.ne.s32.totalorder %s26, %s29
      %p38 = scmp.eq.s32.totalorder %s21, 1
      %p39 = por %p37, %p38
      %p40 = scmp.ne.s32.totalorder %s29, %s30
      %p41 = scmp.eq.s32.totalorder %s21, 0
      %p42 = por %p40, %p41
      %p43 = scmp.ne.s32.totalorder %s29, %s30
      %p44 = scmp.eq.s32.totalorder %s22, 1
      %p45 = por %p43, %p44
      %p47 = scmp.ne.s32.totalorder %s30, %s46
      %p48 = scmp.eq.s32.totalorder %s22, 0
      %p49 = por %p47, %p48
      %s51 = sadd.s32 %s50, 1
      %p54 = scmp.eq.s32.totalorder %s16, 1
      %p55 = scmp.ne.s32.totalorder %s50, %s52
      %p56 = scmp.eq.s32.totalorder %s16, 0
      %p57 = por %p55, %p56
      %p58 = scmp.ne.s32.totalorder %s50, %s52
      %p59 = scmp.eq.s32.totalorder %s21, 1
      %p60 = por %p58, %p59
      %p61 = scmp.ne.s32.totalorder %s52, %s53
      %p62 = scmp.eq.s32.totalorder %s21, 0
      %p63 = por %p61, %p62
      %p64 = scmp.ne.s32.totalorder %s52, %s53
      %p65 = scmp.eq.s32.totalorder %s22, 1
      %p66 = por %p64, %p65
      %p68 = scmp.ne.s32.totalorder %s53, %s67
      %p69 = scmp.eq.s32.totalorder %s22, 0
      %p70 = por %p68, %p69
      %s72 = sadd.s32 %s71, 1
      %p75 = scmp.eq.s32.totalorder %s16, 1
      %p76 = scmp.ne.s32.totalorder %s71, %s73
      %p77 = scmp.eq.s32.totalorder %s16, 0
      %p78 = por %p76, %p77
      %p79 = scmp.ne.s32.totalorder %s71, %s73
      %p80 = scmp.eq.s32.totalorder %s21, 1
      %p81 = por %p79, %p80
      %p82 = scmp.ne.s32.totalorder %s73, %s74
      %p83 = scmp.eq.s32.totalorder %s21, 0
      %p84 = por %p82, %p83
      %p85 = scmp.ne.s32.totalorder %s73, %s74
      %p86 = scmp.eq.s32.totalorder %s22, 1
      %p87 = por %p85, %p86
      %p89 = scmp.ne.s32.totalorder %s74, %s88
      %p90 = scmp.eq.s32.totalorder %s22, 0
      %p91 = por %p89, %p90
      %s92 = ssub.s32 %s16, %s23
      %p93 = scmp.eq.s32.totalorder %s92, 0
      %s95 = sadd.s32 %s94, 1
      %s96 = scalar_select %p93, %s94, %s95
      %p99 = pneg %p93
      %p100 = scmp.eq.s32.totalorder %s16, 1
      %p101 = por %p99, %p100
      %p102 = scmp.ne.s32.totalorder %s94, %s97
      %p103 = scmp.eq.s32.totalorder %s16, 0
      %p104 = por %p102, %p103
      %p105 = scmp.ne.s32.totalorder %s94, %s97
      %p106 = scmp.eq.s32.totalorder %s21, 1
      %p107 = por %p105, %p106
      %p108 = scmp.ne.s32.totalorder %s97, %s98
      %p109 = scmp.eq.s32.totalorder %s21, 0
      %p110 = por %p108, %p109
      %p111 = scmp.ne.s32.totalorder %s97, %s98
      %p112 = scmp.eq.s32.totalorder %s22, 1
      %p113 = por %p111, %p112
      %p115 = scmp.ne.s32.totalorder %s98, %s114
      %p116 = scmp.eq.s32.totalorder %s22, 0
      %p117 = por %p115, %p116
      %p118 = scmp.le.s32.totalorder 1, %s16
      %p119 = scmp.lt.s32.totalorder %s16, 3
      %p120 = pnand %p118, %p119
      %p121 = pneg %p120
      // Predicated region
      $region9: #{run.9} parent=5 // pred_check
        _
      $region10: #{run.9} parent=5 // pred_check_branch
        %123 = sbr.rel (%p120) target = $region12
      $region11: #{run.9} parent=5 // pred_region
        %s124 = ssub.s32 %s16, 1
        // Predicated region
        $region13: #{run.9} parent=11 // pred_check
          %p125 = pneg %p63
        $region14: #{run.9} parent=11 // pred_check_branch
          %127 = sbr.rel (%p125) target = $region16
        $region15: #{run.9} parent=11 // pred_region
          %s129 = ssub.s32 192, 192
          %130 = vsyncadd [#allocation6], %s129
          %s131 = sshll.u32 [#allocation5], 4
          %s132 = int_to_ptr.vmem [resolvable:$true] %s131
          %137 = dma.hbm_to_vmem [thread:$0]  %s1, 192, %s132, [#allocation6], 64, 64, 4
        $region16: #{run.9} parent=11 // pred_fallthru
          _
        // Predicated region
        $region17: #{run.9} parent=11 // pred_check
          %p138 = pneg %p84
        $region18: #{run.9} parent=11 // pred_check_branch
          %140 = sbr.rel (%p138) target = $region20
        $region19: #{run.9} parent=11 // pred_region
          %s142 = ssub.s32 16, 16
          %143 = vsyncadd [#allocation6], %s142
          %s145 = sshll.u32 [#allocation7], 4
          %s146 = int_to_ptr.vmem [resolvable:$true] %s145
          %148 = dma.hbm_to_vmem [thread:$0]  %s2, 16, %s146, [#allocation6]
        $region20: #{run.9} parent=11 // pred_fallthru
          _
      $region12: #{run.9} parent=5 // pred_fallthru
        _
      %p149 = scmp.lt.s32.totalorder %s16, 2
      // Predicated region
      $region21: #{run.9} parent=5 // pred_check
        %p150 = pneg %p149
      $region22: #{run.9} parent=5 // pred_check_branch
        %152 = sbr.rel (%p150) target = $region24
      $region23: #{run.9} parent=5 // pred_region
        // Predicated region
        $region25: #{run.9} parent=23 // pred_check
          %p153 = pneg %p36
        $region26: #{run.9} parent=23 // pred_check_branch
          %155 = sbr.rel (%p153) target = $region28
        $region27: #{run.9} parent=23 // pred_region
          %s156 = sand.u32 %s26, 1
          %s157 = scalar_lea.sflag [#allocation3], %s156
          %s158 = sand.u32 %s26, 1
          %s159 = smul.addr %s158, 160
          %s160 = scalar_lea.vmem [#allocation2], %s159
          %s162 = ssub.s32 2560, 2560
          %163 = vsyncadd %s157, %s162
          %s164 = smul.addr %s16, 20
          %s165 = smul.addr %s164, 128
          %s166 = scalar_lea.hbm %s0, %s165
          %s167 = sshll.u32 %s160, 4
          %s168 = int_to_ptr.vmem [resolvable:$true] %s167
          %173 = dma.hbm_to_vmem [thread:$0]  %s166, 2560, %s168, %s157, 128, 128, 8
        $region28: #{run.9} parent=23 // pred_fallthru
          _
      $region24: #{run.9} parent=5 // pred_fallthru
        _
      %p174 = scmp.le.s32.totalorder 1, %s16
      %p175 = scmp.lt.s32.totalorder %s16, 3
      %p176 = pnand %p174, %p175
      %p177 = pneg %p176
      // Predicated region
      $region29: #{run.9} parent=5 // pred_check
        _
      $region30: #{run.9} parent=5 // pred_check_branch
        %179 = sbr.rel (%p176) target = $region32
      $region31: #{run.9} parent=5 // pred_region
        %s180 = ssub.s32 %s16, 1
        %s181 = sand.u32 %s29, 1
        %s182 = scalar_lea.sflag [#allocation3], %s181
        %s183 = sand.u32 %s29, 1
        %s184 = smul.addr %s183, 160
        %s185 = scalar_lea.vmem [#allocation2], %s184
        // Predicated region
        $region33: #{run.9} parent=31 // pred_check
          %p186 = pneg %p42
        $region34: #{run.9} parent=31 // pred_check_branch
          %188 = sbr.rel (%p186) target = $region36
        $region35: #{run.9} parent=31 // pred_region
          %189 = dma.done %s182, 2560
        $region36: #{run.9} parent=31 // pred_fallthru
          _
        // Predicated region
        $region37: #{run.9} parent=31 // pred_check
          %p190 = pneg %p63
        $region38: #{run.9} parent=31 // pred_check_branch
          %192 = sbr.rel (%p190) target = $region40
        $region39: #{run.9} parent=31 // pred_region
          %193 = dma.done [#allocation6], 192
        $region40: #{run.9} parent=31 // pred_fallthru
          _
        // Predicated region
        $region41: #{run.9} parent=31 // pred_check
          %p194 = pneg %p84
        $region42: #{run.9} parent=31 // pred_check_branch
          %196 = sbr.rel (%p194) target = $region44
        $region43: #{run.9} parent=31 // pred_region
          %197 = dma.done [#allocation6], 16
        $region44: #{run.9} parent=31 // pred_fallthru
          _
        %s198 = sand.u32 %s29, 1
        %s199 = scalar_lea.sflag [#allocation3], %s198
        %s200 = sand.u32 %s29, 1
        %s201 = smul.addr %s200, 160
        %s202 = scalar_lea.vmem [#allocation2], %s201
        %p203 = pneg %p42
        %p204 = pneg %p39
        %p205 = pneg %p63
        %p206 = pneg %p60
        %p207 = pneg %p84
        %p208 = pneg %p81
        %p209 = pneg %p110
        %p210 = pneg %p107
        %s211 = sand.u32 %s97, 1
        %s212 = scalar_lea.sflag [#allocation4], %s211
        %s213 = sand.u32 %s97, 1
        %s214 = smul.addr %s213, 64
        %s215 = scalar_lea.vmem [#allocation8], %s214
        %v216 = vld [vmem:[%s185] sm:$0xff]
        %v217 = vld [vmem:[%s185 + $0x8] sm:$0x3]
        %v218 = vld [vmem:[%s185 + $0x10] sm:$0xff]
        %v219 = vld [vmem:[%s185 + $0x18] sm:$0x3]
        %v220 = vld [vmem:[%s185 + $0x20] sm:$0xff]
        %v221 = vld [vmem:[%s185 + $0x28] sm:$0x3]
        %v222 = vld [vmem:[%s185 + $0x30] sm:$0xff]
        %v223 = vld [vmem:[%s185 + $0x38] sm:$0x3]
        %v224 = vld [vmem:[%s185 + $0x40] sm:$0xff]
        %v225 = vld [vmem:[%s185 + $0x48] sm:$0x3]
        %v226 = vld [vmem:[%s185 + $0x50] sm:$0xff]
        %v227 = vld [vmem:[%s185 + $0x58] sm:$0x3]
        %v228 = vld [vmem:[%s185 + $0x60] sm:$0xff]
        %v229 = vld [vmem:[%s185 + $0x68] sm:$0x3]
        %v230 = vld [vmem:[%s185 + $0x70] sm:$0xff]
        %v231 = vld [vmem:[%s185 + $0x78] sm:$0x3]
        %v232 = vld [vmem:[%s185 + $0x80] sm:$0xff]
        %v233 = vld [vmem:[%s185 + $0x88] sm:$0x3]
        %v234 = vld [vmem:[%s185 + $0x90] sm:$0xff]
        %v235 = vld [vmem:[%s185 + $0x98] sm:$0x3]
        %v236 = vld [vmem:[#allocation5] sm:$0x7]
        %v237 = vld [vmem:[#allocation5 + $0x4] sm:$0x7]
        %v238 = vld [vmem:[#allocation5 + $0x8] sm:$0x7]
        %v239 = vlaneseq
        %v240 = vshrl.u32 %v239, 7
        %v241 = vsub.s32 0, %v240
        %v242 = vrot.slane %v236, %v241
        %v243 = vmul.f32 %v216, %v242
        %v244 = vmul.f32 %v218, %v242
        %v245 = vmul.f32 %v220, %v242
        %v246 = vmul.f32 %v222, %v242
        %v247 = vmul.f32 %v224, %v242
        %v248 = vmul.f32 %v226, %v242
        %v249 = vmul.f32 %v228, %v242
        %v250 = vmul.f32 %v230, %v242
        %v251 = vadd.f32 %v243, 0.0
        %v252 = vadd.f32 %v244, 0.0
        %v253 = vadd.f32 %v245, 0.0
        %v254 = vadd.f32 %v246, 0.0
        %v255 = vadd.f32 %v247, 0.0
        %v256 = vadd.f32 %v248, 0.0
        %v257 = vadd.f32 %v249, 0.0
        %v258 = vadd.f32 %v250, 0.0
        %v259 = vlaneseq
        %v260 = vshrl.u32 %v259, 7
        %v261 = vsub.s32 1, %v260
        %v262 = vrot.slane %v236, %v261
        %v263 = vmul.f32 %v216, %v262
        %v264 = vmul.f32 %v217, %v262
        %v265 = vmul.f32 %v218, %v262
        %v266 = vmul.f32 %v219, %v262
        %v267 = vmul.f32 %v220, %v262
        %v268 = vmul.f32 %v221, %v262
        %v269 = vmul.f32 %v222, %v262
        %v270 = vmul.f32 %v223, %v262
        %v271 = vmul.f32 %v224, %v262
        %v272 = vmul.f32 %v225, %v262
        %v273 = vmul.f32 %v226, %v262
        %v274 = vmul.f32 %v227, %v262
        %v275 = vmul.f32 %v228, %v262
        %v276 = vmul.f32 %v229, %v262
        %v277 = vmul.f32 %v230, %v262
        %v278 = vmul.f32 %v231, %v262
        %vm295 = vcmask 1046528
        %v296 = vrot.slane %v263, 1
        %v297 = vrot.slane %v264, 1
        %v298 = vsel %vm295, %v296, %v297
        %v299 = vrot.slane %v265, 1
        %v300 = vrot.slane %v266, 1
        %v301 = vsel %vm295, %v299, %v300
        %v302 = vrot.slane %v267, 1
        %v303 = vrot.slane %v268, 1
        %v304 = vsel %vm295, %v302, %v303
        %v305 = vrot.slane %v269, 1
        %v306 = vrot.slane %v270, 1
        %v307 = vsel %vm295, %v305, %v306
        %v308 = vrot.slane %v271, 1
        %v309 = vrot.slane %v272, 1
        %v310 = vsel %vm295, %v308, %v309
        %v311 = vrot.slane %v273, 1
        %v312 = vrot.slane %v274, 1
        %v313 = vsel %vm295, %v311, %v312
        %v314 = vrot.slane %v275, 1
        %v315 = vrot.slane %v276, 1
        %v316 = vsel %vm295, %v314, %v315
        %v317 = vrot.slane %v277, 1
        %v318 = vrot.slane %v278, 1
        %v319 = vsel %vm295, %v317, %v318
        %v328 = vadd.f32 %v251, %v298
        %v329 = vadd.f32 %v252, %v301
        %v330 = vadd.f32 %v253, %v304
        %v331 = vadd.f32 %v254, %v307
        %v332 = vadd.f32 %v255, %v310
        %v333 = vadd.f32 %v256, %v313
        %v334 = vadd.f32 %v257, %v316
        %v335 = vadd.f32 %v258, %v319
        %v336 = vlaneseq
        %v337 = vshrl.u32 %v336, 7
        %v338 = vsub.s32 2, %v337
        %v339 = vrot.slane %v236, %v338
        %v340 = vmul.f32 %v216, %v339
        %v341 = vmul.f32 %v217, %v339
        %v342 = vmul.f32 %v218, %v339
        %v343 = vmul.f32 %v219, %v339
        %v344 = vmul.f32 %v220, %v339
        %v345 = vmul.f32 %v221, %v339
        %v346 = vmul.f32 %v222, %v339
        %v347 = vmul.f32 %v223, %v339
        %v348 = vmul.f32 %v224, %v339
        %v349 = vmul.f32 %v225, %v339
        %v350 = vmul.f32 %v226, %v339
        %v351 = vmul.f32 %v227, %v339
        %v352 = vmul.f32 %v228, %v339
        %v353 = vmul.f32 %v229, %v339
        %v354 = vmul.f32 %v230, %v339
        %v355 = vmul.f32 %v231, %v339
        %vm372 = vcmask 1045504
        %v373 = vrot.slane %v340, 2
        %v374 = vrot.slane %v341, 2
        %v375 = vsel %vm372, %v373, %v374
        %v376 = vrot.slane %v342, 2
        %v377 = vrot.slane %v343, 2
        %v378 = vsel %vm372, %v376, %v377
        %v379 = vrot.slane %v344, 2
        %v380 = vrot.slane %v345, 2
        %v381 = vsel %vm372, %v379, %v380
        %v382 = vrot.slane %v346, 2
        %v383 = vrot.slane %v347, 2
        %v384 = vsel %vm372, %v382, %v383
        %v385 = vrot.slane %v348, 2
        %v386 = vrot.slane %v349, 2
        %v387 = vsel %vm372, %v385, %v386
        %v388 = vrot.slane %v350, 2
        %v389 = vrot.slane %v351, 2
        %v390 = vsel %vm372, %v388, %v389
        %v391 = vrot.slane %v352, 2
        %v392 = vrot.slane %v353, 2
        %v393 = vsel %vm372, %v391, %v392
        %v394 = vrot.slane %v354, 2
        %v395 = vrot.slane %v355, 2
        %v396 = vsel %vm372, %v394, %v395
        %v405 = vadd.f32 %v328, %v375
        %v406 = vadd.f32 %v329, %v378
        %v407 = vadd.f32 %v330, %v381
        %v408 = vadd.f32 %v331, %v384
        %v409 = vadd.f32 %v332, %v387
        %v410 = vadd.f32 %v333, %v390
        %v411 = vadd.f32 %v334, %v393
        %v412 = vadd.f32 %v335, %v396
        %v413 = vlaneseq
        %v414 = vshrl.u32 %v413, 7
        %v415 = vsub.s32 0, %v414
        %v416 = vrot.slane %v237, %v415
        %v417 = vmul.f32 %v218, %v416
        %v418 = vmul.f32 %v220, %v416
        %v419 = vmul.f32 %v222, %v416
        %v420 = vmul.f32 %v224, %v416
        %v421 = vmul.f32 %v226, %v416
        %v422 = vmul.f32 %v228, %v416
        %v423 = vmul.f32 %v230, %v416
        %v424 = vmul.f32 %v232, %v416
        %v425 = vadd.f32 %v405, %v417
        %v426 = vadd.f32 %v406, %v418
        %v427 = vadd.f32 %v407, %v419
        %v428 = vadd.f32 %v408, %v420
        %v429 = vadd.f32 %v409, %v421
        %v430 = vadd.f32 %v410, %v422
        %v431 = vadd.f32 %v411, %v423
        %v432 = vadd.f32 %v412, %v424
        %v433 = vlaneseq
        %v434 = vshrl.u32 %v433, 7
        %v435 = vsub.s32 1, %v434
        %v436 = vrot.slane %v237, %v435
        %v437 = vmul.f32 %v218, %v436
        %v438 = vmul.f32 %v219, %v436
        %v439 = vmul.f32 %v220, %v436
        %v440 = vmul.f32 %v221, %v436
        %v441 = vmul.f32 %v222, %v436
        %v442 = vmul.f32 %v223, %v436
        %v443 = vmul.f32 %v224, %v436
        %v444 = vmul.f32 %v225, %v436
        %v445 = vmul.f32 %v226, %v436
        %v446 = vmul.f32 %v227, %v436
        %v447 = vmul.f32 %v228, %v436
        %v448 = vmul.f32 %v229, %v436
        %v449 = vmul.f32 %v230, %v436
        %v450 = vmul.f32 %v231, %v436
        %v451 = vmul.f32 %v232, %v436
        %v452 = vmul.f32 %v233, %v436
        %v469 = vrot.slane %v437, 1
        %v470 = vrot.slane %v438, 1
        %v471 = vsel %vm295, %v469, %v470
        %v472 = vrot.slane %v439, 1
        %v473 = vrot.slane %v440, 1
        %v474 = vsel %vm295, %v472, %v473
        %v475 = vrot.slane %v441, 1
        %v476 = vrot.slane %v442, 1
        %v477 = vsel %vm295, %v475, %v476
        %v478 = vrot.slane %v443, 1
        %v479 = vrot.slane %v444, 1
        %v480 = vsel %vm295, %v478, %v479
        %v481 = vrot.slane %v445, 1
        %v482 = vrot.slane %v446, 1
        %v483 = vsel %vm295, %v481, %v482
        %v484 = vrot.slane %v447, 1
        %v485 = vrot.slane %v448, 1
        %v486 = vsel %vm295, %v484, %v485
        %v487 = vrot.slane %v449, 1
        %v488 = vrot.slane %v450, 1
        %v489 = vsel %vm295, %v487, %v488
        %v490 = vrot.slane %v451, 1
        %v491 = vrot.slane %v452, 1
        %v492 = vsel %vm295, %v490, %v491
        %v501 = vadd.f32 %v425, %v471
        %v502 = vadd.f32 %v426, %v474
        %v503 = vadd.f32 %v427, %v477
        %v504 = vadd.f32 %v428, %v480
        %v505 = vadd.f32 %v429, %v483
        %v506 = vadd.f32 %v430, %v486
        %v507 = vadd.f32 %v431, %v489
        %v508 = vadd.f32 %v432, %v492
        %v509 = vlaneseq
        %v510 = vshrl.u32 %v509, 7
        %v511 = vsub.s32 2, %v510
        %v512 = vrot.slane %v237, %v511
        %v513 = vmul.f32 %v218, %v512
        %v514 = vmul.f32 %v219, %v512
        %v515 = vmul.f32 %v220, %v512
        %v516 = vmul.f32 %v221, %v512
        %v517 = vmul.f32 %v222, %v512
        %v518 = vmul.f32 %v223, %v512
        %v519 = vmul.f32 %v224, %v512
        %v520 = vmul.f32 %v225, %v512
        %v521 = vmul.f32 %v226, %v512
        %v522 = vmul.f32 %v227, %v512
        %v523 = vmul.f32 %v228, %v512
        %v524 = vmul.f32 %v229, %v512
        %v525 = vmul.f32 %v230, %v512
        %v526 = vmul.f32 %v231, %v512
        %v527 = vmul.f32 %v232, %v512
        %v528 = vmul.f32 %v233, %v512
        %v545 = vrot.slane %v513, 2
        %v546 = vrot.slane %v514, 2
        %v547 = vsel %vm372, %v545, %v546
        %v548 = vrot.slane %v515, 2
        %v549 = vrot.slane %v516, 2
        %v550 = vsel %vm372, %v548, %v549
        %v551 = vrot.slane %v517, 2
        %v552 = vrot.slane %v518, 2
        %v553 = vsel %vm372, %v551, %v552
        %v554 = vrot.slane %v519, 2
        %v555 = vrot.slane %v520, 2
        %v556 = vsel %vm372, %v554, %v555
        %v557 = vrot.slane %v521, 2
        %v558 = vrot.slane %v522, 2
        %v559 = vsel %vm372, %v557, %v558
        %v560 = vrot.slane %v523, 2
        %v561 = vrot.slane %v524, 2
        %v562 = vsel %vm372, %v560, %v561
        %v563 = vrot.slane %v525, 2
        %v564 = vrot.slane %v526, 2
        %v565 = vsel %vm372, %v563, %v564
        %v566 = vrot.slane %v527, 2
        %v567 = vrot.slane %v528, 2
        %v568 = vsel %vm372, %v566, %v567
        %v577 = vadd.f32 %v501, %v547
        %v578 = vadd.f32 %v502, %v550
        %v579 = vadd.f32 %v503, %v553
        %v580 = vadd.f32 %v504, %v556
        %v581 = vadd.f32 %v505, %v559
        %v582 = vadd.f32 %v506, %v562
        %v583 = vadd.f32 %v507, %v565
        %v584 = vadd.f32 %v508, %v568
        %v585 = vlaneseq
        %v586 = vshrl.u32 %v585, 7
        %v587 = vsub.s32 0, %v586
        %v588 = vrot.slane %v238, %v587
        %v589 = vmul.f32 %v220, %v588
        %v590 = vmul.f32 %v222, %v588
        %v591 = vmul.f32 %v224, %v588
        %v592 = vmul.f32 %v226, %v588
        %v593 = vmul.f32 %v228, %v588
        %v594 = vmul.f32 %v230, %v588
        %v595 = vmul.f32 %v232, %v588
        %v596 = vmul.f32 %v234, %v588
        %v597 = vadd.f32 %v577, %v589
        %v598 = vadd.f32 %v578, %v590
        %v599 = vadd.f32 %v579, %v591
        %v600 = vadd.f32 %v580, %v592
        %v601 = vadd.f32 %v581, %v593
        %v602 = vadd.f32 %v582, %v594
        %v603 = vadd.f32 %v583, %v595
        %v604 = vadd.f32 %v584, %v596
        %v605 = vlaneseq
        %v606 = vshrl.u32 %v605, 7
        %v607 = vsub.s32 1, %v606
        %v608 = vrot.slane %v238, %v607
        %v609 = vmul.f32 %v220, %v608
        %v610 = vmul.f32 %v221, %v608
        %v611 = vmul.f32 %v222, %v608
        %v612 = vmul.f32 %v223, %v608
        %v613 = vmul.f32 %v224, %v608
        %v614 = vmul.f32 %v225, %v608
        %v615 = vmul.f32 %v226, %v608
        %v616 = vmul.f32 %v227, %v608
        %v617 = vmul.f32 %v228, %v608
        %v618 = vmul.f32 %v229, %v608
        %v619 = vmul.f32 %v230, %v608
        %v620 = vmul.f32 %v231, %v608
        %v621 = vmul.f32 %v232, %v608
        %v622 = vmul.f32 %v233, %v608
        %v623 = vmul.f32 %v234, %v608
        %v624 = vmul.f32 %v235, %v608
        %v641 = vrot.slane %v609, 1
        %v642 = vrot.slane %v610, 1
        %v643 = vsel %vm295, %v641, %v642
        %v644 = vrot.slane %v611, 1
        %v645 = vrot.slane %v612, 1
        %v646 = vsel %vm295, %v644, %v645
        %v647 = vrot.slane %v613, 1
        %v648 = vrot.slane %v614, 1
        %v649 = vsel %vm295, %v647, %v648
        %v650 = vrot.slane %v615, 1
        %v651 = vrot.slane %v616, 1
        %v652 = vsel %vm295, %v650, %v651
        %v653 = vrot.slane %v617, 1
        %v654 = vrot.slane %v618, 1
        %v655 = vsel %vm295, %v653, %v654
        %v656 = vrot.slane %v619, 1
        %v657 = vrot.slane %v620, 1
        %v658 = vsel %vm295, %v656, %v657
        %v659 = vrot.slane %v621, 1
        %v660 = vrot.slane %v622, 1
        %v661 = vsel %vm295, %v659, %v660
        %v662 = vrot.slane %v623, 1
        %v663 = vrot.slane %v624, 1
        %v664 = vsel %vm295, %v662, %v663
        %v673 = vadd.f32 %v597, %v643
        %v674 = vadd.f32 %v598, %v646
        %v675 = vadd.f32 %v599, %v649
        %v676 = vadd.f32 %v600, %v652
        %v677 = vadd.f32 %v601, %v655
        %v678 = vadd.f32 %v602, %v658
        %v679 = vadd.f32 %v603, %v661
        %v680 = vadd.f32 %v604, %v664
        %v681 = vlaneseq
        %v682 = vshrl.u32 %v681, 7
        %v683 = vsub.s32 2, %v682
        %v684 = vrot.slane %v238, %v683
        %v685 = vmul.f32 %v220, %v684
        %v686 = vmul.f32 %v221, %v684
        %v687 = vmul.f32 %v222, %v684
        %v688 = vmul.f32 %v223, %v684
        %v689 = vmul.f32 %v224, %v684
        %v690 = vmul.f32 %v225, %v684
        %v691 = vmul.f32 %v226, %v684
        %v692 = vmul.f32 %v227, %v684
        %v693 = vmul.f32 %v228, %v684
        %v694 = vmul.f32 %v229, %v684
        %v695 = vmul.f32 %v230, %v684
        %v696 = vmul.f32 %v231, %v684
        %v697 = vmul.f32 %v232, %v684
        %v698 = vmul.f32 %v233, %v684
        %v699 = vmul.f32 %v234, %v684
        %v700 = vmul.f32 %v235, %v684
        %v717 = vrot.slane %v685, 2
        %v718 = vrot.slane %v686, 2
        %v719 = vsel %vm372, %v717, %v718
        %v720 = vrot.slane %v687, 2
        %v721 = vrot.slane %v688, 2
        %v722 = vsel %vm372, %v720, %v721
        %v723 = vrot.slane %v689, 2
        %v724 = vrot.slane %v690, 2
        %v725 = vsel %vm372, %v723, %v724
        %v726 = vrot.slane %v691, 2
        %v727 = vrot.slane %v692, 2
        %v728 = vsel %vm372, %v726, %v727
        %v729 = vrot.slane %v693, 2
        %v730 = vrot.slane %v694, 2
        %v731 = vsel %vm372, %v729, %v730
        %v732 = vrot.slane %v695, 2
        %v733 = vrot.slane %v696, 2
        %v734 = vsel %vm372, %v732, %v733
        %v735 = vrot.slane %v697, 2
        %v736 = vrot.slane %v698, 2
        %v737 = vsel %vm372, %v735, %v736
        %v738 = vrot.slane %v699, 2
        %v739 = vrot.slane %v700, 2
        %v740 = vsel %vm372, %v738, %v739
        %v749 = vadd.f32 %v673, %v719
        %v750 = vadd.f32 %v674, %v722
        %v751 = vadd.f32 %v675, %v725
        %v752 = vadd.f32 %v676, %v728
        %v753 = vadd.f32 %v677, %v731
        %v754 = vadd.f32 %v678, %v734
        %v755 = vadd.f32 %v679, %v737
        %v756 = vadd.f32 %v680, %v740
        %v757 = vld [vmem:[#allocation7] sm:$0x1]
        %v759 = vlaneseq
        %v760 = vshrl.u32 %v759, 7
        %v761 = vsub.s32 0, %v760
        %v762 = vrot.slane %v757, %v761
        %v764 = vadd.f32 %v749, %v762
        %v765 = vadd.f32 %v750, %v762
        %v766 = vadd.f32 %v751, %v762
        %v767 = vadd.f32 %v752, %v762
        %v768 = vadd.f32 %v753, %v762
        %v769 = vadd.f32 %v754, %v762
        %v770 = vadd.f32 %v755, %v762
        %v771 = vadd.f32 %v756, %v762
        %vm772 = vcmask 261120
        %773 = vst.msk [vmem:[%s215] sm:$0xff] %vm772, %v764
        %774 = vst.msk [vmem:[%s215 + $0x8] sm:$0xff] %vm772, %v765
        %775 = vst.msk [vmem:[%s215 + $0x10] sm:$0xff] %vm772, %v766
        %776 = vst.msk [vmem:[%s215 + $0x18] sm:$0xff] %vm772, %v767
        %777 = vst.msk [vmem:[%s215 + $0x20] sm:$0xff] %vm772, %v768
        %778 = vst.msk [vmem:[%s215 + $0x28] sm:$0xff] %vm772, %v769
        %779 = vst.msk [vmem:[%s215 + $0x30] sm:$0xff] %vm772, %v770
        %780 = vst.msk [vmem:[%s215 + $0x38] sm:$0xff] %vm772, %v771
        %s781 = sand.u32 %s97, 1
        %s782 = scalar_lea.sflag [#allocation4], %s781
        %s783 = sand.u32 %s97, 1
        %s784 = smul.addr %s783, 64
        %s785 = scalar_lea.vmem [#allocation8], %s784
        // Predicated region
        $region45: #{run.9} parent=31 // pred_check
          %p786 = pneg %p107
        $region46: #{run.9} parent=31 // pred_check_branch
          %788 = sbr.rel (%p786) target = $region48
        $region47: #{run.9} parent=31 // pred_region
          %s790 = ssub.s32 1024, 1024
          %791 = vsyncadd %s782, %s790
          %s792 = smul.addr %s21, 8
          %s793 = smul.addr %s792, 128
          %s794 = scalar_lea.hbm %s3, %s793
          %s795 = sshll.u32 %s785, 4
          %s796 = int_to_ptr.vmem [resolvable:$true] %s795
          %801 = dma.vmem_to_hbm [thread:$0]  %s796, 1024, %s794, %s782, 128, 128, 8
        $region48: #{run.9} parent=31 // pred_fallthru
          _
      $region32: #{run.9} parent=5 // pred_fallthru
        _
      %p802 = scmp.le.s32.totalorder 2, %s16
      // Predicated region
      $region49: #{run.9} parent=5 // pred_check
        %p803 = pneg %p802
      $region50: #{run.9} parent=5 // pred_check_branch
        %805 = sbr.rel (%p803) target = $region52
      $region51: #{run.9} parent=5 // pred_region
        %s806 = ssub.s32 %s16, 2
        // Predicated region
        $region53: #{run.9} parent=51 // pred_check
          %p807 = pneg %p113
        $region54: #{run.9} parent=51 // pred_check_branch
          %809 = sbr.rel (%p807) target = $region56
        $region55: #{run.9} parent=51 // pred_region
          %s810 = sand.u32 %s98, 1
          %s811 = scalar_lea.sflag [#allocation4], %s810
          %s812 = sand.u32 %s98, 1
          %s813 = smul.addr %s812, 64
          %s814 = scalar_lea.vmem [#allocation8], %s813
          %815 = dma.done %s811, 1024
        $region56: #{run.9} parent=51 // pred_fallthru
          _
      $region52: #{run.9} parent=5 // pred_fallthru
        _
    $region6: #{run.9} parent=1 // loop_footer
      %s20 = sadd.s32 1, %s16
    $region7: #{run.9} parent=1 // loop_footer_branch
      %15 = sbr.rel target = $region3
    $region8: #{run.9} parent=1 // loop_exit
      _
    %816 = vsyncpa [#allocation3], 1
    %s817 = scalar_lea.sflag [#allocation3], 1
    %818 = vsyncpa %s817, 1
    %819 = vsyncpa [#allocation6], 1
    %820 = vsyncpa [#allocation4], 1
    %s821 = scalar_lea.sflag [#allocation4], 1
    %822 = vsyncpa %s821, 1

// kernel: run.11
$region0: #{run.11}
  #allocation0 [shape = 'u32[]', space=smem, size = 0x4, offset = 0x4, fixed_abs, tag = 'smem constant byte address 0x4 - core index']
  #allocation1 [shape = 'u32[144,128]{1,0:T(1,128)}', space=vmem, size = 0x12000, scoped, tag = 'internal scratch']
  %s0 = inlined_call_operand.hbm [shape: f32[2,4,16,48], index: 0, kind: input, shape index: {}]
  %s1 = inlined_call_operand.hbm [shape: f32[2,1,16], index: 1, kind: input, shape index: {}]
  %s2 = inlined_call_operand.hbm [shape: f32[2,16,16], index: 2, kind: input, shape index: {}]
  %s3 = inlined_call_operand.hbm [shape: f32[2,4,16,16], index: 3, kind: output, shape index: {}]
  %s4 = sld [smem:[#allocation0]]
  $region57: #{run.11} parent=0
    _
  %s6 = ssub.s32 1, %s4
  %s7 = scalar_select 0, %s6, %s4
  $region1: #{run.11} parent=0
    #allocation2 [shape = 'u8[65536]{0}', space=vmem, size = 0x10000, scoped, tag = 'input window, operand 0']
    #allocation3 [shape = 's32[2]{0}', space=sflag, size = 0x8, scoped, tag = 'scoped memory for run.11']
    #allocation4 [shape = 's32[2]{0}', space=sflag, size = 0x8, scoped, tag = 'scoped memory for run.11']
    #allocation5 [shape = 'u8[1024]{0}', space=vmem, size = 0x400, scoped, tag = 'input window, operand 1']
    #allocation6 [shape = 's32[2]{0}', space=sflag, size = 0x8, scoped, tag = 'scoped memory for run.11']
    #allocation7 [shape = 'u8[16384]{0}', space=vmem, size = 0x4000, scoped, tag = 'input window, operand 2, single buffered']
    #allocation8 [shape = 'u8[65536]{0}', space=vmem, size = 0x10000, scoped, tag = 'output window, operand 0']
    %8 = vsyncpa [#allocation3], 0
    %s9 = scalar_lea.sflag [#allocation3], 1
    %10 = vsyncpa %s9, 0
    %11 = vsyncpa [#allocation6], 0
    %s12 = scalar_lea.sflag [#allocation6], 1
    %13 = vsyncpa %s12, 0
    %14 = vsyncpa [#allocation4], 0
    %s15 = scalar_lea.sflag [#allocation4], 1
    %16 = vsyncpa %s15, 0
    loop: start=0, step=1, limit=4
    $region2: #{run.11} parent=1 // loop_pre_header
      _
    $region3: #{run.11} parent=1 // loop_header
      %s18 = sphi 0, %s22
      %p19 = scmp.ge.s32.totalorder %s18, 4
      %s25 = sphi 0, %s37
      %s26 = sphi 0, %s33
      %s27 = sphi 0, %s25
      %s28 = sphi 0, %s26
      %s29 = sphi 0, %s27
      %s30 = sphi 0, %s28
      %s42 = sphi 0, %s44
      %s45 = sphi 0, %s42
      %s46 = sphi 0, %s45
      %s62 = sphi 0, %s46
      %s68 = sphi 0, %s70
      %s71 = sphi 0, %s68
      %s72 = sphi 0, %s71
      %s88 = sphi 0, %s72
      %s92 = sphi 0, %s92
      %s94 = sphi 0, %s92
      %s95 = sphi 0, %s94
      %s109 = sphi 0, %s95
      %s117 = sphi 0, %s119
      %s120 = sphi 0, %s117
      %s121 = sphi 0, %s120
      %s137 = sphi 0, %s121
    $region4: #{run.11} parent=1 // loop_header_branch
      %21 = sbr.rel (%p19) target = $region8
    $region5: #{run.11} parent=1 // loop_body
      %s23 = ssub.s32 %s18, 1
      %s24 = ssub.s32 %s18, 2
      %s31 = sadd.s32 1, %s26
      %p32 = scmp.ge.s32.totalorder %s31, 1
      %s33 = scalar_select %p32, 0, %s31
      %s34 = sadd.s32 1, %s25
      %s35 = scalar_select %p32, %s34, %s25
      %p36 = scmp.ge.s32.totalorder %s35, 2
      %s37 = scalar_select %p36, 0, %s35
      %s38 = ssub.s32 %s25, %s37
      %s39 = ssub.s32 %s26, %s33
      %s40 = sor.u32 %s38, %s39
      %p41 = scmp.eq.s32.totalorder %s40, 0
      %s43 = sadd.s32 %s42, 1
      %s44 = scalar_select %p41, %s42, %s43
      %p47 = pneg %p41
      %p48 = scmp.eq.s32.totalorder %s18, 1
      %p49 = por %p47, %p48
      %p50 = scmp.ne.s32.totalorder %s42, %s45
      %p51 = scmp.eq.s32.totalorder %s18, 0
      %p52 = por %p50, %p51
      %p53 = scmp.ne.s32.totalorder %s42, %s45
      %p54 = scmp.eq.s32.totalorder %s23, 1
      %p55 = por %p53, %p54
      %p56 = scmp.ne.s32.totalorder %s45, %s46
      %p57 = scmp.eq.s32.totalorder %s23, 0
      %p58 = por %p56, %p57
      %p59 = scmp.ne.s32.totalorder %s45, %s46
      %p60 = scmp.eq.s32.totalorder %s24, 1
      %p61 = por %p59, %p60
      %p63 = scmp.ne.s32.totalorder %s46, %s62
      %p64 = scmp.eq.s32.totalorder %s24, 0
      %p65 = por %p63, %p64
      %s66 = ssub.s32 %s25, %s37
      %p67 = scmp.eq.s32.totalorder %s66, 0
      %s69 = sadd.s32 %s68, 1
      %s70 = scalar_select %p67, %s68, %s69
      %p73 = pneg %p67
      %p74 = scmp.eq.s32.totalorder %s18, 1
      %p75 = por %p73, %p74
      %p76 = scmp.ne.s32.totalorder %s68, %s71
      %p77 = scmp.eq.s32.totalorder %s18, 0
      %p78 = por %p76, %p77
      %p79 = scmp.ne.s32.totalorder %s68, %s71
      %p80 = scmp.eq.s32.totalorder %s23, 1
      %p81 = por %p79, %p80
      %p82 = scmp.ne.s32.totalorder %s71, %s72
      %p83 = scmp.eq.s32.totalorder %s23, 0
      %p84 = por %p82, %p83
      %p85 = scmp.ne.s32.totalorder %s71, %s72
      %p86 = scmp.eq.s32.totalorder %s24, 1
      %p87 = por %p85, %p86
      %p89 = scmp.ne.s32.totalorder %s72, %s88
      %p90 = scmp.eq.s32.totalorder %s24, 0
      %p91 = por %p89, %p90
      %s93 = sadd.s32 %s92, 1
      %p96 = scmp.eq.s32.totalorder %s18, 1
      %p97 = scmp.ne.s32.totalorder %s92, %s94
      %p98 = scmp.eq.s32.totalorder %s18, 0
      %p99 = por %p97, %p98
      %p100 = scmp.ne.s32.totalorder %s92, %s94
      %p101 = scmp.eq.s32.totalorder %s23, 1
      %p102 = por %p100, %p101
      %p103 = scmp.ne.s32.totalorder %s94, %s95
      %p104 = scmp.eq.s32.totalorder %s23, 0
      %p105 = por %p103, %p104
      %p106 = scmp.ne.s32.totalorder %s94, %s95
      %p107 = scmp.eq.s32.totalorder %s24, 1
      %p108 = por %p106, %p107
      %p110 = scmp.ne.s32.totalorder %s95, %s109
      %p111 = scmp.eq.s32.totalorder %s24, 0
      %p112 = por %p110, %p111
      %s113 = ssub.s32 %s25, %s37
      %s114 = ssub.s32 %s26, %s33
      %s115 = sor.u32 %s113, %s114
      %p116 = scmp.eq.s32.totalorder %s115, 0
      %s118 = sadd.s32 %s117, 1
      %s119 = scalar_select %p116, %s117, %s118
      %p122 = pneg %p116
      %p123 = scmp.eq.s32.totalorder %s18, 1
      %p124 = por %p122, %p123
      %p125 = scmp.ne.s32.totalorder %s117, %s120
      %p126 = scmp.eq.s32.totalorder %s18, 0
      %p127 = por %p125, %p126
      %p128 = scmp.ne.s32.totalorder %s117, %s120
      %p129 = scmp.eq.s32.totalorder %s23, 1
      %p130 = por %p128, %p129
      %p131 = scmp.ne.s32.totalorder %s120, %s121
      %p132 = scmp.eq.s32.totalorder %s23, 0
      %p133 = por %p131, %p132
      %p134 = scmp.ne.s32.totalorder %s120, %s121
      %p135 = scmp.eq.s32.totalorder %s24, 1
      %p136 = por %p134, %p135
      %p138 = scmp.ne.s32.totalorder %s121, %s137
      %p139 = scmp.eq.s32.totalorder %s24, 0
      %p140 = por %p138, %p139
      %p141 = scmp.le.s32.totalorder 1, %s18
      %p142 = scmp.lt.s32.totalorder %s18, 3
      %p143 = pnand %p141, %p142
      %p144 = pneg %p143
      // Predicated region
      $region9: #{run.11} parent=5 // pred_check
        _
      $region10: #{run.11} parent=5 // pred_check_branch
        %146 = sbr.rel (%p143) target = $region12
      $region11: #{run.11} parent=5 // pred_region
        %s147 = ssub.s32 %s18, 1
        // Predicated region
        $region13: #{run.11} parent=11 // pred_check
          %p148 = pneg %p105
        $region14: #{run.11} parent=11 // pred_check_branch
          %150 = sbr.rel (%p148) target = $region16
        $region15: #{run.11} parent=11 // pred_region
          %s152 = ssub.s32 512, 512
          %153 = vsyncadd [#allocation6], %s152
          %s154 = sshll.u32 [#allocation7], 4
          %s155 = int_to_ptr.vmem [resolvable:$true] %s154
          %160 = dma.hbm_to_vmem [thread:$0]  %s2, 512, %s155, [#allocation6], 128, 128, 8
        $region16: #{run.11} parent=11 // pred_fallthru
          _
      $region12: #{run.11} parent=5 // pred_fallthru
        _
      %p161 = scmp.lt.s32.totalorder %s18, 2
      // Predicated region
      $region17: #{run.11} parent=5 // pred_check
        %p162 = pneg %p161
      $region18: #{run.11} parent=5 // pred_check_branch
        %164 = sbr.rel (%p162) target = $region20
      $region19: #{run.11} parent=5 // pred_region
        // Predicated region
        $region21: #{run.11} parent=19 // pred_check
          %p165 = pneg %p52
        $region22: #{run.11} parent=19 // pred_check_branch
          %167 = sbr.rel (%p165) target = $region24
        $region23: #{run.11} parent=19 // pred_region
          %s168 = sand.u32 %s42, 1
          %s169 = scalar_lea.sflag [#allocation3], %s168
          %s170 = sand.u32 %s42, 1
          %s171 = smul.addr %s170, 64
          %s172 = scalar_lea.vmem [#allocation2], %s171
          %s173 = smul.u32 4, %s26
          %s175 = ssub.s32 1024, 1024
          %176 = vsyncadd %s169, %s175
          %s177 = smul.addr %s173, 2
          %s178 = smul.addr %s25, 8
          %s179 = sadd.s32 %s177, %s178
          %s180 = smul.addr %s179, 128
          %s181 = scalar_lea.hbm %s0, %s180
          %s182 = sshll.u32 %s172, 4
          %s183 = int_to_ptr.vmem [resolvable:$true] %s182
          %188 = dma.hbm_to_vmem [thread:$0]  %s181, 1024, %s183, %s169, 128, 128, 8
        $region24: #{run.11} parent=19 // pred_fallthru
          _
        // Predicated region
        $region25: #{run.11} parent=19 // pred_check
          %p189 = pneg %p78
        $region26: #{run.11} parent=19 // pred_check_branch
          %191 = sbr.rel (%p189) target = $region28
        $region27: #{run.11} parent=19 // pred_region
          %s192 = sand.u32 %s18, 1
          %s193 = scalar_lea.sflag [#allocation6], %s192
          %s194 = sand.u32 %s68, 1
          %s195 = scalar_lea.vmem [#allocation5], %s194
          %s197 = ssub.s32 16, 16
          %198 = vsyncadd %s193, %s197
          %s199 = smul.addr %s25, 16
          %s200 = scalar_lea.hbm %s1, %s199
          %s202 = sshll.u32 %s195, 4
          %s203 = int_to_ptr.vmem [resolvable:$true] %s202
          %205 = dma.hbm_to_vmem [thread:$0]  %s200, 16, %s203, %s193
        $region28: #{run.11} parent=19 // pred_fallthru
          _
      $region20: #{run.11} parent=5 // pred_fallthru
        _
      %p206 = scmp.le.s32.totalorder 1, %s18
      %p207 = scmp.lt.s32.totalorder %s18, 3
      %p208 = pnand %p206, %p207
      %p209 = pneg %p208
      // Predicated region
      $region29: #{run.11} parent=5 // pred_check
        _
      $region30: #{run.11} parent=5 // pred_check_branch
        %211 = sbr.rel (%p208) target = $region32
      $region31: #{run.11} parent=5 // pred_region
        %s212 = ssub.s32 %s18, 1
        %s213 = sand.u32 %s45, 1
        %s214 = scalar_lea.sflag [#allocation3], %s213
        %s215 = sand.u32 %s45, 1
        %s216 = smul.addr %s215, 64
        %s217 = scalar_lea.vmem [#allocation2], %s216
        // Predicated region
        $region33: #{run.11} parent=31 // pred_check
          %p218 = pneg %p58
        $region34: #{run.11} parent=31 // pred_check_branch
          %220 = sbr.rel (%p218) target = $region36
        $region35: #{run.11} parent=31 // pred_region
          %221 = dma.done %s214, 1024
        $region36: #{run.11} parent=31 // pred_fallthru
          _
        %s222 = sand.u32 %s23, 1
        %s223 = scalar_lea.sflag [#allocation6], %s222
        %s224 = sand.u32 %s71, 1
        %s225 = scalar_lea.vmem [#allocation5], %s224
        // Predicated region
        $region37: #{run.11} parent=31 // pred_check
          %p226 = pneg %p84
        $region38: #{run.11} parent=31 // pred_check_branch
          %228 = sbr.rel (%p226) target = $region40
        $region39: #{run.11} parent=31 // pred_region
          %229 = dma.done %s223, 16
        $region40: #{run.11} parent=31 // pred_fallthru
          _
        // Predicated region
        $region41: #{run.11} parent=31 // pred_check
          %p230 = pneg %p105
        $region42: #{run.11} parent=31 // pred_check_branch
          %232 = sbr.rel (%p230) target = $region44
        $region43: #{run.11} parent=31 // pred_region
          %233 = dma.done [#allocation6], 512
        $region44: #{run.11} parent=31 // pred_fallthru
          _
        %s234 = sand.u32 %s45, 1
        %s235 = scalar_lea.sflag [#allocation3], %s234
        %s236 = sand.u32 %s45, 1
        %s237 = smul.addr %s236, 64
        %s238 = scalar_lea.vmem [#allocation2], %s237
        %p239 = pneg %p58
        %p240 = pneg %p55
        %s241 = sand.u32 %s23, 1
        %s242 = scalar_lea.sflag [#allocation6], %s241
        %s243 = sand.u32 %s71, 1
        %s244 = scalar_lea.vmem [#allocation5], %s243
        %p245 = pneg %p84
        %p246 = pneg %p81
        %p247 = pneg %p105
        %p248 = pneg %p102
        %p249 = pneg %p133
        %p250 = pneg %p130
        %s251 = sand.u32 %s120, 1
        %s252 = scalar_lea.sflag [#allocation4], %s251
        %s253 = sand.u32 %s120, 1
        %s254 = smul.addr %s253, 64
        %s255 = scalar_lea.vmem [#allocation8], %s254
        %s256 = smul.u32 4, %s28
        %s257 = smul.u32 4, %s28
        %v259 = vld [vmem:[%s217] sm:$0xff]
        %v260 = vld [vmem:[%s217 + $0x8] sm:$0xff]
        %v261 = vld [vmem:[%s217 + $0x10] sm:$0xff]
        %v262 = vld [vmem:[%s217 + $0x18] sm:$0xff]
        %v263 = vld [vmem:[%s217 + $0x20] sm:$0xff]
        %v264 = vld [vmem:[%s217 + $0x28] sm:$0xff]
        %v265 = vld [vmem:[%s217 + $0x30] sm:$0xff]
        %v266 = vld [vmem:[%s217 + $0x38] sm:$0xff]
        %v267 = vld [vmem:[%s225] sm:$0x1]
        %v268 = vmul.f32 %v259, 0.35355338
        %v269 = vmul.f32 %v260, 0.35355338
        %v270 = vmul.f32 %v261, 0.35355338
        %v271 = vmul.f32 %v262, 0.35355338
        %v272 = vmul.f32 %v263, 0.35355338
        %v273 = vmul.f32 %v264, 0.35355338
        %v274 = vmul.f32 %v265, 0.35355338
        %v275 = vmul.f32 %v266, 0.35355338
        %v276 = vpack.c.bf16 %v269, %v268
        %v277 = vpack.c.bf16 %v271, %v270
        %v278 = vpack.c.bf16 %v273, %v272
        %v279 = vpack.c.bf16 %v275, %v274
        %v280 = vpack.c.bf16 %v260, %v259
        %v281 = vpack.c.bf16 %v262, %v261
        %v282 = vpack.c.bf16 %v264, %v263
        %v283 = vpack.c.bf16 %v266, %v265
        %v285 = vlaneseq
        %v286 = vshrl.u32 %v285, 7
        %v287 = vsub.s32 0, %v286
        %v288 = vrot.slane %v267, %v287
        %289 = vrot.lane.b32.xlu0 %v288, 32
        %v290 = vpop.permute.xlu0 %289
        %v292 = vmul.f32 %v259, %v290
        %v293 = vmul.f32 %v260, %v290
        %v294 = vmul.f32 %v261, %v290
        %v295 = vmul.f32 %v262, %v290
        %v296 = vmul.f32 %v263, %v290
        %v297 = vmul.f32 %v264, %v290
        %v298 = vmul.f32 %v265, %v290
        %v299 = vmul.f32 %v266, %v290
        %v300 = vpack.c.bf16 %v293, %v292
        %v301 = vpack.c.bf16 %v295, %v294
        %v302 = vpack.c.bf16 %v297, %v296
        %v303 = vpack.c.bf16 %v299, %v298
        %v304 = vld [vmem:[#allocation7] sm:$0xff]
        %v305 = vld [vmem:[#allocation7 + $0x8] sm:$0xff]
        %307 = vrot.lane.b32.xlu0 %v280, 112
        %v308 = vpop.permute.xlu0 %307
        %vm309 = vcmask 64512
        %v311 = vsel %vm309, %v276, 0
        %v314 = vsel %vm309, %v308, 0
        %316 = vmatprep.subr.bf16.mxu0 0
        %317 = vmatpush1.bf16.xpose.msra.mxu0 %v314
        %318 = vmatprep.subr.bf16.mxu0 0
        %319 = vmatpush1.bf16.xpose.msra.mxu0 0
        %320 = vmatprep.subr.bf16.mxu0 0
        %321 = vmatpush1.bf16.xpose.msra.mxu0 0
        %322 = vmatprep.subr.bf16.mxu0 0
        %323 = vmatpush1.bf16.xpose.msra.mxu0 0
        %324 = vmatprep.subr.bf16.mxu0 0
        %325 = vmatpush1.bf16.xpose.msra.mxu0 0
        %326 = vmatprep.subr.bf16.mxu0 0
        %327 = vmatpush1.bf16.xpose.msra.mxu0 0
        %328 = vmatprep.subr.bf16.mxu0 0
        %329 = vmatpush1.bf16.xpose.msra.mxu0 0
        %330 = vmatprep.subr.bf16.mxu0 0
        %331 = vmatpush1.bf16.xpose.msra.mxu0 0
        %332 = vmatprep.subr.bf16.mxu0 0
        %333 = vmatpush1.bf16.xpose.msra.mxu0 0
        %334 = vmatprep.subr.bf16.mxu0 0
        %335 = vmatpush1.bf16.xpose.msra.mxu0 0
        %336 = vmatprep.subr.bf16.mxu0 0
        %337 = vmatpush1.bf16.xpose.msra.mxu0 0
        %338 = vmatprep.subr.bf16.mxu0 0
        %339 = vmatpush1.bf16.xpose.msra.mxu0 0
        %340 = vmatprep.subr.bf16.mxu0 0
        %341 = vmatpush1.bf16.xpose.msra.mxu0 0
        %342 = vmatprep.subr.bf16.mxu0 0
        %343 = vmatpush1.bf16.xpose.msra.mxu0 0
        %344 = vmatprep.subr.bf16.mxu0 0
        %345 = vmatpush1.bf16.xpose.msra.mxu0 0
        %346 = vmatprep.subr.bf16.mxu0 0
        %347 = vmatpush1.bf16.xpose.msra.mxu0 0
        %348 = vmatprep.mubr.bf16.mxu0 0
        %349 = vmatmul.mubr.bf16.gmra.mrb[0].mxu0 %v311
        %v350 = vpop.f32.mrb[0].mxu0
        %v351 = vadd.f32 %v304, %v350
        %v352 = vpop.f32.mrb[0].mxu0
        %v353 = vpop.f32.mrb[0].mxu0
        %v354 = vadd.f32 %v305, %v353
        %v355 = vpop.f32.mrb[0].mxu0
        %356 = vdwg.mxu0
        %358 = vrot.lane.b32.xlu0 %v281, 112
        %v359 = vpop.permute.xlu0 %358
        %v361 = vsel %vm309, %v277, 0
        %v364 = vsel %vm309, %v359, 0
        %366 = vmatprep.subr.bf16.mxu0 0
        %367 = vmatpush1.bf16.xpose.msra.mxu0 %v364
        %368 = vmatprep.subr.bf16.mxu0 0
        %369 = vmatpush1.bf16.xpose.msra.mxu0 0
        %370 = vmatprep.subr.bf16.mxu0 0
        %371 = vmatpush1.bf16.xpose.msra.mxu0 0
        %372 = vmatprep.subr.bf16.mxu0 0
        %373 = vmatpush1.bf16.xpose.msra.mxu0 0
        %374 = vmatprep.subr.bf16.mxu0 0
        %375 = vmatpush1.bf16.xpose.msra.mxu0 0
        %376 = vmatprep.subr.bf16.mxu0 0
        %377 = vmatpush1.bf16.xpose.msra.mxu0 0
        %378 = vmatprep.subr.bf16.mxu0 0
        %379 = vmatpush1.bf16.xpose.msra.mxu0 0
        %380 = vmatprep.subr.bf16.mxu0 0
        %381 = vmatpush1.bf16.xpose.msra.mxu0 0
        %382 = vmatprep.subr.bf16.mxu0 0
        %383 = vmatpush1.bf16.xpose.msra.mxu0 0
        %384 = vmatprep.subr.bf16.mxu0 0
        %385 = vmatpush1.bf16.xpose.msra.mxu0 0
        %386 = vmatprep.subr.bf16.mxu0 0
        %387 = vmatpush1.bf16.xpose.msra.mxu0 0
        %388 = vmatprep.subr.bf16.mxu0 0
        %389 = vmatpush1.bf16.xpose.msra.mxu0 0
        %390 = vmatprep.subr.bf16.mxu0 0
        %391 = vmatpush1.bf16.xpose.msra.mxu0 0
        %392 = vmatprep.subr.bf16.mxu0 0
        %393 = vmatpush1.bf16.xpose.msra.mxu0 0
        %394 = vmatprep.subr.bf16.mxu0 0
        %395 = vmatpush1.bf16.xpose.msra.mxu0 0
        %396 = vmatprep.subr.bf16.mxu0 0
        %397 = vmatpush1.bf16.xpose.msra.mxu0 0
        %398 = vmatprep.mubr.bf16.mxu0 0
        %399 = vmatmul.mubr.bf16.gmra.mrb[0].mxu0 %v361
        %v400 = vpop.f32.mrb[0].mxu0
        %v401 = vadd.f32 %v304, %v400
        %v402 = vpop.f32.mrb[0].mxu0
        %v403 = vpop.f32.mrb[0].mxu0
        %v404 = vadd.f32 %v305, %v403
        %v405 = vpop.f32.mrb[0].mxu0
        %406 = vdwg.mxu0
        %408 = vrot.lane.b32.xlu0 %v282, 112
        %v409 = vpop.permute.xlu0 %408
        %v411 = vsel %vm309, %v278, 0
        %v414 = vsel %vm309, %v409, 0
        %416 = vmatprep.subr.bf16.mxu0 0
        %417 = vmatpush1.bf16.xpose.msra.mxu0 %v414
        %418 = vmatprep.subr.bf16.mxu0 0
        %419 = vmatpush1.bf16.xpose.msra.mxu0 0
        %420 = vmatprep.subr.bf16.mxu0 0
        %421 = vmatpush1.bf16.xpose.msra.mxu0 0
        %422 = vmatprep.subr.bf16.mxu0 0
        %423 = vmatpush1.bf16.xpose.msra.mxu0 0
        %424 = vmatprep.subr.bf16.mxu0 0
        %425 = vmatpush1.bf16.xpose.msra.mxu0 0
        %426 = vmatprep.subr.bf16.mxu0 0
        %427 = vmatpush1.bf16.xpose.msra.mxu0 0
        %428 = vmatprep.subr.bf16.mxu0 0
        %429 = vmatpush1.bf16.xpose.msra.mxu0 0
        %430 = vmatprep.subr.bf16.mxu0 0
        %431 = vmatpush1.bf16.xpose.msra.mxu0 0
        %432 = vmatprep.subr.bf16.mxu0 0
        %433 = vmatpush1.bf16.xpose.msra.mxu0 0
        %434 = vmatprep.subr.bf16.mxu0 0
        %435 = vmatpush1.bf16.xpose.msra.mxu0 0
        %436 = vmatprep.subr.bf16.mxu0 0
        %437 = vmatpush1.bf16.xpose.msra.mxu0 0
        %438 = vmatprep.subr.bf16.mxu0 0
        %439 = vmatpush1.bf16.xpose.msra.mxu0 0
        %440 = vmatprep.subr.bf16.mxu0 0
        %441 = vmatpush1.bf16.xpose.msra.mxu0 0
        %442 = vmatprep.subr.bf16.mxu0 0
        %443 = vmatpush1.bf16.xpose.msra.mxu0 0
        %444 = vmatprep.subr.bf16.mxu0 0
        %445 = vmatpush1.bf16.xpose.msra.mxu0 0
        %446 = vmatprep.subr.bf16.mxu0 0
        %447 = vmatpush1.bf16.xpose.msra.mxu0 0
        %448 = vmatprep.mubr.bf16.mxu0 0
        %449 = vmatmul.mubr.bf16.gmra.mrb[0].mxu0 %v411
        %v450 = vpop.f32.mrb[0].mxu0
        %v451 = vadd.f32 %v304, %v450
        %v452 = vpop.f32.mrb[0].mxu0
        %v453 = vpop.f32.mrb[0].mxu0
        %v454 = vadd.f32 %v305, %v453
        %v455 = vpop.f32.mrb[0].mxu0
        %456 = vdwg.mxu0
        %458 = vrot.lane.b32.xlu0 %v283, 112
        %v459 = vpop.permute.xlu0 %458
        %v461 = vsel %vm309, %v279, 0
        %v464 = vsel %vm309, %v459, 0
        %466 = vmatprep.subr.bf16.mxu0 0
        %467 = vmatpush1.bf16.xpose.msra.mxu0 %v464
        %468 = vmatprep.subr.bf16.mxu0 0
        %469 = vmatpush1.bf16.xpose.msra.mxu0 0
        %470 = vmatprep.subr.bf16.mxu0 0
        %471 = vmatpush1.bf16.xpose.msra.mxu0 0
        %472 = vmatprep.subr.bf16.mxu0 0
        %473 = vmatpush1.bf16.xpose.msra.mxu0 0
        %474 = vmatprep.subr.bf16.mxu0 0
        %475 = vmatpush1.bf16.xpose.msra.mxu0 0
        %476 = vmatprep.subr.bf16.mxu0 0
        %477 = vmatpush1.bf16.xpose.msra.mxu0 0
        %478 = vmatprep.subr.bf16.mxu0 0
        %479 = vmatpush1.bf16.xpose.msra.mxu0 0
        %480 = vmatprep.subr.bf16.mxu0 0
        %481 = vmatpush1.bf16.xpose.msra.mxu0 0
        %482 = vmatprep.subr.bf16.mxu0 0
        %483 = vmatpush1.bf16.xpose.msra.mxu0 0
        %484 = vmatprep.subr.bf16.mxu0 0
        %485 = vmatpush1.bf16.xpose.msra.mxu0 0
        %486 = vmatprep.subr.bf16.mxu0 0
        %487 = vmatpush1.bf16.xpose.msra.mxu0 0
        %488 = vmatprep.subr.bf16.mxu0 0
        %489 = vmatpush1.bf16.xpose.msra.mxu0 0
        %490 = vmatprep.subr.bf16.mxu0 0
        %491 = vmatpush1.bf16.xpose.msra.mxu0 0
        %492 = vmatprep.subr.bf16.mxu0 0
        %493 = vmatpush1.bf16.xpose.msra.mxu0 0
        %494 = vmatprep.subr.bf16.mxu0 0
        %495 = vmatpush1.bf16.xpose.msra.mxu0 0
        %496 = vmatprep.subr.bf16.mxu0 0
        %497 = vmatpush1.bf16.xpose.msra.mxu0 0
        %498 = vmatprep.mubr.bf16.mxu0 0
        %499 = vmatmul.mubr.bf16.gmra.mrb[0].mxu0 %v461
        %v500 = vpop.f32.mrb[0].mxu0
        %v501 = vadd.f32 %v304, %v500
        %v502 = vpop.f32.mrb[0].mxu0
        %v503 = vpop.f32.mrb[0].mxu0
        %v504 = vadd.f32 %v305, %v503
        %v505 = vpop.f32.mrb[0].mxu0
        %506 = vdwg.mxu0
        %vm507 = vcmask 130048
        %v508 = vsel %vm507, %v351, -inf
        %509 = vmax.xlane.f32.xlu0 %v508
        %v510 = vpop.xlane.xlu0 %509
        %v511 = vsel %vm507, %v354, -inf
        %512 = vmax.xlane.f32.xlu0 %v511
        %v513 = vpop.xlane.xlu0 %512
        %v514 = vsel %vm507, %v401, -inf
        %515 = vmax.xlane.f32.xlu0 %v514
        %v516 = vpop.xlane.xlu0 %515
        %v517 = vsel %vm507, %v404, -inf
        %518 = vmax.xlane.f32.xlu0 %v517
        %v519 = vpop.xlane.xlu0 %518
        %v520 = vsel %vm507, %v451, -inf
        %521 = vmax.xlane.f32.xlu0 %v520
        %v522 = vpop.xlane.xlu0 %521
        %v523 = vsel %vm507, %v454, -inf
        %524 = vmax.xlane.f32.xlu0 %v523
        %v525 = vpop.xlane.xlu0 %524
        %v526 = vsel %vm507, %v501, -inf
        %527 = vmax.xlane.f32.xlu0 %v526
        %v528 = vpop.xlane.xlu0 %527
        %v529 = vsel %vm507, %v504, -inf
        %530 = vmax.xlane.f32.xlu0 %v529
        %v531 = vpop.xlane.xlu0 %530
        %v532 = vsub.f32 %v351, %v510
        %v533 = vsub.f32 %v354, %v513
        %v534 = vsub.f32 %v401, %v516
        %v535 = vsub.f32 %v404, %v519
        %v536 = vsub.f32 %v451, %v522
        %v537 = vsub.f32 %v454, %v525
        %v538 = vsub.f32 %v501, %v528
        %v539 = vsub.f32 %v504, %v531
        %v540 = vmul.f32 %v532, 1.442695
        %v541 = vpow.pop %v540
        %v542 = vmul.f32 %v533, 1.442695
        %v543 = vpow.pop %v542
        %v544 = vmul.f32 %v534, 1.442695
        %v545 = vpow.pop %v544
        %v546 = vmul.f32 %v535, 1.442695
        %v547 = vpow.pop %v546
        %v548 = vmul.f32 %v536, 1.442695
        %v549 = vpow.pop %v548
        %v550 = vmul.f32 %v537, 1.442695
        %v551 = vpow.pop %v550
        %v552 = vmul.f32 %v538, 1.442695
        %v553 = vpow.pop %v552
        %v554 = vmul.f32 %v539, 1.442695
        %v555 = vpow.pop %v554
        %v556 = vsel %vm507, %v541, 0.0
        %557 = vadd.xlane.f32.xlu0 %v556
        %v558 = vpop.xlane.xlu0 %557
        %v559 = vsel %vm507, %v543, 0.0
        %560 = vadd.xlane.f32.xlu0 %v559
        %v561 = vpop.xlane.xlu0 %560
        %v562 = vsel %vm507, %v545, 0.0
        %563 = vadd.xlane.f32.xlu0 %v562
        %v564 = vpop.xlane.xlu0 %563
        %v565 = vsel %vm507, %v547, 0.0
        %566 = vadd.xlane.f32.xlu0 %v565
        %v567 = vpop.xlane.xlu0 %566
        %v568 = vsel %vm507, %v549, 0.0
        %569 = vadd.xlane.f32.xlu0 %v568
        %v570 = vpop.xlane.xlu0 %569
        %v571 = vsel %vm507, %v551, 0.0
        %572 = vadd.xlane.f32.xlu0 %v571
        %v573 = vpop.xlane.xlu0 %572
        %v574 = vsel %vm507, %v553, 0.0
        %575 = vadd.xlane.f32.xlu0 %v574
        %v576 = vpop.xlane.xlu0 %575
        %v577 = vsel %vm507, %v555, 0.0
        %578 = vadd.xlane.f32.xlu0 %v577
        %v579 = vpop.xlane.xlu0 %578
        %v580 = vrcp.pop %v558
        %v581 = vrcp.pop %v561
        %v582 = vrcp.pop %v564
        %v583 = vrcp.pop %v567
        %v584 = vrcp.pop %v570
        %v585 = vrcp.pop %v573
        %v586 = vrcp.pop %v576
        %v587 = vrcp.pop %v579
        %v588 = vmul.f32 %v541, %v580
        %v589 = vmul.f32 %v543, %v581
        %v590 = vmul.f32 %v545, %v582
        %v591 = vmul.f32 %v547, %v583
        %v592 = vmul.f32 %v549, %v584
        %v593 = vmul.f32 %v551, %v585
        %v594 = vmul.f32 %v553, %v586
        %v595 = vmul.f32 %v555, %v587
        %v596 = vpack.c.bf16 %v589, %v588
        %v597 = vpack.c.bf16 %v591, %v590
        %v598 = vpack.c.bf16 %v593, %v592
        %v599 = vpack.c.bf16 %v595, %v594
        %601 = vrot.lane.b32.xlu0 %v300, 96
        %v602 = vpop.permute.xlu0 %601
        %v605 = vsel %vm507, %v596, 0
        %607 = vmatprep.subr.bf16.mxu0 0
        %608 = vmatpush1.bf16.msra.mxu0 %v602
        %609 = vmatprep.subr.bf16.mxu0 0
        %610 = vmatpush1.bf16.msra.mxu0 0
        %611 = vmatprep.subr.bf16.mxu0 0
        %612 = vmatpush1.bf16.msra.mxu0 0
        %613 = vmatprep.subr.bf16.mxu0 0
        %614 = vmatpush1.bf16.msra.mxu0 0
        %615 = vmatprep.subr.bf16.mxu0 0
        %616 = vmatpush1.bf16.msra.mxu0 0
        %617 = vmatprep.subr.bf16.mxu0 0
        %618 = vmatpush1.bf16.msra.mxu0 0
        %619 = vmatprep.subr.bf16.mxu0 0
        %620 = vmatpush1.bf16.msra.mxu0 0
        %621 = vmatprep.subr.bf16.mxu0 0
        %622 = vmatpush1.bf16.msra.mxu0 0
        %623 = vmatprep.subr.bf16.mxu0 0
        %624 = vmatpush1.bf16.msra.mxu0 0
        %625 = vmatprep.subr.bf16.mxu0 0
        %626 = vmatpush1.bf16.msra.mxu0 0
        %627 = vmatprep.subr.bf16.mxu0 0
        %628 = vmatpush1.bf16.msra.mxu0 0
        %629 = vmatprep.subr.bf16.mxu0 0
        %630 = vmatpush1.bf16.msra.mxu0 0
        %631 = vmatprep.subr.bf16.mxu0 0
        %632 = vmatpush1.bf16.msra.mxu0 0
        %633 = vmatprep.subr.bf16.mxu0 0
        %634 = vmatpush1.bf16.msra.mxu0 0
        %635 = vmatprep.subr.bf16.mxu0 0
        %636 = vmatpush1.bf16.msra.mxu0 0
        %637 = vmatprep.subr.bf16.mxu0 0
        %638 = vmatpush1.bf16.msra.mxu0 0
        %639 = vmatprep.mubr.bf16.mxu0 0
        %640 = vmatmul.mubr.bf16.gmra.mrb[0].mxu0 %v605
        %v641 = vpop.f32.mrb[0].mxu0
        %v642 = vadd.f32 0.0, %v641
        %v643 = vpop.f32.mrb[0].mxu0
        %v644 = vpop.f32.mrb[0].mxu0
        %v645 = vadd.f32 0.0, %v644
        %v646 = vpop.f32.mrb[0].mxu0
        %647 = vdwg.mxu0
        %649 = vrot.lane.b32.xlu0 %v301, 96
        %v650 = vpop.permute.xlu0 %649
        %v653 = vsel %vm507, %v597, 0
        %655 = vmatprep.subr.bf16.mxu0 0
        %656 = vmatpush1.bf16.msra.mxu0 %v650
        %657 = vmatprep.subr.bf16.mxu0 0
        %658 = vmatpush1.bf16.msra.mxu0 0
        %659 = vmatprep.subr.bf16.mxu0 0
        %660 = vmatpush1.bf16.msra.mxu0 0
        %661 = vmatprep.subr.bf16.mxu0 0
        %662 = vmatpush1.bf16.msra.mxu0 0
        %663 = vmatprep.subr.bf16.mxu0 0
        %664 = vmatpush1.bf16.msra.mxu0 0
        %665 = vmatprep.subr.bf16.mxu0 0
        %666 = vmatpush1.bf16.msra.mxu0 0
        %667 = vmatprep.subr.bf16.mxu0 0
        %668 = vmatpush1.bf16.msra.mxu0 0
        %669 = vmatprep.subr.bf16.mxu0 0
        %670 = vmatpush1.bf16.msra.mxu0 0
        %671 = vmatprep.subr.bf16.mxu0 0
        %672 = vmatpush1.bf16.msra.mxu0 0
        %673 = vmatprep.subr.bf16.mxu0 0
        %674 = vmatpush1.bf16.msra.mxu0 0
        %675 = vmatprep.subr.bf16.mxu0 0
        %676 = vmatpush1.bf16.msra.mxu0 0
        %677 = vmatprep.subr.bf16.mxu0 0
        %678 = vmatpush1.bf16.msra.mxu0 0
        %679 = vmatprep.subr.bf16.mxu0 0
        %680 = vmatpush1.bf16.msra.mxu0 0
        %681 = vmatprep.subr.bf16.mxu0 0
        %682 = vmatpush1.bf16.msra.mxu0 0
        %683 = vmatprep.subr.bf16.mxu0 0
        %684 = vmatpush1.bf16.msra.mxu0 0
        %685 = vmatprep.subr.bf16.mxu0 0
        %686 = vmatpush1.bf16.msra.mxu0 0
        %687 = vmatprep.mubr.bf16.mxu0 0
        %688 = vmatmul.mubr.bf16.gmra.mrb[0].mxu0 %v653
        %v689 = vpop.f32.mrb[0].mxu0
        %v690 = vadd.f32 0.0, %v689
        %v691 = vpop.f32.mrb[0].mxu0
        %v692 = vpop.f32.mrb[0].mxu0
        %v693 = vadd.f32 0.0, %v692
        %v694 = vpop.f32.mrb[0].mxu0
        %695 = vdwg.mxu0
        %697 = vrot.lane.b32.xlu0 %v302, 96
        %v698 = vpop.permute.xlu0 %697
        %v701 = vsel %vm507, %v598, 0
        %703 = vmatprep.subr.bf16.mxu0 0
        %704 = vmatpush1.bf16.msra.mxu0 %v698
        %705 = vmatprep.subr.bf16.mxu0 0
        %706 = vmatpush1.bf16.msra.mxu0 0
        %707 = vmatprep.subr.bf16.mxu0 0
        %708 = vmatpush1.bf16.msra.mxu0 0
        %709 = vmatprep.subr.bf16.mxu0 0
        %710 = vmatpush1.bf16.msra.mxu0 0
        %711 = vmatprep.subr.bf16.mxu0 0
        %712 = vmatpush1.bf16.msra.mxu0 0
        %713 = vmatprep.subr.bf16.mxu0 0
        %714 = vmatpush1.bf16.msra.mxu0 0
        %715 = vmatprep.subr.bf16.mxu0 0
        %716 = vmatpush1.bf16.msra.mxu0 0
        %717 = vmatprep.subr.bf16.mxu0 0
        %718 = vmatpush1.bf16.msra.mxu0 0
        %719 = vmatprep.subr.bf16.mxu0 0
        %720 = vmatpush1.bf16.msra.mxu0 0
        %721 = vmatprep.subr.bf16.mxu0 0
        %722 = vmatpush1.bf16.msra.mxu0 0
        %723 = vmatprep.subr.bf16.mxu0 0
        %724 = vmatpush1.bf16.msra.mxu0 0
        %725 = vmatprep.subr.bf16.mxu0 0
        %726 = vmatpush1.bf16.msra.mxu0 0
        %727 = vmatprep.subr.bf16.mxu0 0
        %728 = vmatpush1.bf16.msra.mxu0 0
        %729 = vmatprep.subr.bf16.mxu0 0
        %730 = vmatpush1.bf16.msra.mxu0 0
        %731 = vmatprep.subr.bf16.mxu0 0
        %732 = vmatpush1.bf16.msra.mxu0 0
        %733 = vmatprep.subr.bf16.mxu0 0
        %734 = vmatpush1.bf16.msra.mxu0 0
        %735 = vmatprep.mubr.bf16.mxu0 0
        %736 = vmatmul.mubr.bf16.gmra.mrb[0].mxu0 %v701
        %v737 = vpop.f32.mrb[0].mxu0
        %v738 = vadd.f32 0.0, %v737
        %v739 = vpop.f32.mrb[0].mxu0
        %v740 = vpop.f32.mrb[0].mxu0
        %v741 = vadd.f32 0.0, %v740
        %v742 = vpop.f32.mrb[0].mxu0
        %743 = vdwg.mxu0
        %745 = vrot.lane.b32.xlu0 %v303, 96
        %v746 = vpop.permute.xlu0 %745
        %v749 = vsel %vm507, %v599, 0
        %751 = vmatprep.subr.bf16.mxu0 0
        %752 = vmatpush1.bf16.msra.mxu0 %v746
        %753 = vmatprep.subr.bf16.mxu0 0
        %754 = vmatpush1.bf16.msra.mxu0 0
        %755 = vmatprep.subr.bf16.mxu0 0
        %756 = vmatpush1.bf16.msra.mxu0 0
        %757 = vmatprep.subr.bf16.mxu0 0
        %758 = vmatpush1.bf16.msra.mxu0 0
        %759 = vmatprep.subr.bf16.mxu0 0
        %760 = vmatpush1.bf16.msra.mxu0 0
        %761 = vmatprep.subr.bf16.mxu0 0
        %762 = vmatpush1.bf16.msra.mxu0 0
        %763 = vmatprep.subr.bf16.mxu0 0
        %764 = vmatpush1.bf16.msra.mxu0 0
        %765 = vmatprep.subr.bf16.mxu0 0
        %766 = vmatpush1.bf16.msra.mxu0 0
        %767 = vmatprep.subr.bf16.mxu0 0
        %768 = vmatpush1.bf16.msra.mxu0 0
        %769 = vmatprep.subr.bf16.mxu0 0
        %770 = vmatpush1.bf16.msra.mxu0 0
        %771 = vmatprep.subr.bf16.mxu0 0
        %772 = vmatpush1.bf16.msra.mxu0 0
        %773 = vmatprep.subr.bf16.mxu0 0
        %774 = vmatpush1.bf16.msra.mxu0 0
        %775 = vmatprep.subr.bf16.mxu0 0
        %776 = vmatpush1.bf16.msra.mxu0 0
        %777 = vmatprep.subr.bf16.mxu0 0
        %778 = vmatpush1.bf16.msra.mxu0 0
        %779 = vmatprep.subr.bf16.mxu0 0
        %780 = vmatpush1.bf16.msra.mxu0 0
        %781 = vmatprep.subr.bf16.mxu0 0
        %782 = vmatpush1.bf16.msra.mxu0 0
        %783 = vmatprep.mubr.bf16.mxu0 0
        %784 = vmatmul.mubr.bf16.gmra.mrb[0].mxu0 %v749
        %v785 = vpop.f32.mrb[0].mxu0
        %v786 = vadd.f32 0.0, %v785
        %v787 = vpop.f32.mrb[0].mxu0
        %v788 = vpop.f32.mrb[0].mxu0
        %v789 = vadd.f32 0.0, %v788
        %v790 = vpop.f32.mrb[0].mxu0
        %791 = vdwg.mxu0
        %s792 = scalar_lea.vmem [#allocation7], 16
        %v793 = vld [vmem:[%s792] sm:$0xff]
        %v794 = vld [vmem:[%s792 + $0x8] sm:$0xff]
        %796 = vrot.lane.b32.xlu0 %v276, 120
        %v797 = vpop.permute.xlu0 %796
        %798 = vrot.lane.b32.xlu0 %v280, 104
        %v799 = vpop.permute.xlu0 %798
        %v801 = vsel %vm309, %v797, 0
        %v804 = vsel %vm309, %v799, 0
        %806 = vmatprep.subr.bf16.mxu0 0
        %807 = vmatpush1.bf16.xpose.msra.mxu0 %v804
        %808 = vmatprep.subr.bf16.mxu0 0
        %809 = vmatpush1.bf16.xpose.msra.mxu0 0
        %810 = vmatprep.subr.bf16.mxu0 0
        %811 = vmatpush1.bf16.xpose.msra.mxu0 0
        %812 = vmatprep.subr.bf16.mxu0 0
        %813 = vmatpush1.bf16.xpose.msra.mxu0 0
        %814 = vmatprep.subr.bf16.mxu0 0
        %815 = vmatpush1.bf16.xpose.msra.mxu0 0
        %816 = vmatprep.subr.bf16.mxu0 0
        %817 = vmatpush1.bf16.xpose.msra.mxu0 0
        %818 = vmatprep.subr.bf16.mxu0 0
        %819 = vmatpush1.bf16.xpose.msra.mxu0 0
        %820 = vmatprep.subr.bf16.mxu0 0
        %821 = vmatpush1.bf16.xpose.msra.mxu0 0
        %822 = vmatprep.subr.bf16.mxu0 0
        %823 = vmatpush1.bf16.xpose.msra.mxu0 0
        %824 = vmatprep.subr.bf16.mxu0 0
        %825 = vmatpush1.bf16.xpose.msra.mxu0 0
        %826 = vmatprep.subr.bf16.mxu0 0
        %827 = vmatpush1.bf16.xpose.msra.mxu0 0
        %828 = vmatprep.subr.bf16.mxu0 0
        %829 = vmatpush1.bf16.xpose.msra.mxu0 0
        %830 = vmatprep.subr.bf16.mxu0 0
        %831 = vmatpush1.bf16.xpose.msra.mxu0 0
        %832 = vmatprep.subr.bf16.mxu0 0
        %833 = vmatpush1.bf16.xpose.msra.mxu0 0
        %834 = vmatprep.subr.bf16.mxu0 0
        %835 = vmatpush1.bf16.xpose.msra.mxu0 0
        %836 = vmatprep.subr.bf16.mxu0 0
        %837 = vmatpush1.bf16.xpose.msra.mxu0 0
        %838 = vmatprep.mubr.bf16.mxu0 0
        %839 = vmatmul.mubr.bf16.gmra.mrb[0].mxu0 %v801
        %v840 = vpop.f32.mrb[0].mxu0
        %v841 = vadd.f32 %v793, %v840
        %v842 = vpop.f32.mrb[0].mxu0
        %v843 = vpop.f32.mrb[0].mxu0
        %v844 = vadd.f32 %v794, %v843
        %v845 = vpop.f32.mrb[0].mxu0
        %846 = vdwg.mxu0
        %848 = vrot.lane.b32.xlu0 %v277, 120
        %v849 = vpop.permute.xlu0 %848
        %850 = vrot.lane.b32.xlu0 %v281, 104
        %v851 = vpop.permute.xlu0 %850
        %v853 = vsel %vm309, %v849, 0
        %v856 = vsel %vm309, %v851, 0
        %858 = vmatprep.subr.bf16.mxu0 0
        %859 = vmatpush1.bf16.xpose.msra.mxu0 %v856
        %860 = vmatprep.subr.bf16.mxu0 0
        %861 = vmatpush1.bf16.xpose.msra.mxu0 0
        %862 = vmatprep.subr.bf16.mxu0 0
        %863 = vmatpush1.bf16.xpose.msra.mxu0 0
        %864 = vmatprep.subr.bf16.mxu0 0
        %865 = vmatpush1.bf16.xpose.msra.mxu0 0
        %866 = vmatprep.subr.bf16.mxu0 0
        %867 = vmatpush1.bf16.xpose.msra.mxu0 0
        %868 = vmatprep.subr.bf16.mxu0 0
        %869 = vmatpush1.bf16.xpose.msra.mxu0 0
        %870 = vmatprep.subr.bf16.mxu0 0
        %871 = vmatpush1.bf16.xpose.msra.mxu0 0
        %872 = vmatprep.subr.bf16.mxu0 0
        %873 = vmatpush1.bf16.xpose.msra.mxu0 0
        %874 = vmatprep.subr.bf16.mxu0 0
        %875 = vmatpush1.bf16.xpose.msra.mxu0 0
        %876 = vmatprep.subr.bf16.mxu0 0
        %877 = vmatpush1.bf16.xpose.msra.mxu0 0
        %878 = vmatprep.subr.bf16.mxu0 0
        %879 = vmatpush1.bf16.xpose.msra.mxu0 0
        %880 = vmatprep.subr.bf16.mxu0 0
        %881 = vmatpush1.bf16.xpose.msra.mxu0 0
        %882 = vmatprep.subr.bf16.mxu0 0
        %883 = vmatpush1.bf16.xpose.msra.mxu0 0
        %884 = vmatprep.subr.bf16.mxu0 0
        %885 = vmatpush1.bf16.xpose.msra.mxu0 0
        %886 = vmatprep.subr.bf16.mxu0 0
        %887 = vmatpush1.bf16.xpose.msra.mxu0 0
        %888 = vmatprep.subr.bf16.mxu0 0
        %889 = vmatpush1.bf16.xpose.msra.mxu0 0
        %890 = vmatprep.mubr.bf16.mxu0 0
        %891 = vmatmul.mubr.bf16.gmra.mrb[0].mxu0 %v853
        %v892 = vpop.f32.mrb[0].mxu0
        %v893 = vadd.f32 %v793, %v892
        %v894 = vpop.f32.mrb[0].mxu0
        %v895 = vpop.f32.mrb[0].mxu0
        %v896 = vadd.f32 %v794, %v895
        %v897 = vpop.f32.mrb[0].mxu0
        %898 = vdwg.mxu0
        %900 = vrot.lane.b32.xlu0 %v278, 120
        %v901 = vpop.permute.xlu0 %900
        %902 = vrot.lane.b32.xlu0 %v282, 104
        %v903 = vpop.permute.xlu0 %902
        %v905 = vsel %vm309, %v901, 0
        %v908 = vsel %vm309, %v903, 0
        %910 = vmatprep.subr.bf16.mxu0 0
        %911 = vmatpush1.bf16.xpose.msra.mxu0 %v908
        %912 = vmatprep.subr.bf16.mxu0 0
        %913 = vmatpush1.bf16.xpose.msra.mxu0 0
        %914 = vmatprep.subr.bf16.mxu0 0
        %915 = vmatpush1.bf16.xpose.msra.mxu0 0
        %916 = vmatprep.subr.bf16.mxu0 0
        %917 = vmatpush1.bf16.xpose.msra.mxu0 0
        %918 = vmatprep.subr.bf16.mxu0 0
        %919 = vmatpush1.bf16.xpose.msra.mxu0 0
        %920 = vmatprep.subr.bf16.mxu0 0
        %921 = vmatpush1.bf16.xpose.msra.mxu0 0
        %922 = vmatprep.subr.bf16.mxu0 0
        %923 = vmatpush1.bf16.xpose.msra.mxu0 0
        %924 = vmatprep.subr.bf16.mxu0 0
        %925 = vmatpush1.bf16.xpose.msra.mxu0 0
        %926 = vmatprep.subr.bf16.mxu0 0
        %927 = vmatpush1.bf16.xpose.msra.mxu0 0
        %928 = vmatprep.subr.bf16.mxu0 0
        %929 = vmatpush1.bf16.xpose.msra.mxu0 0
        %930 = vmatprep.subr.bf16.mxu0 0
        %931 = vmatpush1.bf16.xpose.msra.mxu0 0
        %932 = vmatprep.subr.bf16.mxu0 0
        %933 = vmatpush1.bf16.xpose.msra.mxu0 0
        %934 = vmatprep.subr.bf16.mxu0 0
        %935 = vmatpush1.bf16.xpose.msra.mxu0 0
        %936 = vmatprep.subr.bf16.mxu0 0
        %937 = vmatpush1.bf16.xpose.msra.mxu0 0
        %938 = vmatprep.subr.bf16.mxu0 0
        %939 = vmatpush1.bf16.xpose.msra.mxu0 0
        %940 = vmatprep.subr.bf16.mxu0 0
        %941 = vmatpush1.bf16.xpose.msra.mxu0 0
        %942 = vmatprep.mubr.bf16.mxu0 0
        %943 = vmatmul.mubr.bf16.gmra.mrb[0].mxu0 %v905
        %v944 = vpop.f32.mrb[0].mxu0
        %v945 = vadd.f32 %v793, %v944
        %v946 = vpop.f32.mrb[0].mxu0
        %v947 = vpop.f32.mrb[0].mxu0
        %v948 = vadd.f32 %v794, %v947
        %v949 = vpop.f32.mrb[0].mxu0
        %950 = vdwg.mxu0
        %952 = vrot.lane.b32.xlu0 %v279, 120
        %v953 = vpop.permute.xlu0 %952
        %954 = vrot.lane.b32.xlu0 %v283, 104
        %v955 = vpop.permute.xlu0 %954
        %v957 = vsel %vm309, %v953, 0
        %v960 = vsel %vm309, %v955, 0
        %962 = vmatprep.subr.bf16.mxu0 0
        %963 = vmatpush1.bf16.xpose.msra.mxu0 %v960
        %964 = vmatprep.subr.bf16.mxu0 0
        %965 = vmatpush1.bf16.xpose.msra.mxu0 0
        %966 = vmatprep.subr.bf16.mxu0 0
        %967 = vmatpush1.bf16.xpose.msra.mxu0 0
        %968 = vmatprep.subr.bf16.mxu0 0
        %969 = vmatpush1.bf16.xpose.msra.mxu0 0
        %970 = vmatprep.subr.bf16.mxu0 0
        %971 = vmatpush1.bf16.xpose.msra.mxu0 0
        %972 = vmatprep.subr.bf16.mxu0 0
        %973 = vmatpush1.bf16.xpose.msra.mxu0 0
        %974 = vmatprep.subr.bf16.mxu0 0
        %975 = vmatpush1.bf16.xpose.msra.mxu0 0
        %976 = vmatprep.subr.bf16.mxu0 0
        %977 = vmatpush1.bf16.xpose.msra.mxu0 0
        %978 = vmatprep.subr.bf16.mxu0 0
        %979 = vmatpush1.bf16.xpose.msra.mxu0 0
        %980 = vmatprep.subr.bf16.mxu0 0
        %981 = vmatpush1.bf16.xpose.msra.mxu0 0
        %982 = vmatprep.subr.bf16.mxu0 0
        %983 = vmatpush1.bf16.xpose.msra.mxu0 0
        %984 = vmatprep.subr.bf16.mxu0 0
        %985 = vmatpush1.bf16.xpose.msra.mxu0 0
        %986 = vmatprep.subr.bf16.mxu0 0
        %987 = vmatpush1.bf16.xpose.msra.mxu0 0
        %988 = vmatprep.subr.bf16.mxu0 0
        %989 = vmatpush1.bf16.xpose.msra.mxu0 0
        %990 = vmatprep.subr.bf16.mxu0 0
        %991 = vmatpush1.bf16.xpose.msra.mxu0 0
        %992 = vmatprep.subr.bf16.mxu0 0
        %993 = vmatpush1.bf16.xpose.msra.mxu0 0
        %994 = vmatprep.mubr.bf16.mxu0 0
        %995 = vmatmul.mubr.bf16.gmra.mrb[0].mxu0 %v957
        %v996 = vpop.f32.mrb[0].mxu0
        %v997 = vadd.f32 %v793, %v996
        %v998 = vpop.f32.mrb[0].mxu0
        %v999 = vpop.f32.mrb[0].mxu0
        %v1000 = vadd.f32 %v794, %v999
        %v1001 = vpop.f32.mrb[0].mxu0
        %1002 = vdwg.mxu0
        %v1003 = vsel %vm507, %v841, -inf
        %1004 = vmax.xlane.f32.xlu0 %v1003
        %v1005 = vpop.xlane.xlu0 %1004
        %v1006 = vsel %vm507, %v844, -inf
        %1007 = vmax.xlane.f32.xlu0 %v1006
        %v1008 = vpop.xlane.xlu0 %1007
        %v1009 = vsel %vm507, %v893, -inf
        %1010 = vmax.xlane.f32.xlu0 %v1009
        %v1011 = vpop.xlane.xlu0 %1010
        %v1012 = vsel %vm507, %v896, -inf
        %1013 = vmax.xlane.f32.xlu0 %v1012
        %v1014 = vpop.xlane.xlu0 %1013
        %v1015 = vsel %vm507, %v945, -inf
        %1016 = vmax.xlane.f32.xlu0 %v1015
        %v1017 = vpop.xlane.xlu0 %1016
        %v1018 = vsel %vm507, %v948, -inf
        %1019 = vmax.xlane.f32.xlu0 %v1018
        %v1020 = vpop.xlane.xlu0 %1019
        %v1021 = vsel %vm507, %v997, -inf
        %1022 = vmax.xlane.f32.xlu0 %v1021
        %v1023 = vpop.xlane.xlu0 %1022
        %v1024 = vsel %vm507, %v1000, -inf
        %1025 = vmax.xlane.f32.xlu0 %v1024
        %v1026 = vpop.xlane.xlu0 %1025
        %v1027 = vsub.f32 %v841, %v1005
        %v1028 = vsub.f32 %v844, %v1008
        %v1029 = vsub.f32 %v893, %v1011
        %v1030 = vsub.f32 %v896, %v1014
        %v1031 = vsub.f32 %v945, %v1017
        %v1032 = vsub.f32 %v948, %v1020
        %v1033 = vsub.f32 %v997, %v1023
        %v1034 = vsub.f32 %v1000, %v1026
        %v1035 = vmul.f32 %v1027, 1.442695
        %v1036 = vpow.pop %v1035
        %v1037 = vmul.f32 %v1028, 1.442695
        %v1038 = vpow.pop %v1037
        %v1039 = vmul.f32 %v1029, 1.442695
        %v1040 = vpow.pop %v1039
        %v1041 = vmul.f32 %v1030, 1.442695
        %v1042 = vpow.pop %v1041
        %v1043 = vmul.f32 %v1031, 1.442695
        %v1044 = vpow.pop %v1043
        %v1045 = vmul.f32 %v1032, 1.442695
        %v1046 = vpow.pop %v1045
        %v1047 = vmul.f32 %v1033, 1.442695
        %v1048 = vpow.pop %v1047
        %v1049 = vmul.f32 %v1034, 1.442695
        %v1050 = vpow.pop %v1049
        %v1051 = vsel %vm507, %v1036, 0.0
        %1052 = vadd.xlane.f32.xlu0 %v1051
        %v1053 = vpop.xlane.xlu0 %1052
        %v1054 = vsel %vm507, %v1038, 0.0
        %1055 = vadd.xlane.f32.xlu0 %v1054
        %v1056 = vpop.xlane.xlu0 %1055
        %v1057 = vsel %vm507, %v1040, 0.0
        %1058 = vadd.xlane.f32.xlu0 %v1057
        %v1059 = vpop.xlane.xlu0 %1058
        %v1060 = vsel %vm507, %v1042, 0.0
        %1061 = vadd.xlane.f32.xlu0 %v1060
        %v1062 = vpop.xlane.xlu0 %1061
        %v1063 = vsel %vm507, %v1044, 0.0
        %1064 = vadd.xlane.f32.xlu0 %v1063
        %v1065 = vpop.xlane.xlu0 %1064
        %v1066 = vsel %vm507, %v1046, 0.0
        %1067 = vadd.xlane.f32.xlu0 %v1066
        %v1068 = vpop.xlane.xlu0 %1067
        %v1069 = vsel %vm507, %v1048, 0.0
        %1070 = vadd.xlane.f32.xlu0 %v1069
        %v1071 = vpop.xlane.xlu0 %1070
        %v1072 = vsel %vm507, %v1050, 0.0
        %1073 = vadd.xlane.f32.xlu0 %v1072
        %v1074 = vpop.xlane.xlu0 %1073
        %v1075 = vrcp.pop %v1053
        %v1076 = vrcp.pop %v1056
        %v1077 = vrcp.pop %v1059
        %v1078 = vrcp.pop %v1062
        %v1079 = vrcp.pop %v1065
        %v1080 = vrcp.pop %v1068
        %v1081 = vrcp.pop %v1071
        %v1082 = vrcp.pop %v1074
        %v1083 = vmul.f32 %v1036, %v1075
        %v1084 = vmul.f32 %v1038, %v1076
        %v1085 = vmul.f32 %v1040, %v1077
        %v1086 = vmul.f32 %v1042, %v1078
        %v1087 = vmul.f32 %v1044, %v1079
        %v1088 = vmul.f32 %v1046, %v1080
        %v1089 = vmul.f32 %v1048, %v1081
        %v1090 = vmul.f32 %v1050, %v1082
        %v1091 = vpack.c.bf16 %v1084, %v1083
        %v1092 = vpack.c.bf16 %v1086, %v1085
        %v1093 = vpack.c.bf16 %v1088, %v1087
        %v1094 = vpack.c.bf16 %v1090, %v1089
        %1095 = vrot.lane.b32.xlu0 %v300, 88
        %v1096 = vpop.permute.xlu0 %1095
        %v1099 = vsel %vm507, %v1091, 0
        %1101 = vmatprep.subr.bf16.mxu0 0
        %1102 = vmatpush1.bf16.msra.mxu0 %v1096
        %1103 = vmatprep.subr.bf16.mxu0 0
        %1104 = vmatpush1.bf16.msra.mxu0 0
        %1105 = vmatprep.subr.bf16.mxu0 0
        %1106 = vmatpush1.bf16.msra.mxu0 0
        %1107 = vmatprep.subr.bf16.mxu0 0
        %1108 = vmatpush1.bf16.msra.mxu0 0
        %1109 = vmatprep.subr.bf16.mxu0 0
        %1110 = vmatpush1.bf16.msra.mxu0 0
        %1111 = vmatprep.subr.bf16.mxu0 0
        %1112 = vmatpush1.bf16.msra.mxu0 0
        %1113 = vmatprep.subr.bf16.mxu0 0
        %1114 = vmatpush1.bf16.msra.mxu0 0
        %1115 = vmatprep.subr.bf16.mxu0 0
        %1116 = vmatpush1.bf16.msra.mxu0 0
        %1117 = vmatprep.subr.bf16.mxu0 0
        %1118 = vmatpush1.bf16.msra.mxu0 0
        %1119 = vmatprep.subr.bf16.mxu0 0
        %1120 = vmatpush1.bf16.msra.mxu0 0
        %1121 = vmatprep.subr.bf16.mxu0 0
        %1122 = vmatpush1.bf16.msra.mxu0 0
        %1123 = vmatprep.subr.bf16.mxu0 0
        %1124 = vmatpush1.bf16.msra.mxu0 0
        %1125 = vmatprep.subr.bf16.mxu0 0
        %1126 = vmatpush1.bf16.msra.mxu0 0
        %1127 = vmatprep.subr.bf16.mxu0 0
        %1128 = vmatpush1.bf16.msra.mxu0 0
        %1129 = vmatprep.subr.bf16.mxu0 0
        %1130 = vmatpush1.bf16.msra.mxu0 0
        %1131 = vmatprep.subr.bf16.mxu0 0
        %1132 = vmatpush1.bf16.msra.mxu0 0
        %1133 = vmatprep.mubr.bf16.mxu0 0
        %1134 = vmatmul.mubr.bf16.gmra.mrb[0].mxu0 %v1099
        %v1135 = vpop.f32.mrb[0].mxu0
        %v1136 = vadd.f32 0.0, %v1135
        %v1137 = vpop.f32.mrb[0].mxu0
        %v1138 = vpop.f32.mrb[0].mxu0
        %v1139 = vadd.f32 0.0, %v1138
        %v1140 = vpop.f32.mrb[0].mxu0
        %1141 = vdwg.mxu0
        %1142 = vrot.lane.b32.xlu0 %v301, 88
        %v1143 = vpop.permute.xlu0 %1142
        %v1146 = vsel %vm507, %v1092, 0
        %1148 = vmatprep.subr.bf16.mxu0 0
        %1149 = vmatpush1.bf16.msra.mxu0 %v1143
        %1150 = vmatprep.subr.bf16.mxu0 0
        %1151 = vmatpush1.bf16.msra.mxu0 0
        %1152 = vmatprep.subr.bf16.mxu0 0
        %1153 = vmatpush1.bf16.msra.mxu0 0
        %1154 = vmatprep.subr.bf16.mxu0 0
        %1155 = vmatpush1.bf16.msra.mxu0 0
        %1156 = vmatprep.subr.bf16.mxu0 0
        %1157 = vmatpush1.bf16.msra.mxu0 0
        %1158 = vmatprep.subr.bf16.mxu0 0
        %1159 = vmatpush1.bf16.msra.mxu0 0
        %1160 = vmatprep.subr.bf16.mxu0 0
        %1161 = vmatpush1.bf16.msra.mxu0 0
        %1162 = vmatprep.subr.bf16.mxu0 0
        %1163 = vmatpush1.bf16.msra.mxu0 0
        %1164 = vmatprep.subr.bf16.mxu0 0
        %1165 = vmatpush1.bf16.msra.mxu0 0
        %1166 = vmatprep.subr.bf16.mxu0 0
        %1167 = vmatpush1.bf16.msra.mxu0 0
        %1168 = vmatprep.subr.bf16.mxu0 0
        %1169 = vmatpush1.bf16.msra.mxu0 0
        %1170 = vmatprep.subr.bf16.mxu0 0
        %1171 = vmatpush1.bf16.msra.mxu0 0
        %1172 = vmatprep.subr.bf16.mxu0 0
        %1173 = vmatpush1.bf16.msra.mxu0 0
        %1174 = vmatprep.subr.bf16.mxu0 0
        %1175 = vmatpush1.bf16.msra.mxu0 0
        %1176 = vmatprep.subr.bf16.mxu0 0
        %1177 = vmatpush1.bf16.msra.mxu0 0
        %1178 = vmatprep.subr.bf16.mxu0 0
        %1179 = vmatpush1.bf16.msra.mxu0 0
        %1180 = vmatprep.mubr.bf16.mxu0 0
        %1181 = vmatmul.mubr.bf16.gmra.mrb[0].mxu0 %v1146
        %v1182 = vpop.f32.mrb[0].mxu0
        %v1183 = vadd.f32 0.0, %v1182
        %v1184 = vpop.f32.mrb[0].mxu0
        %v1185 = vpop.f32.mrb[0].mxu0
        %v1186 = vadd.f32 0.0, %v1185
        %v1187 = vpop.f32.mrb[0].mxu0
        %1188 = vdwg.mxu0
        %1189 = vrot.lane.b32.xlu0 %v302, 88
        %v1190 = vpop.permute.xlu0 %1189
        %v1193 = vsel %vm507, %v1093, 0
        %1195 = vmatprep.subr.bf16.mxu0 0
        %1196 = vmatpush1.bf16.msra.mxu0 %v1190
        %1197 = vmatprep.subr.bf16.mxu0 0
        %1198 = vmatpush1.bf16.msra.mxu0 0
        %1199 = vmatprep.subr.bf16.mxu0 0
        %1200 = vmatpush1.bf16.msra.mxu0 0
        %1201 = vmatprep.subr.bf16.mxu0 0
        %1202 = vmatpush1.bf16.msra.mxu0 0
        %1203 = vmatprep.subr.bf16.mxu0 0
        %1204 = vmatpush1.bf16.msra.mxu0 0
        %1205 = vmatprep.subr.bf16.mxu0 0
        %1206 = vmatpush1.bf16.msra.mxu0 0
        %1207 = vmatprep.subr.bf16.mxu0 0
        %1208 = vmatpush1.bf16.msra.mxu0 0
        %1209 = vmatprep.subr.bf16.mxu0 0
        %1210 = vmatpush1.bf16.msra.mxu0 0
        %1211 = vmatprep.subr.bf16.mxu0 0
        %1212 = vmatpush1.bf16.msra.mxu0 0
        %1213 = vmatprep.subr.bf16.mxu0 0
        %1214 = vmatpush1.bf16.msra.mxu0 0
        %1215 = vmatprep.subr.bf16.mxu0 0
        %1216 = vmatpush1.bf16.msra.mxu0 0
        %1217 = vmatprep.subr.bf16.mxu0 0
        %1218 = vmatpush1.bf16.msra.mxu0 0
        %1219 = vmatprep.subr.bf16.mxu0 0
        %1220 = vmatpush1.bf16.msra.mxu0 0
        %1221 = vmatprep.subr.bf16.mxu0 0
        %1222 = vmatpush1.bf16.msra.mxu0 0
        %1223 = vmatprep.subr.bf16.mxu0 0
        %1224 = vmatpush1.bf16.msra.mxu0 0
        %1225 = vmatprep.subr.bf16.mxu0 0
        %1226 = vmatpush1.bf16.msra.mxu0 0
        %1227 = vmatprep.mubr.bf16.mxu0 0
        %1228 = vmatmul.mubr.bf16.gmra.mrb[0].mxu0 %v1193
        %v1229 = vpop.f32.mrb[0].mxu0
        %v1230 = vadd.f32 0.0, %v1229
        %v1231 = vpop.f32.mrb[0].mxu0
        %v1232 = vpop.f32.mrb[0].mxu0
        %v1233 = vadd.f32 0.0, %v1232
        %v1234 = vpop.f32.mrb[0].mxu0
        %1235 = vdwg.mxu0
        %1236 = vrot.lane.b32.xlu0 %v303, 88
        %v1237 = vpop.permute.xlu0 %1236
        %v1240 = vsel %vm507, %v1094, 0
        %1242 = vmatprep.subr.bf16.mxu0 0
        %1243 = vmatpush1.bf16.msra.mxu0 %v1237
        %1244 = vmatprep.subr.bf16.mxu0 0
        %1245 = vmatpush1.bf16.msra.mxu0 0
        %1246 = vmatprep.subr.bf16.mxu0 0
        %1247 = vmatpush1.bf16.msra.mxu0 0
        %1248 = vmatprep.subr.bf16.mxu0 0
        %1249 = vmatpush1.bf16.msra.mxu0 0
        %1250 = vmatprep.subr.bf16.mxu0 0
        %1251 = vmatpush1.bf16.msra.mxu0 0
        %1252 = vmatprep.subr.bf16.mxu0 0
        %1253 = vmatpush1.bf16.msra.mxu0 0
        %1254 = vmatprep.subr.bf16.mxu0 0
        %1255 = vmatpush1.bf16.msra.mxu0 0
        %1256 = vmatprep.subr.bf16.mxu0 0
        %1257 = vmatpush1.bf16.msra.mxu0 0
        %1258 = vmatprep.subr.bf16.mxu0 0
        %1259 = vmatpush1.bf16.msra.mxu0 0
        %1260 = vmatprep.subr.bf16.mxu0 0
        %1261 = vmatpush1.bf16.msra.mxu0 0
        %1262 = vmatprep.subr.bf16.mxu0 0
        %1263 = vmatpush1.bf16.msra.mxu0 0
        %1264 = vmatprep.subr.bf16.mxu0 0
        %1265 = vmatpush1.bf16.msra.mxu0 0
        %1266 = vmatprep.subr.bf16.mxu0 0
        %1267 = vmatpush1.bf16.msra.mxu0 0
        %1268 = vmatprep.subr.bf16.mxu0 0
        %1269 = vmatpush1.bf16.msra.mxu0 0
        %1270 = vmatprep.subr.bf16.mxu0 0
        %1271 = vmatpush1.bf16.msra.mxu0 0
        %1272 = vmatprep.subr.bf16.mxu0 0
        %1273 = vmatpush1.bf16.msra.mxu0 0
        %1274 = vmatprep.mubr.bf16.mxu0 0
        %1275 = vmatmul.mubr.bf16.gmra.mrb[0].mxu0 %v1240
        %v1276 = vpop.f32.mrb[0].mxu0
        %v1277 = vadd.f32 0.0, %v1276
        %v1278 = vpop.f32.mrb[0].mxu0
        %v1279 = vpop.f32.mrb[0].mxu0
        %v1280 = vadd.f32 0.0, %v1279
        %v1281 = vpop.f32.mrb[0].mxu0
        %1282 = vdwg.mxu0
        %1291 = vrot.lane.b32.xlu0 %v1136, 8
        %v1292 = vpop.permute.xlu0 %1291
        %1293 = vrot.lane.b32.xlu0 %v1139, 8
        %v1294 = vpop.permute.xlu0 %1293
        %1295 = vrot.lane.b32.xlu0 %v1183, 8
        %v1296 = vpop.permute.xlu0 %1295
        %1297 = vrot.lane.b32.xlu0 %v1186, 8
        %v1298 = vpop.permute.xlu0 %1297
        %1299 = vrot.lane.b32.xlu0 %v1230, 8
        %v1300 = vpop.permute.xlu0 %1299
        %1301 = vrot.lane.b32.xlu0 %v1233, 8
        %v1302 = vpop.permute.xlu0 %1301
        %1303 = vrot.lane.b32.xlu0 %v1277, 8
        %v1304 = vpop.permute.xlu0 %1303
        %1305 = vrot.lane.b32.xlu0 %v1280, 8
        %v1306 = vpop.permute.xlu0 %1305
        %v1315 = vsel %vm309, %v642, %v1292
        %v1316 = vsel %vm309, %v645, %v1294
        %v1317 = vsel %vm309, %v690, %v1296
        %v1318 = vsel %vm309, %v693, %v1298
        %v1319 = vsel %vm309, %v738, %v1300
        %v1320 = vsel %vm309, %v741, %v1302
        %v1321 = vsel %vm309, %v786, %v1304
        %v1322 = vsel %vm309, %v789, %v1306
        %1323 = vst.msk [vmem:[%s255] sm:$0xff] %vm507, %v1315
        %1324 = vst.msk [vmem:[%s255 + $0x8] sm:$0xff] %vm507, %v1316
        %1325 = vst.msk [vmem:[%s255 + $0x10] sm:$0xff] %vm507, %v1317
        %1326 = vst.msk [vmem:[%s255 + $0x18] sm:$0xff] %vm507, %v1318
        %1327 = vst.msk [vmem:[%s255 + $0x20] sm:$0xff] %vm507, %v1319
        %1328 = vst.msk [vmem:[%s255 + $0x28] sm:$0xff] %vm507, %v1320
        %1329 = vst.msk [vmem:[%s255 + $0x30] sm:$0xff] %vm507, %v1321
        %1330 = vst.msk [vmem:[%s255 + $0x38] sm:$0xff] %vm507, %v1322
        %s1331 = sand.u32 %s120, 1
        %s1332 = scalar_lea.sflag [#allocation4], %s1331
        %s1333 = sand.u32 %s120, 1
        %s1334 = smul.addr %s1333, 64
        %s1335 = scalar_lea.vmem [#allocation8], %s1334
        // Predicated region
        $region45: #{run.11} parent=31 // pred_check
          %p1336 = pneg %p130
        $region46: #{run.11} parent=31 // pred_check_branch
          %1338 = sbr.rel (%p1336) target = $region48
        $region47: #{run.11} parent=31 // pred_region
          %s1339 = smul.u32 4, %s28
          %s1341 = ssub.s32 1024, 1024
          %1342 = vsyncadd %s1332, %s1341
          %s1343 = smul.addr %s1339, 2
          %s1344 = smul.addr %s27, 8
          %s1345 = sadd.s32 %s1343, %s1344
          %s1346 = smul.addr %s1345, 128
          %s1347 = scalar_lea.hbm %s3, %s1346
          %s1348 = sshll.u32 %s1335, 4
          %s1349 = int_to_ptr.vmem [resolvable:$true] %s1348
          %1354 = dma.vmem_to_hbm [thread:$0]  %s1349, 1024, %s1347, %s1332, 128, 128, 8
        $region48: #{run.11} parent=31 // pred_fallthru
          _
      $region32: #{run.11} parent=5 // pred_fallthru
        _
      %p1355 = scmp.le.s32.totalorder 2, %s18
      // Predicated region
      $region49: #{run.11} parent=5 // pred_check
        %p1356 = pneg %p1355
      $region50: #{run.11} parent=5 // pred_check_branch
        %1358 = sbr.rel (%p1356) target = $region52
      $region51: #{run.11} parent=5 // pred_region
        %s1359 = ssub.s32 %s18, 2
        // Predicated region
        $region53: #{run.11} parent=51 // pred_check
          %p1360 = pneg %p136
        $region54: #{run.11} parent=51 // pred_check_branch
          %1362 = sbr.rel (%p1360) target = $region56
        $region55: #{run.11} parent=51 // pred_region
          %s1363 = sand.u32 %s121, 1
          %s1364 = scalar_lea.sflag [#allocation4], %s1363
          %s1365 = sand.u32 %s121, 1
          %s1366 = smul.addr %s1365, 64
          %s1367 = scalar_lea.vmem [#allocation8], %s1366
          %1368 = dma.done %s1364, 1024
        $region56: #{run.11} parent=51 // pred_fallthru
          _
      $region52: #{run.11} parent=5 // pred_fallthru
        _
    $region6: #{run.11} parent=1 // loop_footer
      %s22 = sadd.s32 1, %s18
    $region7: #{run.11} parent=1 // loop_footer_branch
      %17 = sbr.rel target = $region3
    $region8: #{run.11} parent=1 // loop_exit
      _
    %1369 = vsyncpa [#allocation3], 1
    %s1370 = scalar_lea.sflag [#allocation3], 1
    %1371 = vsyncpa %s1370, 1
    %1372 = vsyncpa [#allocation6], 1
    %s1373 = scalar_lea.sflag [#allocation6], 1
    %1374 = vsyncpa %s1373, 1
    %1375 = vsyncpa [#allocation4], 1
    %s1376 = scalar_lea.sflag [#allocation4], 1
    %1377 = vsyncpa %s1376, 1

// kernel: run.10
$region0: #{run.10}
  #allocation0 [shape = 'u32[]', space=smem, size = 0x4, offset = 0x4, fixed_abs, tag = 'smem constant byte address 0x4 - core index']
  #allocation1 [shape = 'u32[144,128]{1,0:T(1,128)}', space=vmem, size = 0x12000, scoped, tag = 'internal scratch']
  %s0 = inlined_call_operand.hbm [shape: f32[128,32], index: 0, kind: input, shape index: {}]
  %s1 = inlined_call_operand.hbm [shape: f32[1,32], index: 1, kind: input, shape index: {}]
  %s2 = inlined_call_operand.hbm [shape: f32[1,32], index: 2, kind: input, shape index: {}]
  %s3 = inlined_call_operand.hbm [shape: f32[32,16], index: 3, kind: input, shape index: {}]
  %s4 = inlined_call_operand.hbm [shape: f32[1,16], index: 4, kind: input, shape index: {}]
  %s5 = inlined_call_operand.hbm [shape: f32[128,16], index: 5, kind: output, shape index: {}]
  %s6 = sld [smem:[#allocation0]]
  $region50: #{run.10} parent=0
    _
  %s8 = ssub.s32 1, %s6
  %s9 = scalar_select 0, %s8, %s6
  $region1: #{run.10} parent=0
    #allocation2 [shape = 'u8[65536]{0}', space=vmem, size = 0x10000, scoped, tag = 'input window, operand 0, single buffered']
    #allocation3 [shape = 's32[1]{0}', space=sflag, size = 0x4, scoped, tag = 'scoped memory for run.10']
    #allocation4 [shape = 's32[1]{0}', space=sflag, size = 0x4, scoped, tag = 'scoped memory for run.10']
    #allocation5 [shape = 'u8[512]{0}', space=vmem, size = 0x400, scoped, tag = 'input window, operand 1, single buffered']
    #allocation6 [shape = 's32[1]{0}', space=sflag, size = 0x4, scoped, tag = 'scoped memory for run.10']
    #allocation7 [shape = 'u8[512]{0}', space=vmem, size = 0x400, scoped, tag = 'input window, operand 2, single buffered']
    #allocation8 [shape = 'u8[16384]{0}', space=vmem, size = 0x4000, scoped, tag = 'input window, operand 3, single buffered']
    #allocation9 [shape = 's32[1]{0}', space=sflag, size = 0x4, scoped, tag = 'scoped memory for run.10']
    #allocation10 [shape = 'u8[512]{0}', space=vmem, size = 0x400, scoped, tag = 'input window, operand 4, single buffered']
    #allocation11 [shape = 'u8[65536]{0}', space=vmem, size = 0x10000, scoped, tag = 'output window, operand 0, single buffered']
    %10 = vsyncpa [#allocation3], 0
    %11 = vsyncpa [#allocation6], 0
    %12 = vsyncpa [#allocation9], 0
    %13 = vsyncpa [#allocation4], 0
    // Predicated region
    $region2: #{run.10} parent=1 // pred_check
      _
    $region3: #{run.10} parent=1 // pred_check_branch
      %15 = sbr.rel (0) target = $region5
    $region4: #{run.10} parent=1 // pred_region
      %s17 = ssub.s32 2048, 2048
      %18 = vsyncadd [#allocation3], %s17
      %s19 = sshll.u32 [#allocation2], 4
      %s20 = int_to_ptr.vmem [resolvable:$true] %s19
      %25 = dma.hbm_to_vmem [thread:$0]  %s0, 2048, %s20, [#allocation3], 128, 128, 8
    $region5: #{run.10} parent=1 // pred_fallthru
      _
    // Predicated region
    $region6: #{run.10} parent=1 // pred_check
      _
    $region7: #{run.10} parent=1 // pred_check_branch
      %27 = sbr.rel (0) target = $region9
    $region8: #{run.10} parent=1 // pred_region
      %s29 = ssub.s32 16, 16
      %30 = vsyncadd [#allocation6], %s29
      %s32 = sshll.u32 [#allocation5], 4
      %s33 = int_to_ptr.vmem [resolvable:$true] %s32
      %35 = dma.hbm_to_vmem [thread:$0]  %s1, 16, %s33, [#allocation6]
    $region9: #{run.10} parent=1 // pred_fallthru
      _
    // Predicated region
    $region10: #{run.10} parent=1 // pred_check
      _
    $region11: #{run.10} parent=1 // pred_check_branch
      %37 = sbr.rel (0) target = $region13
    $region12: #{run.10} parent=1 // pred_region
      %s39 = ssub.s32 16, 16
      %40 = vsyncadd [#allocation6], %s39
      %s42 = sshll.u32 [#allocation7], 4
      %s43 = int_to_ptr.vmem [resolvable:$true] %s42
      %45 = dma.hbm_to_vmem [thread:$0]  %s2, 16, %s43, [#allocation6]
    $region13: #{run.10} parent=1 // pred_fallthru
      _
    // Predicated region
    $region14: #{run.10} parent=1 // pred_check
      _
    $region15: #{run.10} parent=1 // pred_check_branch
      %47 = sbr.rel (0) target = $region17
    $region16: #{run.10} parent=1 // pred_region
      %s49 = ssub.s32 512, 512
      %50 = vsyncadd [#allocation9], %s49
      %s51 = sshll.u32 [#allocation8], 4
      %s52 = int_to_ptr.vmem [resolvable:$true] %s51
      %57 = dma.hbm_to_vmem [thread:$0]  %s3, 512, %s52, [#allocation9], 128, 128, 8
    $region17: #{run.10} parent=1 // pred_fallthru
      _
    // Predicated region
    $region18: #{run.10} parent=1 // pred_check
      _
    $region19: #{run.10} parent=1 // pred_check_branch
      %59 = sbr.rel (0) target = $region21
    $region20: #{run.10} parent=1 // pred_region
      %s61 = ssub.s32 16, 16
      %62 = vsyncadd [#allocation9], %s61
      %s64 = sshll.u32 [#allocation10], 4
      %s65 = int_to_ptr.vmem [resolvable:$true] %s64
      %67 = dma.hbm_to_vmem [thread:$0]  %s4, 16, %s65, [#allocation9]
    $region21: #{run.10} parent=1 // pred_fallthru
      _
    // Predicated region
    $region22: #{run.10} parent=1 // pred_check
      _
    $region23: #{run.10} parent=1 // pred_check_branch
      %69 = sbr.rel (0) target = $region25
    $region24: #{run.10} parent=1 // pred_region
      %70 = dma.done [#allocation3], 2048
    $region25: #{run.10} parent=1 // pred_fallthru
      _
    // Predicated region
    $region26: #{run.10} parent=1 // pred_check
      _
    $region27: #{run.10} parent=1 // pred_check_branch
      %72 = sbr.rel (0) target = $region29
    $region28: #{run.10} parent=1 // pred_region
      %73 = dma.done [#allocation6], 16
    $region29: #{run.10} parent=1 // pred_fallthru
      _
    // Predicated region
    $region30: #{run.10} parent=1 // pred_check
      _
    $region31: #{run.10} parent=1 // pred_check_branch
      %75 = sbr.rel (0) target = $region33
    $region32: #{run.10} parent=1 // pred_region
      %76 = dma.done [#allocation6], 16
    $region33: #{run.10} parent=1 // pred_fallthru
      _
    // Predicated region
    $region34: #{run.10} parent=1 // pred_check
      _
    $region35: #{run.10} parent=1 // pred_check_branch
      %78 = sbr.rel (0) target = $region37
    $region36: #{run.10} parent=1 // pred_region
      %79 = dma.done [#allocation9], 512
    $region37: #{run.10} parent=1 // pred_fallthru
      _
    // Predicated region
    $region38: #{run.10} parent=1 // pred_check
      _
    $region39: #{run.10} parent=1 // pred_check_branch
      %81 = sbr.rel (0) target = $region41
    $region40: #{run.10} parent=1 // pred_region
      %82 = dma.done [#allocation9], 16
    $region41: #{run.10} parent=1 // pred_fallthru
      _
    %v84 = vld [vmem:[#allocation2] sm:$0xff]
    %v85 = vld [vmem:[#allocation2 + $0x8] sm:$0xff]
    %v86 = vld [vmem:[#allocation2 + $0x10] sm:$0xff]
    %v87 = vld [vmem:[#allocation2 + $0x18] sm:$0xff]
    %v88 = vld [vmem:[#allocation2 + $0x20] sm:$0xff]
    %v89 = vld [vmem:[#allocation2 + $0x28] sm:$0xff]
    %v90 = vld [vmem:[#allocation2 + $0x30] sm:$0xff]
    %v91 = vld [vmem:[#allocation2 + $0x38] sm:$0xff]
    %v92 = vld [vmem:[#allocation2 + $0x40] sm:$0xff]
    %v93 = vld [vmem:[#allocation2 + $0x48] sm:$0xff]
    %v94 = vld [vmem:[#allocation2 + $0x50] sm:$0xff]
    %v95 = vld [vmem:[#allocation2 + $0x58] sm:$0xff]
    %v96 = vld [vmem:[#allocation2 + $0x60] sm:$0xff]
    %v97 = vld [vmem:[#allocation2 + $0x68] sm:$0xff]
    %v98 = vld [vmem:[#allocation2 + $0x70] sm:$0xff]
    %v99 = vld [vmem:[#allocation2 + $0x78] sm:$0xff]
    %v100 = vld [vmem:[#allocation5] sm:$0x1]
    %v102 = vlaneseq
    %v103 = vshrl.u32 %v102, 7
    %v104 = vsub.s32 0, %v103
    %v105 = vrot.slane %v100, %v104
    %v107 = vmul.f32 %v84, %v105
    %v108 = vmul.f32 %v85, %v105
    %v109 = vmul.f32 %v86, %v105
    %v110 = vmul.f32 %v87, %v105
    %v111 = vmul.f32 %v88, %v105
    %v112 = vmul.f32 %v89, %v105
    %v113 = vmul.f32 %v90, %v105
    %v114 = vmul.f32 %v91, %v105
    %v115 = vmul.f32 %v92, %v105
    %v116 = vmul.f32 %v93, %v105
    %v117 = vmul.f32 %v94, %v105
    %v118 = vmul.f32 %v95, %v105
    %v119 = vmul.f32 %v96, %v105
    %v120 = vmul.f32 %v97, %v105
    %v121 = vmul.f32 %v98, %v105
    %v122 = vmul.f32 %v99, %v105
    %v123 = vld [vmem:[#allocation7] sm:$0x1]
    %v125 = vlaneseq
    %v126 = vshrl.u32 %v125, 7
    %v127 = vsub.s32 0, %v126
    %v128 = vrot.slane %v123, %v127
    %v130 = vadd.f32 %v107, %v128
    %v131 = vadd.f32 %v108, %v128
    %v132 = vadd.f32 %v109, %v128
    %v133 = vadd.f32 %v110, %v128
    %v134 = vadd.f32 %v111, %v128
    %v135 = vadd.f32 %v112, %v128
    %v136 = vadd.f32 %v113, %v128
    %v137 = vadd.f32 %v114, %v128
    %v138 = vadd.f32 %v115, %v128
    %v139 = vadd.f32 %v116, %v128
    %v140 = vadd.f32 %v117, %v128
    %v141 = vadd.f32 %v118, %v128
    %v142 = vadd.f32 %v119, %v128
    %v143 = vadd.f32 %v120, %v128
    %v144 = vadd.f32 %v121, %v128
    %v145 = vadd.f32 %v122, %v128
    %v146 = vmul.f32 %v130, 0.5
    %v147 = vmul.f32 %v131, 0.5
    %v148 = vmul.f32 %v132, 0.5
    %v149 = vmul.f32 %v133, 0.5
    %v150 = vmul.f32 %v134, 0.5
    %v151 = vmul.f32 %v135, 0.5
    %v152 = vmul.f32 %v136, 0.5
    %v153 = vmul.f32 %v137, 0.5
    %v154 = vmul.f32 %v138, 0.5
    %v155 = vmul.f32 %v139, 0.5
    %v156 = vmul.f32 %v140, 0.5
    %v157 = vmul.f32 %v141, 0.5
    %v158 = vmul.f32 %v142, 0.5
    %v159 = vmul.f32 %v143, 0.5
    %v160 = vmul.f32 %v144, 0.5
    %v161 = vmul.f32 %v145, 0.5
    %v162 = vmul.f32 %v130, 0.044715
    %v163 = vmul.f32 %v131, 0.044715
    %v164 = vmul.f32 %v132, 0.044715
    %v165 = vmul.f32 %v133, 0.044715
    %v166 = vmul.f32 %v134, 0.044715
    %v167 = vmul.f32 %v135, 0.044715
    %v168 = vmul.f32 %v136, 0.044715
    %v169 = vmul.f32 %v137, 0.044715
    %v170 = vmul.f32 %v138, 0.044715
    %v171 = vmul.f32 %v139, 0.044715
    %v172 = vmul.f32 %v140, 0.044715
    %v173 = vmul.f32 %v141, 0.044715
    %v174 = vmul.f32 %v142, 0.044715
    %v175 = vmul.f32 %v143, 0.044715
    %v176 = vmul.f32 %v144, 0.044715
    %v177 = vmul.f32 %v145, 0.044715
    %v178 = vmul.f32 %v162, %v130
    %v179 = vmul.f32 %v163, %v131
    %v180 = vmul.f32 %v164, %v132
    %v181 = vmul.f32 %v165, %v133
    %v182 = vmul.f32 %v166, %v134
    %v183 = vmul.f32 %v167, %v135
    %v184 = vmul.f32 %v168, %v136
    %v185 = vmul.f32 %v169, %v137
    %v186 = vmul.f32 %v170, %v138
    %v187 = vmul.f32 %v171, %v139
    %v188 = vmul.f32 %v172, %v140
    %v189 = vmul.f32 %v173, %v141
    %v190 = vmul.f32 %v174, %v142
    %v191 = vmul.f32 %v175, %v143
    %v192 = vmul.f32 %v176, %v144
    %v193 = vmul.f32 %v177, %v145
    %v194 = vmul.f32 %v178, %v130
    %v195 = vmul.f32 %v179, %v131
    %v196 = vmul.f32 %v180, %v132
    %v197 = vmul.f32 %v181, %v133
    %v198 = vmul.f32 %v182, %v134
    %v199 = vmul.f32 %v183, %v135
    %v200 = vmul.f32 %v184, %v136
    %v201 = vmul.f32 %v185, %v137
    %v202 = vmul.f32 %v186, %v138
    %v203 = vmul.f32 %v187, %v139
    %v204 = vmul.f32 %v188, %v140
    %v205 = vmul.f32 %v189, %v141
    %v206 = vmul.f32 %v190, %v142
    %v207 = vmul.f32 %v191, %v143
    %v208 = vmul.f32 %v192, %v144
    %v209 = vmul.f32 %v193, %v145
    %v210 = vadd.f32 %v130, %v194
    %v211 = vadd.f32 %v131, %v195
    %v212 = vadd.f32 %v132, %v196
    %v213 = vadd.f32 %v133, %v197
    %v214 = vadd.f32 %v134, %v198
    %v215 = vadd.f32 %v135, %v199
    %v216 = vadd.f32 %v136, %v200
    %v217 = vadd.f32 %v137, %v201
    %v218 = vadd.f32 %v138, %v202
    %v219 = vadd.f32 %v139, %v203
    %v220 = vadd.f32 %v140, %v204
    %v221 = vadd.f32 %v141, %v205
    %v222 = vadd.f32 %v142, %v206
    %v223 = vadd.f32 %v143, %v207
    %v224 = vadd.f32 %v144, %v208
    %v225 = vadd.f32 %v145, %v209
    %v226 = vmul.f32 %v210, 0.7978846
    %v227 = vmul.f32 %v211, 0.7978846
    %v228 = vmul.f32 %v212, 0.7978846
    %v229 = vmul.f32 %v213, 0.7978846
    %v230 = vmul.f32 %v214, 0.7978846
    %v231 = vmul.f32 %v215, 0.7978846
    %v232 = vmul.f32 %v216, 0.7978846
    %v233 = vmul.f32 %v217, 0.7978846
    %v234 = vmul.f32 %v218, 0.7978846
    %v235 = vmul.f32 %v219, 0.7978846
    %v236 = vmul.f32 %v220, 0.7978846
    %v237 = vmul.f32 %v221, 0.7978846
    %v238 = vmul.f32 %v222, 0.7978846
    %v239 = vmul.f32 %v223, 0.7978846
    %v240 = vmul.f32 %v224, 0.7978846
    %v241 = vmul.f32 %v225, 0.7978846
    %v242 = vtanh.pop %v226
    %v243 = vtanh.pop %v227
    %v244 = vtanh.pop %v228
    %v245 = vtanh.pop %v229
    %v246 = vtanh.pop %v230
    %v247 = vtanh.pop %v231
    %v248 = vtanh.pop %v232
    %v249 = vtanh.pop %v233
    %v250 = vtanh.pop %v234
    %v251 = vtanh.pop %v235
    %v252 = vtanh.pop %v236
    %v253 = vtanh.pop %v237
    %v254 = vtanh.pop %v238
    %v255 = vtanh.pop %v239
    %v256 = vtanh.pop %v240
    %v257 = vtanh.pop %v241
    %v258 = vadd.f32 %v242, 1.0
    %v259 = vadd.f32 %v243, 1.0
    %v260 = vadd.f32 %v244, 1.0
    %v261 = vadd.f32 %v245, 1.0
    %v262 = vadd.f32 %v246, 1.0
    %v263 = vadd.f32 %v247, 1.0
    %v264 = vadd.f32 %v248, 1.0
    %v265 = vadd.f32 %v249, 1.0
    %v266 = vadd.f32 %v250, 1.0
    %v267 = vadd.f32 %v251, 1.0
    %v268 = vadd.f32 %v252, 1.0
    %v269 = vadd.f32 %v253, 1.0
    %v270 = vadd.f32 %v254, 1.0
    %v271 = vadd.f32 %v255, 1.0
    %v272 = vadd.f32 %v256, 1.0
    %v273 = vadd.f32 %v257, 1.0
    %v274 = vmul.f32 %v146, %v258
    %v275 = vmul.f32 %v147, %v259
    %v276 = vmul.f32 %v148, %v260
    %v277 = vmul.f32 %v149, %v261
    %v278 = vmul.f32 %v150, %v262
    %v279 = vmul.f32 %v151, %v263
    %v280 = vmul.f32 %v152, %v264
    %v281 = vmul.f32 %v153, %v265
    %v282 = vmul.f32 %v154, %v266
    %v283 = vmul.f32 %v155, %v267
    %v284 = vmul.f32 %v156, %v268
    %v285 = vmul.f32 %v157, %v269
    %v286 = vmul.f32 %v158, %v270
    %v287 = vmul.f32 %v159, %v271
    %v288 = vmul.f32 %v160, %v272
    %v289 = vmul.f32 %v161, %v273
    %v290 = vld [vmem:[#allocation8] sm:$0xff]
    %v291 = vld [vmem:[#allocation8 + $0x8] sm:$0xff]
    %v292 = vld [vmem:[#allocation8 + $0x10] sm:$0xff]
    %v293 = vld [vmem:[#allocation8 + $0x18] sm:$0xff]
    %v294 = vpack.c.bf16 %v275, %v274
    %v295 = vpack.c.bf16 %v277, %v276
    %v296 = vpack.c.bf16 %v279, %v278
    %v297 = vpack.c.bf16 %v281, %v280
    %v298 = vpack.c.bf16 %v283, %v282
    %v299 = vpack.c.bf16 %v285, %v284
    %v300 = vpack.c.bf16 %v287, %v286
    %v301 = vpack.c.bf16 %v289, %v288
    %v302 = vpack.c.bf16 %v291, %v290
    %v303 = vpack.c.bf16 %v293, %v292
    %v304 = vld [vmem:[#allocation10] sm:$0x1]
    %v306 = vlaneseq
    %v307 = vshrl.u32 %v306, 7
    %v308 = vsub.s32 0, %v307
    %v309 = vrot.slane %v304, %v308
    %vm311 = vcmask 261120
    %v313 = vsel %vm311, %v294, 0
    %v316 = vsel %vm311, %v295, 0
    %v319 = vsel %vm311, %v296, 0
    %v322 = vsel %vm311, %v297, 0
    %v325 = vsel %vm311, %v298, 0
    %v328 = vsel %vm311, %v299, 0
    %v331 = vsel %vm311, %v300, 0
    %v334 = vsel %vm311, %v301, 0
    %336 = vmatprep.subr.bf16.mxu0 0
    %337 = vmatpush1.bf16.msra.mxu0 %v302
    %338 = vmatprep.subr.bf16.mxu0 0
    %339 = vmatpush1.bf16.msra.mxu0 %v303
    %340 = vmatprep.subr.bf16.mxu0 0
    %341 = vmatpush1.bf16.msra.mxu0 0
    %342 = vmatprep.subr.bf16.mxu0 0
    %343 = vmatpush1.bf16.msra.mxu0 0
    %344 = vmatprep.subr.bf16.mxu0 0
    %345 = vmatpush1.bf16.msra.mxu0 0
    %346 = vmatprep.subr.bf16.mxu0 0
    %347 = vmatpush1.bf16.msra.mxu0 0
    %348 = vmatprep.subr.bf16.mxu0 0
    %349 = vmatpush1.bf16.msra.mxu0 0
    %350 = vmatprep.subr.bf16.mxu0 0
    %351 = vmatpush1.bf16.msra.mxu0 0
    %352 = vmatprep.subr.bf16.mxu0 0
    %353 = vmatpush1.bf16.msra.mxu0 0
    %354 = vmatprep.subr.bf16.mxu0 0
    %355 = vmatpush1.bf16.msra.mxu0 0
    %356 = vmatprep.subr.bf16.mxu0 0
    %357 = vmatpush1.bf16.msra.mxu0 0
    %358 = vmatprep.subr.bf16.mxu0 0
    %359 = vmatpush1.bf16.msra.mxu0 0
    %360 = vmatprep.subr.bf16.mxu0 0
    %361 = vmatpush1.bf16.msra.mxu0 0
    %362 = vmatprep.subr.bf16.mxu0 0
    %363 = vmatpush1.bf16.msra.mxu0 0
    %364 = vmatprep.subr.bf16.mxu0 0
    %365 = vmatpush1.bf16.msra.mxu0 0
    %366 = vmatprep.subr.bf16.mxu0 0
    %367 = vmatpush1.bf16.msra.mxu0 0
    %368 = vmatprep.mubr.bf16.mxu0 0
    %369 = vmatmul.mubr.bf16.gmra.mrb[0].mxu0 %v313
    %v370 = vpop.f32.mrb[0].mxu0
    %v371 = vadd.f32 %v309, %v370
    %v372 = vpop.f32.mrb[0].mxu0
    %v373 = vpop.f32.mrb[0].mxu0
    %v374 = vadd.f32 %v309, %v373
    %v375 = vpop.f32.mrb[0].mxu0
    %376 = vmatprep.mubr.bf16.mxu0 0
    %377 = vmatmul.mubr.bf16.gmra.mrb[0].mxu0 %v316
    %v378 = vpop.f32.mrb[0].mxu0
    %v379 = vadd.f32 %v309, %v378
    %v380 = vpop.f32.mrb[0].mxu0
    %v381 = vpop.f32.mrb[0].mxu0
    %v382 = vadd.f32 %v309, %v381
    %v383 = vpop.f32.mrb[0].mxu0
    %384 = vmatprep.mubr.bf16.mxu0 0
    %385 = vmatmul.mubr.bf16.gmra.mrb[0].mxu0 %v319
    %v386 = vpop.f32.mrb[0].mxu0
    %v387 = vadd.f32 %v309, %v386
    %v388 = vpop.f32.mrb[0].mxu0
    %v389 = vpop.f32.mrb[0].mxu0
    %v390 = vadd.f32 %v309, %v389
    %v391 = vpop.f32.mrb[0].mxu0
    %392 = vmatprep.mubr.bf16.mxu0 0
    %393 = vmatmul.mubr.bf16.gmra.mrb[0].mxu0 %v322
    %v394 = vpop.f32.mrb[0].mxu0
    %v395 = vadd.f32 %v309, %v394
    %v396 = vpop.f32.mrb[0].mxu0
    %v397 = vpop.f32.mrb[0].mxu0
    %v398 = vadd.f32 %v309, %v397
    %v399 = vpop.f32.mrb[0].mxu0
    %400 = vmatprep.mubr.bf16.mxu0 0
    %401 = vmatmul.mubr.bf16.gmra.mrb[0].mxu0 %v325
    %v402 = vpop.f32.mrb[0].mxu0
    %v403 = vadd.f32 %v309, %v402
    %v404 = vpop.f32.mrb[0].mxu0
    %v405 = vpop.f32.mrb[0].mxu0
    %v406 = vadd.f32 %v309, %v405
    %v407 = vpop.f32.mrb[0].mxu0
    %408 = vmatprep.mubr.bf16.mxu0 0
    %409 = vmatmul.mubr.bf16.gmra.mrb[0].mxu0 %v328
    %v410 = vpop.f32.mrb[0].mxu0
    %v411 = vadd.f32 %v309, %v410
    %v412 = vpop.f32.mrb[0].mxu0
    %v413 = vpop.f32.mrb[0].mxu0
    %v414 = vadd.f32 %v309, %v413
    %v415 = vpop.f32.mrb[0].mxu0
    %416 = vmatprep.mubr.bf16.mxu0 0
    %417 = vmatmul.mubr.bf16.gmra.mrb[0].mxu0 %v331
    %v418 = vpop.f32.mrb[0].mxu0
    %v419 = vadd.f32 %v309, %v418
    %v420 = vpop.f32.mrb[0].mxu0
    %v421 = vpop.f32.mrb[0].mxu0
    %v422 = vadd.f32 %v309, %v421
    %v423 = vpop.f32.mrb[0].mxu0
    %424 = vmatprep.mubr.bf16.mxu0 0
    %425 = vmatmul.mubr.bf16.gmra.mrb[0].mxu0 %v334
    %v426 = vpop.f32.mrb[0].mxu0
    %v427 = vadd.f32 %v309, %v426
    %v428 = vpop.f32.mrb[0].mxu0
    %v429 = vpop.f32.mrb[0].mxu0
    %v430 = vadd.f32 %v309, %v429
    %v431 = vpop.f32.mrb[0].mxu0
    %432 = vdwg.mxu0
    %vm433 = vcmask 130048
    %434 = vst.msk [vmem:[#allocation11] sm:$0xff] %vm433, %v371
    %435 = vst.msk [vmem:[#allocation11 + $0x8] sm:$0xff] %vm433, %v374
    %436 = vst.msk [vmem:[#allocation11 + $0x10] sm:$0xff] %vm433, %v379
    %437 = vst.msk [vmem:[#allocation11 + $0x18] sm:$0xff] %vm433, %v382
    %438 = vst.msk [vmem:[#allocation11 + $0x20] sm:$0xff] %vm433, %v387
    %439 = vst.msk [vmem:[#allocation11 + $0x28] sm:$0xff] %vm433, %v390
    %440 = vst.msk [vmem:[#allocation11 + $0x30] sm:$0xff] %vm433, %v395
    %441 = vst.msk [vmem:[#allocation11 + $0x38] sm:$0xff] %vm433, %v398
    %442 = vst.msk [vmem:[#allocation11 + $0x40] sm:$0xff] %vm433, %v403
    %443 = vst.msk [vmem:[#allocation11 + $0x48] sm:$0xff] %vm433, %v406
    %444 = vst.msk [vmem:[#allocation11 + $0x50] sm:$0xff] %vm433, %v411
    %445 = vst.msk [vmem:[#allocation11 + $0x58] sm:$0xff] %vm433, %v414
    %446 = vst.msk [vmem:[#allocation11 + $0x60] sm:$0xff] %vm433, %v419
    %447 = vst.msk [vmem:[#allocation11 + $0x68] sm:$0xff] %vm433, %v422
    %448 = vst.msk [vmem:[#allocation11 + $0x70] sm:$0xff] %vm433, %v427
    %449 = vst.msk [vmem:[#allocation11 + $0x78] sm:$0xff] %vm433, %v430
    // Predicated region
    $region42: #{run.10} parent=1 // pred_check
      _
    $region43: #{run.10} parent=1 // pred_check_branch
      %451 = sbr.rel (0) target = $region45
    $region44: #{run.10} parent=1 // pred_region
      %s453 = ssub.s32 2048, 2048
      %454 = vsyncadd [#allocation4], %s453
      %s455 = sshll.u32 [#allocation11], 4
      %s456 = int_to_ptr.vmem [resolvable:$true] %s455
      %461 = dma.vmem_to_hbm [thread:$0]  %s456, 2048, %s5, [#allocation4], 128, 128, 8
    $region45: #{run.10} parent=1 // pred_fallthru
      _
    // Predicated region
    $region46: #{run.10} parent=1 // pred_check
      _
    $region47: #{run.10} parent=1 // pred_check_branch
      %463 = sbr.rel (0) target = $region49
    $region48: #{run.10} parent=1 // pred_region
      %464 = dma.done [#allocation4], 2048
    $region49: #{run.10} parent=1 // pred_fallthru
      _
    %465 = vsyncpa [#allocation3], 1
    %466 = vsyncpa [#allocation6], 1
    %467 = vsyncpa [#allocation9], 1
    %468 = vsyncpa [#allocation4], 1

// kernel: run.12
$region0: #{run.12}
  #allocation0 [shape = 'u32[]', space=smem, size = 0x4, offset = 0x4, fixed_abs, tag = 'smem constant byte address 0x4 - core index']
  #allocation1 [shape = 'u32[144,128]{1,0:T(1,128)}', space=vmem, size = 0x12000, scoped, tag = 'internal scratch']
  %s0 = inlined_call_operand.hbm [shape: f32[128,16], index: 0, kind: input, shape index: {}]
  %s1 = inlined_call_operand.hbm [shape: f32[128,16], index: 1, kind: input, shape index: {}]
  %s2 = inlined_call_operand.hbm [shape: f32[1,16], index: 2, kind: input, shape index: {}]
  %s3 = inlined_call_operand.hbm [shape: f32[1,16], index: 3, kind: input, shape index: {}]
  %s4 = inlined_call_operand.hbm [shape: f32[1,16], index: 4, kind: input, shape index: {}]
  %s5 = inlined_call_operand.hbm [shape: f32[1,16], index: 5, kind: input, shape index: {}]
  %s6 = inlined_call_operand.hbm [shape: f32[32,32], index: 6, kind: input, shape index: {}]
  %s7 = inlined_call_operand.hbm [shape: f32[1,32], index: 7, kind: input, shape index: {}]
  %s8 = inlined_call_operand.hbm [shape: f32[128,32], index: 8, kind: output, shape index: {}]
  %s9 = sld [smem:[#allocation0]]
  $region74: #{run.12} parent=0
    _
  %s11 = ssub.s32 1, %s9
  %s12 = scalar_select 0, %s11, %s9
  $region1: #{run.12} parent=0
    #allocation2 [shape = 'u8[65536]{0}', space=vmem, size = 0x10000, scoped, tag = 'input window, operand 0, single buffered']
    #allocation3 [shape = 's32[1]{0}', space=sflag, size = 0x4, scoped, tag = 'scoped memory for run.12']
    #allocation4 [shape = 's32[1]{0}', space=sflag, size = 0x4, scoped, tag = 'scoped memory for run.12']
    #allocation5 [shape = 'u8[65536]{0}', space=vmem, size = 0x10000, scoped, tag = 'input window, operand 1, single buffered']
    #allocation6 [shape = 's32[1]{0}', space=sflag, size = 0x4, scoped, tag = 'scoped memory for run.12']
    #allocation7 [shape = 'u8[512]{0}', space=vmem, size = 0x400, scoped, tag = 'input window, operand 2, single buffered']
    #allocation8 [shape = 'u8[512]{0}', space=vmem, size = 0x400, scoped, tag = 'input window, operand 3, single buffered']
    #allocation9 [shape = 's32[1]{0}', space=sflag, size = 0x4, scoped, tag = 'scoped memory for run.12']
    #allocation10 [shape = 'u8[512]{0}', space=vmem, size = 0x400, scoped, tag = 'input window, operand 4, single buffered']
    #allocation11 [shape = 'u8[512]{0}', space=vmem, size = 0x400, scoped, tag = 'input window, operand 5, single buffered']
    #allocation12 [shape = 's32[1]{0}', space=sflag, size = 0x4, scoped, tag = 'scoped memory for run.12']
    #allocation13 [shape = 'u8[16384]{0}', space=vmem, size = 0x4000, scoped, tag = 'input window, operand 6, single buffered']
    #allocation14 [shape = 'u8[512]{0}', space=vmem, size = 0x400, scoped, tag = 'input window, operand 7, single buffered']
    #allocation15 [shape = 's32[1]{0}', space=sflag, size = 0x4, scoped, tag = 'scoped memory for run.12']
    #allocation16 [shape = 'u8[65536]{0}', space=vmem, size = 0x10000, scoped, tag = 'output window, operand 0, single buffered']
    %13 = vsyncpa [#allocation3], 0
    %14 = vsyncpa [#allocation6], 0
    %15 = vsyncpa [#allocation9], 0
    %16 = vsyncpa [#allocation12], 0
    %17 = vsyncpa [#allocation15], 0
    %18 = vsyncpa [#allocation4], 0
    // Predicated region
    $region2: #{run.12} parent=1 // pred_check
      _
    $region3: #{run.12} parent=1 // pred_check_branch
      %20 = sbr.rel (0) target = $region5
    $region4: #{run.12} parent=1 // pred_region
      %s22 = ssub.s32 2048, 2048
      %23 = vsyncadd [#allocation3], %s22
      %s24 = sshll.u32 [#allocation2], 4
      %s25 = int_to_ptr.vmem [resolvable:$true] %s24
      %30 = dma.hbm_to_vmem [thread:$0]  %s0, 2048, %s25, [#allocation3], 128, 128, 8
    $region5: #{run.12} parent=1 // pred_fallthru
      _
    // Predicated region
    $region6: #{run.12} parent=1 // pred_check
      _
    $region7: #{run.12} parent=1 // pred_check_branch
      %32 = sbr.rel (0) target = $region9
    $region8: #{run.12} parent=1 // pred_region
      %s34 = ssub.s32 2048, 2048
      %35 = vsyncadd [#allocation6], %s34
      %s36 = sshll.u32 [#allocation5], 4
      %s37 = int_to_ptr.vmem [resolvable:$true] %s36
      %42 = dma.hbm_to_vmem [thread:$0]  %s1, 2048, %s37, [#allocation6], 128, 128, 8
    $region9: #{run.12} parent=1 // pred_fallthru
      _
    // Predicated region
    $region10: #{run.12} parent=1 // pred_check
      _
    $region11: #{run.12} parent=1 // pred_check_branch
      %44 = sbr.rel (0) target = $region13
    $region12: #{run.12} parent=1 // pred_region
      %s46 = ssub.s32 16, 16
      %47 = vsyncadd [#allocation6], %s46
      %s49 = sshll.u32 [#allocation7], 4
      %s50 = int_to_ptr.vmem [resolvable:$true] %s49
      %52 = dma.hbm_to_vmem [thread:$0]  %s2, 16, %s50, [#allocation6]
    $region13: #{run.12} parent=1 // pred_fallthru
      _
    // Predicated region
    $region14: #{run.12} parent=1 // pred_check
      _
    $region15: #{run.12} parent=1 // pred_check_branch
      %54 = sbr.rel (0) target = $region17
    $region16: #{run.12} parent=1 // pred_region
      %s56 = ssub.s32 16, 16
      %57 = vsyncadd [#allocation9], %s56
      %s59 = sshll.u32 [#allocation8], 4
      %s60 = int_to_ptr.vmem [resolvable:$true] %s59
      %62 = dma.hbm_to_vmem [thread:$0]  %s3, 16, %s60, [#allocation9]
    $region17: #{run.12} parent=1 // pred_fallthru
      _
    // Predicated region
    $region18: #{run.12} parent=1 // pred_check
      _
    $region19: #{run.12} parent=1 // pred_check_branch
      %64 = sbr.rel (0) target = $region21
    $region20: #{run.12} parent=1 // pred_region
      %s66 = ssub.s32 16, 16
      %67 = vsyncadd [#allocation9], %s66
      %s69 = sshll.u32 [#allocation10], 4
      %s70 = int_to_ptr.vmem [resolvable:$true] %s69
      %72 = dma.hbm_to_vmem [thread:$0]  %s4, 16, %s70, [#allocation9]
    $region21: #{run.12} parent=1 // pred_fallthru
      _
    // Predicated region
    $region22: #{run.12} parent=1 // pred_check
      _
    $region23: #{run.12} parent=1 // pred_check_branch
      %74 = sbr.rel (0) target = $region25
    $region24: #{run.12} parent=1 // pred_region
      %s76 = ssub.s32 16, 16
      %77 = vsyncadd [#allocation12], %s76
      %s79 = sshll.u32 [#allocation11], 4
      %s80 = int_to_ptr.vmem [resolvable:$true] %s79
      %82 = dma.hbm_to_vmem [thread:$0]  %s5, 16, %s80, [#allocation12]
    $region25: #{run.12} parent=1 // pred_fallthru
      _
    // Predicated region
    $region26: #{run.12} parent=1 // pred_check
      _
    $region27: #{run.12} parent=1 // pred_check_branch
      %84 = sbr.rel (0) target = $region29
    $region28: #{run.12} parent=1 // pred_region
      %s86 = ssub.s32 512, 512
      %87 = vsyncadd [#allocation12], %s86
      %s88 = sshll.u32 [#allocation13], 4
      %s89 = int_to_ptr.vmem [resolvable:$true] %s88
      %94 = dma.hbm_to_vmem [thread:$0]  %s6, 512, %s89, [#allocation12], 128, 128, 8
    $region29: #{run.12} parent=1 // pred_fallthru
      _
    // Predicated region
    $region30: #{run.12} parent=1 // pred_check
      _
    $region31: #{run.12} parent=1 // pred_check_branch
      %96 = sbr.rel (0) target = $region33
    $region32: #{run.12} parent=1 // pred_region
      %s98 = ssub.s32 16, 16
      %99 = vsyncadd [#allocation15], %s98
      %s101 = sshll.u32 [#allocation14], 4
      %s102 = int_to_ptr.vmem [resolvable:$true] %s101
      %104 = dma.hbm_to_vmem [thread:$0]  %s7, 16, %s102, [#allocation15]
    $region33: #{run.12} parent=1 // pred_fallthru
      _
    // Predicated region
    $region34: #{run.12} parent=1 // pred_check
      _
    $region35: #{run.12} parent=1 // pred_check_branch
      %106 = sbr.rel (0) target = $region37
    $region36: #{run.12} parent=1 // pred_region
      %107 = dma.done [#allocation3], 2048
    $region37: #{run.12} parent=1 // pred_fallthru
      _
    // Predicated region
    $region38: #{run.12} parent=1 // pred_check
      _
    $region39: #{run.12} parent=1 // pred_check_branch
      %109 = sbr.rel (0) target = $region41
    $region40: #{run.12} parent=1 // pred_region
      %110 = dma.done [#allocation6], 2048
    $region41: #{run.12} parent=1 // pred_fallthru
      _
    // Predicated region
    $region42: #{run.12} parent=1 // pred_check
      _
    $region43: #{run.12} parent=1 // pred_check_branch
      %112 = sbr.rel (0) target = $region45
    $region44: #{run.12} parent=1 // pred_region
      %113 = dma.done [#allocation6], 16
    $region45: #{run.12} parent=1 // pred_fallthru
      _
    // Predicated region
    $region46: #{run.12} parent=1 // pred_check
      _
    $region47: #{run.12} parent=1 // pred_check_branch
      %115 = sbr.rel (0) target = $region49
    $region48: #{run.12} parent=1 // pred_region
      %116 = dma.done [#allocation9], 16
    $region49: #{run.12} parent=1 // pred_fallthru
      _
    // Predicated region
    $region50: #{run.12} parent=1 // pred_check
      _
    $region51: #{run.12} parent=1 // pred_check_branch
      %118 = sbr.rel (0) target = $region53
    $region52: #{run.12} parent=1 // pred_region
      %119 = dma.done [#allocation9], 16
    $region53: #{run.12} parent=1 // pred_fallthru
      _
    // Predicated region
    $region54: #{run.12} parent=1 // pred_check
      _
    $region55: #{run.12} parent=1 // pred_check_branch
      %121 = sbr.rel (0) target = $region57
    $region56: #{run.12} parent=1 // pred_region
      %122 = dma.done [#allocation12], 16
    $region57: #{run.12} parent=1 // pred_fallthru
      _
    // Predicated region
    $region58: #{run.12} parent=1 // pred_check
      _
    $region59: #{run.12} parent=1 // pred_check_branch
      %124 = sbr.rel (0) target = $region61
    $region60: #{run.12} parent=1 // pred_region
      %125 = dma.done [#allocation12], 512
    $region61: #{run.12} parent=1 // pred_fallthru
      _
    // Predicated region
    $region62: #{run.12} parent=1 // pred_check
      _
    $region63: #{run.12} parent=1 // pred_check_branch
      %127 = sbr.rel (0) target = $region65
    $region64: #{run.12} parent=1 // pred_region
      %128 = dma.done [#allocation15], 16
    $region65: #{run.12} parent=1 // pred_fallthru
      _
    %v130 = vld [vmem:[#allocation2] sm:$0xff]
    %v131 = vld [vmem:[#allocation2 + $0x8] sm:$0xff]
    %v132 = vld [vmem:[#allocation2 + $0x10] sm:$0xff]
    %v133 = vld [vmem:[#allocation2 + $0x18] sm:$0xff]
    %v134 = vld [vmem:[#allocation2 + $0x20] sm:$0xff]
    %v135 = vld [vmem:[#allocation2 + $0x28] sm:$0xff]
    %v136 = vld [vmem:[#allocation2 + $0x30] sm:$0xff]
    %v137 = vld [vmem:[#allocation2 + $0x38] sm:$0xff]
    %v138 = vld [vmem:[#allocation2 + $0x40] sm:$0xff]
    %v139 = vld [vmem:[#allocation2 + $0x48] sm:$0xff]
    %v140 = vld [vmem:[#allocation2 + $0x50] sm:$0xff]
    %v141 = vld [vmem:[#allocation2 + $0x58] sm:$0xff]
    %v142 = vld [vmem:[#allocation2 + $0x60] sm:$0xff]
    %v143 = vld [vmem:[#allocation2 + $0x68] sm:$0xff]
    %v144 = vld [vmem:[#allocation2 + $0x70] sm:$0xff]
    %v145 = vld [vmem:[#allocation2 + $0x78] sm:$0xff]
    %v146 = vld [vmem:[#allocation7] sm:$0x1]
    %v147 = vld [vmem:[#allocation8] sm:$0x1]
    %vm148 = vcmask 130048
    %v149 = vsel %vm148, %v130, 0.0
    %150 = vadd.xlane.f32.xlu0 %v149
    %v151 = vpop.xlane.xlu0 %150
    %v152 = vsel %vm148, %v131, 0.0
    %153 = vadd.xlane.f32.xlu0 %v152
    %v154 = vpop.xlane.xlu0 %153
    %v155 = vsel %vm148, %v132, 0.0
    %156 = vadd.xlane.f32.xlu0 %v155
    %v157 = vpop.xlane.xlu0 %156
    %v158 = vsel %vm148, %v133, 0.0
    %159 = vadd.xlane.f32.xlu0 %v158
    %v160 = vpop.xlane.xlu0 %159
    %v161 = vsel %vm148, %v134, 0.0
    %162 = vadd.xlane.f32.xlu0 %v161
    %v163 = vpop.xlane.xlu0 %162
    %v164 = vsel %vm148, %v135, 0.0
    %165 = vadd.xlane.f32.xlu0 %v164
    %v166 = vpop.xlane.xlu0 %165
    %v167 = vsel %vm148, %v136, 0.0
    %168 = vadd.xlane.f32.xlu0 %v167
    %v169 = vpop.xlane.xlu0 %168
    %v170 = vsel %vm148, %v137, 0.0
    %171 = vadd.xlane.f32.xlu0 %v170
    %v172 = vpop.xlane.xlu0 %171
    %v173 = vsel %vm148, %v138, 0.0
    %174 = vadd.xlane.f32.xlu0 %v173
    %v175 = vpop.xlane.xlu0 %174
    %v176 = vsel %vm148, %v139, 0.0
    %177 = vadd.xlane.f32.xlu0 %v176
    %v178 = vpop.xlane.xlu0 %177
    %v179 = vsel %vm148, %v140, 0.0
    %180 = vadd.xlane.f32.xlu0 %v179
    %v181 = vpop.xlane.xlu0 %180
    %v182 = vsel %vm148, %v141, 0.0
    %183 = vadd.xlane.f32.xlu0 %v182
    %v184 = vpop.xlane.xlu0 %183
    %v185 = vsel %vm148, %v142, 0.0
    %186 = vadd.xlane.f32.xlu0 %v185
    %v187 = vpop.xlane.xlu0 %186
    %v188 = vsel %vm148, %v143, 0.0
    %189 = vadd.xlane.f32.xlu0 %v188
    %v190 = vpop.xlane.xlu0 %189
    %v191 = vsel %vm148, %v144, 0.0
    %192 = vadd.xlane.f32.xlu0 %v191
    %v193 = vpop.xlane.xlu0 %192
    %v194 = vsel %vm148, %v145, 0.0
    %195 = vadd.xlane.f32.xlu0 %v194
    %v196 = vpop.xlane.xlu0 %195
    %v197 = vrcp.pop 16.0
    %v198 = vmul.f32 %v151, %v197
    %v199 = vmul.f32 %v154, %v197
    %v200 = vmul.f32 %v157, %v197
    %v201 = vmul.f32 %v160, %v197
    %v202 = vmul.f32 %v163, %v197
    %v203 = vmul.f32 %v166, %v197
    %v204 = vmul.f32 %v169, %v197
    %v205 = vmul.f32 %v172, %v197
    %v206 = vmul.f32 %v175, %v197
    %v207 = vmul.f32 %v178, %v197
    %v208 = vmul.f32 %v181, %v197
    %v209 = vmul.f32 %v184, %v197
    %v210 = vmul.f32 %v187, %v197
    %v211 = vmul.f32 %v190, %v197
    %v212 = vmul.f32 %v193, %v197
    %v213 = vmul.f32 %v196, %v197
    %v214 = vsub.f32 %v130, %v198
    %v215 = vsub.f32 %v131, %v199
    %v216 = vsub.f32 %v132, %v200
    %v217 = vsub.f32 %v133, %v201
    %v218 = vsub.f32 %v134, %v202
    %v219 = vsub.f32 %v135, %v203
    %v220 = vsub.f32 %v136, %v204
    %v221 = vsub.f32 %v137, %v205
    %v222 = vsub.f32 %v138, %v206
    %v223 = vsub.f32 %v139, %v207
    %v224 = vsub.f32 %v140, %v208
    %v225 = vsub.f32 %v141, %v209
    %v226 = vsub.f32 %v142, %v210
    %v227 = vsub.f32 %v143, %v211
    %v228 = vsub.f32 %v144, %v212
    %v229 = vsub.f32 %v145, %v213
    %v230 = vmul.f32 %v214, %v214
    %v231 = vmul.f32 %v215, %v215
    %v232 = vmul.f32 %v216, %v216
    %v233 = vmul.f32 %v217, %v217
    %v234 = vmul.f32 %v218, %v218
    %v235 = vmul.f32 %v219, %v219
    %v236 = vmul.f32 %v220, %v220
    %v237 = vmul.f32 %v221, %v221
    %v238 = vmul.f32 %v222, %v222
    %v239 = vmul.f32 %v223, %v223
    %v240 = vmul.f32 %v224, %v224
    %v241 = vmul.f32 %v225, %v225
    %v242 = vmul.f32 %v226, %v226
    %v243 = vmul.f32 %v227, %v227
    %v244 = vmul.f32 %v228, %v228
    %v245 = vmul.f32 %v229, %v229
    %v246 = vsel %vm148, %v230, 0.0
    %247 = vadd.xlane.f32.xlu0 %v246
    %v248 = vpop.xlane.xlu0 %247
    %v249 = vsel %vm148, %v231, 0.0
    %250 = vadd.xlane.f32.xlu0 %v249
    %v251 = vpop.xlane.xlu0 %250
    %v252 = vsel %vm148, %v232, 0.0
    %253 = vadd.xlane.f32.xlu0 %v252
    %v254 = vpop.xlane.xlu0 %253
    %v255 = vsel %vm148, %v233, 0.0
    %256 = vadd.xlane.f32.xlu0 %v255
    %v257 = vpop.xlane.xlu0 %256
    %v258 = vsel %vm148, %v234, 0.0
    %259 = vadd.xlane.f32.xlu0 %v258
    %v260 = vpop.xlane.xlu0 %259
    %v261 = vsel %vm148, %v235, 0.0
    %262 = vadd.xlane.f32.xlu0 %v261
    %v263 = vpop.xlane.xlu0 %262
    %v264 = vsel %vm148, %v236, 0.0
    %265 = vadd.xlane.f32.xlu0 %v264
    %v266 = vpop.xlane.xlu0 %265
    %v267 = vsel %vm148, %v237, 0.0
    %268 = vadd.xlane.f32.xlu0 %v267
    %v269 = vpop.xlane.xlu0 %268
    %v270 = vsel %vm148, %v238, 0.0
    %271 = vadd.xlane.f32.xlu0 %v270
    %v272 = vpop.xlane.xlu0 %271
    %v273 = vsel %vm148, %v239, 0.0
    %274 = vadd.xlane.f32.xlu0 %v273
    %v275 = vpop.xlane.xlu0 %274
    %v276 = vsel %vm148, %v240, 0.0
    %277 = vadd.xlane.f32.xlu0 %v276
    %v278 = vpop.xlane.xlu0 %277
    %v279 = vsel %vm148, %v241, 0.0
    %280 = vadd.xlane.f32.xlu0 %v279
    %v281 = vpop.xlane.xlu0 %280
    %v282 = vsel %vm148, %v242, 0.0
    %283 = vadd.xlane.f32.xlu0 %v282
    %v284 = vpop.xlane.xlu0 %283
    %v285 = vsel %vm148, %v243, 0.0
    %286 = vadd.xlane.f32.xlu0 %v285
    %v287 = vpop.xlane.xlu0 %286
    %v288 = vsel %vm148, %v244, 0.0
    %289 = vadd.xlane.f32.xlu0 %v288
    %v290 = vpop.xlane.xlu0 %289
    %v291 = vsel %vm148, %v245, 0.0
    %292 = vadd.xlane.f32.xlu0 %v291
    %v293 = vpop.xlane.xlu0 %292
    %v294 = vmul.f32 %v248, %v197
    %v295 = vmul.f32 %v251, %v197
    %v296 = vmul.f32 %v254, %v197
    %v297 = vmul.f32 %v257, %v197
    %v298 = vmul.f32 %v260, %v197
    %v299 = vmul.f32 %v263, %v197
    %v300 = vmul.f32 %v266, %v197
    %v301 = vmul.f32 %v269, %v197
    %v302 = vmul.f32 %v272, %v197
    %v303 = vmul.f32 %v275, %v197
    %v304 = vmul.f32 %v278, %v197
    %v305 = vmul.f32 %v281, %v197
    %v306 = vmul.f32 %v284, %v197
    %v307 = vmul.f32 %v287, %v197
    %v308 = vmul.f32 %v290, %v197
    %v309 = vmul.f32 %v293, %v197
    %v310 = vadd.f32 %v294, 1e-05
    %v311 = vadd.f32 %v295, 1e-05
    %v312 = vadd.f32 %v296, 1e-05
    %v313 = vadd.f32 %v297, 1e-05
    %v314 = vadd.f32 %v298, 1e-05
    %v315 = vadd.f32 %v299, 1e-05
    %v316 = vadd.f32 %v300, 1e-05
    %v317 = vadd.f32 %v301, 1e-05
    %v318 = vadd.f32 %v302, 1e-05
    %v319 = vadd.f32 %v303, 1e-05
    %v320 = vadd.f32 %v304, 1e-05
    %v321 = vadd.f32 %v305, 1e-05
    %v322 = vadd.f32 %v306, 1e-05
    %v323 = vadd.f32 %v307, 1e-05
    %v324 = vadd.f32 %v308, 1e-05
    %v325 = vadd.f32 %v309, 1e-05
    %v326 = vrsqrt.pop %v310
    %v327 = vrsqrt.pop %v311
    %v328 = vrsqrt.pop %v312
    %v329 = vrsqrt.pop %v313
    %v330 = vrsqrt.pop %v314
    %v331 = vrsqrt.pop %v315
    %v332 = vrsqrt.pop %v316
    %v333 = vrsqrt.pop %v317
    %v334 = vrsqrt.pop %v318
    %v335 = vrsqrt.pop %v319
    %v336 = vrsqrt.pop %v320
    %v337 = vrsqrt.pop %v321
    %v338 = vrsqrt.pop %v322
    %v339 = vrsqrt.pop %v323
    %v340 = vrsqrt.pop %v324
    %v341 = vrsqrt.pop %v325
    %v342 = vmul.f32 %v214, %v326
    %v343 = vmul.f32 %v215, %v327
    %v344 = vmul.f32 %v216, %v328
    %v345 = vmul.f32 %v217, %v329
    %v346 = vmul.f32 %v218, %v330
    %v347 = vmul.f32 %v219, %v331
    %v348 = vmul.f32 %v220, %v332
    %v349 = vmul.f32 %v221, %v333
    %v350 = vmul.f32 %v222, %v334
    %v351 = vmul.f32 %v223, %v335
    %v352 = vmul.f32 %v224, %v336
    %v353 = vmul.f32 %v225, %v337
    %v354 = vmul.f32 %v226, %v338
    %v355 = vmul.f32 %v227, %v339
    %v356 = vmul.f32 %v228, %v340
    %v357 = vmul.f32 %v229, %v341
    %v359 = vlaneseq
    %v360 = vshrl.u32 %v359, 7
    %v361 = vsub.s32 0, %v360
    %v362 = vrot.slane %v146, %v361
    %v364 = vmul.f32 %v342, %v362
    %v365 = vmul.f32 %v343, %v362
    %v366 = vmul.f32 %v344, %v362
    %v367 = vmul.f32 %v345, %v362
    %v368 = vmul.f32 %v346, %v362
    %v369 = vmul.f32 %v347, %v362
    %v370 = vmul.f32 %v348, %v362
    %v371 = vmul.f32 %v349, %v362
    %v372 = vmul.f32 %v350, %v362
    %v373 = vmul.f32 %v351, %v362
    %v374 = vmul.f32 %v352, %v362
    %v375 = vmul.f32 %v353, %v362
    %v376 = vmul.f32 %v354, %v362
    %v377 = vmul.f32 %v355, %v362
    %v378 = vmul.f32 %v356, %v362
    %v379 = vmul.f32 %v357, %v362
    %v381 = vlaneseq
    %v382 = vshrl.u32 %v381, 7
    %v383 = vsub.s32 0, %v382
    %v384 = vrot.slane %v147, %v383
    %v386 = vadd.f32 %v364, %v384
    %v387 = vadd.f32 %v365, %v384
    %v388 = vadd.f32 %v366, %v384
    %v389 = vadd.f32 %v367, %v384
    %v390 = vadd.f32 %v368, %v384
    %v391 = vadd.f32 %v369, %v384
    %v392 = vadd.f32 %v370, %v384
    %v393 = vadd.f32 %v371, %v384
    %v394 = vadd.f32 %v372, %v384
    %v395 = vadd.f32 %v373, %v384
    %v396 = vadd.f32 %v374, %v384
    %v397 = vadd.f32 %v375, %v384
    %v398 = vadd.f32 %v376, %v384
    %v399 = vadd.f32 %v377, %v384
    %v400 = vadd.f32 %v378, %v384
    %v401 = vadd.f32 %v379, %v384
    %v402 = vld [vmem:[#allocation5] sm:$0xff]
    %v403 = vld [vmem:[#allocation5 + $0x8] sm:$0xff]
    %v404 = vld [vmem:[#allocation5 + $0x10] sm:$0xff]
    %v405 = vld [vmem:[#allocation5 + $0x18] sm:$0xff]
    %v406 = vld [vmem:[#allocation5 + $0x20] sm:$0xff]
    %v407 = vld [vmem:[#allocation5 + $0x28] sm:$0xff]
    %v408 = vld [vmem:[#allocation5 + $0x30] sm:$0xff]
    %v409 = vld [vmem:[#allocation5 + $0x38] sm:$0xff]
    %v410 = vld [vmem:[#allocation5 + $0x40] sm:$0xff]
    %v411 = vld [vmem:[#allocation5 + $0x48] sm:$0xff]
    %v412 = vld [vmem:[#allocation5 + $0x50] sm:$0xff]
    %v413 = vld [vmem:[#allocation5 + $0x58] sm:$0xff]
    %v414 = vld [vmem:[#allocation5 + $0x60] sm:$0xff]
    %v415 = vld [vmem:[#allocation5 + $0x68] sm:$0xff]
    %v416 = vld [vmem:[#allocation5 + $0x70] sm:$0xff]
    %v417 = vld [vmem:[#allocation5 + $0x78] sm:$0xff]
    %v418 = vld [vmem:[#allocation10] sm:$0x1]
    %v420 = vlaneseq
    %v421 = vshrl.u32 %v420, 7
    %v422 = vsub.s32 0, %v421
    %v423 = vrot.slane %v418, %v422
    %v425 = vmul.f32 %v402, %v423
    %v426 = vmul.f32 %v403, %v423
    %v427 = vmul.f32 %v404, %v423
    %v428 = vmul.f32 %v405, %v423
    %v429 = vmul.f32 %v406, %v423
    %v430 = vmul.f32 %v407, %v423
    %v431 = vmul.f32 %v408, %v423
    %v432 = vmul.f32 %v409, %v423
    %v433 = vmul.f32 %v410, %v423
    %v434 = vmul.f32 %v411, %v423
    %v435 = vmul.f32 %v412, %v423
    %v436 = vmul.f32 %v413, %v423
    %v437 = vmul.f32 %v414, %v423
    %v438 = vmul.f32 %v415, %v423
    %v439 = vmul.f32 %v416, %v423
    %v440 = vmul.f32 %v417, %v423
    %v441 = vld [vmem:[#allocation11] sm:$0x1]
    %v443 = vlaneseq
    %v444 = vshrl.u32 %v443, 7
    %v445 = vsub.s32 0, %v444
    %v446 = vrot.slane %v441, %v445
    %v448 = vadd.f32 %v425, %v446
    %v449 = vadd.f32 %v426, %v446
    %v450 = vadd.f32 %v427, %v446
    %v451 = vadd.f32 %v428, %v446
    %v452 = vadd.f32 %v429, %v446
    %v453 = vadd.f32 %v430, %v446
    %v454 = vadd.f32 %v431, %v446
    %v455 = vadd.f32 %v432, %v446
    %v456 = vadd.f32 %v433, %v446
    %v457 = vadd.f32 %v434, %v446
    %v458 = vadd.f32 %v435, %v446
    %v459 = vadd.f32 %v436, %v446
    %v460 = vadd.f32 %v437, %v446
    %v461 = vadd.f32 %v438, %v446
    %v462 = vadd.f32 %v439, %v446
    %v463 = vadd.f32 %v440, %v446
    %v464 = vld [vmem:[#allocation13] sm:$0xff]
    %v465 = vld [vmem:[#allocation13 + $0x8] sm:$0xff]
    %v466 = vld [vmem:[#allocation13 + $0x10] sm:$0xff]
    %v467 = vld [vmem:[#allocation13 + $0x18] sm:$0xff]
    %v468 = vpack.c.bf16 %v387, %v386
    %v469 = vpack.c.bf16 %v389, %v388
    %v470 = vpack.c.bf16 %v391, %v390
    %v471 = vpack.c.bf16 %v393, %v392
    %v472 = vpack.c.bf16 %v395, %v394
    %v473 = vpack.c.bf16 %v397, %v396
    %v474 = vpack.c.bf16 %v399, %v398
    %v475 = vpack.c.bf16 %v401, %v400
    %v476 = vpack.c.bf16 %v465, %v464
    %v477 = vpack.c.bf16 %v449, %v448
    %v478 = vpack.c.bf16 %v451, %v450
    %v479 = vpack.c.bf16 %v453, %v452
    %v480 = vpack.c.bf16 %v455, %v454
    %v481 = vpack.c.bf16 %v457, %v456
    %v482 = vpack.c.bf16 %v459, %v458
    %v483 = vpack.c.bf16 %v461, %v460
    %v484 = vpack.c.bf16 %v463, %v462
    %v485 = vpack.c.bf16 %v467, %v466
    %v487 = vsel %vm148, %v477, 0
    %v490 = vsel %vm148, %v478, 0
    %v493 = vsel %vm148, %v479, 0
    %v496 = vsel %vm148, %v480, 0
    %v499 = vsel %vm148, %v481, 0
    %v502 = vsel %vm148, %v482, 0
    %v505 = vsel %vm148, %v483, 0
    %v508 = vsel %vm148, %v484, 0
    %510 = vmatprep.subr.bf16.mxu0 0
    %511 = vmatpush1.bf16.msra.mxu0 %v485
    %512 = vmatprep.subr.bf16.mxu0 0
    %513 = vmatpush1.bf16.msra.mxu0 0
    %514 = vmatprep.subr.bf16.mxu0 0
    %515 = vmatpush1.bf16.msra.mxu0 0
    %516 = vmatprep.subr.bf16.mxu0 0
    %517 = vmatpush1.bf16.msra.mxu0 0
    %518 = vmatprep.subr.bf16.mxu0 0
    %519 = vmatpush1.bf16.msra.mxu0 0
    %520 = vmatprep.subr.bf16.mxu0 0
    %521 = vmatpush1.bf16.msra.mxu0 0
    %522 = vmatprep.subr.bf16.mxu0 0
    %523 = vmatpush1.bf16.msra.mxu0 0
    %524 = vmatprep.subr.bf16.mxu0 0
    %525 = vmatpush1.bf16.msra.mxu0 0
    %526 = vmatprep.subr.bf16.mxu0 0
    %527 = vmatpush1.bf16.msra.mxu0 0
    %528 = vmatprep.subr.bf16.mxu0 0
    %529 = vmatpush1.bf16.msra.mxu0 0
    %530 = vmatprep.subr.bf16.mxu0 0
    %531 = vmatpush1.bf16.msra.mxu0 0
    %532 = vmatprep.subr.bf16.mxu0 0
    %533 = vmatpush1.bf16.msra.mxu0 0
    %534 = vmatprep.subr.bf16.mxu0 0
    %535 = vmatpush1.bf16.msra.mxu0 0
    %536 = vmatprep.subr.bf16.mxu0 0
    %537 = vmatpush1.bf16.msra.mxu0 0
    %538 = vmatprep.subr.bf16.mxu0 0
    %539 = vmatpush1.bf16.msra.mxu0 0
    %540 = vmatprep.subr.bf16.mxu0 0
    %541 = vmatpush1.bf16.msra.mxu0 0
    %542 = vmatprep.mubr.bf16.mxu0 0
    %543 = vmatmul.mubr.bf16.gmra.mrb[0].mxu0 %v487
    %v544 = vpop.f32.mrb[0].mxu0
    %v545 = vadd.f32 0.0, %v544
    %v546 = vpop.f32.mrb[0].mxu0
    %v547 = vpop.f32.mrb[0].mxu0
    %v548 = vadd.f32 0.0, %v547
    %v549 = vpop.f32.mrb[0].mxu0
    %550 = vmatprep.mubr.bf16.mxu0 0
    %551 = vmatmul.mubr.bf16.gmra.mrb[0].mxu0 %v490
    %v552 = vpop.f32.mrb[0].mxu0
    %v553 = vadd.f32 0.0, %v552
    %v554 = vpop.f32.mrb[0].mxu0
    %v555 = vpop.f32.mrb[0].mxu0
    %v556 = vadd.f32 0.0, %v555
    %v557 = vpop.f32.mrb[0].mxu0
    %558 = vmatprep.mubr.bf16.mxu0 0
    %559 = vmatmul.mubr.bf16.gmra.mrb[0].mxu0 %v493
    %v560 = vpop.f32.mrb[0].mxu0
    %v561 = vadd.f32 0.0, %v560
    %v562 = vpop.f32.mrb[0].mxu0
    %v563 = vpop.f32.mrb[0].mxu0
    %v564 = vadd.f32 0.0, %v563
    %v565 = vpop.f32.mrb[0].mxu0
    %566 = vmatprep.mubr.bf16.mxu0 0
    %567 = vmatmul.mubr.bf16.gmra.mrb[0].mxu0 %v496
    %v568 = vpop.f32.mrb[0].mxu0
    %v569 = vadd.f32 0.0, %v568
    %v570 = vpop.f32.mrb[0].mxu0
    %v571 = vpop.f32.mrb[0].mxu0
    %v572 = vadd.f32 0.0, %v571
    %v573 = vpop.f32.mrb[0].mxu0
    %574 = vmatprep.mubr.bf16.mxu0 0
    %575 = vmatmul.mubr.bf16.gmra.mrb[0].mxu0 %v499
    %v576 = vpop.f32.mrb[0].mxu0
    %v577 = vadd.f32 0.0, %v576
    %v578 = vpop.f32.mrb[0].mxu0
    %v579 = vpop.f32.mrb[0].mxu0
    %v580 = vadd.f32 0.0, %v579
    %v581 = vpop.f32.mrb[0].mxu0
    %582 = vmatprep.mubr.bf16.mxu0 0
    %583 = vmatmul.mubr.bf16.gmra.mrb[0].mxu0 %v502
    %v584 = vpop.f32.mrb[0].mxu0
    %v585 = vadd.f32 0.0, %v584
    %v586 = vpop.f32.mrb[0].mxu0
    %v587 = vpop.f32.mrb[0].mxu0
    %v588 = vadd.f32 0.0, %v587
    %v589 = vpop.f32.mrb[0].mxu0
    %590 = vmatprep.mubr.bf16.mxu0 0
    %591 = vmatmul.mubr.bf16.gmra.mrb[0].mxu0 %v505
    %v592 = vpop.f32.mrb[0].mxu0
    %v593 = vadd.f32 0.0, %v592
    %v594 = vpop.f32.mrb[0].mxu0
    %v595 = vpop.f32.mrb[0].mxu0
    %v596 = vadd.f32 0.0, %v595
    %v597 = vpop.f32.mrb[0].mxu0
    %598 = vmatprep.mubr.bf16.mxu0 0
    %599 = vmatmul.mubr.bf16.gmra.mrb[0].mxu0 %v508
    %v600 = vpop.f32.mrb[0].mxu0
    %v601 = vadd.f32 0.0, %v600
    %v602 = vpop.f32.mrb[0].mxu0
    %v603 = vpop.f32.mrb[0].mxu0
    %v604 = vadd.f32 0.0, %v603
    %v605 = vpop.f32.mrb[0].mxu0
    %606 = vdwg.mxu0
    %v608 = vsel %vm148, %v468, 0
    %v611 = vsel %vm148, %v469, 0
    %v614 = vsel %vm148, %v470, 0
    %v617 = vsel %vm148, %v471, 0
    %v620 = vsel %vm148, %v472, 0
    %v623 = vsel %vm148, %v473, 0
    %v626 = vsel %vm148, %v474, 0
    %v629 = vsel %vm148, %v475, 0
    %631 = vmatprep.subr.bf16.mxu0 0
    %632 = vmatpush1.bf16.msra.mxu0 %v476
    %633 = vmatprep.subr.bf16.mxu0 0
    %634 = vmatpush1.bf16.msra.mxu0 0
    %635 = vmatprep.subr.bf16.mxu0 0
    %636 = vmatpush1.bf16.msra.mxu0 0
    %637 = vmatprep.subr.bf16.mxu0 0
    %638 = vmatpush1.bf16.msra.mxu0 0
    %639 = vmatprep.subr.bf16.mxu0 0
    %640 = vmatpush1.bf16.msra.mxu0 0
    %641 = vmatprep.subr.bf16.mxu0 0
    %642 = vmatpush1.bf16.msra.mxu0 0
    %643 = vmatprep.subr.bf16.mxu0 0
    %644 = vmatpush1.bf16.msra.mxu0 0
    %645 = vmatprep.subr.bf16.mxu0 0
    %646 = vmatpush1.bf16.msra.mxu0 0
    %647 = vmatprep.subr.bf16.mxu0 0
    %648 = vmatpush1.bf16.msra.mxu0 0
    %649 = vmatprep.subr.bf16.mxu0 0
    %650 = vmatpush1.bf16.msra.mxu0 0
    %651 = vmatprep.subr.bf16.mxu0 0
    %652 = vmatpush1.bf16.msra.mxu0 0
    %653 = vmatprep.subr.bf16.mxu0 0
    %654 = vmatpush1.bf16.msra.mxu0 0
    %655 = vmatprep.subr.bf16.mxu0 0
    %656 = vmatpush1.bf16.msra.mxu0 0
    %657 = vmatprep.subr.bf16.mxu0 0
    %658 = vmatpush1.bf16.msra.mxu0 0
    %659 = vmatprep.subr.bf16.mxu0 0
    %660 = vmatpush1.bf16.msra.mxu0 0
    %661 = vmatprep.subr.bf16.mxu0 0
    %662 = vmatpush1.bf16.msra.mxu0 0
    %663 = vmatprep.mubr.bf16.mxu0 0
    %664 = vmatmul.mubr.bf16.gmra.mrb[0].mxu0 %v608
    %v665 = vpop.f32.mrb[0].mxu0
    %v666 = vadd.f32 %v545, %v665
    %v667 = vpop.f32.mrb[0].mxu0
    %v668 = vpop.f32.mrb[0].mxu0
    %v669 = vadd.f32 %v548, %v668
    %v670 = vpop.f32.mrb[0].mxu0
    %671 = vmatprep.mubr.bf16.mxu0 0
    %672 = vmatmul.mubr.bf16.gmra.mrb[0].mxu0 %v611
    %v673 = vpop.f32.mrb[0].mxu0
    %v674 = vadd.f32 %v553, %v673
    %v675 = vpop.f32.mrb[0].mxu0
    %v676 = vpop.f32.mrb[0].mxu0
    %v677 = vadd.f32 %v556, %v676
    %v678 = vpop.f32.mrb[0].mxu0
    %679 = vmatprep.mubr.bf16.mxu0 0
    %680 = vmatmul.mubr.bf16.gmra.mrb[0].mxu0 %v614
    %v681 = vpop.f32.mrb[0].mxu0
    %v682 = vadd.f32 %v561, %v681
    %v683 = vpop.f32.mrb[0].mxu0
    %v684 = vpop.f32.mrb[0].mxu0
    %v685 = vadd.f32 %v564, %v684
    %v686 = vpop.f32.mrb[0].mxu0
    %687 = vmatprep.mubr.bf16.mxu0 0
    %688 = vmatmul.mubr.bf16.gmra.mrb[0].mxu0 %v617
    %v689 = vpop.f32.mrb[0].mxu0
    %v690 = vadd.f32 %v569, %v689
    %v691 = vpop.f32.mrb[0].mxu0
    %v692 = vpop.f32.mrb[0].mxu0
    %v693 = vadd.f32 %v572, %v692
    %v694 = vpop.f32.mrb[0].mxu0
    %695 = vmatprep.mubr.bf16.mxu0 0
    %696 = vmatmul.mubr.bf16.gmra.mrb[0].mxu0 %v620
    %v697 = vpop.f32.mrb[0].mxu0
    %v698 = vadd.f32 %v577, %v697
    %v699 = vpop.f32.mrb[0].mxu0
    %v700 = vpop.f32.mrb[0].mxu0
    %v701 = vadd.f32 %v580, %v700
    %v702 = vpop.f32.mrb[0].mxu0
    %703 = vmatprep.mubr.bf16.mxu0 0
    %704 = vmatmul.mubr.bf16.gmra.mrb[0].mxu0 %v623
    %v705 = vpop.f32.mrb[0].mxu0
    %v706 = vadd.f32 %v585, %v705
    %v707 = vpop.f32.mrb[0].mxu0
    %v708 = vpop.f32.mrb[0].mxu0
    %v709 = vadd.f32 %v588, %v708
    %v710 = vpop.f32.mrb[0].mxu0
    %711 = vmatprep.mubr.bf16.mxu0 0
    %712 = vmatmul.mubr.bf16.gmra.mrb[0].mxu0 %v626
    %v713 = vpop.f32.mrb[0].mxu0
    %v714 = vadd.f32 %v593, %v713
    %v715 = vpop.f32.mrb[0].mxu0
    %v716 = vpop.f32.mrb[0].mxu0
    %v717 = vadd.f32 %v596, %v716
    %v718 = vpop.f32.mrb[0].mxu0
    %719 = vmatprep.mubr.bf16.mxu0 0
    %720 = vmatmul.mubr.bf16.gmra.mrb[0].mxu0 %v629
    %v721 = vpop.f32.mrb[0].mxu0
    %v722 = vadd.f32 %v601, %v721
    %v723 = vpop.f32.mrb[0].mxu0
    %v724 = vpop.f32.mrb[0].mxu0
    %v725 = vadd.f32 %v604, %v724
    %v726 = vpop.f32.mrb[0].mxu0
    %727 = vdwg.mxu0
    %v728 = vld [vmem:[#allocation14] sm:$0x1]
    %v730 = vlaneseq
    %v731 = vshrl.u32 %v730, 7
    %v732 = vsub.s32 0, %v731
    %v733 = vrot.slane %v728, %v732
    %v735 = vadd.f32 %v666, %v733
    %v736 = vadd.f32 %v669, %v733
    %v737 = vadd.f32 %v674, %v733
    %v738 = vadd.f32 %v677, %v733
    %v739 = vadd.f32 %v682, %v733
    %v740 = vadd.f32 %v685, %v733
    %v741 = vadd.f32 %v690, %v733
    %v742 = vadd.f32 %v693, %v733
    %v743 = vadd.f32 %v698, %v733
    %v744 = vadd.f32 %v701, %v733
    %v745 = vadd.f32 %v706, %v733
    %v746 = vadd.f32 %v709, %v733
    %v747 = vadd.f32 %v714, %v733
    %v748 = vadd.f32 %v717, %v733
    %v749 = vadd.f32 %v722, %v733
    %v750 = vadd.f32 %v725, %v733
    %vm751 = vcmask 261120
    %752 = vst.msk [vmem:[#allocation16] sm:$0xff] %vm751, %v735
    %753 = vst.msk [vmem:[#allocation16 + $0x8] sm:$0xff] %vm751, %v736
    %754 = vst.msk [vmem:[#allocation16 + $0x10] sm:$0xff] %vm751, %v737
    %755 = vst.msk [vmem:[#allocation16 + $0x18] sm:$0xff] %vm751, %v738
    %756 = vst.msk [vmem:[#allocation16 + $0x20] sm:$0xff] %vm751, %v739
    %757 = vst.msk [vmem:[#allocation16 + $0x28] sm:$0xff] %vm751, %v740
    %758 = vst.msk [vmem:[#allocation16 + $0x30] sm:$0xff] %vm751, %v741
    %759 = vst.msk [vmem:[#allocation16 + $0x38] sm:$0xff] %vm751, %v742
    %760 = vst.msk [vmem:[#allocation16 + $0x40] sm:$0xff] %vm751, %v743
    %761 = vst.msk [vmem:[#allocation16 + $0x48] sm:$0xff] %vm751, %v744
    %762 = vst.msk [vmem:[#allocation16 + $0x50] sm:$0xff] %vm751, %v745
    %763 = vst.msk [vmem:[#allocation16 + $0x58] sm:$0xff] %vm751, %v746
    %764 = vst.msk [vmem:[#allocation16 + $0x60] sm:$0xff] %vm751, %v747
    %765 = vst.msk [vmem:[#allocation16 + $0x68] sm:$0xff] %vm751, %v748
    %766 = vst.msk [vmem:[#allocation16 + $0x70] sm:$0xff] %vm751, %v749
    %767 = vst.msk [vmem:[#allocation16 + $0x78] sm:$0xff] %vm751, %v750
    // Predicated region
    $region66: #{run.12} parent=1 // pred_check
      _
    $region67: #{run.12} parent=1 // pred_check_branch
      %769 = sbr.rel (0) target = $region69
    $region68: #{run.12} parent=1 // pred_region
      %s771 = ssub.s32 2048, 2048
      %772 = vsyncadd [#allocation4], %s771
      %s773 = sshll.u32 [#allocation16], 4
      %s774 = int_to_ptr.vmem [resolvable:$true] %s773
      %779 = dma.vmem_to_hbm [thread:$0]  %s774, 2048, %s8, [#allocation4], 128, 128, 8
    $region69: #{run.12} parent=1 // pred_fallthru
      _
    // Predicated region
    $region70: #{run.12} parent=1 // pred_check
      _
    $region71: #{run.12} parent=1 // pred_check_branch
      %781 = sbr.rel (0) target = $region73
    $region72: #{run.12} parent=1 // pred_region
      %782 = dma.done [#allocation4], 2048
    $region73: #{run.12} parent=1 // pred_fallthru
      _
    %783 = vsyncpa [#allocation3], 1
    %784 = vsyncpa [#allocation6], 1
    %785 = vsyncpa [#allocation9], 1
    %786 = vsyncpa [#allocation12], 1
    %787 = vsyncpa [#allocation15], 1
    %788 = vsyncpa [#allocation4], 1

// kernel: run.13
$region0: #{run.13}
  #allocation0 [shape = 'u32[]', space=smem, size = 0x4, offset = 0x4, fixed_abs, tag = 'smem constant byte address 0x4 - core index']
  #allocation1 [shape = 'u32[144,128]{1,0:T(1,128)}', space=vmem, size = 0x12000, scoped, tag = 'internal scratch']
  %s0 = inlined_call_operand.hbm [shape: f32[128,32], index: 0, kind: input, shape index: {}]
  %s1 = inlined_call_operand.hbm [shape: f32[1,32], index: 1, kind: input, shape index: {}]
  %s2 = inlined_call_operand.hbm [shape: f32[1,32], index: 2, kind: input, shape index: {}]
  %s3 = inlined_call_operand.hbm [shape: f32[32,64], index: 3, kind: input, shape index: {}]
  %s4 = inlined_call_operand.hbm [shape: f32[1,64], index: 4, kind: input, shape index: {}]
  %s5 = inlined_call_operand.hbm [shape: f32[1,64], index: 5, kind: input, shape index: {}]
  %s6 = inlined_call_operand.hbm [shape: f32[1,64], index: 6, kind: input, shape index: {}]
  %s7 = inlined_call_operand.hbm [shape: f32[64,32], index: 7, kind: input, shape index: {}]
  %s8 = inlined_call_operand.hbm [shape: f32[1,32], index: 8, kind: input, shape index: {}]
  %s9 = inlined_call_operand.hbm [shape: f32[128,32], index: 9, kind: output, shape index: {}]
  %s10 = sld [smem:[#allocation0]]
  $region82: #{run.13} parent=0
    _
  %s12 = ssub.s32 1, %s10
  %s13 = scalar_select 0, %s12, %s10
  $region1: #{run.13} parent=0
    #allocation2 [shape = 'u8[65536]{0}', space=vmem, size = 0x10000, scoped, tag = 'input window, operand 0, single buffered']
    #allocation3 [shape = 's32[1]{0}', space=sflag, size = 0x4, scoped, tag = 'scoped memory for run.13']
    #allocation4 [shape = 's32[1]{0}', space=sflag, size = 0x4, scoped, tag = 'scoped memory for run.13']
    #allocation5 [shape = 'u8[512]{0}', space=vmem, size = 0x400, scoped, tag = 'input window, operand 1, single buffered']
    #allocation6 [shape = 's32[1]{0}', space=sflag, size = 0x4, scoped, tag = 'scoped memory for run.13']
    #allocation7 [shape = 'u8[512]{0}', space=vmem, size = 0x400, scoped, tag = 'input window, operand 2, single buffered']
    #allocation8 [shape = 'u8[16384]{0}', space=vmem, size = 0x4000, scoped, tag = 'input window, operand 3, single buffered']
    #allocation9 [shape = 's32[1]{0}', space=sflag, size = 0x4, scoped, tag = 'scoped memory for run.13']
    #allocation10 [shape = 'u8[512]{0}', space=vmem, size = 0x400, scoped, tag = 'input window, operand 4, single buffered']
    #allocation11 [shape = 'u8[512]{0}', space=vmem, size = 0x400, scoped, tag = 'input window, operand 5, single buffered']
    #allocation12 [shape = 's32[1]{0}', space=sflag, size = 0x4, scoped, tag = 'scoped memory for run.13']
    #allocation13 [shape = 'u8[512]{0}', space=vmem, size = 0x400, scoped, tag = 'input window, operand 6, single buffered']
    #allocation14 [shape = 'u8[32768]{0}', space=vmem, size = 0x8000, scoped, tag = 'input window, operand 7, single buffered']
    #allocation15 [shape = 's32[1]{0}', space=sflag, size = 0x4, scoped, tag = 'scoped memory for run.13']
    #allocation16 [shape = 'u8[512]{0}', space=vmem, size = 0x400, scoped, tag = 'input window, operand 8, single buffered']
    #allocation17 [shape = 'u8[65536]{0}', space=vmem, size = 0x10000, scoped, tag = 'output window, operand 0, single buffered']
    %14 = vsyncpa [#allocation3], 0
    %15 = vsyncpa [#allocation6], 0
    %16 = vsyncpa [#allocation9], 0
    %17 = vsyncpa [#allocation12], 0
    %18 = vsyncpa [#allocation15], 0
    %19 = vsyncpa [#allocation4], 0
    // Predicated region
    $region2: #{run.13} parent=1 // pred_check
      _
    $region3: #{run.13} parent=1 // pred_check_branch
      %21 = sbr.rel (0) target = $region5
    $region4: #{run.13} parent=1 // pred_region
      %s23 = ssub.s32 2048, 2048
      %24 = vsyncadd [#allocation3], %s23
      %s25 = sshll.u32 [#allocation2], 4
      %s26 = int_to_ptr.vmem [resolvable:$true] %s25
      %31 = dma.hbm_to_vmem [thread:$0]  %s0, 2048, %s26, [#allocation3], 128, 128, 8
    $region5: #{run.13} parent=1 // pred_fallthru
      _
    // Predicated region
    $region6: #{run.13} parent=1 // pred_check
      _
    $region7: #{run.13} parent=1 // pred_check_branch
      %33 = sbr.rel (0) target = $region9
    $region8: #{run.13} parent=1 // pred_region
      %s35 = ssub.s32 16, 16
      %36 = vsyncadd [#allocation6], %s35
      %s38 = sshll.u32 [#allocation5], 4
      %s39 = int_to_ptr.vmem [resolvable:$true] %s38
      %41 = dma.hbm_to_vmem [thread:$0]  %s1, 16, %s39, [#allocation6]
    $region9: #{run.13} parent=1 // pred_fallthru
      _
    // Predicated region
    $region10: #{run.13} parent=1 // pred_check
      _
    $region11: #{run.13} parent=1 // pred_check_branch
      %43 = sbr.rel (0) target = $region13
    $region12: #{run.13} parent=1 // pred_region
      %s45 = ssub.s32 16, 16
      %46 = vsyncadd [#allocation6], %s45
      %s48 = sshll.u32 [#allocation7], 4
      %s49 = int_to_ptr.vmem [resolvable:$true] %s48
      %51 = dma.hbm_to_vmem [thread:$0]  %s2, 16, %s49, [#allocation6]
    $region13: #{run.13} parent=1 // pred_fallthru
      _
    // Predicated region
    $region14: #{run.13} parent=1 // pred_check
      _
    $region15: #{run.13} parent=1 // pred_check_branch
      %53 = sbr.rel (0) target = $region17
    $region16: #{run.13} parent=1 // pred_region
      %s55 = ssub.s32 512, 512
      %56 = vsyncadd [#allocation9], %s55
      %s57 = sshll.u32 [#allocation8], 4
      %s58 = int_to_ptr.vmem [resolvable:$true] %s57
      %63 = dma.hbm_to_vmem [thread:$0]  %s3, 512, %s58, [#allocation9], 128, 128, 8
    $region17: #{run.13} parent=1 // pred_fallthru
      _
    // Predicated region
    $region18: #{run.13} parent=1 // pred_check
      _
    $region19: #{run.13} parent=1 // pred_check_branch
      %65 = sbr.rel (0) target = $region21
    $region20: #{run.13} parent=1 // pred_region
      %s67 = ssub.s32 16, 16
      %68 = vsyncadd [#allocation9], %s67
      %s70 = sshll.u32 [#allocation10], 4
      %s71 = int_to_ptr.vmem [resolvable:$true] %s70
      %73 = dma.hbm_to_vmem [thread:$0]  %s4, 16, %s71, [#allocation9]
    $region21: #{run.13} parent=1 // pred_fallthru
      _
    // Predicated region
    $region22: #{run.13} parent=1 // pred_check
      _
    $region23: #{run.13} parent=1 // pred_check_branch
      %75 = sbr.rel (0) target = $region25
    $region24: #{run.13} parent=1 // pred_region
      %s77 = ssub.s32 16, 16
      %78 = vsyncadd [#allocation12], %s77
      %s80 = sshll.u32 [#allocation11], 4
      %s81 = int_to_ptr.vmem [resolvable:$true] %s80
      %83 = dma.hbm_to_vmem [thread:$0]  %s5, 16, %s81, [#allocation12]
    $region25: #{run.13} parent=1 // pred_fallthru
      _
    // Predicated region
    $region26: #{run.13} parent=1 // pred_check
      _
    $region27: #{run.13} parent=1 // pred_check_branch
      %85 = sbr.rel (0) target = $region29
    $region28: #{run.13} parent=1 // pred_region
      %s87 = ssub.s32 16, 16
      %88 = vsyncadd [#allocation12], %s87
      %s90 = sshll.u32 [#allocation13], 4
      %s91 = int_to_ptr.vmem [resolvable:$true] %s90
      %93 = dma.hbm_to_vmem [thread:$0]  %s6, 16, %s91, [#allocation12]
    $region29: #{run.13} parent=1 // pred_fallthru
      _
    // Predicated region
    $region30: #{run.13} parent=1 // pred_check
      _
    $region31: #{run.13} parent=1 // pred_check_branch
      %95 = sbr.rel (0) target = $region33
    $region32: #{run.13} parent=1 // pred_region
      %s97 = ssub.s32 1024, 1024
      %98 = vsyncadd [#allocation15], %s97
      %s99 = sshll.u32 [#allocation14], 4
      %s100 = int_to_ptr.vmem [resolvable:$true] %s99
      %105 = dma.hbm_to_vmem [thread:$0]  %s7, 1024, %s100, [#allocation15], 128, 128, 8
    $region33: #{run.13} parent=1 // pred_fallthru
      _
    // Predicated region
    $region34: #{run.13} parent=1 // pred_check
      _
    $region35: #{run.13} parent=1 // pred_check_branch
      %107 = sbr.rel (0) target = $region37
    $region36: #{run.13} parent=1 // pred_region
      %s109 = ssub.s32 16, 16
      %110 = vsyncadd [#allocation15], %s109
      %s112 = sshll.u32 [#allocation16], 4
      %s113 = int_to_ptr.vmem [resolvable:$true] %s112
      %115 = dma.hbm_to_vmem [thread:$0]  %s8, 16, %s113, [#allocation15]
    $region37: #{run.13} parent=1 // pred_fallthru
      _
    // Predicated region
    $region38: #{run.13} parent=1 // pred_check
      _
    $region39: #{run.13} parent=1 // pred_check_branch
      %117 = sbr.rel (0) target = $region41
    $region40: #{run.13} parent=1 // pred_region
      %118 = dma.done [#allocation3], 2048
    $region41: #{run.13} parent=1 // pred_fallthru
      _
    // Predicated region
    $region42: #{run.13} parent=1 // pred_check
      _
    $region43: #{run.13} parent=1 // pred_check_branch
      %120 = sbr.rel (0) target = $region45
    $region44: #{run.13} parent=1 // pred_region
      %121 = dma.done [#allocation6], 16
    $region45: #{run.13} parent=1 // pred_fallthru
      _
    // Predicated region
    $region46: #{run.13} parent=1 // pred_check
      _
    $region47: #{run.13} parent=1 // pred_check_branch
      %123 = sbr.rel (0) target = $region49
    $region48: #{run.13} parent=1 // pred_region
      %124 = dma.done [#allocation6], 16
    $region49: #{run.13} parent=1 // pred_fallthru
      _
    // Predicated region
    $region50: #{run.13} parent=1 // pred_check
      _
    $region51: #{run.13} parent=1 // pred_check_branch
      %126 = sbr.rel (0) target = $region53
    $region52: #{run.13} parent=1 // pred_region
      %127 = dma.done [#allocation9], 512
    $region53: #{run.13} parent=1 // pred_fallthru
      _
    // Predicated region
    $region54: #{run.13} parent=1 // pred_check
      _
    $region55: #{run.13} parent=1 // pred_check_branch
      %129 = sbr.rel (0) target = $region57
    $region56: #{run.13} parent=1 // pred_region
      %130 = dma.done [#allocation9], 16
    $region57: #{run.13} parent=1 // pred_fallthru
      _
    // Predicated region
    $region58: #{run.13} parent=1 // pred_check
      _
    $region59: #{run.13} parent=1 // pred_check_branch
      %132 = sbr.rel (0) target = $region61
    $region60: #{run.13} parent=1 // pred_region
      %133 = dma.done [#allocation12], 16
    $region61: #{run.13} parent=1 // pred_fallthru
      _
    // Predicated region
    $region62: #{run.13} parent=1 // pred_check
      _
    $region63: #{run.13} parent=1 // pred_check_branch
      %135 = sbr.rel (0) target = $region65
    $region64: #{run.13} parent=1 // pred_region
      %136 = dma.done [#allocation12], 16
    $region65: #{run.13} parent=1 // pred_fallthru
      _
    // Predicated region
    $region66: #{run.13} parent=1 // pred_check
      _
    $region67: #{run.13} parent=1 // pred_check_branch
      %138 = sbr.rel (0) target = $region69
    $region68: #{run.13} parent=1 // pred_region
      %139 = dma.done [#allocation15], 1024
    $region69: #{run.13} parent=1 // pred_fallthru
      _
    // Predicated region
    $region70: #{run.13} parent=1 // pred_check
      _
    $region71: #{run.13} parent=1 // pred_check_branch
      %141 = sbr.rel (0) target = $region73
    $region72: #{run.13} parent=1 // pred_region
      %142 = dma.done [#allocation15], 16
    $region73: #{run.13} parent=1 // pred_fallthru
      _
    %v144 = vld [vmem:[#allocation2] sm:$0xff]
    %v145 = vld [vmem:[#allocation2 + $0x8] sm:$0xff]
    %v146 = vld [vmem:[#allocation2 + $0x10] sm:$0xff]
    %v147 = vld [vmem:[#allocation2 + $0x18] sm:$0xff]
    %v148 = vld [vmem:[#allocation2 + $0x20] sm:$0xff]
    %v149 = vld [vmem:[#allocation2 + $0x28] sm:$0xff]
    %v150 = vld [vmem:[#allocation2 + $0x30] sm:$0xff]
    %v151 = vld [vmem:[#allocation2 + $0x38] sm:$0xff]
    %v152 = vld [vmem:[#allocation2 + $0x40] sm:$0xff]
    %v153 = vld [vmem:[#allocation2 + $0x48] sm:$0xff]
    %v154 = vld [vmem:[#allocation2 + $0x50] sm:$0xff]
    %v155 = vld [vmem:[#allocation2 + $0x58] sm:$0xff]
    %v156 = vld [vmem:[#allocation2 + $0x60] sm:$0xff]
    %v157 = vld [vmem:[#allocation2 + $0x68] sm:$0xff]
    %v158 = vld [vmem:[#allocation2 + $0x70] sm:$0xff]
    %v159 = vld [vmem:[#allocation2 + $0x78] sm:$0xff]
    %v160 = vld [vmem:[#allocation5] sm:$0x1]
    %v161 = vld [vmem:[#allocation7] sm:$0x1]
    %vm162 = vcmask 261120
    %v163 = vsel %vm162, %v144, 0.0
    %164 = vadd.xlane.f32.xlu0 %v163
    %v165 = vpop.xlane.xlu0 %164
    %v166 = vsel %vm162, %v145, 0.0
    %167 = vadd.xlane.f32.xlu0 %v166
    %v168 = vpop.xlane.xlu0 %167
    %v169 = vsel %vm162, %v146, 0.0
    %170 = vadd.xlane.f32.xlu0 %v169
    %v171 = vpop.xlane.xlu0 %170
    %v172 = vsel %vm162, %v147, 0.0
    %173 = vadd.xlane.f32.xlu0 %v172
    %v174 = vpop.xlane.xlu0 %173
    %v175 = vsel %vm162, %v148, 0.0
    %176 = vadd.xlane.f32.xlu0 %v175
    %v177 = vpop.xlane.xlu0 %176
    %v178 = vsel %vm162, %v149, 0.0
    %179 = vadd.xlane.f32.xlu0 %v178
    %v180 = vpop.xlane.xlu0 %179
    %v181 = vsel %vm162, %v150, 0.0
    %182 = vadd.xlane.f32.xlu0 %v181
    %v183 = vpop.xlane.xlu0 %182
    %v184 = vsel %vm162, %v151, 0.0
    %185 = vadd.xlane.f32.xlu0 %v184
    %v186 = vpop.xlane.xlu0 %185
    %v187 = vsel %vm162, %v152, 0.0
    %188 = vadd.xlane.f32.xlu0 %v187
    %v189 = vpop.xlane.xlu0 %188
    %v190 = vsel %vm162, %v153, 0.0
    %191 = vadd.xlane.f32.xlu0 %v190
    %v192 = vpop.xlane.xlu0 %191
    %v193 = vsel %vm162, %v154, 0.0
    %194 = vadd.xlane.f32.xlu0 %v193
    %v195 = vpop.xlane.xlu0 %194
    %v196 = vsel %vm162, %v155, 0.0
    %197 = vadd.xlane.f32.xlu0 %v196
    %v198 = vpop.xlane.xlu0 %197
    %v199 = vsel %vm162, %v156, 0.0
    %200 = vadd.xlane.f32.xlu0 %v199
    %v201 = vpop.xlane.xlu0 %200
    %v202 = vsel %vm162, %v157, 0.0
    %203 = vadd.xlane.f32.xlu0 %v202
    %v204 = vpop.xlane.xlu0 %203
    %v205 = vsel %vm162, %v158, 0.0
    %206 = vadd.xlane.f32.xlu0 %v205
    %v207 = vpop.xlane.xlu0 %206
    %v208 = vsel %vm162, %v159, 0.0
    %209 = vadd.xlane.f32.xlu0 %v208
    %v210 = vpop.xlane.xlu0 %209
    %v211 = vrcp.pop 32.0
    %v212 = vmul.f32 %v165, %v211
    %v213 = vmul.f32 %v168, %v211
    %v214 = vmul.f32 %v171, %v211
    %v215 = vmul.f32 %v174, %v211
    %v216 = vmul.f32 %v177, %v211
    %v217 = vmul.f32 %v180, %v211
    %v218 = vmul.f32 %v183, %v211
    %v219 = vmul.f32 %v186, %v211
    %v220 = vmul.f32 %v189, %v211
    %v221 = vmul.f32 %v192, %v211
    %v222 = vmul.f32 %v195, %v211
    %v223 = vmul.f32 %v198, %v211
    %v224 = vmul.f32 %v201, %v211
    %v225 = vmul.f32 %v204, %v211
    %v226 = vmul.f32 %v207, %v211
    %v227 = vmul.f32 %v210, %v211
    %v228 = vsub.f32 %v144, %v212
    %v229 = vsub.f32 %v145, %v213
    %v230 = vsub.f32 %v146, %v214
    %v231 = vsub.f32 %v147, %v215
    %v232 = vsub.f32 %v148, %v216
    %v233 = vsub.f32 %v149, %v217
    %v234 = vsub.f32 %v150, %v218
    %v235 = vsub.f32 %v151, %v219
    %v236 = vsub.f32 %v152, %v220
    %v237 = vsub.f32 %v153, %v221
    %v238 = vsub.f32 %v154, %v222
    %v239 = vsub.f32 %v155, %v223
    %v240 = vsub.f32 %v156, %v224
    %v241 = vsub.f32 %v157, %v225
    %v242 = vsub.f32 %v158, %v226
    %v243 = vsub.f32 %v159, %v227
    %v244 = vmul.f32 %v228, %v228
    %v245 = vmul.f32 %v229, %v229
    %v246 = vmul.f32 %v230, %v230
    %v247 = vmul.f32 %v231, %v231
    %v248 = vmul.f32 %v232, %v232
    %v249 = vmul.f32 %v233, %v233
    %v250 = vmul.f32 %v234, %v234
    %v251 = vmul.f32 %v235, %v235
    %v252 = vmul.f32 %v236, %v236
    %v253 = vmul.f32 %v237, %v237
    %v254 = vmul.f32 %v238, %v238
    %v255 = vmul.f32 %v239, %v239
    %v256 = vmul.f32 %v240, %v240
    %v257 = vmul.f32 %v241, %v241
    %v258 = vmul.f32 %v242, %v242
    %v259 = vmul.f32 %v243, %v243
    %v260 = vsel %vm162, %v244, 0.0
    %261 = vadd.xlane.f32.xlu0 %v260
    %v262 = vpop.xlane.xlu0 %261
    %v263 = vsel %vm162, %v245, 0.0
    %264 = vadd.xlane.f32.xlu0 %v263
    %v265 = vpop.xlane.xlu0 %264
    %v266 = vsel %vm162, %v246, 0.0
    %267 = vadd.xlane.f32.xlu0 %v266
    %v268 = vpop.xlane.xlu0 %267
    %v269 = vsel %vm162, %v247, 0.0
    %270 = vadd.xlane.f32.xlu0 %v269
    %v271 = vpop.xlane.xlu0 %270
    %v272 = vsel %vm162, %v248, 0.0
    %273 = vadd.xlane.f32.xlu0 %v272
    %v274 = vpop.xlane.xlu0 %273
    %v275 = vsel %vm162, %v249, 0.0
    %276 = vadd.xlane.f32.xlu0 %v275
    %v277 = vpop.xlane.xlu0 %276
    %v278 = vsel %vm162, %v250, 0.0
    %279 = vadd.xlane.f32.xlu0 %v278
    %v280 = vpop.xlane.xlu0 %279
    %v281 = vsel %vm162, %v251, 0.0
    %282 = vadd.xlane.f32.xlu0 %v281
    %v283 = vpop.xlane.xlu0 %282
    %v284 = vsel %vm162, %v252, 0.0
    %285 = vadd.xlane.f32.xlu0 %v284
    %v286 = vpop.xlane.xlu0 %285
    %v287 = vsel %vm162, %v253, 0.0
    %288 = vadd.xlane.f32.xlu0 %v287
    %v289 = vpop.xlane.xlu0 %288
    %v290 = vsel %vm162, %v254, 0.0
    %291 = vadd.xlane.f32.xlu0 %v290
    %v292 = vpop.xlane.xlu0 %291
    %v293 = vsel %vm162, %v255, 0.0
    %294 = vadd.xlane.f32.xlu0 %v293
    %v295 = vpop.xlane.xlu0 %294
    %v296 = vsel %vm162, %v256, 0.0
    %297 = vadd.xlane.f32.xlu0 %v296
    %v298 = vpop.xlane.xlu0 %297
    %v299 = vsel %vm162, %v257, 0.0
    %300 = vadd.xlane.f32.xlu0 %v299
    %v301 = vpop.xlane.xlu0 %300
    %v302 = vsel %vm162, %v258, 0.0
    %303 = vadd.xlane.f32.xlu0 %v302
    %v304 = vpop.xlane.xlu0 %303
    %v305 = vsel %vm162, %v259, 0.0
    %306 = vadd.xlane.f32.xlu0 %v305
    %v307 = vpop.xlane.xlu0 %306
    %v308 = vmul.f32 %v262, %v211
    %v309 = vmul.f32 %v265, %v211
    %v310 = vmul.f32 %v268, %v211
    %v311 = vmul.f32 %v271, %v211
    %v312 = vmul.f32 %v274, %v211
    %v313 = vmul.f32 %v277, %v211
    %v314 = vmul.f32 %v280, %v211
    %v315 = vmul.f32 %v283, %v211
    %v316 = vmul.f32 %v286, %v211
    %v317 = vmul.f32 %v289, %v211
    %v318 = vmul.f32 %v292, %v211
    %v319 = vmul.f32 %v295, %v211
    %v320 = vmul.f32 %v298, %v211
    %v321 = vmul.f32 %v301, %v211
    %v322 = vmul.f32 %v304, %v211
    %v323 = vmul.f32 %v307, %v211
    %v324 = vadd.f32 %v308, 1e-05
    %v325 = vadd.f32 %v309, 1e-05
    %v326 = vadd.f32 %v310, 1e-05
    %v327 = vadd.f32 %v311, 1e-05
    %v328 = vadd.f32 %v312, 1e-05
    %v329 = vadd.f32 %v313, 1e-05
    %v330 = vadd.f32 %v314, 1e-05
    %v331 = vadd.f32 %v315, 1e-05
    %v332 = vadd.f32 %v316, 1e-05
    %v333 = vadd.f32 %v317, 1e-05
    %v334 = vadd.f32 %v318, 1e-05
    %v335 = vadd.f32 %v319, 1e-05
    %v336 = vadd.f32 %v320, 1e-05
    %v337 = vadd.f32 %v321, 1e-05
    %v338 = vadd.f32 %v322, 1e-05
    %v339 = vadd.f32 %v323, 1e-05
    %v340 = vrsqrt.pop %v324
    %v341 = vrsqrt.pop %v325
    %v342 = vrsqrt.pop %v326
    %v343 = vrsqrt.pop %v327
    %v344 = vrsqrt.pop %v328
    %v345 = vrsqrt.pop %v329
    %v346 = vrsqrt.pop %v330
    %v347 = vrsqrt.pop %v331
    %v348 = vrsqrt.pop %v332
    %v349 = vrsqrt.pop %v333
    %v350 = vrsqrt.pop %v334
    %v351 = vrsqrt.pop %v335
    %v352 = vrsqrt.pop %v336
    %v353 = vrsqrt.pop %v337
    %v354 = vrsqrt.pop %v338
    %v355 = vrsqrt.pop %v339
    %v356 = vmul.f32 %v228, %v340
    %v357 = vmul.f32 %v229, %v341
    %v358 = vmul.f32 %v230, %v342
    %v359 = vmul.f32 %v231, %v343
    %v360 = vmul.f32 %v232, %v344
    %v361 = vmul.f32 %v233, %v345
    %v362 = vmul.f32 %v234, %v346
    %v363 = vmul.f32 %v235, %v347
    %v364 = vmul.f32 %v236, %v348
    %v365 = vmul.f32 %v237, %v349
    %v366 = vmul.f32 %v238, %v350
    %v367 = vmul.f32 %v239, %v351
    %v368 = vmul.f32 %v240, %v352
    %v369 = vmul.f32 %v241, %v353
    %v370 = vmul.f32 %v242, %v354
    %v371 = vmul.f32 %v243, %v355
    %v373 = vlaneseq
    %v374 = vshrl.u32 %v373, 7
    %v375 = vsub.s32 0, %v374
    %v376 = vrot.slane %v160, %v375
    %v378 = vmul.f32 %v356, %v376
    %v379 = vmul.f32 %v357, %v376
    %v380 = vmul.f32 %v358, %v376
    %v381 = vmul.f32 %v359, %v376
    %v382 = vmul.f32 %v360, %v376
    %v383 = vmul.f32 %v361, %v376
    %v384 = vmul.f32 %v362, %v376
    %v385 = vmul.f32 %v363, %v376
    %v386 = vmul.f32 %v364, %v376
    %v387 = vmul.f32 %v365, %v376
    %v388 = vmul.f32 %v366, %v376
    %v389 = vmul.f32 %v367, %v376
    %v390 = vmul.f32 %v368, %v376
    %v391 = vmul.f32 %v369, %v376
    %v392 = vmul.f32 %v370, %v376
    %v393 = vmul.f32 %v371, %v376
    %v395 = vlaneseq
    %v396 = vshrl.u32 %v395, 7
    %v397 = vsub.s32 0, %v396
    %v398 = vrot.slane %v161, %v397
    %v400 = vadd.f32 %v378, %v398
    %v401 = vadd.f32 %v379, %v398
    %v402 = vadd.f32 %v380, %v398
    %v403 = vadd.f32 %v381, %v398
    %v404 = vadd.f32 %v382, %v398
    %v405 = vadd.f32 %v383, %v398
    %v406 = vadd.f32 %v384, %v398
    %v407 = vadd.f32 %v385, %v398
    %v408 = vadd.f32 %v386, %v398
    %v409 = vadd.f32 %v387, %v398
    %v410 = vadd.f32 %v388, %v398
    %v411 = vadd.f32 %v389, %v398
    %v412 = vadd.f32 %v390, %v398
    %v413 = vadd.f32 %v391, %v398
    %v414 = vadd.f32 %v392, %v398
    %v415 = vadd.f32 %v393, %v398
    %v416 = vld [vmem:[#allocation8] sm:$0xff]
    %v417 = vld [vmem:[#allocation8 + $0x8] sm:$0xff]
    %v418 = vld [vmem:[#allocation8 + $0x10] sm:$0xff]
    %v419 = vld [vmem:[#allocation8 + $0x18] sm:$0xff]
    %v420 = vpack.c.bf16 %v401, %v400
    %v421 = vpack.c.bf16 %v403, %v402
    %v422 = vpack.c.bf16 %v405, %v404
    %v423 = vpack.c.bf16 %v407, %v406
    %v424 = vpack.c.bf16 %v409, %v408
    %v425 = vpack.c.bf16 %v411, %v410
    %v426 = vpack.c.bf16 %v413, %v412
    %v427 = vpack.c.bf16 %v415, %v414
    %v428 = vpack.c.bf16 %v417, %v416
    %v429 = vpack.c.bf16 %v419, %v418
    %v430 = vld [vmem:[#allocation10] sm:$0x1]
    %v432 = vlaneseq
    %v433 = vshrl.u32 %v432, 7
    %v434 = vsub.s32 0, %v433
    %v435 = vrot.slane %v430, %v434
    %v438 = vsel %vm162, %v420, 0
    %v441 = vsel %vm162, %v421, 0
    %v444 = vsel %vm162, %v422, 0
    %v447 = vsel %vm162, %v423, 0
    %v450 = vsel %vm162, %v424, 0
    %v453 = vsel %vm162, %v425, 0
    %v456 = vsel %vm162, %v426, 0
    %v459 = vsel %vm162, %v427, 0
    %461 = vmatprep.subr.bf16.mxu0 0
    %462 = vmatpush1.bf16.msra.mxu0 %v428
    %463 = vmatprep.subr.bf16.mxu0 0
    %464 = vmatpush1.bf16.msra.mxu0 %v429
    %465 = vmatprep.subr.bf16.mxu0 0
    %466 = vmatpush1.bf16.msra.mxu0 0
    %467 = vmatprep.subr.bf16.mxu0 0
    %468 = vmatpush1.bf16.msra.mxu0 0
    %469 = vmatprep.subr.bf16.mxu0 0
    %470 = vmatpush1.bf16.msra.mxu0 0
    %471 = vmatprep.subr.bf16.mxu0 0
    %472 = vmatpush1.bf16.msra.mxu0 0
    %473 = vmatprep.subr.bf16.mxu0 0
    %474 = vmatpush1.bf16.msra.mxu0 0
    %475 = vmatprep.subr.bf16.mxu0 0
    %476 = vmatpush1.bf16.msra.mxu0 0
    %477 = vmatprep.subr.bf16.mxu0 0
    %478 = vmatpush1.bf16.msra.mxu0 0
    %479 = vmatprep.subr.bf16.mxu0 0
    %480 = vmatpush1.bf16.msra.mxu0 0
    %481 = vmatprep.subr.bf16.mxu0 0
    %482 = vmatpush1.bf16.msra.mxu0 0
    %483 = vmatprep.subr.bf16.mxu0 0
    %484 = vmatpush1.bf16.msra.mxu0 0
    %485 = vmatprep.subr.bf16.mxu0 0
    %486 = vmatpush1.bf16.msra.mxu0 0
    %487 = vmatprep.subr.bf16.mxu0 0
    %488 = vmatpush1.bf16.msra.mxu0 0
    %489 = vmatprep.subr.bf16.mxu0 0
    %490 = vmatpush1.bf16.msra.mxu0 0
    %491 = vmatprep.subr.bf16.mxu0 0
    %492 = vmatpush1.bf16.msra.mxu0 0
    %493 = vmatprep.mubr.bf16.mxu0 0
    %494 = vmatmul.mubr.bf16.gmra.mrb[0].mxu0 %v438
    %v495 = vpop.f32.mrb[0].mxu0
    %v496 = vadd.f32 %v435, %v495
    %v497 = vpop.f32.mrb[0].mxu0
    %v498 = vpop.f32.mrb[0].mxu0
    %v499 = vadd.f32 %v435, %v498
    %v500 = vpop.f32.mrb[0].mxu0
    %501 = vmatprep.mubr.bf16.mxu0 0
    %502 = vmatmul.mubr.bf16.gmra.mrb[0].mxu0 %v441
    %v503 = vpop.f32.mrb[0].mxu0
    %v504 = vadd.f32 %v435, %v503
    %v505 = vpop.f32.mrb[0].mxu0
    %v506 = vpop.f32.mrb[0].mxu0
    %v507 = vadd.f32 %v435, %v506
    %v508 = vpop.f32.mrb[0].mxu0
    %509 = vmatprep.mubr.bf16.mxu0 0
    %510 = vmatmul.mubr.bf16.gmra.mrb[0].mxu0 %v444
    %v511 = vpop.f32.mrb[0].mxu0
    %v512 = vadd.f32 %v435, %v511
    %v513 = vpop.f32.mrb[0].mxu0
    %v514 = vpop.f32.mrb[0].mxu0
    %v515 = vadd.f32 %v435, %v514
    %v516 = vpop.f32.mrb[0].mxu0
    %517 = vmatprep.mubr.bf16.mxu0 0
    %518 = vmatmul.mubr.bf16.gmra.mrb[0].mxu0 %v447
    %v519 = vpop.f32.mrb[0].mxu0
    %v520 = vadd.f32 %v435, %v519
    %v521 = vpop.f32.mrb[0].mxu0
    %v522 = vpop.f32.mrb[0].mxu0
    %v523 = vadd.f32 %v435, %v522
    %v524 = vpop.f32.mrb[0].mxu0
    %525 = vmatprep.mubr.bf16.mxu0 0
    %526 = vmatmul.mubr.bf16.gmra.mrb[0].mxu0 %v450
    %v527 = vpop.f32.mrb[0].mxu0
    %v528 = vadd.f32 %v435, %v527
    %v529 = vpop.f32.mrb[0].mxu0
    %v530 = vpop.f32.mrb[0].mxu0
    %v531 = vadd.f32 %v435, %v530
    %v532 = vpop.f32.mrb[0].mxu0
    %533 = vmatprep.mubr.bf16.mxu0 0
    %534 = vmatmul.mubr.bf16.gmra.mrb[0].mxu0 %v453
    %v535 = vpop.f32.mrb[0].mxu0
    %v536 = vadd.f32 %v435, %v535
    %v537 = vpop.f32.mrb[0].mxu0
    %v538 = vpop.f32.mrb[0].mxu0
    %v539 = vadd.f32 %v435, %v538
    %v540 = vpop.f32.mrb[0].mxu0
    %541 = vmatprep.mubr.bf16.mxu0 0
    %542 = vmatmul.mubr.bf16.gmra.mrb[0].mxu0 %v456
    %v543 = vpop.f32.mrb[0].mxu0
    %v544 = vadd.f32 %v435, %v543
    %v545 = vpop.f32.mrb[0].mxu0
    %v546 = vpop.f32.mrb[0].mxu0
    %v547 = vadd.f32 %v435, %v546
    %v548 = vpop.f32.mrb[0].mxu0
    %549 = vmatprep.mubr.bf16.mxu0 0
    %550 = vmatmul.mubr.bf16.gmra.mrb[0].mxu0 %v459
    %v551 = vpop.f32.mrb[0].mxu0
    %v552 = vadd.f32 %v435, %v551
    %v553 = vpop.f32.mrb[0].mxu0
    %v554 = vpop.f32.mrb[0].mxu0
    %v555 = vadd.f32 %v435, %v554
    %v556 = vpop.f32.mrb[0].mxu0
    %557 = vdwg.mxu0
    %v558 = vmul.f32 %v496, 0.5
    %v559 = vmul.f32 %v499, 0.5
    %v560 = vmul.f32 %v504, 0.5
    %v561 = vmul.f32 %v507, 0.5
    %v562 = vmul.f32 %v512, 0.5
    %v563 = vmul.f32 %v515, 0.5
    %v564 = vmul.f32 %v520, 0.5
    %v565 = vmul.f32 %v523, 0.5
    %v566 = vmul.f32 %v528, 0.5
    %v567 = vmul.f32 %v531, 0.5
    %v568 = vmul.f32 %v536, 0.5
    %v569 = vmul.f32 %v539, 0.5
    %v570 = vmul.f32 %v544, 0.5
    %v571 = vmul.f32 %v547, 0.5
    %v572 = vmul.f32 %v552, 0.5
    %v573 = vmul.f32 %v555, 0.5
    %v574 = vmul.f32 %v496, 0.044715
    %v575 = vmul.f32 %v499, 0.044715
    %v576 = vmul.f32 %v504, 0.044715
    %v577 = vmul.f32 %v507, 0.044715
    %v578 = vmul.f32 %v512, 0.044715
    %v579 = vmul.f32 %v515, 0.044715
    %v580 = vmul.f32 %v520, 0.044715
    %v581 = vmul.f32 %v523, 0.044715
    %v582 = vmul.f32 %v528, 0.044715
    %v583 = vmul.f32 %v531, 0.044715
    %v584 = vmul.f32 %v536, 0.044715
    %v585 = vmul.f32 %v539, 0.044715
    %v586 = vmul.f32 %v544, 0.044715
    %v587 = vmul.f32 %v547, 0.044715
    %v588 = vmul.f32 %v552, 0.044715
    %v589 = vmul.f32 %v555, 0.044715
    %v590 = vmul.f32 %v574, %v496
    %v591 = vmul.f32 %v575, %v499
    %v592 = vmul.f32 %v576, %v504
    %v593 = vmul.f32 %v577, %v507
    %v594 = vmul.f32 %v578, %v512
    %v595 = vmul.f32 %v579, %v515
    %v596 = vmul.f32 %v580, %v520
    %v597 = vmul.f32 %v581, %v523
    %v598 = vmul.f32 %v582, %v528
    %v599 = vmul.f32 %v583, %v531
    %v600 = vmul.f32 %v584, %v536
    %v601 = vmul.f32 %v585, %v539
    %v602 = vmul.f32 %v586, %v544
    %v603 = vmul.f32 %v587, %v547
    %v604 = vmul.f32 %v588, %v552
    %v605 = vmul.f32 %v589, %v555
    %v606 = vmul.f32 %v590, %v496
    %v607 = vmul.f32 %v591, %v499
    %v608 = vmul.f32 %v592, %v504
    %v609 = vmul.f32 %v593, %v507
    %v610 = vmul.f32 %v594, %v512
    %v611 = vmul.f32 %v595, %v515
    %v612 = vmul.f32 %v596, %v520
    %v613 = vmul.f32 %v597, %v523
    %v614 = vmul.f32 %v598, %v528
    %v615 = vmul.f32 %v599, %v531
    %v616 = vmul.f32 %v600, %v536
    %v617 = vmul.f32 %v601, %v539
    %v618 = vmul.f32 %v602, %v544
    %v619 = vmul.f32 %v603, %v547
    %v620 = vmul.f32 %v604, %v552
    %v621 = vmul.f32 %v605, %v555
    %v622 = vadd.f32 %v496, %v606
    %v623 = vadd.f32 %v499, %v607
    %v624 = vadd.f32 %v504, %v608
    %v625 = vadd.f32 %v507, %v609
    %v626 = vadd.f32 %v512, %v610
    %v627 = vadd.f32 %v515, %v611
    %v628 = vadd.f32 %v520, %v612
    %v629 = vadd.f32 %v523, %v613
    %v630 = vadd.f32 %v528, %v614
    %v631 = vadd.f32 %v531, %v615
    %v632 = vadd.f32 %v536, %v616
    %v633 = vadd.f32 %v539, %v617
    %v634 = vadd.f32 %v544, %v618
    %v635 = vadd.f32 %v547, %v619
    %v636 = vadd.f32 %v552, %v620
    %v637 = vadd.f32 %v555, %v621
    %v638 = vmul.f32 %v622, 0.7978846
    %v639 = vmul.f32 %v623, 0.7978846
    %v640 = vmul.f32 %v624, 0.7978846
    %v641 = vmul.f32 %v625, 0.7978846
    %v642 = vmul.f32 %v626, 0.7978846
    %v643 = vmul.f32 %v627, 0.7978846
    %v644 = vmul.f32 %v628, 0.7978846
    %v645 = vmul.f32 %v629, 0.7978846
    %v646 = vmul.f32 %v630, 0.7978846
    %v647 = vmul.f32 %v631, 0.7978846
    %v648 = vmul.f32 %v632, 0.7978846
    %v649 = vmul.f32 %v633, 0.7978846
    %v650 = vmul.f32 %v634, 0.7978846
    %v651 = vmul.f32 %v635, 0.7978846
    %v652 = vmul.f32 %v636, 0.7978846
    %v653 = vmul.f32 %v637, 0.7978846
    %v654 = vtanh.pop %v638
    %v655 = vtanh.pop %v639
    %v656 = vtanh.pop %v640
    %v657 = vtanh.pop %v641
    %v658 = vtanh.pop %v642
    %v659 = vtanh.pop %v643
    %v660 = vtanh.pop %v644
    %v661 = vtanh.pop %v645
    %v662 = vtanh.pop %v646
    %v663 = vtanh.pop %v647
    %v664 = vtanh.pop %v648
    %v665 = vtanh.pop %v649
    %v666 = vtanh.pop %v650
    %v667 = vtanh.pop %v651
    %v668 = vtanh.pop %v652
    %v669 = vtanh.pop %v653
    %v670 = vadd.f32 %v654, 1.0
    %v671 = vadd.f32 %v655, 1.0
    %v672 = vadd.f32 %v656, 1.0
    %v673 = vadd.f32 %v657, 1.0
    %v674 = vadd.f32 %v658, 1.0
    %v675 = vadd.f32 %v659, 1.0
    %v676 = vadd.f32 %v660, 1.0
    %v677 = vadd.f32 %v661, 1.0
    %v678 = vadd.f32 %v662, 1.0
    %v679 = vadd.f32 %v663, 1.0
    %v680 = vadd.f32 %v664, 1.0
    %v681 = vadd.f32 %v665, 1.0
    %v682 = vadd.f32 %v666, 1.0
    %v683 = vadd.f32 %v667, 1.0
    %v684 = vadd.f32 %v668, 1.0
    %v685 = vadd.f32 %v669, 1.0
    %v686 = vmul.f32 %v558, %v670
    %v687 = vmul.f32 %v559, %v671
    %v688 = vmul.f32 %v560, %v672
    %v689 = vmul.f32 %v561, %v673
    %v690 = vmul.f32 %v562, %v674
    %v691 = vmul.f32 %v563, %v675
    %v692 = vmul.f32 %v564, %v676
    %v693 = vmul.f32 %v565, %v677
    %v694 = vmul.f32 %v566, %v678
    %v695 = vmul.f32 %v567, %v679
    %v696 = vmul.f32 %v568, %v680
    %v697 = vmul.f32 %v569, %v681
    %v698 = vmul.f32 %v570, %v682
    %v699 = vmul.f32 %v571, %v683
    %v700 = vmul.f32 %v572, %v684
    %v701 = vmul.f32 %v573, %v685
    %v702 = vld [vmem:[#allocation11] sm:$0x1]
    %v703 = vld [vmem:[#allocation13] sm:$0x1]
    %vm704 = vcmask 523264
    %v705 = vsel %vm704, %v686, 0.0
    %706 = vadd.xlane.f32.xlu0 %v705
    %v707 = vpop.xlane.xlu0 %706
    %v708 = vsel %vm704, %v687, 0.0
    %709 = vadd.xlane.f32.xlu0 %v708
    %v710 = vpop.xlane.xlu0 %709
    %v711 = vsel %vm704, %v688, 0.0
    %712 = vadd.xlane.f32.xlu0 %v711
    %v713 = vpop.xlane.xlu0 %712
    %v714 = vsel %vm704, %v689, 0.0
    %715 = vadd.xlane.f32.xlu0 %v714
    %v716 = vpop.xlane.xlu0 %715
    %v717 = vsel %vm704, %v690, 0.0
    %718 = vadd.xlane.f32.xlu0 %v717
    %v719 = vpop.xlane.xlu0 %718
    %v720 = vsel %vm704, %v691, 0.0
    %721 = vadd.xlane.f32.xlu0 %v720
    %v722 = vpop.xlane.xlu0 %721
    %v723 = vsel %vm704, %v692, 0.0
    %724 = vadd.xlane.f32.xlu0 %v723
    %v725 = vpop.xlane.xlu0 %724
    %v726 = vsel %vm704, %v693, 0.0
    %727 = vadd.xlane.f32.xlu0 %v726
    %v728 = vpop.xlane.xlu0 %727
    %v729 = vsel %vm704, %v694, 0.0
    %730 = vadd.xlane.f32.xlu0 %v729
    %v731 = vpop.xlane.xlu0 %730
    %v732 = vsel %vm704, %v695, 0.0
    %733 = vadd.xlane.f32.xlu0 %v732
    %v734 = vpop.xlane.xlu0 %733
    %v735 = vsel %vm704, %v696, 0.0
    %736 = vadd.xlane.f32.xlu0 %v735
    %v737 = vpop.xlane.xlu0 %736
    %v738 = vsel %vm704, %v697, 0.0
    %739 = vadd.xlane.f32.xlu0 %v738
    %v740 = vpop.xlane.xlu0 %739
    %v741 = vsel %vm704, %v698, 0.0
    %742 = vadd.xlane.f32.xlu0 %v741
    %v743 = vpop.xlane.xlu0 %742
    %v744 = vsel %vm704, %v699, 0.0
    %745 = vadd.xlane.f32.xlu0 %v744
    %v746 = vpop.xlane.xlu0 %745
    %v747 = vsel %vm704, %v700, 0.0
    %748 = vadd.xlane.f32.xlu0 %v747
    %v749 = vpop.xlane.xlu0 %748
    %v750 = vsel %vm704, %v701, 0.0
    %751 = vadd.xlane.f32.xlu0 %v750
    %v752 = vpop.xlane.xlu0 %751
    %v753 = vrcp.pop 64.0
    %v754 = vmul.f32 %v707, %v753
    %v755 = vmul.f32 %v710, %v753
    %v756 = vmul.f32 %v713, %v753
    %v757 = vmul.f32 %v716, %v753
    %v758 = vmul.f32 %v719, %v753
    %v759 = vmul.f32 %v722, %v753
    %v760 = vmul.f32 %v725, %v753
    %v761 = vmul.f32 %v728, %v753
    %v762 = vmul.f32 %v731, %v753
    %v763 = vmul.f32 %v734, %v753
    %v764 = vmul.f32 %v737, %v753
    %v765 = vmul.f32 %v740, %v753
    %v766 = vmul.f32 %v743, %v753
    %v767 = vmul.f32 %v746, %v753
    %v768 = vmul.f32 %v749, %v753
    %v769 = vmul.f32 %v752, %v753
    %v770 = vsub.f32 %v686, %v754
    %v771 = vsub.f32 %v687, %v755
    %v772 = vsub.f32 %v688, %v756
    %v773 = vsub.f32 %v689, %v757
    %v774 = vsub.f32 %v690, %v758
    %v775 = vsub.f32 %v691, %v759
    %v776 = vsub.f32 %v692, %v760
    %v777 = vsub.f32 %v693, %v761
    %v778 = vsub.f32 %v694, %v762
    %v779 = vsub.f32 %v695, %v763
    %v780 = vsub.f32 %v696, %v764
    %v781 = vsub.f32 %v697, %v765
    %v782 = vsub.f32 %v698, %v766
    %v783 = vsub.f32 %v699, %v767
    %v784 = vsub.f32 %v700, %v768
    %v785 = vsub.f32 %v701, %v769
    %v786 = vmul.f32 %v770, %v770
    %v787 = vmul.f32 %v771, %v771
    %v788 = vmul.f32 %v772, %v772
    %v789 = vmul.f32 %v773, %v773
    %v790 = vmul.f32 %v774, %v774
    %v791 = vmul.f32 %v775, %v775
    %v792 = vmul.f32 %v776, %v776
    %v793 = vmul.f32 %v777, %v777
    %v794 = vmul.f32 %v778, %v778
    %v795 = vmul.f32 %v779, %v779
    %v796 = vmul.f32 %v780, %v780
    %v797 = vmul.f32 %v781, %v781
    %v798 = vmul.f32 %v782, %v782
    %v799 = vmul.f32 %v783, %v783
    %v800 = vmul.f32 %v784, %v784
    %v801 = vmul.f32 %v785, %v785
    %v802 = vsel %vm704, %v786, 0.0
    %803 = vadd.xlane.f32.xlu0 %v802
    %v804 = vpop.xlane.xlu0 %803
    %v805 = vsel %vm704, %v787, 0.0
    %806 = vadd.xlane.f32.xlu0 %v805
    %v807 = vpop.xlane.xlu0 %806
    %v808 = vsel %vm704, %v788, 0.0
    %809 = vadd.xlane.f32.xlu0 %v808
    %v810 = vpop.xlane.xlu0 %809
    %v811 = vsel %vm704, %v789, 0.0
    %812 = vadd.xlane.f32.xlu0 %v811
    %v813 = vpop.xlane.xlu0 %812
    %v814 = vsel %vm704, %v790, 0.0
    %815 = vadd.xlane.f32.xlu0 %v814
    %v816 = vpop.xlane.xlu0 %815
    %v817 = vsel %vm704, %v791, 0.0
    %818 = vadd.xlane.f32.xlu0 %v817
    %v819 = vpop.xlane.xlu0 %818
    %v820 = vsel %vm704, %v792, 0.0
    %821 = vadd.xlane.f32.xlu0 %v820
    %v822 = vpop.xlane.xlu0 %821
    %v823 = vsel %vm704, %v793, 0.0
    %824 = vadd.xlane.f32.xlu0 %v823
    %v825 = vpop.xlane.xlu0 %824
    %v826 = vsel %vm704, %v794, 0.0
    %827 = vadd.xlane.f32.xlu0 %v826
    %v828 = vpop.xlane.xlu0 %827
    %v829 = vsel %vm704, %v795, 0.0
    %830 = vadd.xlane.f32.xlu0 %v829
    %v831 = vpop.xlane.xlu0 %830
    %v832 = vsel %vm704, %v796, 0.0
    %833 = vadd.xlane.f32.xlu0 %v832
    %v834 = vpop.xlane.xlu0 %833
    %v835 = vsel %vm704, %v797, 0.0
    %836 = vadd.xlane.f32.xlu0 %v835
    %v837 = vpop.xlane.xlu0 %836
    %v838 = vsel %vm704, %v798, 0.0
    %839 = vadd.xlane.f32.xlu0 %v838
    %v840 = vpop.xlane.xlu0 %839
    %v841 = vsel %vm704, %v799, 0.0
    %842 = vadd.xlane.f32.xlu0 %v841
    %v843 = vpop.xlane.xlu0 %842
    %v844 = vsel %vm704, %v800, 0.0
    %845 = vadd.xlane.f32.xlu0 %v844
    %v846 = vpop.xlane.xlu0 %845
    %v847 = vsel %vm704, %v801, 0.0
    %848 = vadd.xlane.f32.xlu0 %v847
    %v849 = vpop.xlane.xlu0 %848
    %v850 = vmul.f32 %v804, %v753
    %v851 = vmul.f32 %v807, %v753
    %v852 = vmul.f32 %v810, %v753
    %v853 = vmul.f32 %v813, %v753
    %v854 = vmul.f32 %v816, %v753
    %v855 = vmul.f32 %v819, %v753
    %v856 = vmul.f32 %v822, %v753
    %v857 = vmul.f32 %v825, %v753
    %v858 = vmul.f32 %v828, %v753
    %v859 = vmul.f32 %v831, %v753
    %v860 = vmul.f32 %v834, %v753
    %v861 = vmul.f32 %v837, %v753
    %v862 = vmul.f32 %v840, %v753
    %v863 = vmul.f32 %v843, %v753
    %v864 = vmul.f32 %v846, %v753
    %v865 = vmul.f32 %v849, %v753
    %v866 = vadd.f32 %v850, 1e-05
    %v867 = vadd.f32 %v851, 1e-05
    %v868 = vadd.f32 %v852, 1e-05
    %v869 = vadd.f32 %v853, 1e-05
    %v870 = vadd.f32 %v854, 1e-05
    %v871 = vadd.f32 %v855, 1e-05
    %v872 = vadd.f32 %v856, 1e-05
    %v873 = vadd.f32 %v857, 1e-05
    %v874 = vadd.f32 %v858, 1e-05
    %v875 = vadd.f32 %v859, 1e-05
    %v876 = vadd.f32 %v860, 1e-05
    %v877 = vadd.f32 %v861, 1e-05
    %v878 = vadd.f32 %v862, 1e-05
    %v879 = vadd.f32 %v863, 1e-05
    %v880 = vadd.f32 %v864, 1e-05
    %v881 = vadd.f32 %v865, 1e-05
    %v882 = vrsqrt.pop %v866
    %v883 = vrsqrt.pop %v867
    %v884 = vrsqrt.pop %v868
    %v885 = vrsqrt.pop %v869
    %v886 = vrsqrt.pop %v870
    %v887 = vrsqrt.pop %v871
    %v888 = vrsqrt.pop %v872
    %v889 = vrsqrt.pop %v873
    %v890 = vrsqrt.pop %v874
    %v891 = vrsqrt.pop %v875
    %v892 = vrsqrt.pop %v876
    %v893 = vrsqrt.pop %v877
    %v894 = vrsqrt.pop %v878
    %v895 = vrsqrt.pop %v879
    %v896 = vrsqrt.pop %v880
    %v897 = vrsqrt.pop %v881
    %v898 = vmul.f32 %v770, %v882
    %v899 = vmul.f32 %v771, %v883
    %v900 = vmul.f32 %v772, %v884
    %v901 = vmul.f32 %v773, %v885
    %v902 = vmul.f32 %v774, %v886
    %v903 = vmul.f32 %v775, %v887
    %v904 = vmul.f32 %v776, %v888
    %v905 = vmul.f32 %v777, %v889
    %v906 = vmul.f32 %v778, %v890
    %v907 = vmul.f32 %v779, %v891
    %v908 = vmul.f32 %v780, %v892
    %v909 = vmul.f32 %v781, %v893
    %v910 = vmul.f32 %v782, %v894
    %v911 = vmul.f32 %v783, %v895
    %v912 = vmul.f32 %v784, %v896
    %v913 = vmul.f32 %v785, %v897
    %v915 = vlaneseq
    %v916 = vshrl.u32 %v915, 7
    %v917 = vsub.s32 0, %v916
    %v918 = vrot.slane %v702, %v917
    %v920 = vmul.f32 %v898, %v918
    %v921 = vmul.f32 %v899, %v918
    %v922 = vmul.f32 %v900, %v918
    %v923 = vmul.f32 %v901, %v918
    %v924 = vmul.f32 %v902, %v918
    %v925 = vmul.f32 %v903, %v918
    %v926 = vmul.f32 %v904, %v918
    %v927 = vmul.f32 %v905, %v918
    %v928 = vmul.f32 %v906, %v918
    %v929 = vmul.f32 %v907, %v918
    %v930 = vmul.f32 %v908, %v918
    %v931 = vmul.f32 %v909, %v918
    %v932 = vmul.f32 %v910, %v918
    %v933 = vmul.f32 %v911, %v918
    %v934 = vmul.f32 %v912, %v918
    %v935 = vmul.f32 %v913, %v918
    %v937 = vlaneseq
    %v938 = vshrl.u32 %v937, 7
    %v939 = vsub.s32 0, %v938
    %v940 = vrot.slane %v703, %v939
    %v942 = vadd.f32 %v920, %v940
    %v943 = vadd.f32 %v921, %v940
    %v944 = vadd.f32 %v922, %v940
    %v945 = vadd.f32 %v923, %v940
    %v946 = vadd.f32 %v924, %v940
    %v947 = vadd.f32 %v925, %v940
    %v948 = vadd.f32 %v926, %v940
    %v949 = vadd.f32 %v927, %v940
    %v950 = vadd.f32 %v928, %v940
    %v951 = vadd.f32 %v929, %v940
    %v952 = vadd.f32 %v930, %v940
    %v953 = vadd.f32 %v931, %v940
    %v954 = vadd.f32 %v932, %v940
    %v955 = vadd.f32 %v933, %v940
    %v956 = vadd.f32 %v934, %v940
    %v957 = vadd.f32 %v935, %v940
    %v958 = vld [vmem:[#allocation14] sm:$0xff]
    %v959 = vld [vmem:[#allocation14 + $0x8] sm:$0xff]
    %v960 = vld [vmem:[#allocation14 + $0x10] sm:$0xff]
    %v961 = vld [vmem:[#allocation14 + $0x18] sm:$0xff]
    %v962 = vld [vmem:[#allocation14 + $0x20] sm:$0xff]
    %v963 = vld [vmem:[#allocation14 + $0x28] sm:$0xff]
    %v964 = vld [vmem:[#allocation14 + $0x30] sm:$0xff]
    %v965 = vld [vmem:[#allocation14 + $0x38] sm:$0xff]
    %v966 = vpack.c.bf16 %v943, %v942
    %v967 = vpack.c.bf16 %v945, %v944
    %v968 = vpack.c.bf16 %v947, %v946
    %v969 = vpack.c.bf16 %v949, %v948
    %v970 = vpack.c.bf16 %v951, %v950
    %v971 = vpack.c.bf16 %v953, %v952
    %v972 = vpack.c.bf16 %v955, %v954
    %v973 = vpack.c.bf16 %v957, %v956
    %v974 = vpack.c.bf16 %v959, %v958
    %v975 = vpack.c.bf16 %v961, %v960
    %v976 = vpack.c.bf16 %v963, %v962
    %v977 = vpack.c.bf16 %v965, %v964
    %v978 = vld [vmem:[#allocation16] sm:$0x1]
    %v980 = vlaneseq
    %v981 = vshrl.u32 %v980, 7
    %v982 = vsub.s32 0, %v981
    %v983 = vrot.slane %v978, %v982
    %v986 = vsel %vm704, %v966, 0
    %v989 = vsel %vm704, %v967, 0
    %v992 = vsel %vm704, %v968, 0
    %v995 = vsel %vm704, %v969, 0
    %v998 = vsel %vm704, %v970, 0
    %v1001 = vsel %vm704, %v971, 0
    %v1004 = vsel %vm704, %v972, 0
    %v1007 = vsel %vm704, %v973, 0
    %1009 = vmatprep.subr.bf16.mxu0 0
    %1010 = vmatpush1.bf16.msra.mxu0 %v974
    %1011 = vmatprep.subr.bf16.mxu0 0
    %1012 = vmatpush1.bf16.msra.mxu0 %v975
    %1013 = vmatprep.subr.bf16.mxu0 0
    %1014 = vmatpush1.bf16.msra.mxu0 %v976
    %1015 = vmatprep.subr.bf16.mxu0 0
    %1016 = vmatpush1.bf16.msra.mxu0 %v977
    %1017 = vmatprep.subr.bf16.mxu0 0
    %1018 = vmatpush1.bf16.msra.mxu0 0
    %1019 = vmatprep.subr.bf16.mxu0 0
    %1020 = vmatpush1.bf16.msra.mxu0 0
    %1021 = vmatprep.subr.bf16.mxu0 0
    %1022 = vmatpush1.bf16.msra.mxu0 0
    %1023 = vmatprep.subr.bf16.mxu0 0
    %1024 = vmatpush1.bf16.msra.mxu0 0
    %1025 = vmatprep.subr.bf16.mxu0 0
    %1026 = vmatpush1.bf16.msra.mxu0 0
    %1027 = vmatprep.subr.bf16.mxu0 0
    %1028 = vmatpush1.bf16.msra.mxu0 0
    %1029 = vmatprep.subr.bf16.mxu0 0
    %1030 = vmatpush1.bf16.msra.mxu0 0
    %1031 = vmatprep.subr.bf16.mxu0 0
    %1032 = vmatpush1.bf16.msra.mxu0 0
    %1033 = vmatprep.subr.bf16.mxu0 0
    %1034 = vmatpush1.bf16.msra.mxu0 0
    %1035 = vmatprep.subr.bf16.mxu0 0
    %1036 = vmatpush1.bf16.msra.mxu0 0
    %1037 = vmatprep.subr.bf16.mxu0 0
    %1038 = vmatpush1.bf16.msra.mxu0 0
    %1039 = vmatprep.subr.bf16.mxu0 0
    %1040 = vmatpush1.bf16.msra.mxu0 0
    %1041 = vmatprep.mubr.bf16.mxu0 0
    %1042 = vmatmul.mubr.bf16.gmra.mrb[0].mxu0 %v986
    %v1043 = vpop.f32.mrb[0].mxu0
    %v1044 = vadd.f32 %v983, %v1043
    %v1045 = vpop.f32.mrb[0].mxu0
    %v1046 = vpop.f32.mrb[0].mxu0
    %v1047 = vadd.f32 %v983, %v1046
    %v1048 = vpop.f32.mrb[0].mxu0
    %1049 = vmatprep.mubr.bf16.mxu0 0
    %1050 = vmatmul.mubr.bf16.gmra.mrb[0].mxu0 %v989
    %v1051 = vpop.f32.mrb[0].mxu0
    %v1052 = vadd.f32 %v983, %v1051
    %v1053 = vpop.f32.mrb[0].mxu0
    %v1054 = vpop.f32.mrb[0].mxu0
    %v1055 = vadd.f32 %v983, %v1054
    %v1056 = vpop.f32.mrb[0].mxu0
    %1057 = vmatprep.mubr.bf16.mxu0 0
    %1058 = vmatmul.mubr.bf16.gmra.mrb[0].mxu0 %v992
    %v1059 = vpop.f32.mrb[0].mxu0
    %v1060 = vadd.f32 %v983, %v1059
    %v1061 = vpop.f32.mrb[0].mxu0
    %v1062 = vpop.f32.mrb[0].mxu0
    %v1063 = vadd.f32 %v983, %v1062
    %v1064 = vpop.f32.mrb[0].mxu0
    %1065 = vmatprep.mubr.bf16.mxu0 0
    %1066 = vmatmul.mubr.bf16.gmra.mrb[0].mxu0 %v995
    %v1067 = vpop.f32.mrb[0].mxu0
    %v1068 = vadd.f32 %v983, %v1067
    %v1069 = vpop.f32.mrb[0].mxu0
    %v1070 = vpop.f32.mrb[0].mxu0
    %v1071 = vadd.f32 %v983, %v1070
    %v1072 = vpop.f32.mrb[0].mxu0
    %1073 = vmatprep.mubr.bf16.mxu0 0
    %1074 = vmatmul.mubr.bf16.gmra.mrb[0].mxu0 %v998
    %v1075 = vpop.f32.mrb[0].mxu0
    %v1076 = vadd.f32 %v983, %v1075
    %v1077 = vpop.f32.mrb[0].mxu0
    %v1078 = vpop.f32.mrb[0].mxu0
    %v1079 = vadd.f32 %v983, %v1078
    %v1080 = vpop.f32.mrb[0].mxu0
    %1081 = vmatprep.mubr.bf16.mxu0 0
    %1082 = vmatmul.mubr.bf16.gmra.mrb[0].mxu0 %v1001
    %v1083 = vpop.f32.mrb[0].mxu0
    %v1084 = vadd.f32 %v983, %v1083
    %v1085 = vpop.f32.mrb[0].mxu0
    %v1086 = vpop.f32.mrb[0].mxu0
    %v1087 = vadd.f32 %v983, %v1086
    %v1088 = vpop.f32.mrb[0].mxu0
    %1089 = vmatprep.mubr.bf16.mxu0 0
    %1090 = vmatmul.mubr.bf16.gmra.mrb[0].mxu0 %v1004
    %v1091 = vpop.f32.mrb[0].mxu0
    %v1092 = vadd.f32 %v983, %v1091
    %v1093 = vpop.f32.mrb[0].mxu0
    %v1094 = vpop.f32.mrb[0].mxu0
    %v1095 = vadd.f32 %v983, %v1094
    %v1096 = vpop.f32.mrb[0].mxu0
    %1097 = vmatprep.mubr.bf16.mxu0 0
    %1098 = vmatmul.mubr.bf16.gmra.mrb[0].mxu0 %v1007
    %v1099 = vpop.f32.mrb[0].mxu0
    %v1100 = vadd.f32 %v983, %v1099
    %v1101 = vpop.f32.mrb[0].mxu0
    %v1102 = vpop.f32.mrb[0].mxu0
    %v1103 = vadd.f32 %v983, %v1102
    %v1104 = vpop.f32.mrb[0].mxu0
    %1105 = vdwg.mxu0
    %v1106 = vadd.f32 %v144, %v1044
    %v1107 = vadd.f32 %v145, %v1047
    %v1108 = vadd.f32 %v146, %v1052
    %v1109 = vadd.f32 %v147, %v1055
    %v1110 = vadd.f32 %v148, %v1060
    %v1111 = vadd.f32 %v149, %v1063
    %v1112 = vadd.f32 %v150, %v1068
    %v1113 = vadd.f32 %v151, %v1071
    %v1114 = vadd.f32 %v152, %v1076
    %v1115 = vadd.f32 %v153, %v1079
    %v1116 = vadd.f32 %v154, %v1084
    %v1117 = vadd.f32 %v155, %v1087
    %v1118 = vadd.f32 %v156, %v1092
    %v1119 = vadd.f32 %v157, %v1095
    %v1120 = vadd.f32 %v158, %v1100
    %v1121 = vadd.f32 %v159, %v1103
    %1122 = vst.msk [vmem:[#allocation17] sm:$0xff] %vm162, %v1106
    %1123 = vst.msk [vmem:[#allocation17 + $0x8] sm:$0xff] %vm162, %v1107
    %1124 = vst.msk [vmem:[#allocation17 + $0x10] sm:$0xff] %vm162, %v1108
    %1125 = vst.msk [vmem:[#allocation17 + $0x18] sm:$0xff] %vm162, %v1109
    %1126 = vst.msk [vmem:[#allocation17 + $0x20] sm:$0xff] %vm162, %v1110
    %1127 = vst.msk [vmem:[#allocation17 + $0x28] sm:$0xff] %vm162, %v1111
    %1128 = vst.msk [vmem:[#allocation17 + $0x30] sm:$0xff] %vm162, %v1112
    %1129 = vst.msk [vmem:[#allocation17 + $0x38] sm:$0xff] %vm162, %v1113
    %1130 = vst.msk [vmem:[#allocation17 + $0x40] sm:$0xff] %vm162, %v1114
    %1131 = vst.msk [vmem:[#allocation17 + $0x48] sm:$0xff] %vm162, %v1115
    %1132 = vst.msk [vmem:[#allocation17 + $0x50] sm:$0xff] %vm162, %v1116
    %1133 = vst.msk [vmem:[#allocation17 + $0x58] sm:$0xff] %vm162, %v1117
    %1134 = vst.msk [vmem:[#allocation17 + $0x60] sm:$0xff] %vm162, %v1118
    %1135 = vst.msk [vmem:[#allocation17 + $0x68] sm:$0xff] %vm162, %v1119
    %1136 = vst.msk [vmem:[#allocation17 + $0x70] sm:$0xff] %vm162, %v1120
    %1137 = vst.msk [vmem:[#allocation17 + $0x78] sm:$0xff] %vm162, %v1121
    // Predicated region
    $region74: #{run.13} parent=1 // pred_check
      _
    $region75: #{run.13} parent=1 // pred_check_branch
      %1139 = sbr.rel (0) target = $region77
    $region76: #{run.13} parent=1 // pred_region
      %s1141 = ssub.s32 2048, 2048
      %1142 = vsyncadd [#allocation4], %s1141
      %s1143 = sshll.u32 [#allocation17], 4
      %s1144 = int_to_ptr.vmem [resolvable:$true] %s1143
      %1149 = dma.vmem_to_hbm [thread:$0]  %s1144, 2048, %s9, [#allocation4], 128, 128, 8
    $region77: #{run.13} parent=1 // pred_fallthru
      _
    // Predicated region
    $region78: #{run.13} parent=1 // pred_check
      _
    $region79: #{run.13} parent=1 // pred_check_branch
      %1151 = sbr.rel (0) target = $region81
    $region80: #{run.13} parent=1 // pred_region
      %1152 = dma.done [#allocation4], 2048
    $region81: #{run.13} parent=1 // pred_fallthru
      _
    %1153 = vsyncpa [#allocation3], 1
    %1154 = vsyncpa [#allocation6], 1
    %1155 = vsyncpa [#allocation9], 1
    %1156 = vsyncpa [#allocation12], 1
    %1157 = vsyncpa [#allocation15], 1
    %1158 = vsyncpa [#allocation4], 1

</llo_original>
